<compile_context>
chip_gen: v7x
topology: tpu7x:2x2x1
jax: 0.10.0
libtpu: 0.0.40
codegen_flags: <defaults>
</compile_context>

<pallas_src>
import functools

import jax
import jax.numpy as jnp
from jax import lax
from jax.experimental import pallas as pl
from jax.experimental.pallas import tpu as pltpu


# ------------------------------------------------------------------
# Fused Pallas kernel (whole TimberEncoder forward, one batch element)
# ------------------------------------------------------------------

def _timber_encoder_kernel(*refs, cfg):
    x_ref = refs[0]
    g_ref = refs[-2]          # (1, 1, out_channels)
    l_ref = refs[-1]          # (1, timber, tokens)
    prm = iter(refs[1:-2])

    def nxt():
        return next(prm)[...]

    f32 = jnp.float32
    bf16 = jnp.bfloat16
    C = cfg['channels']
    scale = cfg['scale']
    width = C // scale
    heads = cfg['heads']
    K = cfg['kernels']

    def conv_same(x, w, b, sc, sh, dil, pad, relu=True):
        """Dilated 'same' Conv1d -> +bias -> ReLU -> BN affine.

        x: (Cin, T) f32, w: (K, C_out, C_in) bf16, b/sc/sh: (C_out, 1) f32.
        Each tap is pltpu.roll + a static edge mask (no pad-concat, no
        unaligned lane slices); taps are combined as a pure sum of dots.
        """
        Kw = w.shape[0]
        Cin, T = x.shape
        t = lax.broadcasted_iota(jnp.int32, (Cin, T), 1)
        taps = []
        for k in range(Kw):
            shift = pad - k * dil            # y[:, t] needs x[:, t - shift]
            s_mod = shift % T
            rolled = pltpu.roll(x, shift=s_mod, axis=1) if s_mod else x
            valid = (t >= shift) & (t < T + shift)
            taps.append(jnp.where(valid, rolled, 0.0).astype(bf16))
        acc = jnp.dot(w[0], taps[0], preferred_element_type=f32)
        for k in range(1, Kw):
            acc = acc + jnp.dot(w[k], taps[k], preferred_element_type=f32)
        acc = acc + b
        if relu:
            acc = jnp.maximum(acc, 0.0)
        return acc * sc + sh

    x = x_ref[0]                                             # (C_in, T)

    # ---- preblock: Conv(prekernels) -> ReLU -> BN --------------------------
    pre_w = nxt(); pre_b = nxt(); pre_sc = nxt(); pre_sh = nxt()
    h = conv_same(x, pre_w, pre_b, pre_sc, pre_sh,
                  dil=1, pad=cfg['prekernels'] // 2)

    # ---- SERes2Blocks + incremental MFA accumulation ------------------------
    mfa_acc = None
    for dil in cfg['dilations']:
        inp = h
        hb = h.astype(bf16)
        pw = nxt(); pb = nxt(); psc = nxt(); psh = nxt()
        rw = nxt(); rb = nxt(); rsc = nxt(); rsh = nxt()
        qw_res = nxt(); qw_rest = nxt(); qb = nxt(); qsc = nxt(); qsh = nxt()
        se_w1 = nxt(); se_b1 = nxt(); se_w2 = nxt(); se_b2 = nxt()
        mfa_wi = nxt()

        # preblock: Conv1x1 -> ReLU -> BN
        y = jnp.dot(pw, hb, preferred_element_type=f32) + pb
        y = jnp.maximum(y, 0.0) * psc + psh

        # Res2Block: each branch convolves its own chunk (matches the reference
        # loop `res += conv_i(chunks[i+1])`); all branches share one
        # block-diagonal per-tap weight -> a single sum-of-dots conv.
        rest = y[width:, :]                                  # chunks[1:], aligned
        z = conv_same(rest, rw, rb, rsc, rsh,
                      dil=dil, pad=(K - 1) * dil // 2)       # (3*width, T)
        res = y[0:width, :]
        for s in range(scale - 1):
            res = res + z[s * width:(s + 1) * width, :]

        # postblock 1x1 on concat([res, chunks[1:]]) via pre-split weights
        y2 = (jnp.dot(qw_res, res.astype(bf16), preferred_element_type=f32)
              + jnp.dot(qw_rest, rest.astype(bf16), preferred_element_type=f32)
              + qb)
        y2 = jnp.maximum(y2, 0.0) * qsc + qsh

        # SE gate: Conv1x1 -> SiLU -> Conv1x1 -> Sigmoid on the time-mean
        m = jnp.mean(y2, axis=-1, keepdims=True).astype(bf16)      # (C, 1)
        g1 = jnp.dot(se_w1, m, preferred_element_type=f32) + se_b1
        g1 = g1 * jax.nn.sigmoid(g1)                               # SiLU
        gate = jax.nn.sigmoid(
            jnp.dot(se_w2, g1.astype(bf16), preferred_element_type=f32) + se_b2)
        h = y2 * gate + inp

        # MFA contribution now (keeps the live set small — v7x VMEM discipline)
        part = jnp.dot(mfa_wi, h.astype(bf16), preferred_element_type=f32)
        mfa_acc = part if mfa_acc is None else mfa_acc + part

    mfa_b = nxt()
    mfa = jnp.maximum(mfa_acc + mfa_b, 0.0)                  # (hid, T)
    mfa_bf = mfa.astype(bf16)

    # ---- Pool: ASP -> BN -> Linear -> BN -> L2 normalize -------------------
    asp_w1 = nxt(); asp_b1 = nxt(); asp_w2 = nxt(); asp_b2 = nxt()
    att = jnp.tanh(jnp.dot(asp_w1, mfa_bf, preferred_element_type=f32) + asp_b1)
    logits = jnp.dot(asp_w2, att.astype(bf16),
                     preferred_element_type=f32) + asp_b2     # (hid, T)
    lmax = jnp.max(logits, axis=-1, keepdims=True)
    e = jnp.exp(logits - lmax)
    wgt = e * pl.reciprocal(jnp.sum(e, axis=-1, keepdims=True), approx=True)
    mean = jnp.sum(wgt * mfa, axis=-1, keepdims=True)         # (hid, 1), f32
    var = jnp.sum(wgt * mfa * mfa, axis=-1, keepdims=True) - mean * mean
    std = jnp.sqrt(jnp.maximum(var, 0.0) + 1e-7)              # clamp: NaN guard

    bn1_sc_m = nxt(); bn1_sh_m = nxt(); bn1_sc_s = nxt(); bn1_sh_s = nxt()
    lin_w_m = nxt(); lin_w_s = nxt(); lin_b = nxt()
    bn2_sc = nxt(); bn2_sh = nxt()
    s_mean = (mean * bn1_sc_m + bn1_sh_m).astype(bf16)
    s_std = (std * bn1_sc_s + bn1_sh_s).astype(bf16)
    # contract the channel axis directly -> lane-dense (1, oc) row output
    dn = (((0,), (1,)), ((), ()))
    g = (lax.dot_general(s_mean, lin_w_m, dn, preferred_element_type=f32)
         + lax.dot_general(s_std, lin_w_s, dn, preferred_element_type=f32)
         + lin_b)                                             # (1, oc)
    g = g * bn2_sc + bn2_sh
    nrm = jnp.sqrt(jnp.sum(g * g, axis=-1, keepdims=True))
    g_ref[0] = g * pl.reciprocal(jnp.maximum(nrm, 1e-12), approx=True)

    # ---- Timber token bank: two fused multi-head attentions ----------------
    def mha(kv_src_bf, q_in, wkv, bkv, wq, bq, wo, bo):
        hidm = wq.shape[0]
        ch = hidm // heads
        kv = jnp.dot(wkv, kv_src_bf, preferred_element_type=f32) + bkv  # (2h, S)
        q = jnp.dot(wq, q_in.astype(bf16), preferred_element_type=f32) + bq
        S = kv.shape[1]
        Tq = q.shape[1]
        k3 = kv[0:hidm].reshape(heads, ch, S).astype(bf16)    # aligned splits
        v3 = kv[hidm:].reshape(heads, ch, S).astype(bf16)
        q3 = q.reshape(heads, ch, Tq).astype(bf16)
        score = jnp.einsum('hcs,hct->hst', k3, q3,
                           preferred_element_type=f32) * (ch ** -0.5)
        smax = jnp.max(score, axis=1, keepdims=True)
        ee = jnp.exp(score - smax)
        ww = ee * pl.reciprocal(jnp.sum(ee, axis=1, keepdims=True), approx=True)
        o3 = jnp.einsum('hcs,hst->hct', v3, ww.astype(bf16),
                        preferred_element_type=f32)           # (heads, ch, Tq)
        return jnp.dot(wo, o3.reshape(hidm, Tq).astype(bf16),
                       preferred_element_type=f32) + bo

    query = nxt()                                             # (latent, tokens)
    wkv1 = nxt(); bkv1 = nxt(); wq1 = nxt(); bq1 = nxt(); wo1 = nxt(); bo1 = nxt()
    q2 = mha(mfa_bf, query, wkv1, bkv1, wq1, bq1, wo1, bo1) + query
    wkv2 = nxt(); bkv2 = nxt(); wq2 = nxt(); bq2 = nxt(); wo2 = nxt(); bo2 = nxt()
    local = mha(mfa_bf, q2, wkv2, bkv2, wq2, bq2, wo2, bo2)

    assert next(prm, None) is None   # all parameter refs consumed (trace-time)
    l_ref[0] = local


# ------------------------------------------------------------------
# Wrapper: flatten params and launch the single fused kernel
# ------------------------------------------------------------------

def _flatten_params(p):
    flat = [p['pre_w'], *p['pre_aff']]
    for bp in p['blocks']:
        flat += [bp['pre_w'], *bp['pre_aff'],
                 bp['res_w'], *bp['res_aff'],
                 bp['post_w_res'], bp['post_w_rest'], *bp['post_aff'],
                 bp['se_w1'], bp['se_b1'], bp['se_w2'], bp['se_b2'],
                 bp['mfa_w']]
    flat += [p['mfa_b'],
             p['asp_w1'], p['asp_b1'], p['asp_w2'], p['asp_b2'],
             p['bn1_sc_mean'], p['bn1_sh_mean'], p['bn1_sc_std'], p['bn1_sh_std'],
             p['lin_w_mean'], p['lin_w_std'], p['lin_b'],
             p['bn2_sc'], p['bn2_sh'],
             p['timber_query']]
    for m in (p['pre_mha'], p['post_mha']):
        flat += [m['wkv'], m['bkv'], m['wq'], m['bq'], m['wo'], m['bo']]
    return flat


def _full_spec(arr):
    nd = arr.ndim
    return pl.BlockSpec(arr.shape, lambda b, _nd=nd: (0,) * _nd)


def _cost_estimate(cfg, B, T, flat, inputs):
    C, K, S = cfg['channels'], cfg['kernels'], cfg['scale']
    width = C // S
    hid, bot = cfg['hiddens'], cfg['bottleneck']
    lat, tim, tok = cfg['latent'], cfg['timber'], cfg['tokens']
    oc = cfg['out_channels']
    nblk = len(cfg['dilations'])
    din = C // bot
    per_b = (2 * cfg['prekernels'] * C * cfg['in_channels'] * T
             + nblk * (2 * 2 * C * C * T
                       + 2 * K * (S - 1) * width * width * T
                       + 2 * (din * C + C * din)
                       + 2 * hid * C * T)
             + 2 * (bot * hid + hid * bot) * T
             + 2 * oc * 2 * hid
             + 2 * (2 * 2 * lat * hid * T + 2 * lat * lat * tok
                    + 2 * 2 * lat * T * tok))
    trans_per_b = (hid + bot) * T + 4 * T * tok + 6 * C
    bytes_accessed = (inputs.size * 4
                      + sum(int(a.size) * a.dtype.itemsize for a in flat)
                      + B * (oc + tim * tok) * 4)
    return pl.CostEstimate(flops=int(B * per_b),
                           transcendentals=int(B * trans_per_b),
                           bytes_accessed=int(bytes_accessed))


def timber_encoder_forward(params, inputs, cfg):
    """inputs: [B, in_channels, T] -> (global_ [B, out_channels], local [B, timber, tokens])."""
    B, Cin, T = inputs.shape
    oc, tim, tok = cfg['out_channels'], cfg['timber'], cfg['tokens']
    flat = _flatten_params(params)

    in_specs = [pl.BlockSpec((1, Cin, T), lambda b: (b, 0, 0))]
    in_specs += [_full_spec(a) for a in flat]
    out_shape = (jax.ShapeDtypeStruct((B, 1, oc), jnp.float32),
                 jax.ShapeDtypeStruct((B, tim, tok), jnp.float32))
    out_specs = (pl.BlockSpec((1, 1, oc), lambda b: (b, 0, 0)),
                 pl.BlockSpec((1, tim, tok), lambda b: (b, 0, 0)))

    g_row, local = pl.pallas_call(
        functools.partial(_timber_encoder_kernel, cfg=cfg),
        out_shape=out_shape,
        grid=(B,),
        in_specs=in_specs,
        out_specs=out_specs,
        compiler_params=pltpu.CompilerParams(
            dimension_semantics=("parallel",),
            # Explicit VMEM budget: stays under v7x's 64 MiB physical VMEM
            # while raising the default scoped limit for larger configs.
            vmem_limit_bytes=48 * 1024 * 1024),
        cost_estimate=_cost_estimate(cfg, B, T, flat, inputs),
    )(inputs, *flat)
    return g_row[:, 0, :], local


# ------------------------------------------------------------------
# Deterministic parameter init (pre-packed / pre-split / bf16 layouts)
# ------------------------------------------------------------------

class KeyGen:
    def __init__(self, key):
        self.key = key

    def __call__(self):
        self.key, sub = jax.random.split(self.key)
        return sub


def bn_affine(key, c):
    """Inference-mode BatchNorm1d folded to per-channel (scale, shift)."""
    k1, k2, k3, k4 = jax.random.split(key, 4)
    gamma = 1.0 + 0.1 * jax.random.normal(k1, (c,), jnp.float32)
    beta = 0.1 * jax.random.normal(k2, (c,), jnp.float32)
    mean = 0.1 * jax.random.normal(k3, (c,), jnp.float32)
    var = 1.0 + 0.1 * jnp.abs(jax.random.normal(k4, (c,), jnp.float32))
    sc = gamma / jnp.sqrt(var + 1e-5)
    sh = beta - mean * sc
    return sc, sh


def init_params(key, cfg):
    kg = KeyGen(key)
    bf16 = jnp.bfloat16

    def w(shape, s=0.2):
        return s * jax.random.normal(kg(), shape, jnp.float32)

    def wb(shape, s=0.2):
        return w(shape, s).astype(bf16)

    def conv_aff(c):
        """(bias, bn_scale, bn_shift) pre-split into three (c, 1) arrays."""
        b = w((c, 1))
        sc, sh = bn_affine(kg(), c)
        return (b, sc.reshape(c, 1), sh.reshape(c, 1))

    C, K, S = cfg['channels'], cfg['kernels'], cfg['scale']
    width = C // S
    hid, lat, tim = cfg['hiddens'], cfg['latent'], cfg['timber']
    bot, oc = cfg['bottleneck'], cfg['out_channels']
    nblk = len(cfg['dilations'])

    p = {}
    # preblock conv weight pre-transposed to (K, C_out, C_in), stored bf16
    p['pre_w'] = jnp.transpose(w((C, cfg['in_channels'], cfg['prekernels'])),
                               (2, 0, 1)).astype(bf16)
    p['pre_aff'] = conv_aff(C)

    blocks = []
    for _ in range(nblk):
        bp = {}
        bp['pre_w'] = wb((C, C))
        bp['pre_aff'] = conv_aff(C)
        # Res2 branch convs packed as block-diagonal per-tap weights
        bd = jnp.zeros((K, (S - 1) * width, (S - 1) * width), jnp.float32)
        for i in range(S - 1):
            wi = jnp.transpose(w((width, width, K)), (2, 0, 1))   # (K, w, w)
            bd = bd.at[:, i * width:(i + 1) * width,
                       i * width:(i + 1) * width].set(wi)
        bp['res_w'] = bd.astype(bf16)
        rb, rsc, rsh = [], [], []
        for _ in range(S - 1):
            b_, sc_, sh_ = conv_aff(width)
            rb.append(b_); rsc.append(sc_); rsh.append(sh_)
        bp['res_aff'] = (jnp.concatenate(rb, 0), jnp.concatenate(rsc, 0),
                         jnp.concatenate(rsh, 0))
        post = w((C, C))
        bp['post_w_res'] = post[:, :width].astype(bf16)
        bp['post_w_rest'] = post[:, width:].astype(bf16)
        bp['post_aff'] = conv_aff(C)
        din = C // bot
        bp['se_w1'] = wb((din, C)); bp['se_b1'] = w((din, 1))
        bp['se_w2'] = wb((C, din)); bp['se_b2'] = w((C, 1))
        bp['mfa_w'] = wb((hid, C))         # pre-split slice of the MFA 1x1 conv
        blocks.append(bp)
    p['blocks'] = blocks

    p['mfa_b'] = w((hid, 1))
    p['asp_w1'] = wb((bot, hid)); p['asp_b1'] = w((bot, 1))
    p['asp_w2'] = wb((hid, bot)); p['asp_b2'] = w((hid, 1))
    sc1, sh1 = bn_affine(kg(), 2 * hid)
    p['bn1_sc_mean'] = sc1[:hid].reshape(hid, 1)
    p['bn1_sh_mean'] = sh1[:hid].reshape(hid, 1)
    p['bn1_sc_std'] = sc1[hid:].reshape(hid, 1)
    p['bn1_sh_std'] = sh1[hid:].reshape(hid, 1)
    lin = w((oc, 2 * hid))
    p['lin_w_mean'] = lin[:, :hid].astype(bf16)
    p['lin_w_std'] = lin[:, hid:].astype(bf16)
    p['lin_b'] = w((1, oc))
    sc2, sh2 = bn_affine(kg(), oc)
    p['bn2_sc'] = sc2.reshape(1, oc)
    p['bn2_sh'] = sh2.reshape(1, oc)
    p['timber_query'] = w((lat, cfg['tokens']), 1.0)

    def mha_params(kvdim, qdim, odim, hdim):
        return {'wkv': wb((2 * hdim, kvdim)), 'bkv': w((2 * hdim, 1)),
                'wq': wb((hdim, qdim)), 'bq': w((hdim, 1)),
                'wo': wb((odim, hdim)), 'bo': w((odim, 1))}

    p['pre_mha'] = mha_params(hid, lat, lat, lat)
    p['post_mha'] = mha_params(hid, lat, tim, lat)
    return p


# ------------------------------------------------------------------
# Main
# ------------------------------------------------------------------

if __name__ == "__main__":
    # channels/scale = 8 keeps every Res2 sublane slice 8-row aligned (f32 tile);
    # T = 128 fills the 128-lane vregs (production T should be a multiple of 128);
    # B = 2 keeps both v7x TensorCores busy via the "parallel" batch grid.
    cfg = dict(in_channels=8, out_channels=16, channels=32, prekernels=5,
               scale=4, kernels=3, dilations=[2, 3], bottleneck=4,
               hiddens=32, latent=16, timber=16, tokens=4, heads=2,
               contents=8, slerp=0.5)

    key = jax.random.PRNGKey(0)
    pkey, xkey = jax.random.split(key)
    params = init_params(pkey, cfg)

    B, T = 2, 128
    inputs = jax.random.normal(xkey, (B, cfg['in_channels'], T), jnp.float32)

    fwd = jax.jit(functools.partial(timber_encoder_forward, cfg=cfg))
    global_, local = fwd(params, inputs)
    jax.block_until_ready((global_, local))

    assert global_.shape == (B, cfg['out_channels']), global_.shape
    assert local.shape == (B, cfg['timber'], cfg['tokens']), local.shape
    assert bool(jnp.all(jnp.isfinite(global_))) and bool(jnp.all(jnp.isfinite(local)))
    print("KERNEL_OK")
</pallas_src>

<mosaic_0001>
module attributes {stable_mosaic.version = 11 : i64} {
  func.func @_timber_encoder_kernel(%arg0: i32, %arg1: memref<1x8x128xf32, #tpu.memory_space<vmem>>, %arg2: memref<5x32x8xbf16, #tpu.memory_space<vmem>>, %arg3: memref<32x1xf32, #tpu.memory_space<vmem>>, %arg4: memref<32x1xf32, #tpu.memory_space<vmem>>, %arg5: memref<32x1xf32, #tpu.memory_space<vmem>>, %arg6: memref<32x32xbf16, #tpu.memory_space<vmem>>, %arg7: memref<32x1xf32, #tpu.memory_space<vmem>>, %arg8: memref<32x1xf32, #tpu.memory_space<vmem>>, %arg9: memref<32x1xf32, #tpu.memory_space<vmem>>, %arg10: memref<3x24x24xbf16, #tpu.memory_space<vmem>>, %arg11: memref<24x1xf32, #tpu.memory_space<vmem>>, %arg12: memref<24x1xf32, #tpu.memory_space<vmem>>, %arg13: memref<24x1xf32, #tpu.memory_space<vmem>>, %arg14: memref<32x8xbf16, #tpu.memory_space<vmem>>, %arg15: memref<32x24xbf16, #tpu.memory_space<vmem>>, %arg16: memref<32x1xf32, #tpu.memory_space<vmem>>, %arg17: memref<32x1xf32, #tpu.memory_space<vmem>>, %arg18: memref<32x1xf32, #tpu.memory_space<vmem>>, %arg19: memref<8x32xbf16, #tpu.memory_space<vmem>>, %arg20: memref<8x1xf32, #tpu.memory_space<vmem>>, %arg21: memref<32x8xbf16, #tpu.memory_space<vmem>>, %arg22: memref<32x1xf32, #tpu.memory_space<vmem>>, %arg23: memref<32x32xbf16, #tpu.memory_space<vmem>>, %arg24: memref<32x32xbf16, #tpu.memory_space<vmem>>, %arg25: memref<32x1xf32, #tpu.memory_space<vmem>>, %arg26: memref<32x1xf32, #tpu.memory_space<vmem>>, %arg27: memref<32x1xf32, #tpu.memory_space<vmem>>, %arg28: memref<3x24x24xbf16, #tpu.memory_space<vmem>>, %arg29: memref<24x1xf32, #tpu.memory_space<vmem>>, %arg30: memref<24x1xf32, #tpu.memory_space<vmem>>, %arg31: memref<24x1xf32, #tpu.memory_space<vmem>>, %arg32: memref<32x8xbf16, #tpu.memory_space<vmem>>, %arg33: memref<32x24xbf16, #tpu.memory_space<vmem>>, %arg34: memref<32x1xf32, #tpu.memory_space<vmem>>, %arg35: memref<32x1xf32, #tpu.memory_space<vmem>>, %arg36: memref<32x1xf32, #tpu.memory_space<vmem>>, %arg37: memref<8x32xbf16, #tpu.memory_space<vmem>>, %arg38: memref<8x1xf32, #tpu.memory_space<vmem>>, %arg39: memref<32x8xbf16, #tpu.memory_space<vmem>>, %arg40: memref<32x1xf32, #tpu.memory_space<vmem>>, %arg41: memref<32x32xbf16, #tpu.memory_space<vmem>>, %arg42: memref<32x1xf32, #tpu.memory_space<vmem>>, %arg43: memref<4x32xbf16, #tpu.memory_space<vmem>>, %arg44: memref<4x1xf32, #tpu.memory_space<vmem>>, %arg45: memref<32x4xbf16, #tpu.memory_space<vmem>>, %arg46: memref<32x1xf32, #tpu.memory_space<vmem>>, %arg47: memref<32x1xf32, #tpu.memory_space<vmem>>, %arg48: memref<32x1xf32, #tpu.memory_space<vmem>>, %arg49: memref<32x1xf32, #tpu.memory_space<vmem>>, %arg50: memref<32x1xf32, #tpu.memory_space<vmem>>, %arg51: memref<16x32xbf16, #tpu.memory_space<vmem>>, %arg52: memref<16x32xbf16, #tpu.memory_space<vmem>>, %arg53: memref<1x16xf32, #tpu.memory_space<vmem>>, %arg54: memref<1x16xf32, #tpu.memory_space<vmem>>, %arg55: memref<1x16xf32, #tpu.memory_space<vmem>>, %arg56: memref<16x4xf32, #tpu.memory_space<vmem>>, %arg57: memref<32x32xbf16, #tpu.memory_space<vmem>>, %arg58: memref<32x1xf32, #tpu.memory_space<vmem>>, %arg59: memref<16x16xbf16, #tpu.memory_space<vmem>>, %arg60: memref<16x1xf32, #tpu.memory_space<vmem>>, %arg61: memref<16x16xbf16, #tpu.memory_space<vmem>>, %arg62: memref<16x1xf32, #tpu.memory_space<vmem>>, %arg63: memref<32x32xbf16, #tpu.memory_space<vmem>>, %arg64: memref<32x1xf32, #tpu.memory_space<vmem>>, %arg65: memref<16x16xbf16, #tpu.memory_space<vmem>>, %arg66: memref<16x1xf32, #tpu.memory_space<vmem>>, %arg67: memref<16x16xbf16, #tpu.memory_space<vmem>>, %arg68: memref<16x1xf32, #tpu.memory_space<vmem>>, %arg69: memref<1x1x16xf32, #tpu.memory_space<vmem>>, %arg70: memref<1x16x4xf32, #tpu.memory_space<vmem>>) attributes {dimension_semantics = [#tpu.dimension_semantics<parallel>], iteration_bounds = array<i64: 2>, scalar_prefetch = 0 : i64, scratch_operands = 0 : i64, tpu.core_type = #tpu.core_type<tc>, window_params = [{transform_indices = @transform_0, window_bounds = array<i64: 1, 8, 128>}, {pipeline_mode = #tpu.pipeline_mode<synchronous>, transform_indices = @transform_1, window_bounds = array<i64: 5, 32, 8>}, {pipeline_mode = #tpu.pipeline_mode<synchronous>, transform_indices = @transform_2, window_bounds = array<i64: 32, 1>}, {pipeline_mode = #tpu.pipeline_mode<synchronous>, transform_indices = @transform_3, window_bounds = array<i64: 32, 1>}, {pipeline_mode = #tpu.pipeline_mode<synchronous>, transform_indices = @transform_4, window_bounds = array<i64: 32, 1>}, {pipeline_mode = #tpu.pipeline_mode<synchronous>, transform_indices = @transform_5, window_bounds = array<i64: 32, 32>}, {pipeline_mode = #tpu.pipeline_mode<synchronous>, transform_indices = @transform_6, window_bounds = array<i64: 32, 1>}, {pipeline_mode = #tpu.pipeline_mode<synchronous>, transform_indices = @transform_7, window_bounds = array<i64: 32, 1>}, {pipeline_mode = #tpu.pipeline_mode<synchronous>, transform_indices = @transform_8, window_bounds = array<i64: 32, 1>}, {pipeline_mode = #tpu.pipeline_mode<synchronous>, transform_indices = @transform_9, window_bounds = array<i64: 3, 24, 24>}, {pipeline_mode = #tpu.pipeline_mode<synchronous>, transform_indices = @transform_10, window_bounds = array<i64: 24, 1>}, {pipeline_mode = #tpu.pipeline_mode<synchronous>, transform_indices = @transform_11, window_bounds = array<i64: 24, 1>}, {pipeline_mode = #tpu.pipeline_mode<synchronous>, transform_indices = @transform_12, window_bounds = array<i64: 24, 1>}, {pipeline_mode = #tpu.pipeline_mode<synchronous>, transform_indices = @transform_13, window_bounds = array<i64: 32, 8>}, {pipeline_mode = #tpu.pipeline_mode<synchronous>, transform_indices = @transform_14, window_bounds = array<i64: 32, 24>}, {pipeline_mode = #tpu.pipeline_mode<synchronous>, transform_indices = @transform_15, window_bounds = array<i64: 32, 1>}, {pipeline_mode = #tpu.pipeline_mode<synchronous>, transform_indices = @transform_16, window_bounds = array<i64: 32, 1>}, {pipeline_mode = #tpu.pipeline_mode<synchronous>, transform_indices = @transform_17, window_bounds = array<i64: 32, 1>}, {pipeline_mode = #tpu.pipeline_mode<synchronous>, transform_indices = @transform_18, window_bounds = array<i64: 8, 32>}, {pipeline_mode = #tpu.pipeline_mode<synchronous>, transform_indices = @transform_19, window_bounds = array<i64: 8, 1>}, {pipeline_mode = #tpu.pipeline_mode<synchronous>, transform_indices = @transform_20, window_bounds = array<i64: 32, 8>}, {pipeline_mode = #tpu.pipeline_mode<synchronous>, transform_indices = @transform_21, window_bounds = array<i64: 32, 1>}, {pipeline_mode = #tpu.pipeline_mode<synchronous>, transform_indices = @transform_22, window_bounds = array<i64: 32, 32>}, {pipeline_mode = #tpu.pipeline_mode<synchronous>, transform_indices = @transform_23, window_bounds = array<i64: 32, 32>}, {pipeline_mode = #tpu.pipeline_mode<synchronous>, transform_indices = @transform_24, window_bounds = array<i64: 32, 1>}, {pipeline_mode = #tpu.pipeline_mode<synchronous>, transform_indices = @transform_25, window_bounds = array<i64: 32, 1>}, {pipeline_mode = #tpu.pipeline_mode<synchronous>, transform_indices = @transform_26, window_bounds = array<i64: 32, 1>}, {pipeline_mode = #tpu.pipeline_mode<synchronous>, transform_indices = @transform_27, window_bounds = array<i64: 3, 24, 24>}, {pipeline_mode = #tpu.pipeline_mode<synchronous>, transform_indices = @transform_28, window_bounds = array<i64: 24, 1>}, {pipeline_mode = #tpu.pipeline_mode<synchronous>, transform_indices = @transform_29, window_bounds = array<i64: 24, 1>}, {pipeline_mode = #tpu.pipeline_mode<synchronous>, transform_indices = @transform_30, window_bounds = array<i64: 24, 1>}, {pipeline_mode = #tpu.pipeline_mode<synchronous>, transform_indices = @transform_31, window_bounds = array<i64: 32, 8>}, {pipeline_mode = #tpu.pipeline_mode<synchronous>, transform_indices = @transform_32, window_bounds = array<i64: 32, 24>}, {pipeline_mode = #tpu.pipeline_mode<synchronous>, transform_indices = @transform_33, window_bounds = array<i64: 32, 1>}, {pipeline_mode = #tpu.pipeline_mode<synchronous>, transform_indices = @transform_34, window_bounds = array<i64: 32, 1>}, {pipeline_mode = #tpu.pipeline_mode<synchronous>, transform_indices = @transform_35, window_bounds = array<i64: 32, 1>}, {pipeline_mode = #tpu.pipeline_mode<synchronous>, transform_indices = @transform_36, window_bounds = array<i64: 8, 32>}, {pipeline_mode = #tpu.pipeline_mode<synchronous>, transform_indices = @transform_37, window_bounds = array<i64: 8, 1>}, {pipeline_mode = #tpu.pipeline_mode<synchronous>, transform_indices = @transform_38, window_bounds = array<i64: 32, 8>}, {pipeline_mode = #tpu.pipeline_mode<synchronous>, transform_indices = @transform_39, window_bounds = array<i64: 32, 1>}, {pipeline_mode = #tpu.pipeline_mode<synchronous>, transform_indices = @transform_40, window_bounds = array<i64: 32, 32>}, {pipeline_mode = #tpu.pipeline_mode<synchronous>, transform_indices = @transform_41, window_bounds = array<i64: 32, 1>}, {pipeline_mode = #tpu.pipeline_mode<synchronous>, transform_indices = @transform_42, window_bounds = array<i64: 4, 32>}, {pipeline_mode = #tpu.pipeline_mode<synchronous>, transform_indices = @transform_43, window_bounds = array<i64: 4, 1>}, {pipeline_mode = #tpu.pipeline_mode<synchronous>, transform_indices = @transform_44, window_bounds = array<i64: 32, 4>}, {pipeline_mode = #tpu.pipeline_mode<synchronous>, transform_indices = @transform_45, window_bounds = array<i64: 32, 1>}, {pipeline_mode = #tpu.pipeline_mode<synchronous>, transform_indices = @transform_46, window_bounds = array<i64: 32, 1>}, {pipeline_mode = #tpu.pipeline_mode<synchronous>, transform_indices = @transform_47, window_bounds = array<i64: 32, 1>}, {pipeline_mode = #tpu.pipeline_mode<synchronous>, transform_indices = @transform_48, window_bounds = array<i64: 32, 1>}, {pipeline_mode = #tpu.pipeline_mode<synchronous>, transform_indices = @transform_49, window_bounds = array<i64: 32, 1>}, {pipeline_mode = #tpu.pipeline_mode<synchronous>, transform_indices = @transform_50, window_bounds = array<i64: 16, 32>}, {pipeline_mode = #tpu.pipeline_mode<synchronous>, transform_indices = @transform_51, window_bounds = array<i64: 16, 32>}, {pipeline_mode = #tpu.pipeline_mode<synchronous>, transform_indices = @transform_52, window_bounds = array<i64: 1, 16>}, {pipeline_mode = #tpu.pipeline_mode<synchronous>, transform_indices = @transform_53, window_bounds = array<i64: 1, 16>}, {pipeline_mode = #tpu.pipeline_mode<synchronous>, transform_indices = @transform_54, window_bounds = array<i64: 1, 16>}, {pipeline_mode = #tpu.pipeline_mode<synchronous>, transform_indices = @transform_55, window_bounds = array<i64: 16, 4>}, {pipeline_mode = #tpu.pipeline_mode<synchronous>, transform_indices = @transform_56, window_bounds = array<i64: 32, 32>}, {pipeline_mode = #tpu.pipeline_mode<synchronous>, transform_indices = @transform_57, window_bounds = array<i64: 32, 1>}, {pipeline_mode = #tpu.pipeline_mode<synchronous>, transform_indices = @transform_58, window_bounds = array<i64: 16, 16>}, {pipeline_mode = #tpu.pipeline_mode<synchronous>, transform_indices = @transform_59, window_bounds = array<i64: 16, 1>}, {pipeline_mode = #tpu.pipeline_mode<synchronous>, transform_indices = @transform_60, window_bounds = array<i64: 16, 16>}, {pipeline_mode = #tpu.pipeline_mode<synchronous>, transform_indices = @transform_61, window_bounds = array<i64: 16, 1>}, {pipeline_mode = #tpu.pipeline_mode<synchronous>, transform_indices = @transform_62, window_bounds = array<i64: 32, 32>}, {pipeline_mode = #tpu.pipeline_mode<synchronous>, transform_indices = @transform_63, window_bounds = array<i64: 32, 1>}, {pipeline_mode = #tpu.pipeline_mode<synchronous>, transform_indices = @transform_64, window_bounds = array<i64: 16, 16>}, {pipeline_mode = #tpu.pipeline_mode<synchronous>, transform_indices = @transform_65, window_bounds = array<i64: 16, 1>}, {pipeline_mode = #tpu.pipeline_mode<synchronous>, transform_indices = @transform_66, window_bounds = array<i64: 16, 16>}, {pipeline_mode = #tpu.pipeline_mode<synchronous>, transform_indices = @transform_67, window_bounds = array<i64: 16, 1>}, {transform_indices = @transform_68, window_bounds = array<i64: 1, 1, 16>}, {transform_indices = @transform_69, window_bounds = array<i64: 1, 16, 4>}]} {
    %c0 = arith.constant 0 : index
    %c0_0 = arith.constant 0 : index
    %c0_1 = arith.constant 0 : index
    %0 = vector.load %arg1[%c0, %c0_0, %c0_1] : memref<1x8x128xf32, #tpu.memory_space<vmem>>, vector<1x8x128xf32>
    %1 = vector.shape_cast %0 : vector<1x8x128xf32> to vector<8x128xf32>
    %c0_2 = arith.constant 0 : index
    %c0_3 = arith.constant 0 : index
    %c0_4 = arith.constant 0 : index
    %2 = vector.load %arg2[%c0_2, %c0_3, %c0_4] : memref<5x32x8xbf16, #tpu.memory_space<vmem>>, vector<5x32x8xbf16>
    %c0_5 = arith.constant 0 : index
    %c0_6 = arith.constant 0 : index
    %3 = vector.load %arg3[%c0_5, %c0_6] : memref<32x1xf32, #tpu.memory_space<vmem>>, vector<32x1xf32>
    %c0_7 = arith.constant 0 : index
    %c0_8 = arith.constant 0 : index
    %4 = vector.load %arg4[%c0_7, %c0_8] : memref<32x1xf32, #tpu.memory_space<vmem>>, vector<32x1xf32>
    %c0_9 = arith.constant 0 : index
    %c0_10 = arith.constant 0 : index
    %5 = vector.load %arg5[%c0_9, %c0_10] : memref<32x1xf32, #tpu.memory_space<vmem>>, vector<32x1xf32>
    %6 = tpu.iota {dimensions = array<i32: 1>} : vector<8x128xi32>
    %c2_i32 = arith.constant 2 : i32
    %7 = tpu.dynamic_rotate %1 by %c2_i32 dim 1 : vector<8x128xf32>, i32 -> vector<8x128xf32>
    %c2_i32_11 = arith.constant 2 : i32
    %8 = vector.broadcast %c2_i32_11 : i32 to vector<8x128xi32>
    %9 = arith.cmpi sge, %6, %8 : vector<8x128xi32>
    %c130_i32 = arith.constant 130 : i32
    %10 = vector.broadcast %c130_i32 : i32 to vector<8x128xi32>
    %11 = arith.cmpi slt, %6, %10 : vector<8x128xi32>
    %12 = arith.andi %9, %11 : vector<8x128xi1>
    %cst = arith.constant 0.000000e+00 : f32
    %13 = vector.broadcast %cst : f32 to vector<8x128xf32>
    %14 = arith.select %12, %7, %13 : vector<8x128xi1>, vector<8x128xf32>
    %15 = arith.truncf %14 : vector<8x128xf32> to vector<8x128xbf16>
    %c1_i32 = arith.constant 1 : i32
    %16 = tpu.dynamic_rotate %1 by %c1_i32 dim 1 : vector<8x128xf32>, i32 -> vector<8x128xf32>
    %c1_i32_12 = arith.constant 1 : i32
    %17 = vector.broadcast %c1_i32_12 : i32 to vector<8x128xi32>
    %18 = arith.cmpi sge, %6, %17 : vector<8x128xi32>
    %c129_i32 = arith.constant 129 : i32
    %19 = vector.broadcast %c129_i32 : i32 to vector<8x128xi32>
    %20 = arith.cmpi slt, %6, %19 : vector<8x128xi32>
    %21 = arith.andi %18, %20 : vector<8x128xi1>
    %cst_13 = arith.constant 0.000000e+00 : f32
    %22 = vector.broadcast %cst_13 : f32 to vector<8x128xf32>
    %23 = arith.select %21, %16, %22 : vector<8x128xi1>, vector<8x128xf32>
    %24 = arith.truncf %23 : vector<8x128xf32> to vector<8x128xbf16>
    %c0_i32 = arith.constant 0 : i32
    %25 = vector.broadcast %c0_i32 : i32 to vector<8x128xi32>
    %26 = arith.cmpi sge, %6, %25 : vector<8x128xi32>
    %c128_i32 = arith.constant 128 : i32
    %27 = vector.broadcast %c128_i32 : i32 to vector<8x128xi32>
    %28 = arith.cmpi slt, %6, %27 : vector<8x128xi32>
    %29 = arith.andi %26, %28 : vector<8x128xi1>
    %cst_14 = arith.constant 0.000000e+00 : f32
    %30 = vector.broadcast %cst_14 : f32 to vector<8x128xf32>
    %31 = arith.select %29, %1, %30 : vector<8x128xi1>, vector<8x128xf32>
    %32 = arith.truncf %31 : vector<8x128xf32> to vector<8x128xbf16>
    %c127_i32 = arith.constant 127 : i32
    %33 = tpu.dynamic_rotate %1 by %c127_i32 dim 1 : vector<8x128xf32>, i32 -> vector<8x128xf32>
    %c-1_i32 = arith.constant -1 : i32
    %34 = vector.broadcast %c-1_i32 : i32 to vector<8x128xi32>
    %35 = arith.cmpi sge, %6, %34 : vector<8x128xi32>
    %c127_i32_15 = arith.constant 127 : i32
    %36 = vector.broadcast %c127_i32_15 : i32 to vector<8x128xi32>
    %37 = arith.cmpi slt, %6, %36 : vector<8x128xi32>
    %38 = arith.andi %35, %37 : vector<8x128xi1>
    %cst_16 = arith.constant 0.000000e+00 : f32
    %39 = vector.broadcast %cst_16 : f32 to vector<8x128xf32>
    %40 = arith.select %38, %33, %39 : vector<8x128xi1>, vector<8x128xf32>
    %41 = arith.truncf %40 : vector<8x128xf32> to vector<8x128xbf16>
    %c126_i32 = arith.constant 126 : i32
    %42 = tpu.dynamic_rotate %1 by %c126_i32 dim 1 : vector<8x128xf32>, i32 -> vector<8x128xf32>
    %c-2_i32 = arith.constant -2 : i32
    %43 = vector.broadcast %c-2_i32 : i32 to vector<8x128xi32>
    %44 = arith.cmpi sge, %6, %43 : vector<8x128xi32>
    %c126_i32_17 = arith.constant 126 : i32
    %45 = vector.broadcast %c126_i32_17 : i32 to vector<8x128xi32>
    %46 = arith.cmpi slt, %6, %45 : vector<8x128xi32>
    %47 = arith.andi %44, %46 : vector<8x128xi1>
    %cst_18 = arith.constant 0.000000e+00 : f32
    %48 = vector.broadcast %cst_18 : f32 to vector<8x128xf32>
    %49 = arith.select %47, %42, %48 : vector<8x128xi1>, vector<8x128xf32>
    %50 = arith.truncf %49 : vector<8x128xf32> to vector<8x128xbf16>
    %51 = vector.extract_strided_slice %2 {offsets = [0, 0, 0], sizes = [1, 32, 8], strides = [1, 1, 1]} : vector<5x32x8xbf16> to vector<1x32x8xbf16>
    %52 = vector.shape_cast %51 : vector<1x32x8xbf16> to vector<32x8xbf16>
    %cst_19 = arith.constant dense<0.000000e+00> : vector<32x128xf32>
    %53 = tpu.matmul %52, %15, %cst_19 {dimension_numbers = #tpu.dot_dimension_numbers<[1], [0], [0], [1], [0, 0, 1, 1], [], []>} : vector<32x8xbf16>, vector<8x128xbf16>, vector<32x128xf32> -> vector<32x128xf32>
    %54 = vector.extract_strided_slice %2 {offsets = [1, 0, 0], sizes = [1, 32, 8], strides = [1, 1, 1]} : vector<5x32x8xbf16> to vector<1x32x8xbf16>
    %55 = vector.shape_cast %54 : vector<1x32x8xbf16> to vector<32x8xbf16>
    %cst_20 = arith.constant dense<0.000000e+00> : vector<32x128xf32>
    %56 = tpu.matmul %55, %24, %cst_20 {dimension_numbers = #tpu.dot_dimension_numbers<[1], [0], [0], [1], [0, 0, 1, 1], [], []>} : vector<32x8xbf16>, vector<8x128xbf16>, vector<32x128xf32> -> vector<32x128xf32>
    %57 = arith.addf %53, %56 : vector<32x128xf32>
    %58 = vector.extract_strided_slice %2 {offsets = [2, 0, 0], sizes = [1, 32, 8], strides = [1, 1, 1]} : vector<5x32x8xbf16> to vector<1x32x8xbf16>
    %59 = vector.shape_cast %58 : vector<1x32x8xbf16> to vector<32x8xbf16>
    %cst_21 = arith.constant dense<0.000000e+00> : vector<32x128xf32>
    %60 = tpu.matmul %59, %32, %cst_21 {dimension_numbers = #tpu.dot_dimension_numbers<[1], [0], [0], [1], [0, 0, 1, 1], [], []>} : vector<32x8xbf16>, vector<8x128xbf16>, vector<32x128xf32> -> vector<32x128xf32>
    %61 = arith.addf %57, %60 : vector<32x128xf32>
    %62 = vector.extract_strided_slice %2 {offsets = [3, 0, 0], sizes = [1, 32, 8], strides = [1, 1, 1]} : vector<5x32x8xbf16> to vector<1x32x8xbf16>
    %63 = vector.shape_cast %62 : vector<1x32x8xbf16> to vector<32x8xbf16>
    %cst_22 = arith.constant dense<0.000000e+00> : vector<32x128xf32>
    %64 = tpu.matmul %63, %41, %cst_22 {dimension_numbers = #tpu.dot_dimension_numbers<[1], [0], [0], [1], [0, 0, 1, 1], [], []>} : vector<32x8xbf16>, vector<8x128xbf16>, vector<32x128xf32> -> vector<32x128xf32>
    %65 = arith.addf %61, %64 : vector<32x128xf32>
    %66 = vector.extract_strided_slice %2 {offsets = [4, 0, 0], sizes = [1, 32, 8], strides = [1, 1, 1]} : vector<5x32x8xbf16> to vector<1x32x8xbf16>
    %67 = vector.shape_cast %66 : vector<1x32x8xbf16> to vector<32x8xbf16>
    %cst_23 = arith.constant dense<0.000000e+00> : vector<32x128xf32>
    %68 = tpu.matmul %67, %50, %cst_23 {dimension_numbers = #tpu.dot_dimension_numbers<[1], [0], [0], [1], [0, 0, 1, 1], [], []>} : vector<32x8xbf16>, vector<8x128xbf16>, vector<32x128xf32> -> vector<32x128xf32>
    %69 = arith.addf %65, %68 : vector<32x128xf32>
    %70 = vector.broadcast %3 : vector<32x1xf32> to vector<32x128xf32>
    %71 = arith.addf %69, %70 : vector<32x128xf32>
    %cst_24 = arith.constant 0.000000e+00 : f32
    %72 = vector.broadcast %cst_24 : f32 to vector<32x128xf32>
    %73 = arith.maximumf %71, %72 : vector<32x128xf32>
    %74 = vector.broadcast %4 : vector<32x1xf32> to vector<32x128xf32>
    %75 = arith.mulf %73, %74 : vector<32x128xf32>
    %76 = vector.broadcast %5 : vector<32x1xf32> to vector<32x128xf32>
    %77 = arith.addf %75, %76 : vector<32x128xf32>
    %78 = arith.truncf %77 : vector<32x128xf32> to vector<32x128xbf16>
    %c0_25 = arith.constant 0 : index
    %c0_26 = arith.constant 0 : index
    %79 = vector.load %arg6[%c0_25, %c0_26] : memref<32x32xbf16, #tpu.memory_space<vmem>>, vector<32x32xbf16>
    %c0_27 = arith.constant 0 : index
    %c0_28 = arith.constant 0 : index
    %80 = vector.load %arg7[%c0_27, %c0_28] : memref<32x1xf32, #tpu.memory_space<vmem>>, vector<32x1xf32>
    %c0_29 = arith.constant 0 : index
    %c0_30 = arith.constant 0 : index
    %81 = vector.load %arg8[%c0_29, %c0_30] : memref<32x1xf32, #tpu.memory_space<vmem>>, vector<32x1xf32>
    %c0_31 = arith.constant 0 : index
    %c0_32 = arith.constant 0 : index
    %82 = vector.load %arg9[%c0_31, %c0_32] : memref<32x1xf32, #tpu.memory_space<vmem>>, vector<32x1xf32>
    %c0_33 = arith.constant 0 : index
    %c0_34 = arith.constant 0 : index
    %c0_35 = arith.constant 0 : index
    %83 = vector.load %arg10[%c0_33, %c0_34, %c0_35] : memref<3x24x24xbf16, #tpu.memory_space<vmem>>, vector<3x24x24xbf16>
    %c0_36 = arith.constant 0 : index
    %c0_37 = arith.constant 0 : index
    %84 = vector.load %arg11[%c0_36, %c0_37] : memref<24x1xf32, #tpu.memory_space<vmem>>, vector<24x1xf32>
    %c0_38 = arith.constant 0 : index
    %c0_39 = arith.constant 0 : index
    %85 = vector.load %arg12[%c0_38, %c0_39] : memref<24x1xf32, #tpu.memory_space<vmem>>, vector<24x1xf32>
    %c0_40 = arith.constant 0 : index
    %c0_41 = arith.constant 0 : index
    %86 = vector.load %arg13[%c0_40, %c0_41] : memref<24x1xf32, #tpu.memory_space<vmem>>, vector<24x1xf32>
    %c0_42 = arith.constant 0 : index
    %c0_43 = arith.constant 0 : index
    %87 = vector.load %arg14[%c0_42, %c0_43] : memref<32x8xbf16, #tpu.memory_space<vmem>>, vector<32x8xbf16>
    %c0_44 = arith.constant 0 : index
    %c0_45 = arith.constant 0 : index
    %88 = vector.load %arg15[%c0_44, %c0_45] : memref<32x24xbf16, #tpu.memory_space<vmem>>, vector<32x24xbf16>
    %c0_46 = arith.constant 0 : index
    %c0_47 = arith.constant 0 : index
    %89 = vector.load %arg16[%c0_46, %c0_47] : memref<32x1xf32, #tpu.memory_space<vmem>>, vector<32x1xf32>
    %c0_48 = arith.constant 0 : index
    %c0_49 = arith.constant 0 : index
    %90 = vector.load %arg17[%c0_48, %c0_49] : memref<32x1xf32, #tpu.memory_space<vmem>>, vector<32x1xf32>
    %c0_50 = arith.constant 0 : index
    %c0_51 = arith.constant 0 : index
    %91 = vector.load %arg18[%c0_50, %c0_51] : memref<32x1xf32, #tpu.memory_space<vmem>>, vector<32x1xf32>
    %c0_52 = arith.constant 0 : index
    %c0_53 = arith.constant 0 : index
    %92 = vector.load %arg19[%c0_52, %c0_53] : memref<8x32xbf16, #tpu.memory_space<vmem>>, vector<8x32xbf16>
    %c0_54 = arith.constant 0 : index
    %c0_55 = arith.constant 0 : index
    %93 = vector.load %arg20[%c0_54, %c0_55] : memref<8x1xf32, #tpu.memory_space<vmem>>, vector<8x1xf32>
    %c0_56 = arith.constant 0 : index
    %c0_57 = arith.constant 0 : index
    %94 = vector.load %arg21[%c0_56, %c0_57] : memref<32x8xbf16, #tpu.memory_space<vmem>>, vector<32x8xbf16>
    %c0_58 = arith.constant 0 : index
    %c0_59 = arith.constant 0 : index
    %95 = vector.load %arg22[%c0_58, %c0_59] : memref<32x1xf32, #tpu.memory_space<vmem>>, vector<32x1xf32>
    %c0_60 = arith.constant 0 : index
    %c0_61 = arith.constant 0 : index
    %96 = vector.load %arg23[%c0_60, %c0_61] : memref<32x32xbf16, #tpu.memory_space<vmem>>, vector<32x32xbf16>
    %cst_62 = arith.constant dense<0.000000e+00> : vector<32x128xf32>
    %97 = tpu.matmul %79, %78, %cst_62 {dimension_numbers = #tpu.dot_dimension_numbers<[1], [0], [0], [1], [0, 0, 1, 1], [], []>} : vector<32x32xbf16>, vector<32x128xbf16>, vector<32x128xf32> -> vector<32x128xf32>
    %98 = vector.broadcast %80 : vector<32x1xf32> to vector<32x128xf32>
    %99 = arith.addf %97, %98 : vector<32x128xf32>
    %cst_63 = arith.constant 0.000000e+00 : f32
    %100 = vector.broadcast %cst_63 : f32 to vector<32x128xf32>
    %101 = arith.maximumf %99, %100 : vector<32x128xf32>
    %102 = vector.broadcast %81 : vector<32x1xf32> to vector<32x128xf32>
    %103 = arith.mulf %101, %102 : vector<32x128xf32>
    %104 = vector.broadcast %82 : vector<32x1xf32> to vector<32x128xf32>
    %105 = arith.addf %103, %104 : vector<32x128xf32>
    %106 = vector.extract_strided_slice %105 {offsets = [8, 0], sizes = [24, 128], strides = [1, 1]} : vector<32x128xf32> to vector<24x128xf32>
    %107 = tpu.iota {dimensions = array<i32: 1>} : vector<24x128xi32>
    %c2_i32_64 = arith.constant 2 : i32
    %108 = tpu.dynamic_rotate %106 by %c2_i32_64 dim 1 : vector<24x128xf32>, i32 -> vector<24x128xf32>
    %c2_i32_65 = arith.constant 2 : i32
    %109 = vector.broadcast %c2_i32_65 : i32 to vector<24x128xi32>
    %110 = arith.cmpi sge, %107, %109 : vector<24x128xi32>
    %c130_i32_66 = arith.constant 130 : i32
    %111 = vector.broadcast %c130_i32_66 : i32 to vector<24x128xi32>
    %112 = arith.cmpi slt, %107, %111 : vector<24x128xi32>
    %113 = arith.andi %110, %112 : vector<24x128xi1>
    %cst_67 = arith.constant 0.000000e+00 : f32
    %114 = vector.broadcast %cst_67 : f32 to vector<24x128xf32>
    %115 = arith.select %113, %108, %114 : vector<24x128xi1>, vector<24x128xf32>
    %116 = arith.truncf %115 : vector<24x128xf32> to vector<24x128xbf16>
    %c0_i32_68 = arith.constant 0 : i32
    %117 = vector.broadcast %c0_i32_68 : i32 to vector<24x128xi32>
    %118 = arith.cmpi sge, %107, %117 : vector<24x128xi32>
    %c128_i32_69 = arith.constant 128 : i32
    %119 = vector.broadcast %c128_i32_69 : i32 to vector<24x128xi32>
    %120 = arith.cmpi slt, %107, %119 : vector<24x128xi32>
    %121 = arith.andi %118, %120 : vector<24x128xi1>
    %cst_70 = arith.constant 0.000000e+00 : f32
    %122 = vector.broadcast %cst_70 : f32 to vector<24x128xf32>
    %123 = arith.select %121, %106, %122 : vector<24x128xi1>, vector<24x128xf32>
    %124 = arith.truncf %123 : vector<24x128xf32> to vector<24x128xbf16>
    %c126_i32_71 = arith.constant 126 : i32
    %125 = tpu.dynamic_rotate %106 by %c126_i32_71 dim 1 : vector<24x128xf32>, i32 -> vector<24x128xf32>
    %c-2_i32_72 = arith.constant -2 : i32
    %126 = vector.broadcast %c-2_i32_72 : i32 to vector<24x128xi32>
    %127 = arith.cmpi sge, %107, %126 : vector<24x128xi32>
    %c126_i32_73 = arith.constant 126 : i32
    %128 = vector.broadcast %c126_i32_73 : i32 to vector<24x128xi32>
    %129 = arith.cmpi slt, %107, %128 : vector<24x128xi32>
    %130 = arith.andi %127, %129 : vector<24x128xi1>
    %cst_74 = arith.constant 0.000000e+00 : f32
    %131 = vector.broadcast %cst_74 : f32 to vector<24x128xf32>
    %132 = arith.select %130, %125, %131 : vector<24x128xi1>, vector<24x128xf32>
    %133 = arith.truncf %132 : vector<24x128xf32> to vector<24x128xbf16>
    %134 = vector.extract_strided_slice %83 {offsets = [0, 0, 0], sizes = [1, 24, 24], strides = [1, 1, 1]} : vector<3x24x24xbf16> to vector<1x24x24xbf16>
    %135 = vector.shape_cast %134 : vector<1x24x24xbf16> to vector<24x24xbf16>
    %cst_75 = arith.constant dense<0.000000e+00> : vector<24x128xf32>
    %136 = tpu.matmul %135, %116, %cst_75 {dimension_numbers = #tpu.dot_dimension_numbers<[1], [0], [0], [1], [0, 0, 1, 1], [], []>} : vector<24x24xbf16>, vector<24x128xbf16>, vector<24x128xf32> -> vector<24x128xf32>
    %137 = vector.extract_strided_slice %83 {offsets = [1, 0, 0], sizes = [1, 24, 24], strides = [1, 1, 1]} : vector<3x24x24xbf16> to vector<1x24x24xbf16>
    %138 = vector.shape_cast %137 : vector<1x24x24xbf16> to vector<24x24xbf16>
    %cst_76 = arith.constant dense<0.000000e+00> : vector<24x128xf32>
    %139 = tpu.matmul %138, %124, %cst_76 {dimension_numbers = #tpu.dot_dimension_numbers<[1], [0], [0], [1], [0, 0, 1, 1], [], []>} : vector<24x24xbf16>, vector<24x128xbf16>, vector<24x128xf32> -> vector<24x128xf32>
    %140 = arith.addf %136, %139 : vector<24x128xf32>
    %141 = vector.extract_strided_slice %83 {offsets = [2, 0, 0], sizes = [1, 24, 24], strides = [1, 1, 1]} : vector<3x24x24xbf16> to vector<1x24x24xbf16>
    %142 = vector.shape_cast %141 : vector<1x24x24xbf16> to vector<24x24xbf16>
    %cst_77 = arith.constant dense<0.000000e+00> : vector<24x128xf32>
    %143 = tpu.matmul %142, %133, %cst_77 {dimension_numbers = #tpu.dot_dimension_numbers<[1], [0], [0], [1], [0, 0, 1, 1], [], []>} : vector<24x24xbf16>, vector<24x128xbf16>, vector<24x128xf32> -> vector<24x128xf32>
    %144 = arith.addf %140, %143 : vector<24x128xf32>
    %145 = vector.broadcast %84 : vector<24x1xf32> to vector<24x128xf32>
    %146 = arith.addf %144, %145 : vector<24x128xf32>
    %cst_78 = arith.constant 0.000000e+00 : f32
    %147 = vector.broadcast %cst_78 : f32 to vector<24x128xf32>
    %148 = arith.maximumf %146, %147 : vector<24x128xf32>
    %149 = vector.broadcast %85 : vector<24x1xf32> to vector<24x128xf32>
    %150 = arith.mulf %148, %149 : vector<24x128xf32>
    %151 = vector.broadcast %86 : vector<24x1xf32> to vector<24x128xf32>
    %152 = arith.addf %150, %151 : vector<24x128xf32>
    %153 = vector.extract_strided_slice %105 {offsets = [0, 0], sizes = [8, 128], strides = [1, 1]} : vector<32x128xf32> to vector<8x128xf32>
    %154 = vector.extract_strided_slice %152 {offsets = [0, 0], sizes = [8, 128], strides = [1, 1]} : vector<24x128xf32> to vector<8x128xf32>
    %155 = arith.addf %153, %154 : vector<8x128xf32>
    %156 = vector.extract_strided_slice %152 {offsets = [8, 0], sizes = [8, 128], strides = [1, 1]} : vector<24x128xf32> to vector<8x128xf32>
    %157 = arith.addf %155, %156 : vector<8x128xf32>
    %158 = vector.extract_strided_slice %152 {offsets = [16, 0], sizes = [8, 128], strides = [1, 1]} : vector<24x128xf32> to vector<8x128xf32>
    %159 = arith.addf %157, %158 : vector<8x128xf32>
    %160 = arith.truncf %159 : vector<8x128xf32> to vector<8x128xbf16>
    %cst_79 = arith.constant dense<0.000000e+00> : vector<32x128xf32>
    %161 = tpu.matmul %87, %160, %cst_79 {dimension_numbers = #tpu.dot_dimension_numbers<[1], [0], [0], [1], [0, 0, 1, 1], [], []>} : vector<32x8xbf16>, vector<8x128xbf16>, vector<32x128xf32> -> vector<32x128xf32>
    %162 = arith.truncf %106 : vector<24x128xf32> to vector<24x128xbf16>
    %cst_80 = arith.constant dense<0.000000e+00> : vector<32x128xf32>
    %163 = tpu.matmul %88, %162, %cst_80 {dimension_numbers = #tpu.dot_dimension_numbers<[1], [0], [0], [1], [0, 0, 1, 1], [], []>} : vector<32x24xbf16>, vector<24x128xbf16>, vector<32x128xf32> -> vector<32x128xf32>
    %164 = arith.addf %161, %163 : vector<32x128xf32>
    %165 = vector.broadcast %89 : vector<32x1xf32> to vector<32x128xf32>
    %166 = arith.addf %164, %165 : vector<32x128xf32>
    %cst_81 = arith.constant 0.000000e+00 : f32
    %167 = vector.broadcast %cst_81 : f32 to vector<32x128xf32>
    %168 = arith.maximumf %166, %167 : vector<32x128xf32>
    %169 = vector.broadcast %90 : vector<32x1xf32> to vector<32x128xf32>
    %170 = arith.mulf %168, %169 : vector<32x128xf32>
    %171 = vector.broadcast %91 : vector<32x1xf32> to vector<32x128xf32>
    %172 = arith.addf %170, %171 : vector<32x128xf32>
    %cst_82 = arith.constant dense<0.000000e+00> : vector<32xf32>
    %173 = vector.multi_reduction <add>, %172, %cst_82 [1] : vector<32x128xf32> to vector<32xf32>
    %174 = vector.shape_cast %173 : vector<32xf32> to vector<32x1xf32>
    %cst_83 = arith.constant 1.280000e+02 : f32
    %175 = vector.broadcast %cst_83 : f32 to vector<32x1xf32>
    %176 = arith.divf %174, %175 : vector<32x1xf32>
    %177 = arith.truncf %176 : vector<32x1xf32> to vector<32x1xbf16>
    %cst_84 = arith.constant dense<0.000000e+00> : vector<8x1xf32>
    %178 = tpu.matmul %92, %177, %cst_84 {dimension_numbers = #tpu.dot_dimension_numbers<[1], [0], [0], [1], [0, 0, 1, 1], [], []>} : vector<8x32xbf16>, vector<32x1xbf16>, vector<8x1xf32> -> vector<8x1xf32>
    %179 = arith.addf %178, %93 : vector<8x1xf32>
    %180 = arith.negf %179 : vector<8x1xf32>
    %181 = math.exp %180 : vector<8x1xf32>
    %cst_85 = arith.constant 1.000000e+00 : f32
    %182 = vector.broadcast %cst_85 : f32 to vector<8x1xf32>
    %183 = arith.addf %182, %181 : vector<8x1xf32>
    %184 = arith.divf %182, %183 : vector<8x1xf32>
    %185 = arith.mulf %179, %184 : vector<8x1xf32>
    %186 = arith.truncf %185 : vector<8x1xf32> to vector<8x1xbf16>
    %cst_86 = arith.constant dense<0.000000e+00> : vector<32x1xf32>
    %187 = tpu.matmul %94, %186, %cst_86 {dimension_numbers = #tpu.dot_dimension_numbers<[1], [0], [0], [1], [0, 0, 1, 1], [], []>} : vector<32x8xbf16>, vector<8x1xbf16>, vector<32x1xf32> -> vector<32x1xf32>
    %188 = arith.addf %187, %95 : vector<32x1xf32>
    %189 = arith.negf %188 : vector<32x1xf32>
    %190 = math.exp %189 : vector<32x1xf32>
    %cst_87 = arith.constant 1.000000e+00 : f32
    %191 = vector.broadcast %cst_87 : f32 to vector<32x1xf32>
    %192 = arith.addf %191, %190 : vector<32x1xf32>
    %193 = arith.divf %191, %192 : vector<32x1xf32>
    %194 = vector.broadcast %193 : vector<32x1xf32> to vector<32x128xf32>
    %195 = arith.mulf %172, %194 : vector<32x128xf32>
    %196 = arith.addf %195, %77 : vector<32x128xf32>
    %197 = arith.truncf %196 : vector<32x128xf32> to vector<32x128xbf16>
    %cst_88 = arith.constant dense<0.000000e+00> : vector<32x128xf32>
    %198 = tpu.matmul %96, %197, %cst_88 {dimension_numbers = #tpu.dot_dimension_numbers<[1], [0], [0], [1], [0, 0, 1, 1], [], []>} : vector<32x32xbf16>, vector<32x128xbf16>, vector<32x128xf32> -> vector<32x128xf32>
    %199 = arith.truncf %196 : vector<32x128xf32> to vector<32x128xbf16>
    %c0_89 = arith.constant 0 : index
    %c0_90 = arith.constant 0 : index
    %200 = vector.load %arg24[%c0_89, %c0_90] : memref<32x32xbf16, #tpu.memory_space<vmem>>, vector<32x32xbf16>
    %c0_91 = arith.constant 0 : index
    %c0_92 = arith.constant 0 : index
    %201 = vector.load %arg25[%c0_91, %c0_92] : memref<32x1xf32, #tpu.memory_space<vmem>>, vector<32x1xf32>
    %c0_93 = arith.constant 0 : index
    %c0_94 = arith.constant 0 : index
    %202 = vector.load %arg26[%c0_93, %c0_94] : memref<32x1xf32, #tpu.memory_space<vmem>>, vector<32x1xf32>
    %c0_95 = arith.constant 0 : index
    %c0_96 = arith.constant 0 : index
    %203 = vector.load %arg27[%c0_95, %c0_96] : memref<32x1xf32, #tpu.memory_space<vmem>>, vector<32x1xf32>
    %c0_97 = arith.constant 0 : index
    %c0_98 = arith.constant 0 : index
    %c0_99 = arith.constant 0 : index
    %204 = vector.load %arg28[%c0_97, %c0_98, %c0_99] : memref<3x24x24xbf16, #tpu.memory_space<vmem>>, vector<3x24x24xbf16>
    %c0_100 = arith.constant 0 : index
    %c0_101 = arith.constant 0 : index
    %205 = vector.load %arg29[%c0_100, %c0_101] : memref<24x1xf32, #tpu.memory_space<vmem>>, vector<24x1xf32>
    %c0_102 = arith.constant 0 : index
    %c0_103 = arith.constant 0 : index
    %206 = vector.load %arg30[%c0_102, %c0_103] : memref<24x1xf32, #tpu.memory_space<vmem>>, vector<24x1xf32>
    %c0_104 = arith.constant 0 : index
    %c0_105 = arith.constant 0 : index
    %207 = vector.load %arg31[%c0_104, %c0_105] : memref<24x1xf32, #tpu.memory_space<vmem>>, vector<24x1xf32>
    %c0_106 = arith.constant 0 : index
    %c0_107 = arith.constant 0 : index
    %208 = vector.load %arg32[%c0_106, %c0_107] : memref<32x8xbf16, #tpu.memory_space<vmem>>, vector<32x8xbf16>
    %c0_108 = arith.constant 0 : index
    %c0_109 = arith.constant 0 : index
    %209 = vector.load %arg33[%c0_108, %c0_109] : memref<32x24xbf16, #tpu.memory_space<vmem>>, vector<32x24xbf16>
    %c0_110 = arith.constant 0 : index
    %c0_111 = arith.constant 0 : index
    %210 = vector.load %arg34[%c0_110, %c0_111] : memref<32x1xf32, #tpu.memory_space<vmem>>, vector<32x1xf32>
    %c0_112 = arith.constant 0 : index
    %c0_113 = arith.constant 0 : index
    %211 = vector.load %arg35[%c0_112, %c0_113] : memref<32x1xf32, #tpu.memory_space<vmem>>, vector<32x1xf32>
    %c0_114 = arith.constant 0 : index
    %c0_115 = arith.constant 0 : index
    %212 = vector.load %arg36[%c0_114, %c0_115] : memref<32x1xf32, #tpu.memory_space<vmem>>, vector<32x1xf32>
    %c0_116 = arith.constant 0 : index
    %c0_117 = arith.constant 0 : index
    %213 = vector.load %arg37[%c0_116, %c0_117] : memref<8x32xbf16, #tpu.memory_space<vmem>>, vector<8x32xbf16>
    %c0_118 = arith.constant 0 : index
    %c0_119 = arith.constant 0 : index
    %214 = vector.load %arg38[%c0_118, %c0_119] : memref<8x1xf32, #tpu.memory_space<vmem>>, vector<8x1xf32>
    %c0_120 = arith.constant 0 : index
    %c0_121 = arith.constant 0 : index
    %215 = vector.load %arg39[%c0_120, %c0_121] : memref<32x8xbf16, #tpu.memory_space<vmem>>, vector<32x8xbf16>
    %c0_122 = arith.constant 0 : index
    %c0_123 = arith.constant 0 : index
    %216 = vector.load %arg40[%c0_122, %c0_123] : memref<32x1xf32, #tpu.memory_space<vmem>>, vector<32x1xf32>
    %c0_124 = arith.constant 0 : index
    %c0_125 = arith.constant 0 : index
    %217 = vector.load %arg41[%c0_124, %c0_125] : memref<32x32xbf16, #tpu.memory_space<vmem>>, vector<32x32xbf16>
    %cst_126 = arith.constant dense<0.000000e+00> : vector<32x128xf32>
    %218 = tpu.matmul %200, %199, %cst_126 {dimension_numbers = #tpu.dot_dimension_numbers<[1], [0], [0], [1], [0, 0, 1, 1], [], []>} : vector<32x32xbf16>, vector<32x128xbf16>, vector<32x128xf32> -> vector<32x128xf32>
    %219 = vector.broadcast %201 : vector<32x1xf32> to vector<32x128xf32>
    %220 = arith.addf %218, %219 : vector<32x128xf32>
    %cst_127 = arith.constant 0.000000e+00 : f32
    %221 = vector.broadcast %cst_127 : f32 to vector<32x128xf32>
    %222 = arith.maximumf %220, %221 : vector<32x128xf32>
    %223 = vector.broadcast %202 : vector<32x1xf32> to vector<32x128xf32>
    %224 = arith.mulf %222, %223 : vector<32x128xf32>
    %225 = vector.broadcast %203 : vector<32x1xf32> to vector<32x128xf32>
    %226 = arith.addf %224, %225 : vector<32x128xf32>
    %227 = vector.extract_strided_slice %226 {offsets = [8, 0], sizes = [24, 128], strides = [1, 1]} : vector<32x128xf32> to vector<24x128xf32>
    %228 = tpu.iota {dimensions = array<i32: 1>} : vector<24x128xi32>
    %c3_i32 = arith.constant 3 : i32
    %229 = tpu.dynamic_rotate %227 by %c3_i32 dim 1 : vector<24x128xf32>, i32 -> vector<24x128xf32>
    %c3_i32_128 = arith.constant 3 : i32
    %230 = vector.broadcast %c3_i32_128 : i32 to vector<24x128xi32>
    %231 = arith.cmpi sge, %228, %230 : vector<24x128xi32>
    %c131_i32 = arith.constant 131 : i32
    %232 = vector.broadcast %c131_i32 : i32 to vector<24x128xi32>
    %233 = arith.cmpi slt, %228, %232 : vector<24x128xi32>
    %234 = arith.andi %231, %233 : vector<24x128xi1>
    %cst_129 = arith.constant 0.000000e+00 : f32
    %235 = vector.broadcast %cst_129 : f32 to vector<24x128xf32>
    %236 = arith.select %234, %229, %235 : vector<24x128xi1>, vector<24x128xf32>
    %237 = arith.truncf %236 : vector<24x128xf32> to vector<24x128xbf16>
    %c0_i32_130 = arith.constant 0 : i32
    %238 = vector.broadcast %c0_i32_130 : i32 to vector<24x128xi32>
    %239 = arith.cmpi sge, %228, %238 : vector<24x128xi32>
    %c128_i32_131 = arith.constant 128 : i32
    %240 = vector.broadcast %c128_i32_131 : i32 to vector<24x128xi32>
    %241 = arith.cmpi slt, %228, %240 : vector<24x128xi32>
    %242 = arith.andi %239, %241 : vector<24x128xi1>
    %cst_132 = arith.constant 0.000000e+00 : f32
    %243 = vector.broadcast %cst_132 : f32 to vector<24x128xf32>
    %244 = arith.select %242, %227, %243 : vector<24x128xi1>, vector<24x128xf32>
    %245 = arith.truncf %244 : vector<24x128xf32> to vector<24x128xbf16>
    %c125_i32 = arith.constant 125 : i32
    %246 = tpu.dynamic_rotate %227 by %c125_i32 dim 1 : vector<24x128xf32>, i32 -> vector<24x128xf32>
    %c-3_i32 = arith.constant -3 : i32
    %247 = vector.broadcast %c-3_i32 : i32 to vector<24x128xi32>
    %248 = arith.cmpi sge, %228, %247 : vector<24x128xi32>
    %c125_i32_133 = arith.constant 125 : i32
    %249 = vector.broadcast %c125_i32_133 : i32 to vector<24x128xi32>
    %250 = arith.cmpi slt, %228, %249 : vector<24x128xi32>
    %251 = arith.andi %248, %250 : vector<24x128xi1>
    %cst_134 = arith.constant 0.000000e+00 : f32
    %252 = vector.broadcast %cst_134 : f32 to vector<24x128xf32>
    %253 = arith.select %251, %246, %252 : vector<24x128xi1>, vector<24x128xf32>
    %254 = arith.truncf %253 : vector<24x128xf32> to vector<24x128xbf16>
    %255 = vector.extract_strided_slice %204 {offsets = [0, 0, 0], sizes = [1, 24, 24], strides = [1, 1, 1]} : vector<3x24x24xbf16> to vector<1x24x24xbf16>
    %256 = vector.shape_cast %255 : vector<1x24x24xbf16> to vector<24x24xbf16>
    %cst_135 = arith.constant dense<0.000000e+00> : vector<24x128xf32>
    %257 = tpu.matmul %256, %237, %cst_135 {dimension_numbers = #tpu.dot_dimension_numbers<[1], [0], [0], [1], [0, 0, 1, 1], [], []>} : vector<24x24xbf16>, vector<24x128xbf16>, vector<24x128xf32> -> vector<24x128xf32>
    %258 = vector.extract_strided_slice %204 {offsets = [1, 0, 0], sizes = [1, 24, 24], strides = [1, 1, 1]} : vector<3x24x24xbf16> to vector<1x24x24xbf16>
    %259 = vector.shape_cast %258 : vector<1x24x24xbf16> to vector<24x24xbf16>
    %cst_136 = arith.constant dense<0.000000e+00> : vector<24x128xf32>
    %260 = tpu.matmul %259, %245, %cst_136 {dimension_numbers = #tpu.dot_dimension_numbers<[1], [0], [0], [1], [0, 0, 1, 1], [], []>} : vector<24x24xbf16>, vector<24x128xbf16>, vector<24x128xf32> -> vector<24x128xf32>
    %261 = arith.addf %257, %260 : vector<24x128xf32>
    %262 = vector.extract_strided_slice %204 {offsets = [2, 0, 0], sizes = [1, 24, 24], strides = [1, 1, 1]} : vector<3x24x24xbf16> to vector<1x24x24xbf16>
    %263 = vector.shape_cast %262 : vector<1x24x24xbf16> to vector<24x24xbf16>
    %cst_137 = arith.constant dense<0.000000e+00> : vector<24x128xf32>
    %264 = tpu.matmul %263, %254, %cst_137 {dimension_numbers = #tpu.dot_dimension_numbers<[1], [0], [0], [1], [0, 0, 1, 1], [], []>} : vector<24x24xbf16>, vector<24x128xbf16>, vector<24x128xf32> -> vector<24x128xf32>
    %265 = arith.addf %261, %264 : vector<24x128xf32>
    %266 = vector.broadcast %205 : vector<24x1xf32> to vector<24x128xf32>
    %267 = arith.addf %265, %266 : vector<24x128xf32>
    %cst_138 = arith.constant 0.000000e+00 : f32
    %268 = vector.broadcast %cst_138 : f32 to vector<24x128xf32>
    %269 = arith.maximumf %267, %268 : vector<24x128xf32>
    %270 = vector.broadcast %206 : vector<24x1xf32> to vector<24x128xf32>
    %271 = arith.mulf %269, %270 : vector<24x128xf32>
    %272 = vector.broadcast %207 : vector<24x1xf32> to vector<24x128xf32>
    %273 = arith.addf %271, %272 : vector<24x128xf32>
    %274 = vector.extract_strided_slice %226 {offsets = [0, 0], sizes = [8, 128], strides = [1, 1]} : vector<32x128xf32> to vector<8x128xf32>
    %275 = vector.extract_strided_slice %273 {offsets = [0, 0], sizes = [8, 128], strides = [1, 1]} : vector<24x128xf32> to vector<8x128xf32>
    %276 = arith.addf %274, %275 : vector<8x128xf32>
    %277 = vector.extract_strided_slice %273 {offsets = [8, 0], sizes = [8, 128], strides = [1, 1]} : vector<24x128xf32> to vector<8x128xf32>
    %278 = arith.addf %276, %277 : vector<8x128xf32>
    %279 = vector.extract_strided_slice %273 {offsets = [16, 0], sizes = [8, 128], strides = [1, 1]} : vector<24x128xf32> to vector<8x128xf32>
    %280 = arith.addf %278, %279 : vector<8x128xf32>
    %281 = arith.truncf %280 : vector<8x128xf32> to vector<8x128xbf16>
    %cst_139 = arith.constant dense<0.000000e+00> : vector<32x128xf32>
    %282 = tpu.matmul %208, %281, %cst_139 {dimension_numbers = #tpu.dot_dimension_numbers<[1], [0], [0], [1], [0, 0, 1, 1], [], []>} : vector<32x8xbf16>, vector<8x128xbf16>, vector<32x128xf32> -> vector<32x128xf32>
    %283 = arith.truncf %227 : vector<24x128xf32> to vector<24x128xbf16>
    %cst_140 = arith.constant dense<0.000000e+00> : vector<32x128xf32>
    %284 = tpu.matmul %209, %283, %cst_140 {dimension_numbers = #tpu.dot_dimension_numbers<[1], [0], [0], [1], [0, 0, 1, 1], [], []>} : vector<32x24xbf16>, vector<24x128xbf16>, vector<32x128xf32> -> vector<32x128xf32>
    %285 = arith.addf %282, %284 : vector<32x128xf32>
    %286 = vector.broadcast %210 : vector<32x1xf32> to vector<32x128xf32>
    %287 = arith.addf %285, %286 : vector<32x128xf32>
    %cst_141 = arith.constant 0.000000e+00 : f32
    %288 = vector.broadcast %cst_141 : f32 to vector<32x128xf32>
    %289 = arith.maximumf %287, %288 : vector<32x128xf32>
    %290 = vector.broadcast %211 : vector<32x1xf32> to vector<32x128xf32>
    %291 = arith.mulf %289, %290 : vector<32x128xf32>
    %292 = vector.broadcast %212 : vector<32x1xf32> to vector<32x128xf32>
    %293 = arith.addf %291, %292 : vector<32x128xf32>
    %cst_142 = arith.constant dense<0.000000e+00> : vector<32xf32>
    %294 = vector.multi_reduction <add>, %293, %cst_142 [1] : vector<32x128xf32> to vector<32xf32>
    %295 = vector.shape_cast %294 : vector<32xf32> to vector<32x1xf32>
    %cst_143 = arith.constant 1.280000e+02 : f32
    %296 = vector.broadcast %cst_143 : f32 to vector<32x1xf32>
    %297 = arith.divf %295, %296 : vector<32x1xf32>
    %298 = arith.truncf %297 : vector<32x1xf32> to vector<32x1xbf16>
    %cst_144 = arith.constant dense<0.000000e+00> : vector<8x1xf32>
    %299 = tpu.matmul %213, %298, %cst_144 {dimension_numbers = #tpu.dot_dimension_numbers<[1], [0], [0], [1], [0, 0, 1, 1], [], []>} : vector<8x32xbf16>, vector<32x1xbf16>, vector<8x1xf32> -> vector<8x1xf32>
    %300 = arith.addf %299, %214 : vector<8x1xf32>
    %301 = arith.negf %300 : vector<8x1xf32>
    %302 = math.exp %301 : vector<8x1xf32>
    %cst_145 = arith.constant 1.000000e+00 : f32
    %303 = vector.broadcast %cst_145 : f32 to vector<8x1xf32>
    %304 = arith.addf %303, %302 : vector<8x1xf32>
    %305 = arith.divf %303, %304 : vector<8x1xf32>
    %306 = arith.mulf %300, %305 : vector<8x1xf32>
    %307 = arith.truncf %306 : vector<8x1xf32> to vector<8x1xbf16>
    %cst_146 = arith.constant dense<0.000000e+00> : vector<32x1xf32>
    %308 = tpu.matmul %215, %307, %cst_146 {dimension_numbers = #tpu.dot_dimension_numbers<[1], [0], [0], [1], [0, 0, 1, 1], [], []>} : vector<32x8xbf16>, vector<8x1xbf16>, vector<32x1xf32> -> vector<32x1xf32>
    %309 = arith.addf %308, %216 : vector<32x1xf32>
    %310 = arith.negf %309 : vector<32x1xf32>
    %311 = math.exp %310 : vector<32x1xf32>
    %cst_147 = arith.constant 1.000000e+00 : f32
    %312 = vector.broadcast %cst_147 : f32 to vector<32x1xf32>
    %313 = arith.addf %312, %311 : vector<32x1xf32>
    %314 = arith.divf %312, %313 : vector<32x1xf32>
    %315 = vector.broadcast %314 : vector<32x1xf32> to vector<32x128xf32>
    %316 = arith.mulf %293, %315 : vector<32x128xf32>
    %317 = arith.addf %316, %196 : vector<32x128xf32>
    %318 = arith.truncf %317 : vector<32x128xf32> to vector<32x128xbf16>
    %cst_148 = arith.constant dense<0.000000e+00> : vector<32x128xf32>
    %319 = tpu.matmul %217, %318, %cst_148 {dimension_numbers = #tpu.dot_dimension_numbers<[1], [0], [0], [1], [0, 0, 1, 1], [], []>} : vector<32x32xbf16>, vector<32x128xbf16>, vector<32x128xf32> -> vector<32x128xf32>
    %320 = arith.addf %198, %319 : vector<32x128xf32>
    %c0_149 = arith.constant 0 : index
    %c0_150 = arith.constant 0 : index
    %321 = vector.load %arg42[%c0_149, %c0_150] : memref<32x1xf32, #tpu.memory_space<vmem>>, vector<32x1xf32>
    %322 = vector.broadcast %321 : vector<32x1xf32> to vector<32x128xf32>
    %323 = arith.addf %320, %322 : vector<32x128xf32>
    %cst_151 = arith.constant 0.000000e+00 : f32
    %324 = vector.broadcast %cst_151 : f32 to vector<32x128xf32>
    %325 = arith.maximumf %323, %324 : vector<32x128xf32>
    %326 = arith.truncf %325 : vector<32x128xf32> to vector<32x128xbf16>
    %c0_152 = arith.constant 0 : index
    %c0_153 = arith.constant 0 : index
    %327 = vector.load %arg43[%c0_152, %c0_153] : memref<4x32xbf16, #tpu.memory_space<vmem>>, vector<4x32xbf16>
    %c0_154 = arith.constant 0 : index
    %c0_155 = arith.constant 0 : index
    %328 = vector.load %arg44[%c0_154, %c0_155] : memref<4x1xf32, #tpu.memory_space<vmem>>, vector<4x1xf32>
    %c0_156 = arith.constant 0 : index
    %c0_157 = arith.constant 0 : index
    %329 = vector.load %arg45[%c0_156, %c0_157] : memref<32x4xbf16, #tpu.memory_space<vmem>>, vector<32x4xbf16>
    %c0_158 = arith.constant 0 : index
    %c0_159 = arith.constant 0 : index
    %330 = vector.load %arg46[%c0_158, %c0_159] : memref<32x1xf32, #tpu.memory_space<vmem>>, vector<32x1xf32>
    %cst_160 = arith.constant dense<0.000000e+00> : vector<4x128xf32>
    %331 = tpu.matmul %327, %326, %cst_160 {dimension_numbers = #tpu.dot_dimension_numbers<[1], [0], [0], [1], [0, 0, 1, 1], [], []>} : vector<4x32xbf16>, vector<32x128xbf16>, vector<4x128xf32> -> vector<4x128xf32>
    %332 = vector.broadcast %328 : vector<4x1xf32> to vector<4x128xf32>
    %333 = arith.addf %331, %332 : vector<4x128xf32>
    %334 = math.tanh %333 : vector<4x128xf32>
    %335 = arith.truncf %334 : vector<4x128xf32> to vector<4x128xbf16>
    %cst_161 = arith.constant dense<0.000000e+00> : vector<32x128xf32>
    %336 = tpu.matmul %329, %335, %cst_161 {dimension_numbers = #tpu.dot_dimension_numbers<[1], [0], [0], [1], [0, 0, 1, 1], [], []>} : vector<32x4xbf16>, vector<4x128xbf16>, vector<32x128xf32> -> vector<32x128xf32>
    %337 = vector.broadcast %330 : vector<32x1xf32> to vector<32x128xf32>
    %338 = arith.addf %336, %337 : vector<32x128xf32>
    %cst_162 = arith.constant dense<0xFF800000> : vector<32xf32>
    %339 = vector.multi_reduction <maximumf>, %338, %cst_162 [1] : vector<32x128xf32> to vector<32xf32>
    %340 = vector.shape_cast %339 : vector<32xf32> to vector<32x1xf32>
    %341 = vector.broadcast %340 : vector<32x1xf32> to vector<32x128xf32>
    %342 = arith.subf %338, %341 : vector<32x128xf32>
    %343 = math.exp %342 : vector<32x128xf32>
    %cst_163 = arith.constant dense<0.000000e+00> : vector<32xf32>
    %344 = vector.multi_reduction <add>, %343, %cst_163 [1] : vector<32x128xf32> to vector<32xf32>
    %345 = vector.shape_cast %344 : vector<32xf32> to vector<32x1xf32>
    %346 = tpu.reciprocal %345 {approx = true} : vector<32x1xf32> -> vector<32x1xf32>
    %347 = vector.broadcast %346 : vector<32x1xf32> to vector<32x128xf32>
    %348 = arith.mulf %343, %347 : vector<32x128xf32>
    %349 = arith.mulf %348, %325 : vector<32x128xf32>
    %cst_164 = arith.constant dense<0.000000e+00> : vector<32xf32>
    %350 = vector.multi_reduction <add>, %349, %cst_164 [1] : vector<32x128xf32> to vector<32xf32>
    %351 = vector.shape_cast %350 : vector<32xf32> to vector<32x1xf32>
    %352 = arith.mulf %348, %325 : vector<32x128xf32>
    %353 = arith.mulf %352, %325 : vector<32x128xf32>
    %cst_165 = arith.constant dense<0.000000e+00> : vector<32xf32>
    %354 = vector.multi_reduction <add>, %353, %cst_165 [1] : vector<32x128xf32> to vector<32xf32>
    %355 = vector.shape_cast %354 : vector<32xf32> to vector<32x1xf32>
    %356 = arith.mulf %351, %351 : vector<32x1xf32>
    %357 = arith.subf %355, %356 : vector<32x1xf32>
    %cst_166 = arith.constant 0.000000e+00 : f32
    %358 = vector.broadcast %cst_166 : f32 to vector<32x1xf32>
    %359 = arith.maximumf %357, %358 : vector<32x1xf32>
    %cst_167 = arith.constant 1.000000e-07 : f32
    %360 = vector.broadcast %cst_167 : f32 to vector<32x1xf32>
    %361 = arith.addf %359, %360 : vector<32x1xf32>
    %362 = math.sqrt %361 : vector<32x1xf32>
    %c0_168 = arith.constant 0 : index
    %c0_169 = arith.constant 0 : index
    %363 = vector.load %arg47[%c0_168, %c0_169] : memref<32x1xf32, #tpu.memory_space<vmem>>, vector<32x1xf32>
    %c0_170 = arith.constant 0 : index
    %c0_171 = arith.constant 0 : index
    %364 = vector.load %arg48[%c0_170, %c0_171] : memref<32x1xf32, #tpu.memory_space<vmem>>, vector<32x1xf32>
    %c0_172 = arith.constant 0 : index
    %c0_173 = arith.constant 0 : index
    %365 = vector.load %arg49[%c0_172, %c0_173] : memref<32x1xf32, #tpu.memory_space<vmem>>, vector<32x1xf32>
    %c0_174 = arith.constant 0 : index
    %c0_175 = arith.constant 0 : index
    %366 = vector.load %arg50[%c0_174, %c0_175] : memref<32x1xf32, #tpu.memory_space<vmem>>, vector<32x1xf32>
    %c0_176 = arith.constant 0 : index
    %c0_177 = arith.constant 0 : index
    %367 = vector.load %arg51[%c0_176, %c0_177] : memref<16x32xbf16, #tpu.memory_space<vmem>>, vector<16x32xbf16>
    %c0_178 = arith.constant 0 : index
    %c0_179 = arith.constant 0 : index
    %368 = vector.load %arg52[%c0_178, %c0_179] : memref<16x32xbf16, #tpu.memory_space<vmem>>, vector<16x32xbf16>
    %c0_180 = arith.constant 0 : index
    %c0_181 = arith.constant 0 : index
    %369 = vector.load %arg53[%c0_180, %c0_181] : memref<1x16xf32, #tpu.memory_space<vmem>>, vector<1x16xf32>
    %c0_182 = arith.constant 0 : index
    %c0_183 = arith.constant 0 : index
    %370 = vector.load %arg54[%c0_182, %c0_183] : memref<1x16xf32, #tpu.memory_space<vmem>>, vector<1x16xf32>
    %c0_184 = arith.constant 0 : index
    %c0_185 = arith.constant 0 : index
    %371 = vector.load %arg55[%c0_184, %c0_185] : memref<1x16xf32, #tpu.memory_space<vmem>>, vector<1x16xf32>
    %372 = arith.mulf %351, %363 : vector<32x1xf32>
    %373 = arith.addf %372, %364 : vector<32x1xf32>
    %374 = arith.truncf %373 : vector<32x1xf32> to vector<32x1xbf16>
    %375 = arith.mulf %362, %365 : vector<32x1xf32>
    %376 = arith.addf %375, %366 : vector<32x1xf32>
    %377 = arith.truncf %376 : vector<32x1xf32> to vector<32x1xbf16>
    %cst_186 = arith.constant dense<0.000000e+00> : vector<1x16xf32>
    %378 = tpu.matmul %374, %367, %cst_186 {dimension_numbers = #tpu.dot_dimension_numbers<[0], [1], [1], [0], [0, 1, 1, 0], [], []>} : vector<32x1xbf16>, vector<16x32xbf16>, vector<1x16xf32> -> vector<1x16xf32>
    %cst_187 = arith.constant dense<0.000000e+00> : vector<1x16xf32>
    %379 = tpu.matmul %377, %368, %cst_187 {dimension_numbers = #tpu.dot_dimension_numbers<[0], [1], [1], [0], [0, 1, 1, 0], [], []>} : vector<32x1xbf16>, vector<16x32xbf16>, vector<1x16xf32> -> vector<1x16xf32>
    %380 = arith.addf %378, %379 : vector<1x16xf32>
    %381 = arith.addf %380, %369 : vector<1x16xf32>
    %382 = arith.mulf %381, %370 : vector<1x16xf32>
    %383 = arith.addf %382, %371 : vector<1x16xf32>
    %384 = arith.mulf %383, %383 : vector<1x16xf32>
    %cst_188 = arith.constant dense<0.000000e+00> : vector<1xf32>
    %385 = vector.multi_reduction <add>, %384, %cst_188 [1] : vector<1x16xf32> to vector<1xf32>
    %386 = vector.shape_cast %385 : vector<1xf32> to vector<1x1xf32>
    %387 = math.sqrt %386 : vector<1x1xf32>
    %cst_189 = arith.constant 9.99999996E-13 : f32
    %388 = vector.broadcast %cst_189 : f32 to vector<1x1xf32>
    %389 = arith.maximumf %387, %388 : vector<1x1xf32>
    %390 = tpu.reciprocal %389 {approx = true} : vector<1x1xf32> -> vector<1x1xf32>
    %391 = vector.broadcast %390 : vector<1x1xf32> to vector<1x16xf32>
    %392 = arith.mulf %383, %391 : vector<1x16xf32>
    %c0_190 = arith.constant 0 : index
    %c0_191 = arith.constant 0 : index
    %c0_192 = arith.constant 0 : index
    %393 = vector.load %arg69[%c0_190, %c0_191, %c0_192] : memref<1x1x16xf32, #tpu.memory_space<vmem>>, vector<1x1x16xf32>
    %394 = vector.shape_cast %393 : vector<1x1x16xf32> to vector<1x16xf32>
    %395 = vector.shape_cast %392 : vector<1x16xf32> to vector<1x1x16xf32>
    tpu.vector_store %arg69[%c0_190, %c0_191, %c0_192], %395 {strides = array<i32>} : memref<1x1x16xf32, #tpu.memory_space<vmem>>, vector<1x1x16xf32>,
    %c0_193 = arith.constant 0 : index
    %c0_194 = arith.constant 0 : index
    %396 = vector.load %arg56[%c0_193, %c0_194] : memref<16x4xf32, #tpu.memory_space<vmem>>, vector<16x4xf32>
    %c0_195 = arith.constant 0 : index
    %c0_196 = arith.constant 0 : index
    %397 = vector.load %arg57[%c0_195, %c0_196] : memref<32x32xbf16, #tpu.memory_space<vmem>>, vector<32x32xbf16>
    %c0_197 = arith.constant 0 : index
    %c0_198 = arith.constant 0 : index
    %398 = vector.load %arg58[%c0_197, %c0_198] : memref<32x1xf32, #tpu.memory_space<vmem>>, vector<32x1xf32>
    %c0_199 = arith.constant 0 : index
    %c0_200 = arith.constant 0 : index
    %399 = vector.load %arg59[%c0_199, %c0_200] : memref<16x16xbf16, #tpu.memory_space<vmem>>, vector<16x16xbf16>
    %c0_201 = arith.constant 0 : index
    %c0_202 = arith.constant 0 : index
    %400 = vector.load %arg60[%c0_201, %c0_202] : memref<16x1xf32, #tpu.memory_space<vmem>>, vector<16x1xf32>
    %c0_203 = arith.constant 0 : index
    %c0_204 = arith.constant 0 : index
    %401 = vector.load %arg61[%c0_203, %c0_204] : memref<16x16xbf16, #tpu.memory_space<vmem>>, vector<16x16xbf16>
    %c0_205 = arith.constant 0 : index
    %c0_206 = arith.constant 0 : index
    %402 = vector.load %arg62[%c0_205, %c0_206] : memref<16x1xf32, #tpu.memory_space<vmem>>, vector<16x1xf32>
    %cst_207 = arith.constant dense<0.000000e+00> : vector<32x128xf32>
    %403 = tpu.matmul %397, %326, %cst_207 {dimension_numbers = #tpu.dot_dimension_numbers<[1], [0], [0], [1], [0, 0, 1, 1], [], []>} : vector<32x32xbf16>, vector<32x128xbf16>, vector<32x128xf32> -> vector<32x128xf32>
    %404 = vector.broadcast %398 : vector<32x1xf32> to vector<32x128xf32>
    %405 = arith.addf %403, %404 : vector<32x128xf32>
    %406 = arith.truncf %396 : vector<16x4xf32> to vector<16x4xbf16>
    %cst_208 = arith.constant dense<0.000000e+00> : vector<16x4xf32>
    %407 = tpu.matmul %399, %406, %cst_208 {dimension_numbers = #tpu.dot_dimension_numbers<[1], [0], [0], [1], [0, 0, 1, 1], [], []>} : vector<16x16xbf16>, vector<16x4xbf16>, vector<16x4xf32> -> vector<16x4xf32>
    %408 = vector.broadcast %400 : vector<16x1xf32> to vector<16x4xf32>
    %409 = arith.addf %407, %408 : vector<16x4xf32>
    %410 = vector.extract_strided_slice %405 {offsets = [0, 0], sizes = [16, 128], strides = [1, 1]} : vector<32x128xf32> to vector<16x128xf32>
    %411 = vector.shape_cast %410 : vector<16x128xf32> to vector<2x8x128xf32>
    %412 = arith.truncf %411 : vector<2x8x128xf32> to vector<2x8x128xbf16>
    %413 = vector.extract_strided_slice %405 {offsets = [16, 0], sizes = [16, 128], strides = [1, 1]} : vector<32x128xf32> to vector<16x128xf32>
    %414 = vector.shape_cast %413 : vector<16x128xf32> to vector<2x8x128xf32>
    %415 = arith.truncf %414 : vector<2x8x128xf32> to vector<2x8x128xbf16>
    %416 = vector.shape_cast %409 : vector<16x4xf32> to vector<2x8x4xf32>
    %417 = arith.truncf %416 : vector<2x8x4xf32> to vector<2x8x4xbf16>
    "tpu.trace_start"() <{level = 10 : i32, message = "hcs,hct->hst"}> : () -> ()
    %cst_209 = arith.constant dense<0.000000e+00> : vector<2x128x4xf32>
    %418 = tpu.matmul %412, %417, %cst_209 {dimension_numbers = #tpu.dot_dimension_numbers<[1], [1], [2], [2], [0, 0, 0, 2, 1, 2], [0], [0]>} : vector<2x8x128xbf16>, vector<2x8x4xbf16>, vector<2x128x4xf32> -> vector<2x128x4xf32>
    "tpu.trace_stop"() : () -> ()
    %cst_210 = arith.constant 0.353553385 : f32
    %419 = vector.broadcast %cst_210 : f32 to vector<2x128x4xf32>
    %420 = arith.mulf %418, %419 : vector<2x128x4xf32>
    %cst_211 = arith.constant dense<0xFF800000> : vector<2x4xf32>
    %421 = vector.multi_reduction <maximumf>, %420, %cst_211 [1] : vector<2x128x4xf32> to vector<2x4xf32>
    %422 = vector.shape_cast %421 : vector<2x4xf32> to vector<2x1x4xf32>
    %423 = vector.broadcast %422 : vector<2x1x4xf32> to vector<2x128x4xf32>
    %424 = arith.subf %420, %423 : vector<2x128x4xf32>
    %425 = math.exp %424 : vector<2x128x4xf32>
    %cst_212 = arith.constant dense<0.000000e+00> : vector<2x4xf32>
    %426 = vector.multi_reduction <add>, %425, %cst_212 [1] : vector<2x128x4xf32> to vector<2x4xf32>
    %427 = vector.shape_cast %426 : vector<2x4xf32> to vector<2x1x4xf32>
    %428 = tpu.reciprocal %427 {approx = true} : vector<2x1x4xf32> -> vector<2x1x4xf32>
    %429 = vector.broadcast %428 : vector<2x1x4xf32> to vector<2x128x4xf32>
    %430 = arith.mulf %425, %429 : vector<2x128x4xf32>
    %431 = arith.truncf %430 : vector<2x128x4xf32> to vector<2x128x4xbf16>
    "tpu.trace_start"() <{level = 10 : i32, message = "hcs,hst->hct"}> : () -> ()
    %cst_213 = arith.constant dense<0.000000e+00> : vector<2x8x4xf32>
    %432 = tpu.matmul %415, %431, %cst_213 {dimension_numbers = #tpu.dot_dimension_numbers<[2], [1], [1], [2], [0, 0, 0, 1, 1, 2], [0], [0]>} : vector<2x8x128xbf16>, vector<2x128x4xbf16>, vector<2x8x4xf32> -> vector<2x8x4xf32>
    "tpu.trace_stop"() : () -> ()
    %433 = vector.shape_cast %432 : vector<2x8x4xf32> to vector<16x4xf32>
    %434 = arith.truncf %433 : vector<16x4xf32> to vector<16x4xbf16>
    %cst_214 = arith.constant dense<0.000000e+00> : vector<16x4xf32>
    %435 = tpu.matmul %401, %434, %cst_214 {dimension_numbers = #tpu.dot_dimension_numbers<[1], [0], [0], [1], [0, 0, 1, 1], [], []>} : vector<16x16xbf16>, vector<16x4xbf16>, vector<16x4xf32> -> vector<16x4xf32>
    %436 = vector.broadcast %402 : vector<16x1xf32> to vector<16x4xf32>
    %437 = arith.addf %435, %436 : vector<16x4xf32>
    %438 = arith.addf %437, %396 : vector<16x4xf32>
    %c0_215 = arith.constant 0 : index
    %c0_216 = arith.constant 0 : index
    %439 = vector.load %arg63[%c0_215, %c0_216] : memref<32x32xbf16, #tpu.memory_space<vmem>>, vector<32x32xbf16>
    %c0_217 = arith.constant 0 : index
    %c0_218 = arith.constant 0 : index
    %440 = vector.load %arg64[%c0_217, %c0_218] : memref<32x1xf32, #tpu.memory_space<vmem>>, vector<32x1xf32>
    %c0_219 = arith.constant 0 : index
    %c0_220 = arith.constant 0 : index
    %441 = vector.load %arg65[%c0_219, %c0_220] : memref<16x16xbf16, #tpu.memory_space<vmem>>, vector<16x16xbf16>
    %c0_221 = arith.constant 0 : index
    %c0_222 = arith.constant 0 : index
    %442 = vector.load %arg66[%c0_221, %c0_222] : memref<16x1xf32, #tpu.memory_space<vmem>>, vector<16x1xf32>
    %c0_223 = arith.constant 0 : index
    %c0_224 = arith.constant 0 : index
    %443 = vector.load %arg67[%c0_223, %c0_224] : memref<16x16xbf16, #tpu.memory_space<vmem>>, vector<16x16xbf16>
    %c0_225 = arith.constant 0 : index
    %c0_226 = arith.constant 0 : index
    %444 = vector.load %arg68[%c0_225, %c0_226] : memref<16x1xf32, #tpu.memory_space<vmem>>, vector<16x1xf32>
    %cst_227 = arith.constant dense<0.000000e+00> : vector<32x128xf32>
    %445 = tpu.matmul %439, %326, %cst_227 {dimension_numbers = #tpu.dot_dimension_numbers<[1], [0], [0], [1], [0, 0, 1, 1], [], []>} : vector<32x32xbf16>, vector<32x128xbf16>, vector<32x128xf32> -> vector<32x128xf32>
    %446 = vector.broadcast %440 : vector<32x1xf32> to vector<32x128xf32>
    %447 = arith.addf %445, %446 : vector<32x128xf32>
    %448 = arith.truncf %438 : vector<16x4xf32> to vector<16x4xbf16>
    %cst_228 = arith.constant dense<0.000000e+00> : vector<16x4xf32>
    %449 = tpu.matmul %441, %448, %cst_228 {dimension_numbers = #tpu.dot_dimension_numbers<[1], [0], [0], [1], [0, 0, 1, 1], [], []>} : vector<16x16xbf16>, vector<16x4xbf16>, vector<16x4xf32> -> vector<16x4xf32>
    %450 = vector.broadcast %442 : vector<16x1xf32> to vector<16x4xf32>
    %451 = arith.addf %449, %450 : vector<16x4xf32>
    %452 = vector.extract_strided_slice %447 {offsets = [0, 0], sizes = [16, 128], strides = [1, 1]} : vector<32x128xf32> to vector<16x128xf32>
    %453 = vector.shape_cast %452 : vector<16x128xf32> to vector<2x8x128xf32>
    %454 = arith.truncf %453 : vector<2x8x128xf32> to vector<2x8x128xbf16>
    %455 = vector.extract_strided_slice %447 {offsets = [16, 0], sizes = [16, 128], strides = [1, 1]} : vector<32x128xf32> to vector<16x128xf32>
    %456 = vector.shape_cast %455 : vector<16x128xf32> to vector<2x8x128xf32>
    %457 = arith.truncf %456 : vector<2x8x128xf32> to vector<2x8x128xbf16>
    %458 = vector.shape_cast %451 : vector<16x4xf32> to vector<2x8x4xf32>
    %459 = arith.truncf %458 : vector<2x8x4xf32> to vector<2x8x4xbf16>
    "tpu.trace_start"() <{level = 10 : i32, message = "hcs,hct->hst"}> : () -> ()
    %cst_229 = arith.constant dense<0.000000e+00> : vector<2x128x4xf32>
    %460 = tpu.matmul %454, %459, %cst_229 {dimension_numbers = #tpu.dot_dimension_numbers<[1], [1], [2], [2], [0, 0, 0, 2, 1, 2], [0], [0]>} : vector<2x8x128xbf16>, vector<2x8x4xbf16>, vector<2x128x4xf32> -> vector<2x128x4xf32>
    "tpu.trace_stop"() : () -> ()
    %cst_230 = arith.constant 0.353553385 : f32
    %461 = vector.broadcast %cst_230 : f32 to vector<2x128x4xf32>
    %462 = arith.mulf %460, %461 : vector<2x128x4xf32>
    %cst_231 = arith.constant dense<0xFF800000> : vector<2x4xf32>
    %463 = vector.multi_reduction <maximumf>, %462, %cst_231 [1] : vector<2x128x4xf32> to vector<2x4xf32>
    %464 = vector.shape_cast %463 : vector<2x4xf32> to vector<2x1x4xf32>
    %465 = vector.broadcast %464 : vector<2x1x4xf32> to vector<2x128x4xf32>
    %466 = arith.subf %462, %465 : vector<2x128x4xf32>
    %467 = math.exp %466 : vector<2x128x4xf32>
    %cst_232 = arith.constant dense<0.000000e+00> : vector<2x4xf32>
    %468 = vector.multi_reduction <add>, %467, %cst_232 [1] : vector<2x128x4xf32> to vector<2x4xf32>
    %469 = vector.shape_cast %468 : vector<2x4xf32> to vector<2x1x4xf32>
    %470 = tpu.reciprocal %469 {approx = true} : vector<2x1x4xf32> -> vector<2x1x4xf32>
    %471 = vector.broadcast %470 : vector<2x1x4xf32> to vector<2x128x4xf32>
    %472 = arith.mulf %467, %471 : vector<2x128x4xf32>
    %473 = arith.truncf %472 : vector<2x128x4xf32> to vector<2x128x4xbf16>
    "tpu.trace_start"() <{level = 10 : i32, message = "hcs,hst->hct"}> : () -> ()
    %cst_233 = arith.constant dense<0.000000e+00> : vector<2x8x4xf32>
    %474 = tpu.matmul %457, %473, %cst_233 {dimension_numbers = #tpu.dot_dimension_numbers<[2], [1], [1], [2], [0, 0, 0, 1, 1, 2], [0], [0]>} : vector<2x8x128xbf16>, vector<2x128x4xbf16>, vector<2x8x4xf32> -> vector<2x8x4xf32>
    "tpu.trace_stop"() : () -> ()
    %475 = vector.shape_cast %474 : vector<2x8x4xf32> to vector<16x4xf32>
    %476 = arith.truncf %475 : vector<16x4xf32> to vector<16x4xbf16>
    %cst_234 = arith.constant dense<0.000000e+00> : vector<16x4xf32>
    %477 = tpu.matmul %443, %476, %cst_234 {dimension_numbers = #tpu.dot_dimension_numbers<[1], [0], [0], [1], [0, 0, 1, 1], [], []>} : vector<16x16xbf16>, vector<16x4xbf16>, vector<16x4xf32> -> vector<16x4xf32>
    %478 = vector.broadcast %444 : vector<16x1xf32> to vector<16x4xf32>
    %479 = arith.addf %477, %478 : vector<16x4xf32>
    %c0_235 = arith.constant 0 : index
    %c0_236 = arith.constant 0 : index
    %c0_237 = arith.constant 0 : index
    %480 = vector.load %arg70[%c0_235, %c0_236, %c0_237] : memref<1x16x4xf32, #tpu.memory_space<vmem>>, vector<1x16x4xf32>
    %481 = vector.shape_cast %480 : vector<1x16x4xf32> to vector<16x4xf32>
    %482 = vector.shape_cast %479 : vector<16x4xf32> to vector<1x16x4xf32>
    tpu.vector_store %arg70[%c0_235, %c0_236, %c0_237], %482 {strides = array<i32>} : memref<1x16x4xf32, #tpu.memory_space<vmem>>, vector<1x16x4xf32>,
    return
  }
  func.func @transform_0(%arg0: i32) -> (i32, i32, i32) {
    %c0_i32 = arith.constant 0 : i32
    %c0_i32_0 = arith.constant 0 : i32
    %c0_i32_1 = arith.constant 0 : i32
    return %arg0, %c0_i32, %c0_i32_0 : i32, i32, i32
  }
  func.func @transform_1(%arg0: i32) -> (i32, i32, i32) {
    %c0_i32 = arith.constant 0 : i32
    %c0_i32_0 = arith.constant 0 : i32
    %c0_i32_1 = arith.constant 0 : i32
    %c0_i32_2 = arith.constant 0 : i32
    return %c0_i32, %c0_i32_0, %c0_i32_1 : i32, i32, i32
  }
  func.func @transform_2(%arg0: i32) -> (i32, i32) {
    %c0_i32 = arith.constant 0 : i32
    %c0_i32_0 = arith.constant 0 : i32
    %c0_i32_1 = arith.constant 0 : i32
    return %c0_i32, %c0_i32_0 : i32, i32
  }
  func.func @transform_3(%arg0: i32) -> (i32, i32) {
    %c0_i32 = arith.constant 0 : i32
    %c0_i32_0 = arith.constant 0 : i32
    %c0_i32_1 = arith.constant 0 : i32
    return %c0_i32, %c0_i32_0 : i32, i32
  }
  func.func @transform_4(%arg0: i32) -> (i32, i32) {
    %c0_i32 = arith.constant 0 : i32
    %c0_i32_0 = arith.constant 0 : i32
    %c0_i32_1 = arith.constant 0 : i32
    return %c0_i32, %c0_i32_0 : i32, i32
  }
  func.func @transform_5(%arg0: i32) -> (i32, i32) {
    %c0_i32 = arith.constant 0 : i32
    %c0_i32_0 = arith.constant 0 : i32
    %c0_i32_1 = arith.constant 0 : i32
    return %c0_i32, %c0_i32_0 : i32, i32
  }
  func.func @transform_6(%arg0: i32) -> (i32, i32) {
    %c0_i32 = arith.constant 0 : i32
    %c0_i32_0 = arith.constant 0 : i32
    %c0_i32_1 = arith.constant 0 : i32
    return %c0_i32, %c0_i32_0 : i32, i32
  }
  func.func @transform_7(%arg0: i32) -> (i32, i32) {
    %c0_i32 = arith.constant 0 : i32
    %c0_i32_0 = arith.constant 0 : i32
    %c0_i32_1 = arith.constant 0 : i32
    return %c0_i32, %c0_i32_0 : i32, i32
  }
  func.func @transform_8(%arg0: i32) -> (i32, i32) {
    %c0_i32 = arith.constant 0 : i32
    %c0_i32_0 = arith.constant 0 : i32
    %c0_i32_1 = arith.constant 0 : i32
    return %c0_i32, %c0_i32_0 : i32, i32
  }
  func.func @transform_9(%arg0: i32) -> (i32, i32, i32) {
    %c0_i32 = arith.constant 0 : i32
    %c0_i32_0 = arith.constant 0 : i32
    %c0_i32_1 = arith.constant 0 : i32
    %c0_i32_2 = arith.constant 0 : i32
    return %c0_i32, %c0_i32_0, %c0_i32_1 : i32, i32, i32
  }
  func.func @transform_10(%arg0: i32) -> (i32, i32) {
    %c0_i32 = arith.constant 0 : i32
    %c0_i32_0 = arith.constant 0 : i32
    %c0_i32_1 = arith.constant 0 : i32
    return %c0_i32, %c0_i32_0 : i32, i32
  }
  func.func @transform_11(%arg0: i32) -> (i32, i32) {
    %c0_i32 = arith.constant 0 : i32
    %c0_i32_0 = arith.constant 0 : i32
    %c0_i32_1 = arith.constant 0 : i32
    return %c0_i32, %c0_i32_0 : i32, i32
  }
  func.func @transform_12(%arg0: i32) -> (i32, i32) {
    %c0_i32 = arith.constant 0 : i32
    %c0_i32_0 = arith.constant 0 : i32
    %c0_i32_1 = arith.constant 0 : i32
    return %c0_i32, %c0_i32_0 : i32, i32
  }
  func.func @transform_13(%arg0: i32) -> (i32, i32) {
    %c0_i32 = arith.constant 0 : i32
    %c0_i32_0 = arith.constant 0 : i32
    %c0_i32_1 = arith.constant 0 : i32
    return %c0_i32, %c0_i32_0 : i32, i32
  }
  func.func @transform_14(%arg0: i32) -> (i32, i32) {
    %c0_i32 = arith.constant 0 : i32
    %c0_i32_0 = arith.constant 0 : i32
    %c0_i32_1 = arith.constant 0 : i32
    return %c0_i32, %c0_i32_0 : i32, i32
  }
  func.func @transform_15(%arg0: i32) -> (i32, i32) {
    %c0_i32 = arith.constant 0 : i32
    %c0_i32_0 = arith.constant 0 : i32
    %c0_i32_1 = arith.constant 0 : i32
    return %c0_i32, %c0_i32_0 : i32, i32
  }
  func.func @transform_16(%arg0: i32) -> (i32, i32) {
    %c0_i32 = arith.constant 0 : i32
    %c0_i32_0 = arith.constant 0 : i32
    %c0_i32_1 = arith.constant 0 : i32
    return %c0_i32, %c0_i32_0 : i32, i32
  }
  func.func @transform_17(%arg0: i32) -> (i32, i32) {
    %c0_i32 = arith.constant 0 : i32
    %c0_i32_0 = arith.constant 0 : i32
    %c0_i32_1 = arith.constant 0 : i32
    return %c0_i32, %c0_i32_0 : i32, i32
  }
  func.func @transform_18(%arg0: i32) -> (i32, i32) {
    %c0_i32 = arith.constant 0 : i32
    %c0_i32_0 = arith.constant 0 : i32
    %c0_i32_1 = arith.constant 0 : i32
    return %c0_i32, %c0_i32_0 : i32, i32
  }
  func.func @transform_19(%arg0: i32) -> (i32, i32) {
    %c0_i32 = arith.constant 0 : i32
    %c0_i32_0 = arith.constant 0 : i32
    %c0_i32_1 = arith.constant 0 : i32
    return %c0_i32, %c0_i32_0 : i32, i32
  }
  func.func @transform_20(%arg0: i32) -> (i32, i32) {
    %c0_i32 = arith.constant 0 : i32
    %c0_i32_0 = arith.constant 0 : i32
    %c0_i32_1 = arith.constant 0 : i32
    return %c0_i32, %c0_i32_0 : i32, i32
  }
  func.func @transform_21(%arg0: i32) -> (i32, i32) {
    %c0_i32 = arith.constant 0 : i32
    %c0_i32_0 = arith.constant 0 : i32
    %c0_i32_1 = arith.constant 0 : i32
    return %c0_i32, %c0_i32_0 : i32, i32
  }
  func.func @transform_22(%arg0: i32) -> (i32, i32) {
    %c0_i32 = arith.constant 0 : i32
    %c0_i32_0 = arith.constant 0 : i32
    %c0_i32_1 = arith.constant 0 : i32
    return %c0_i32, %c0_i32_0 : i32, i32
  }
  func.func @transform_23(%arg0: i32) -> (i32, i32) {
    %c0_i32 = arith.constant 0 : i32
    %c0_i32_0 = arith.constant 0 : i32
    %c0_i32_1 = arith.constant 0 : i32
    return %c0_i32, %c0_i32_0 : i32, i32
  }
  func.func @transform_24(%arg0: i32) -> (i32, i32) {
    %c0_i32 = arith.constant 0 : i32
    %c0_i32_0 = arith.constant 0 : i32
    %c0_i32_1 = arith.constant 0 : i32
    return %c0_i32, %c0_i32_0 : i32, i32
  }
  func.func @transform_25(%arg0: i32) -> (i32, i32) {
    %c0_i32 = arith.constant 0 : i32
    %c0_i32_0 = arith.constant 0 : i32
    %c0_i32_1 = arith.constant 0 : i32
    return %c0_i32, %c0_i32_0 : i32, i32
  }
  func.func @transform_26(%arg0: i32) -> (i32, i32) {
    %c0_i32 = arith.constant 0 : i32
    %c0_i32_0 = arith.constant 0 : i32
    %c0_i32_1 = arith.constant 0 : i32
    return %c0_i32, %c0_i32_0 : i32, i32
  }
  func.func @transform_27(%arg0: i32) -> (i32, i32, i32) {
    %c0_i32 = arith.constant 0 : i32
    %c0_i32_0 = arith.constant 0 : i32
    %c0_i32_1 = arith.constant 0 : i32
    %c0_i32_2 = arith.constant 0 : i32
    return %c0_i32, %c0_i32_0, %c0_i32_1 : i32, i32, i32
  }
  func.func @transform_28(%arg0: i32) -> (i32, i32) {
    %c0_i32 = arith.constant 0 : i32
    %c0_i32_0 = arith.constant 0 : i32
    %c0_i32_1 = arith.constant 0 : i32
    return %c0_i32, %c0_i32_0 : i32, i32
  }
  func.func @transform_29(%arg0: i32) -> (i32, i32) {
    %c0_i32 = arith.constant 0 : i32
    %c0_i32_0 = arith.constant 0 : i32
    %c0_i32_1 = arith.constant 0 : i32
    return %c0_i32, %c0_i32_0 : i32, i32
  }
  func.func @transform_30(%arg0: i32) -> (i32, i32) {
    %c0_i32 = arith.constant 0 : i32
    %c0_i32_0 = arith.constant 0 : i32
    %c0_i32_1 = arith.constant 0 : i32
    return %c0_i32, %c0_i32_0 : i32, i32
  }
  func.func @transform_31(%arg0: i32) -> (i32, i32) {
    %c0_i32 = arith.constant 0 : i32
    %c0_i32_0 = arith.constant 0 : i32
    %c0_i32_1 = arith.constant 0 : i32
    return %c0_i32, %c0_i32_0 : i32, i32
  }
  func.func @transform_32(%arg0: i32) -> (i32, i32) {
    %c0_i32 = arith.constant 0 : i32
    %c0_i32_0 = arith.constant 0 : i32
    %c0_i32_1 = arith.constant 0 : i32
    return %c0_i32, %c0_i32_0 : i32, i32
  }
  func.func @transform_33(%arg0: i32) -> (i32, i32) {
    %c0_i32 = arith.constant 0 : i32
    %c0_i32_0 = arith.constant 0 : i32
    %c0_i32_1 = arith.constant 0 : i32
    return %c0_i32, %c0_i32_0 : i32, i32
  }
  func.func @transform_34(%arg0: i32) -> (i32, i32) {
    %c0_i32 = arith.constant 0 : i32
    %c0_i32_0 = arith.constant 0 : i32
    %c0_i32_1 = arith.constant 0 : i32
    return %c0_i32, %c0_i32_0 : i32, i32
  }
  func.func @transform_35(%arg0: i32) -> (i32, i32) {
    %c0_i32 = arith.constant 0 : i32
    %c0_i32_0 = arith.constant 0 : i32
    %c0_i32_1 = arith.constant 0 : i32
    return %c0_i32, %c0_i32_0 : i32, i32
  }
  func.func @transform_36(%arg0: i32) -> (i32, i32) {
    %c0_i32 = arith.constant 0 : i32
    %c0_i32_0 = arith.constant 0 : i32
    %c0_i32_1 = arith.constant 0 : i32
    return %c0_i32, %c0_i32_0 : i32, i32
  }
  func.func @transform_37(%arg0: i32) -> (i32, i32) {
    %c0_i32 = arith.constant 0 : i32
    %c0_i32_0 = arith.constant 0 : i32
    %c0_i32_1 = arith.constant 0 : i32
    return %c0_i32, %c0_i32_0 : i32, i32
  }
  func.func @transform_38(%arg0: i32) -> (i32, i32) {
    %c0_i32 = arith.constant 0 : i32
    %c0_i32_0 = arith.constant 0 : i32
    %c0_i32_1 = arith.constant 0 : i32
    return %c0_i32, %c0_i32_0 : i32, i32
  }
  func.func @transform_39(%arg0: i32) -> (i32, i32) {
    %c0_i32 = arith.constant 0 : i32
    %c0_i32_0 = arith.constant 0 : i32
    %c0_i32_1 = arith.constant 0 : i32
    return %c0_i32, %c0_i32_0 : i32, i32
  }
  func.func @transform_40(%arg0: i32) -> (i32, i32) {
    %c0_i32 = arith.constant 0 : i32
    %c0_i32_0 = arith.constant 0 : i32
    %c0_i32_1 = arith.constant 0 : i32
    return %c0_i32, %c0_i32_0 : i32, i32
  }
  func.func @transform_41(%arg0: i32) -> (i32, i32) {
    %c0_i32 = arith.constant 0 : i32
    %c0_i32_0 = arith.constant 0 : i32
    %c0_i32_1 = arith.constant 0 : i32
    return %c0_i32, %c0_i32_0 : i32, i32
  }
  func.func @transform_42(%arg0: i32) -> (i32, i32) {
    %c0_i32 = arith.constant 0 : i32
    %c0_i32_0 = arith.constant 0 : i32
    %c0_i32_1 = arith.constant 0 : i32
    return %c0_i32, %c0_i32_0 : i32, i32
  }
  func.func @transform_43(%arg0: i32) -> (i32, i32) {
    %c0_i32 = arith.constant 0 : i32
    %c0_i32_0 = arith.constant 0 : i32
    %c0_i32_1 = arith.constant 0 : i32
    return %c0_i32, %c0_i32_0 : i32, i32
  }
  func.func @transform_44(%arg0: i32) -> (i32, i32) {
    %c0_i32 = arith.constant 0 : i32
    %c0_i32_0 = arith.constant 0 : i32
    %c0_i32_1 = arith.constant 0 : i32
    return %c0_i32, %c0_i32_0 : i32, i32
  }
  func.func @transform_45(%arg0: i32) -> (i32, i32) {
    %c0_i32 = arith.constant 0 : i32
    %c0_i32_0 = arith.constant 0 : i32
    %c0_i32_1 = arith.constant 0 : i32
    return %c0_i32, %c0_i32_0 : i32, i32
  }
  func.func @transform_46(%arg0: i32) -> (i32, i32) {
    %c0_i32 = arith.constant 0 : i32
    %c0_i32_0 = arith.constant 0 : i32
    %c0_i32_1 = arith.constant 0 : i32
    return %c0_i32, %c0_i32_0 : i32, i32
  }
  func.func @transform_47(%arg0: i32) -> (i32, i32) {
    %c0_i32 = arith.constant 0 : i32
    %c0_i32_0 = arith.constant 0 : i32
    %c0_i32_1 = arith.constant 0 : i32
    return %c0_i32, %c0_i32_0 : i32, i32
  }
  func.func @transform_48(%arg0: i32) -> (i32, i32) {
    %c0_i32 = arith.constant 0 : i32
    %c0_i32_0 = arith.constant 0 : i32
    %c0_i32_1 = arith.constant 0 : i32
    return %c0_i32, %c0_i32_0 : i32, i32
  }
  func.func @transform_49(%arg0: i32) -> (i32, i32) {
    %c0_i32 = arith.constant 0 : i32
    %c0_i32_0 = arith.constant 0 : i32
    %c0_i32_1 = arith.constant 0 : i32
    return %c0_i32, %c0_i32_0 : i32, i32
  }
  func.func @transform_50(%arg0: i32) -> (i32, i32) {
    %c0_i32 = arith.constant 0 : i32
    %c0_i32_0 = arith.constant 0 : i32
    %c0_i32_1 = arith.constant 0 : i32
    return %c0_i32, %c0_i32_0 : i32, i32
  }
  func.func @transform_51(%arg0: i32) -> (i32, i32) {
    %c0_i32 = arith.constant 0 : i32
    %c0_i32_0 = arith.constant 0 : i32
    %c0_i32_1 = arith.constant 0 : i32
    return %c0_i32, %c0_i32_0 : i32, i32
  }
  func.func @transform_52(%arg0: i32) -> (i32, i32) {
    %c0_i32 = arith.constant 0 : i32
    %c0_i32_0 = arith.constant 0 : i32
    %c0_i32_1 = arith.constant 0 : i32
    return %c0_i32, %c0_i32_0 : i32, i32
  }
  func.func @transform_53(%arg0: i32) -> (i32, i32) {
    %c0_i32 = arith.constant 0 : i32
    %c0_i32_0 = arith.constant 0 : i32
    %c0_i32_1 = arith.constant 0 : i32
    return %c0_i32, %c0_i32_0 : i32, i32
  }
  func.func @transform_54(%arg0: i32) -> (i32, i32) {
    %c0_i32 = arith.constant 0 : i32
    %c0_i32_0 = arith.constant 0 : i32
    %c0_i32_1 = arith.constant 0 : i32
    return %c0_i32, %c0_i32_0 : i32, i32
  }
  func.func @transform_55(%arg0: i32) -> (i32, i32) {
    %c0_i32 = arith.constant 0 : i32
    %c0_i32_0 = arith.constant 0 : i32
    %c0_i32_1 = arith.constant 0 : i32
    return %c0_i32, %c0_i32_0 : i32, i32
  }
  func.func @transform_56(%arg0: i32) -> (i32, i32) {
    %c0_i32 = arith.constant 0 : i32
    %c0_i32_0 = arith.constant 0 : i32
    %c0_i32_1 = arith.constant 0 : i32
    return %c0_i32, %c0_i32_0 : i32, i32
  }
  func.func @transform_57(%arg0: i32) -> (i32, i32) {
    %c0_i32 = arith.constant 0 : i32
    %c0_i32_0 = arith.constant 0 : i32
    %c0_i32_1 = arith.constant 0 : i32
    return %c0_i32, %c0_i32_0 : i32, i32
  }
  func.func @transform_58(%arg0: i32) -> (i32, i32) {
    %c0_i32 = arith.constant 0 : i32
    %c0_i32_0 = arith.constant 0 : i32
    %c0_i32_1 = arith.constant 0 : i32
    return %c0_i32, %c0_i32_0 : i32, i32
  }
  func.func @transform_59(%arg0: i32) -> (i32, i32) {
    %c0_i32 = arith.constant 0 : i32
    %c0_i32_0 = arith.constant 0 : i32
    %c0_i32_1 = arith.constant 0 : i32
    return %c0_i32, %c0_i32_0 : i32, i32
  }
  func.func @transform_60(%arg0: i32) -> (i32, i32) {
    %c0_i32 = arith.constant 0 : i32
    %c0_i32_0 = arith.constant 0 : i32
    %c0_i32_1 = arith.constant 0 : i32
    return %c0_i32, %c0_i32_0 : i32, i32
  }
  func.func @transform_61(%arg0: i32) -> (i32, i32) {
    %c0_i32 = arith.constant 0 : i32
    %c0_i32_0 = arith.constant 0 : i32
    %c0_i32_1 = arith.constant 0 : i32
    return %c0_i32, %c0_i32_0 : i32, i32
  }
  func.func @transform_62(%arg0: i32) -> (i32, i32) {
    %c0_i32 = arith.constant 0 : i32
    %c0_i32_0 = arith.constant 0 : i32
    %c0_i32_1 = arith.constant 0 : i32
    return %c0_i32, %c0_i32_0 : i32, i32
  }
  func.func @transform_63(%arg0: i32) -> (i32, i32) {
    %c0_i32 = arith.constant 0 : i32
    %c0_i32_0 = arith.constant 0 : i32
    %c0_i32_1 = arith.constant 0 : i32
    return %c0_i32, %c0_i32_0 : i32, i32
  }
  func.func @transform_64(%arg0: i32) -> (i32, i32) {
    %c0_i32 = arith.constant 0 : i32
    %c0_i32_0 = arith.constant 0 : i32
    %c0_i32_1 = arith.constant 0 : i32
    return %c0_i32, %c0_i32_0 : i32, i32
  }
  func.func @transform_65(%arg0: i32) -> (i32, i32) {
    %c0_i32 = arith.constant 0 : i32
    %c0_i32_0 = arith.constant 0 : i32
    %c0_i32_1 = arith.constant 0 : i32
    return %c0_i32, %c0_i32_0 : i32, i32
  }
  func.func @transform_66(%arg0: i32) -> (i32, i32) {
    %c0_i32 = arith.constant 0 : i32
    %c0_i32_0 = arith.constant 0 : i32
    %c0_i32_1 = arith.constant 0 : i32
    return %c0_i32, %c0_i32_0 : i32, i32
  }
  func.func @transform_67(%arg0: i32) -> (i32, i32) {
    %c0_i32 = arith.constant 0 : i32
    %c0_i32_0 = arith.constant 0 : i32
    %c0_i32_1 = arith.constant 0 : i32
    return %c0_i32, %c0_i32_0 : i32, i32
  }
  func.func @transform_68(%arg0: i32) -> (i32, i32, i32) {
    %c0_i32 = arith.constant 0 : i32
    %c0_i32_0 = arith.constant 0 : i32
    %c0_i32_1 = arith.constant 0 : i32
    return %arg0, %c0_i32, %c0_i32_0 : i32, i32, i32
  }
  func.func @transform_69(%arg0: i32) -> (i32, i32, i32) {
    %c0_i32 = arith.constant 0 : i32
    %c0_i32_0 = arith.constant 0 : i32
    %c0_i32_1 = arith.constant 0 : i32
    return %arg0, %c0_i32, %c0_i32_0 : i32, i32, i32
  }
}

</mosaic_0001>

<llo_original>
// kernel: timber_encoder_forward.1
$region0: #{timber_encoder_forward.1}
  #allocation0 [shape = 'u32[]', space=smem, size = 0x4, offset = 0x4, fixed_abs, tag = 'smem constant byte address 0x4 - core index']
  #allocation1 [shape = 'u32[144,128]{1,0:T(1,128)}', space=vmem, size = 0x12000, scoped, tag = 'internal scratch']
  %s0 = inlined_call_operand.smem [shape: u32[70], index: -1, kind: input, shape index: {}]
  %s1 = sld [smem:[%s0]]
  %s2 = scalar_lea.smem %s0, 1
  %s3 = sld [smem:[%s2]]
  %s4 = scalar_lea.smem %s0, 2
  %s5 = sld [smem:[%s4]]
  %s6 = scalar_lea.smem %s0, 3
  %s7 = sld [smem:[%s6]]
  %s8 = scalar_lea.smem %s0, 4
  %s9 = sld [smem:[%s8]]
  %s10 = scalar_lea.smem %s0, 5
  %s11 = sld [smem:[%s10]]
  %s12 = scalar_lea.smem %s0, 6
  %s13 = sld [smem:[%s12]]
  %s14 = scalar_lea.smem %s0, 7
  %s15 = sld [smem:[%s14]]
  %s16 = scalar_lea.smem %s0, 8
  %s17 = sld [smem:[%s16]]
  %s18 = scalar_lea.smem %s0, 9
  %s19 = sld [smem:[%s18]]
  %s20 = scalar_lea.smem %s0, 10
  %s21 = sld [smem:[%s20]]
  %s22 = scalar_lea.smem %s0, 11
  %s23 = sld [smem:[%s22]]
  %s24 = scalar_lea.smem %s0, 12
  %s25 = sld [smem:[%s24]]
  %s26 = scalar_lea.smem %s0, 13
  %s27 = sld [smem:[%s26]]
  %s28 = scalar_lea.smem %s0, 14
  %s29 = sld [smem:[%s28]]
  %s30 = scalar_lea.smem %s0, 15
  %s31 = sld [smem:[%s30]]
  %s32 = scalar_lea.smem %s0, 16
  %s33 = sld [smem:[%s32]]
  %s34 = scalar_lea.smem %s0, 17
  %s35 = sld [smem:[%s34]]
  %s36 = scalar_lea.smem %s0, 18
  %s37 = sld [smem:[%s36]]
  %s38 = scalar_lea.smem %s0, 19
  %s39 = sld [smem:[%s38]]
  %s40 = scalar_lea.smem %s0, 20
  %s41 = sld [smem:[%s40]]
  %s42 = scalar_lea.smem %s0, 21
  %s43 = sld [smem:[%s42]]
  %s44 = scalar_lea.smem %s0, 22
  %s45 = sld [smem:[%s44]]
  %s46 = scalar_lea.smem %s0, 23
  %s47 = sld [smem:[%s46]]
  %s48 = scalar_lea.smem %s0, 24
  %s49 = sld [smem:[%s48]]
  %s50 = scalar_lea.smem %s0, 25
  %s51 = sld [smem:[%s50]]
  %s52 = scalar_lea.smem %s0, 26
  %s53 = sld [smem:[%s52]]
  %s54 = scalar_lea.smem %s0, 27
  %s55 = sld [smem:[%s54]]
  %s56 = scalar_lea.smem %s0, 28
  %s57 = sld [smem:[%s56]]
  %s58 = scalar_lea.smem %s0, 29
  %s59 = sld [smem:[%s58]]
  %s60 = scalar_lea.smem %s0, 30
  %s61 = sld [smem:[%s60]]
  %s62 = scalar_lea.smem %s0, 31
  %s63 = sld [smem:[%s62]]
  %s64 = scalar_lea.smem %s0, 32
  %s65 = sld [smem:[%s64]]
  %s66 = scalar_lea.smem %s0, 33
  %s67 = sld [smem:[%s66]]
  %s68 = scalar_lea.smem %s0, 34
  %s69 = sld [smem:[%s68]]
  %s70 = scalar_lea.smem %s0, 35
  %s71 = sld [smem:[%s70]]
  %s72 = scalar_lea.smem %s0, 36
  %s73 = sld [smem:[%s72]]
  %s74 = scalar_lea.smem %s0, 37
  %s75 = sld [smem:[%s74]]
  %s76 = scalar_lea.smem %s0, 38
  %s77 = sld [smem:[%s76]]
  %s78 = scalar_lea.smem %s0, 39
  %s79 = sld [smem:[%s78]]
  %s80 = scalar_lea.smem %s0, 40
  %s81 = sld [smem:[%s80]]
  %s82 = scalar_lea.smem %s0, 41
  %s83 = sld [smem:[%s82]]
  %s84 = scalar_lea.smem %s0, 42
  %s85 = sld [smem:[%s84]]
  %s86 = scalar_lea.smem %s0, 43
  %s87 = sld [smem:[%s86]]
  %s88 = scalar_lea.smem %s0, 44
  %s89 = sld [smem:[%s88]]
  %s90 = scalar_lea.smem %s0, 45
  %s91 = sld [smem:[%s90]]
  %s92 = scalar_lea.smem %s0, 46
  %s93 = sld [smem:[%s92]]
  %s94 = scalar_lea.smem %s0, 47
  %s95 = sld [smem:[%s94]]
  %s96 = scalar_lea.smem %s0, 48
  %s97 = sld [smem:[%s96]]
  %s98 = scalar_lea.smem %s0, 49
  %s99 = sld [smem:[%s98]]
  %s100 = scalar_lea.smem %s0, 50
  %s101 = sld [smem:[%s100]]
  %s102 = scalar_lea.smem %s0, 51
  %s103 = sld [smem:[%s102]]
  %s104 = scalar_lea.smem %s0, 52
  %s105 = sld [smem:[%s104]]
  %s106 = scalar_lea.smem %s0, 53
  %s107 = sld [smem:[%s106]]
  %s108 = scalar_lea.smem %s0, 54
  %s109 = sld [smem:[%s108]]
  %s110 = scalar_lea.smem %s0, 55
  %s111 = sld [smem:[%s110]]
  %s112 = scalar_lea.smem %s0, 56
  %s113 = sld [smem:[%s112]]
  %s114 = scalar_lea.smem %s0, 57
  %s115 = sld [smem:[%s114]]
  %s116 = scalar_lea.smem %s0, 58
  %s117 = sld [smem:[%s116]]
  %s118 = scalar_lea.smem %s0, 59
  %s119 = sld [smem:[%s118]]
  %s120 = scalar_lea.smem %s0, 60
  %s121 = sld [smem:[%s120]]
  %s122 = scalar_lea.smem %s0, 61
  %s123 = sld [smem:[%s122]]
  %s124 = scalar_lea.smem %s0, 62
  %s125 = sld [smem:[%s124]]
  %s126 = scalar_lea.smem %s0, 63
  %s127 = sld [smem:[%s126]]
  %s128 = scalar_lea.smem %s0, 64
  %s129 = sld [smem:[%s128]]
  %s130 = scalar_lea.smem %s0, 65
  %s131 = sld [smem:[%s130]]
  %s132 = scalar_lea.smem %s0, 66
  %s133 = sld [smem:[%s132]]
  %s134 = scalar_lea.smem %s0, 67
  %s135 = sld [smem:[%s134]]
  %s136 = scalar_lea.smem %s0, 68
  %s137 = sld [smem:[%s136]]
  %s138 = scalar_lea.smem %s0, 69
  %s139 = sld [smem:[%s138]]
  %140 = xla_tuple %s137, %s139
  %s141 = sld [smem:[#allocation0]]
  $region313: #{timber_encoder_forward.1} parent=0
    _
  %s143 = ssub.s32 1, %s141
  %s144 = scalar_select 0, %s143, %s141
  $region1: #{timber_encoder_forward.1} parent=0
    #allocation2 [shape = 'u8[1024]{0}', space=vmem, size = 0x400, scoped, tag = 'output window, operand 0']
    #allocation3 [shape = 's32[2]{0}', space=sflag, size = 0x8, scoped, tag = 'scoped memory for timber_encoder_forward.1']
    %145 = vsyncpa [#allocation3], 0
    %s146 = scalar_lea.sflag [#allocation3], 1
    %147 = vsyncpa %s146, 0
    loop: start=0, step=1, limit=4
    $region2: #{timber_encoder_forward.1} parent=1 // loop_pre_header
      _
    $region3: #{timber_encoder_forward.1} parent=1 // loop_header
      %s149 = sphi 0, %s153
      %p150 = scmp.ge.s32.totalorder %s149, 4
      %s159 = sphi 0, %s161
      %s162 = sphi 0, %s159
      %s163 = sphi 0, %s162
      %s179 = sphi 0, %s163
      %s183 = sphi 0, %s183
      %s185 = sphi 0, %s183
      %s186 = sphi 0, %s185
      %s200 = sphi 0, %s186
      %s204 = sphi 0, %s204
      %s206 = sphi 0, %s204
      %s207 = sphi 0, %s206
      %s221 = sphi 0, %s207
      %s225 = sphi 0, %s225
      %s227 = sphi 0, %s225
      %s228 = sphi 0, %s227
      %s242 = sphi 0, %s228
      %s246 = sphi 0, %s246
      %s248 = sphi 0, %s246
      %s249 = sphi 0, %s248
      %s263 = sphi 0, %s249
      %s267 = sphi 0, %s267
      %s269 = sphi 0, %s267
      %s270 = sphi 0, %s269
      %s284 = sphi 0, %s270
      %s288 = sphi 0, %s288
      %s290 = sphi 0, %s288
      %s291 = sphi 0, %s290
      %s305 = sphi 0, %s291
      %s309 = sphi 0, %s309
      %s311 = sphi 0, %s309
      %s312 = sphi 0, %s311
      %s326 = sphi 0, %s312
      %s330 = sphi 0, %s330
      %s332 = sphi 0, %s330
      %s333 = sphi 0, %s332
      %s347 = sphi 0, %s333
      %s351 = sphi 0, %s351
      %s353 = sphi 0, %s351
      %s354 = sphi 0, %s353
      %s368 = sphi 0, %s354
      %s372 = sphi 0, %s372
      %s374 = sphi 0, %s372
      %s375 = sphi 0, %s374
      %s389 = sphi 0, %s375
      %s393 = sphi 0, %s393
      %s395 = sphi 0, %s393
      %s396 = sphi 0, %s395
      %s410 = sphi 0, %s396
      %s414 = sphi 0, %s414
      %s416 = sphi 0, %s414
      %s417 = sphi 0, %s416
      %s431 = sphi 0, %s417
      %s435 = sphi 0, %s435
      %s437 = sphi 0, %s435
      %s438 = sphi 0, %s437
      %s452 = sphi 0, %s438
      %s456 = sphi 0, %s456
      %s458 = sphi 0, %s456
      %s459 = sphi 0, %s458
      %s473 = sphi 0, %s459
      %s477 = sphi 0, %s477
      %s479 = sphi 0, %s477
      %s480 = sphi 0, %s479
      %s494 = sphi 0, %s480
      %s498 = sphi 0, %s498
      %s500 = sphi 0, %s498
      %s501 = sphi 0, %s500
      %s515 = sphi 0, %s501
      %s519 = sphi 0, %s519
      %s521 = sphi 0, %s519
      %s522 = sphi 0, %s521
      %s536 = sphi 0, %s522
      %s540 = sphi 0, %s540
      %s542 = sphi 0, %s540
      %s543 = sphi 0, %s542
      %s557 = sphi 0, %s543
      %s561 = sphi 0, %s561
      %s563 = sphi 0, %s561
      %s564 = sphi 0, %s563
      %s578 = sphi 0, %s564
      %s582 = sphi 0, %s582
      %s584 = sphi 0, %s582
      %s585 = sphi 0, %s584
      %s599 = sphi 0, %s585
      %s603 = sphi 0, %s603
      %s605 = sphi 0, %s603
      %s606 = sphi 0, %s605
      %s620 = sphi 0, %s606
      %s624 = sphi 0, %s624
      %s626 = sphi 0, %s624
      %s627 = sphi 0, %s626
      %s641 = sphi 0, %s627
      %s645 = sphi 0, %s645
      %s647 = sphi 0, %s645
      %s648 = sphi 0, %s647
      %s662 = sphi 0, %s648
      %s666 = sphi 0, %s666
      %s668 = sphi 0, %s666
      %s669 = sphi 0, %s668
      %s683 = sphi 0, %s669
      %s687 = sphi 0, %s687
      %s689 = sphi 0, %s687
      %s690 = sphi 0, %s689
      %s704 = sphi 0, %s690
      %s708 = sphi 0, %s708
      %s710 = sphi 0, %s708
      %s711 = sphi 0, %s710
      %s725 = sphi 0, %s711
      %s729 = sphi 0, %s729
      %s731 = sphi 0, %s729
      %s732 = sphi 0, %s731
      %s746 = sphi 0, %s732
      %s750 = sphi 0, %s750
      %s752 = sphi 0, %s750
      %s753 = sphi 0, %s752
      %s767 = sphi 0, %s753
      %s771 = sphi 0, %s771
      %s773 = sphi 0, %s771
      %s774 = sphi 0, %s773
      %s788 = sphi 0, %s774
      %s792 = sphi 0, %s792
      %s794 = sphi 0, %s792
      %s795 = sphi 0, %s794
      %s809 = sphi 0, %s795
      %s813 = sphi 0, %s813
      %s815 = sphi 0, %s813
      %s816 = sphi 0, %s815
      %s830 = sphi 0, %s816
      %s834 = sphi 0, %s834
      %s836 = sphi 0, %s834
      %s837 = sphi 0, %s836
      %s851 = sphi 0, %s837
      %s855 = sphi 0, %s855
      %s857 = sphi 0, %s855
      %s858 = sphi 0, %s857
      %s872 = sphi 0, %s858
      %s876 = sphi 0, %s876
      %s878 = sphi 0, %s876
      %s879 = sphi 0, %s878
      %s893 = sphi 0, %s879
      %s897 = sphi 0, %s897
      %s899 = sphi 0, %s897
      %s900 = sphi 0, %s899
      %s914 = sphi 0, %s900
      %s918 = sphi 0, %s918
      %s920 = sphi 0, %s918
      %s921 = sphi 0, %s920
      %s935 = sphi 0, %s921
      %s939 = sphi 0, %s939
      %s941 = sphi 0, %s939
      %s942 = sphi 0, %s941
      %s956 = sphi 0, %s942
      %s960 = sphi 0, %s960
      %s962 = sphi 0, %s960
      %s963 = sphi 0, %s962
      %s977 = sphi 0, %s963
      %s981 = sphi 0, %s981
      %s983 = sphi 0, %s981
      %s984 = sphi 0, %s983
      %s998 = sphi 0, %s984
      %s1002 = sphi 0, %s1002
      %s1004 = sphi 0, %s1002
      %s1005 = sphi 0, %s1004
      %s1019 = sphi 0, %s1005
      %s1023 = sphi 0, %s1023
      %s1025 = sphi 0, %s1023
      %s1026 = sphi 0, %s1025
      %s1040 = sphi 0, %s1026
      %s1044 = sphi 0, %s1044
      %s1046 = sphi 0, %s1044
      %s1047 = sphi 0, %s1046
      %s1061 = sphi 0, %s1047
      %s1065 = sphi 0, %s1065
      %s1067 = sphi 0, %s1065
      %s1068 = sphi 0, %s1067
      %s1082 = sphi 0, %s1068
      %s1086 = sphi 0, %s1086
      %s1088 = sphi 0, %s1086
      %s1089 = sphi 0, %s1088
      %s1103 = sphi 0, %s1089
      %s1107 = sphi 0, %s1107
      %s1109 = sphi 0, %s1107
      %s1110 = sphi 0, %s1109
      %s1124 = sphi 0, %s1110
      %s1128 = sphi 0, %s1128
      %s1130 = sphi 0, %s1128
      %s1131 = sphi 0, %s1130
      %s1145 = sphi 0, %s1131
      %s1149 = sphi 0, %s1149
      %s1151 = sphi 0, %s1149
      %s1152 = sphi 0, %s1151
      %s1166 = sphi 0, %s1152
      %s1170 = sphi 0, %s1170
      %s1172 = sphi 0, %s1170
      %s1173 = sphi 0, %s1172
      %s1187 = sphi 0, %s1173
      %s1191 = sphi 0, %s1191
      %s1193 = sphi 0, %s1191
      %s1194 = sphi 0, %s1193
      %s1208 = sphi 0, %s1194
      %s1212 = sphi 0, %s1212
      %s1214 = sphi 0, %s1212
      %s1215 = sphi 0, %s1214
      %s1229 = sphi 0, %s1215
      %s1233 = sphi 0, %s1233
      %s1235 = sphi 0, %s1233
      %s1236 = sphi 0, %s1235
      %s1250 = sphi 0, %s1236
      %s1254 = sphi 0, %s1254
      %s1256 = sphi 0, %s1254
      %s1257 = sphi 0, %s1256
      %s1271 = sphi 0, %s1257
      %s1275 = sphi 0, %s1275
      %s1277 = sphi 0, %s1275
      %s1278 = sphi 0, %s1277
      %s1292 = sphi 0, %s1278
      %s1296 = sphi 0, %s1296
      %s1298 = sphi 0, %s1296
      %s1299 = sphi 0, %s1298
      %s1313 = sphi 0, %s1299
      %s1317 = sphi 0, %s1317
      %s1319 = sphi 0, %s1317
      %s1320 = sphi 0, %s1319
      %s1334 = sphi 0, %s1320
      %s1338 = sphi 0, %s1338
      %s1340 = sphi 0, %s1338
      %s1341 = sphi 0, %s1340
      %s1355 = sphi 0, %s1341
      %s1359 = sphi 0, %s1359
      %s1361 = sphi 0, %s1359
      %s1362 = sphi 0, %s1361
      %s1376 = sphi 0, %s1362
      %s1380 = sphi 0, %s1380
      %s1382 = sphi 0, %s1380
      %s1383 = sphi 0, %s1382
      %s1397 = sphi 0, %s1383
      %s1401 = sphi 0, %s1401
      %s1403 = sphi 0, %s1401
      %s1404 = sphi 0, %s1403
      %s1418 = sphi 0, %s1404
      %s1422 = sphi 0, %s1422
      %s1424 = sphi 0, %s1422
      %s1425 = sphi 0, %s1424
      %s1439 = sphi 0, %s1425
      %s1443 = sphi 0, %s1443
      %s1445 = sphi 0, %s1443
      %s1446 = sphi 0, %s1445
      %s1460 = sphi 0, %s1446
      %s1464 = sphi 0, %s1464
      %s1466 = sphi 0, %s1464
      %s1467 = sphi 0, %s1466
      %s1481 = sphi 0, %s1467
      %s1485 = sphi 0, %s1485
      %s1487 = sphi 0, %s1485
      %s1488 = sphi 0, %s1487
      %s1502 = sphi 0, %s1488
      %s1506 = sphi 0, %s1506
      %s1508 = sphi 0, %s1506
      %s1509 = sphi 0, %s1508
      %s1523 = sphi 0, %s1509
      %s1527 = sphi 0, %s1527
      %s1529 = sphi 0, %s1527
      %s1530 = sphi 0, %s1529
      %s1544 = sphi 0, %s1530
      %s1548 = sphi 0, %s1548
      %s1550 = sphi 0, %s1548
      %s1551 = sphi 0, %s1550
      %s1565 = sphi 0, %s1551
      %s1569 = sphi 0, %s1569
      %s1571 = sphi 0, %s1569
      %s1572 = sphi 0, %s1571
      %s1586 = sphi 0, %s1572
      %s1592 = sphi 0, %s1594
      %s1595 = sphi 0, %s1592
      %s1596 = sphi 0, %s1595
      %s1612 = sphi 0, %s1596
      %s1618 = sphi 0, %s1620
      %s1621 = sphi 0, %s1618
      %s1622 = sphi 0, %s1621
      %s1638 = sphi 0, %s1622
    $region4: #{timber_encoder_forward.1} parent=1 // loop_header_branch
      %152 = sbr.rel (%p150) target = $region8
    $region5: #{timber_encoder_forward.1} parent=1 // loop_body
      %s154 = ssub.s32 %s149, 1
      %s155 = ssub.s32 %s149, 2
      %s156 = sadd.s32 %s149, 1
      %s157 = ssub.s32 %s149, %s156
      %p158 = scmp.eq.s32.totalorder %s157, 0
      %s160 = sadd.s32 %s159, 1
      %s161 = scalar_select %p158, %s159, %s160
      %p164 = pneg %p158
      %p165 = scmp.eq.s32.totalorder %s149, 1
      %p166 = por %p164, %p165
      %p167 = scmp.ne.s32.totalorder %s159, %s162
      %p168 = scmp.eq.s32.totalorder %s149, 0
      %p169 = por %p167, %p168
      %p170 = scmp.ne.s32.totalorder %s159, %s162
      %p171 = scmp.eq.s32.totalorder %s154, 1
      %p172 = por %p170, %p171
      %p173 = scmp.ne.s32.totalorder %s162, %s163
      %p174 = scmp.eq.s32.totalorder %s154, 0
      %p175 = por %p173, %p174
      %p176 = scmp.ne.s32.totalorder %s162, %s163
      %p177 = scmp.eq.s32.totalorder %s155, 1
      %p178 = por %p176, %p177
      %p180 = scmp.ne.s32.totalorder %s163, %s179
      %p181 = scmp.eq.s32.totalorder %s155, 0
      %p182 = por %p180, %p181
      %s184 = sadd.s32 %s183, 1
      %p187 = scmp.eq.s32.totalorder %s149, 1
      %p188 = scmp.ne.s32.totalorder %s183, %s185
      %p189 = scmp.eq.s32.totalorder %s149, 0
      %p190 = por %p188, %p189
      %p191 = scmp.ne.s32.totalorder %s183, %s185
      %p192 = scmp.eq.s32.totalorder %s154, 1
      %p193 = por %p191, %p192
      %p194 = scmp.ne.s32.totalorder %s185, %s186
      %p195 = scmp.eq.s32.totalorder %s154, 0
      %p196 = por %p194, %p195
      %p197 = scmp.ne.s32.totalorder %s185, %s186
      %p198 = scmp.eq.s32.totalorder %s155, 1
      %p199 = por %p197, %p198
      %p201 = scmp.ne.s32.totalorder %s186, %s200
      %p202 = scmp.eq.s32.totalorder %s155, 0
      %p203 = por %p201, %p202
      %s205 = sadd.s32 %s204, 1
      %p208 = scmp.eq.s32.totalorder %s149, 1
      %p209 = scmp.ne.s32.totalorder %s204, %s206
      %p210 = scmp.eq.s32.totalorder %s149, 0
      %p211 = por %p209, %p210
      %p212 = scmp.ne.s32.totalorder %s204, %s206
      %p213 = scmp.eq.s32.totalorder %s154, 1
      %p214 = por %p212, %p213
      %p215 = scmp.ne.s32.totalorder %s206, %s207
      %p216 = scmp.eq.s32.totalorder %s154, 0
      %p217 = por %p215, %p216
      %p218 = scmp.ne.s32.totalorder %s206, %s207
      %p219 = scmp.eq.s32.totalorder %s155, 1
      %p220 = por %p218, %p219
      %p222 = scmp.ne.s32.totalorder %s207, %s221
      %p223 = scmp.eq.s32.totalorder %s155, 0
      %p224 = por %p222, %p223
      %s226 = sadd.s32 %s225, 1
      %p229 = scmp.eq.s32.totalorder %s149, 1
      %p230 = scmp.ne.s32.totalorder %s225, %s227
      %p231 = scmp.eq.s32.totalorder %s149, 0
      %p232 = por %p230, %p231
      %p233 = scmp.ne.s32.totalorder %s225, %s227
      %p234 = scmp.eq.s32.totalorder %s154, 1
      %p235 = por %p233, %p234
      %p236 = scmp.ne.s32.totalorder %s227, %s228
      %p237 = scmp.eq.s32.totalorder %s154, 0
      %p238 = por %p236, %p237
      %p239 = scmp.ne.s32.totalorder %s227, %s228
      %p240 = scmp.eq.s32.totalorder %s155, 1
      %p241 = por %p239, %p240
      %p243 = scmp.ne.s32.totalorder %s228, %s242
      %p244 = scmp.eq.s32.totalorder %s155, 0
      %p245 = por %p243, %p244
      %s247 = sadd.s32 %s246, 1
      %p250 = scmp.eq.s32.totalorder %s149, 1
      %p251 = scmp.ne.s32.totalorder %s246, %s248
      %p252 = scmp.eq.s32.totalorder %s149, 0
      %p253 = por %p251, %p252
      %p254 = scmp.ne.s32.totalorder %s246, %s248
      %p255 = scmp.eq.s32.totalorder %s154, 1
      %p256 = por %p254, %p255
      %p257 = scmp.ne.s32.totalorder %s248, %s249
      %p258 = scmp.eq.s32.totalorder %s154, 0
      %p259 = por %p257, %p258
      %p260 = scmp.ne.s32.totalorder %s248, %s249
      %p261 = scmp.eq.s32.totalorder %s155, 1
      %p262 = por %p260, %p261
      %p264 = scmp.ne.s32.totalorder %s249, %s263
      %p265 = scmp.eq.s32.totalorder %s155, 0
      %p266 = por %p264, %p265
      %s268 = sadd.s32 %s267, 1
      %p271 = scmp.eq.s32.totalorder %s149, 1
      %p272 = scmp.ne.s32.totalorder %s267, %s269
      %p273 = scmp.eq.s32.totalorder %s149, 0
      %p274 = por %p272, %p273
      %p275 = scmp.ne.s32.totalorder %s267, %s269
      %p276 = scmp.eq.s32.totalorder %s154, 1
      %p277 = por %p275, %p276
      %p278 = scmp.ne.s32.totalorder %s269, %s270
      %p279 = scmp.eq.s32.totalorder %s154, 0
      %p280 = por %p278, %p279
      %p281 = scmp.ne.s32.totalorder %s269, %s270
      %p282 = scmp.eq.s32.totalorder %s155, 1
      %p283 = por %p281, %p282
      %p285 = scmp.ne.s32.totalorder %s270, %s284
      %p286 = scmp.eq.s32.totalorder %s155, 0
      %p287 = por %p285, %p286
      %s289 = sadd.s32 %s288, 1
      %p292 = scmp.eq.s32.totalorder %s149, 1
      %p293 = scmp.ne.s32.totalorder %s288, %s290
      %p294 = scmp.eq.s32.totalorder %s149, 0
      %p295 = por %p293, %p294
      %p296 = scmp.ne.s32.totalorder %s288, %s290
      %p297 = scmp.eq.s32.totalorder %s154, 1
      %p298 = por %p296, %p297
      %p299 = scmp.ne.s32.totalorder %s290, %s291
      %p300 = scmp.eq.s32.totalorder %s154, 0
      %p301 = por %p299, %p300
      %p302 = scmp.ne.s32.totalorder %s290, %s291
      %p303 = scmp.eq.s32.totalorder %s155, 1
      %p304 = por %p302, %p303
      %p306 = scmp.ne.s32.totalorder %s291, %s305
      %p307 = scmp.eq.s32.totalorder %s155, 0
      %p308 = por %p306, %p307
      %s310 = sadd.s32 %s309, 1
      %p313 = scmp.eq.s32.totalorder %s149, 1
      %p314 = scmp.ne.s32.totalorder %s309, %s311
      %p315 = scmp.eq.s32.totalorder %s149, 0
      %p316 = por %p314, %p315
      %p317 = scmp.ne.s32.totalorder %s309, %s311
      %p318 = scmp.eq.s32.totalorder %s154, 1
      %p319 = por %p317, %p318
      %p320 = scmp.ne.s32.totalorder %s311, %s312
      %p321 = scmp.eq.s32.totalorder %s154, 0
      %p322 = por %p320, %p321
      %p323 = scmp.ne.s32.totalorder %s311, %s312
      %p324 = scmp.eq.s32.totalorder %s155, 1
      %p325 = por %p323, %p324
      %p327 = scmp.ne.s32.totalorder %s312, %s326
      %p328 = scmp.eq.s32.totalorder %s155, 0
      %p329 = por %p327, %p328
      %s331 = sadd.s32 %s330, 1
      %p334 = scmp.eq.s32.totalorder %s149, 1
      %p335 = scmp.ne.s32.totalorder %s330, %s332
      %p336 = scmp.eq.s32.totalorder %s149, 0
      %p337 = por %p335, %p336
      %p338 = scmp.ne.s32.totalorder %s330, %s332
      %p339 = scmp.eq.s32.totalorder %s154, 1
      %p340 = por %p338, %p339
      %p341 = scmp.ne.s32.totalorder %s332, %s333
      %p342 = scmp.eq.s32.totalorder %s154, 0
      %p343 = por %p341, %p342
      %p344 = scmp.ne.s32.totalorder %s332, %s333
      %p345 = scmp.eq.s32.totalorder %s155, 1
      %p346 = por %p344, %p345
      %p348 = scmp.ne.s32.totalorder %s333, %s347
      %p349 = scmp.eq.s32.totalorder %s155, 0
      %p350 = por %p348, %p349
      %s352 = sadd.s32 %s351, 1
      %p355 = scmp.eq.s32.totalorder %s149, 1
      %p356 = scmp.ne.s32.totalorder %s351, %s353
      %p357 = scmp.eq.s32.totalorder %s149, 0
      %p358 = por %p356, %p357
      %p359 = scmp.ne.s32.totalorder %s351, %s353
      %p360 = scmp.eq.s32.totalorder %s154, 1
      %p361 = por %p359, %p360
      %p362 = scmp.ne.s32.totalorder %s353, %s354
      %p363 = scmp.eq.s32.totalorder %s154, 0
      %p364 = por %p362, %p363
      %p365 = scmp.ne.s32.totalorder %s353, %s354
      %p366 = scmp.eq.s32.totalorder %s155, 1
      %p367 = por %p365, %p366
      %p369 = scmp.ne.s32.totalorder %s354, %s368
      %p370 = scmp.eq.s32.totalorder %s155, 0
      %p371 = por %p369, %p370
      %s373 = sadd.s32 %s372, 1
      %p376 = scmp.eq.s32.totalorder %s149, 1
      %p377 = scmp.ne.s32.totalorder %s372, %s374
      %p378 = scmp.eq.s32.totalorder %s149, 0
      %p379 = por %p377, %p378
      %p380 = scmp.ne.s32.totalorder %s372, %s374
      %p381 = scmp.eq.s32.totalorder %s154, 1
      %p382 = por %p380, %p381
      %p383 = scmp.ne.s32.totalorder %s374, %s375
      %p384 = scmp.eq.s32.totalorder %s154, 0
      %p385 = por %p383, %p384
      %p386 = scmp.ne.s32.totalorder %s374, %s375
      %p387 = scmp.eq.s32.totalorder %s155, 1
      %p388 = por %p386, %p387
      %p390 = scmp.ne.s32.totalorder %s375, %s389
      %p391 = scmp.eq.s32.totalorder %s155, 0
      %p392 = por %p390, %p391
      %s394 = sadd.s32 %s393, 1
      %p397 = scmp.eq.s32.totalorder %s149, 1
      %p398 = scmp.ne.s32.totalorder %s393, %s395
      %p399 = scmp.eq.s32.totalorder %s149, 0
      %p400 = por %p398, %p399
      %p401 = scmp.ne.s32.totalorder %s393, %s395
      %p402 = scmp.eq.s32.totalorder %s154, 1
      %p403 = por %p401, %p402
      %p404 = scmp.ne.s32.totalorder %s395, %s396
      %p405 = scmp.eq.s32.totalorder %s154, 0
      %p406 = por %p404, %p405
      %p407 = scmp.ne.s32.totalorder %s395, %s396
      %p408 = scmp.eq.s32.totalorder %s155, 1
      %p409 = por %p407, %p408
      %p411 = scmp.ne.s32.totalorder %s396, %s410
      %p412 = scmp.eq.s32.totalorder %s155, 0
      %p413 = por %p411, %p412
      %s415 = sadd.s32 %s414, 1
      %p418 = scmp.eq.s32.totalorder %s149, 1
      %p419 = scmp.ne.s32.totalorder %s414, %s416
      %p420 = scmp.eq.s32.totalorder %s149, 0
      %p421 = por %p419, %p420
      %p422 = scmp.ne.s32.totalorder %s414, %s416
      %p423 = scmp.eq.s32.totalorder %s154, 1
      %p424 = por %p422, %p423
      %p425 = scmp.ne.s32.totalorder %s416, %s417
      %p426 = scmp.eq.s32.totalorder %s154, 0
      %p427 = por %p425, %p426
      %p428 = scmp.ne.s32.totalorder %s416, %s417
      %p429 = scmp.eq.s32.totalorder %s155, 1
      %p430 = por %p428, %p429
      %p432 = scmp.ne.s32.totalorder %s417, %s431
      %p433 = scmp.eq.s32.totalorder %s155, 0
      %p434 = por %p432, %p433
      %s436 = sadd.s32 %s435, 1
      %p439 = scmp.eq.s32.totalorder %s149, 1
      %p440 = scmp.ne.s32.totalorder %s435, %s437
      %p441 = scmp.eq.s32.totalorder %s149, 0
      %p442 = por %p440, %p441
      %p443 = scmp.ne.s32.totalorder %s435, %s437
      %p444 = scmp.eq.s32.totalorder %s154, 1
      %p445 = por %p443, %p444
      %p446 = scmp.ne.s32.totalorder %s437, %s438
      %p447 = scmp.eq.s32.totalorder %s154, 0
      %p448 = por %p446, %p447
      %p449 = scmp.ne.s32.totalorder %s437, %s438
      %p450 = scmp.eq.s32.totalorder %s155, 1
      %p451 = por %p449, %p450
      %p453 = scmp.ne.s32.totalorder %s438, %s452
      %p454 = scmp.eq.s32.totalorder %s155, 0
      %p455 = por %p453, %p454
      %s457 = sadd.s32 %s456, 1
      %p460 = scmp.eq.s32.totalorder %s149, 1
      %p461 = scmp.ne.s32.totalorder %s456, %s458
      %p462 = scmp.eq.s32.totalorder %s149, 0
      %p463 = por %p461, %p462
      %p464 = scmp.ne.s32.totalorder %s456, %s458
      %p465 = scmp.eq.s32.totalorder %s154, 1
      %p466 = por %p464, %p465
      %p467 = scmp.ne.s32.totalorder %s458, %s459
      %p468 = scmp.eq.s32.totalorder %s154, 0
      %p469 = por %p467, %p468
      %p470 = scmp.ne.s32.totalorder %s458, %s459
      %p471 = scmp.eq.s32.totalorder %s155, 1
      %p472 = por %p470, %p471
      %p474 = scmp.ne.s32.totalorder %s459, %s473
      %p475 = scmp.eq.s32.totalorder %s155, 0
      %p476 = por %p474, %p475
      %s478 = sadd.s32 %s477, 1
      %p481 = scmp.eq.s32.totalorder %s149, 1
      %p482 = scmp.ne.s32.totalorder %s477, %s479
      %p483 = scmp.eq.s32.totalorder %s149, 0
      %p484 = por %p482, %p483
      %p485 = scmp.ne.s32.totalorder %s477, %s479
      %p486 = scmp.eq.s32.totalorder %s154, 1
      %p487 = por %p485, %p486
      %p488 = scmp.ne.s32.totalorder %s479, %s480
      %p489 = scmp.eq.s32.totalorder %s154, 0
      %p490 = por %p488, %p489
      %p491 = scmp.ne.s32.totalorder %s479, %s480
      %p492 = scmp.eq.s32.totalorder %s155, 1
      %p493 = por %p491, %p492
      %p495 = scmp.ne.s32.totalorder %s480, %s494
      %p496 = scmp.eq.s32.totalorder %s155, 0
      %p497 = por %p495, %p496
      %s499 = sadd.s32 %s498, 1
      %p502 = scmp.eq.s32.totalorder %s149, 1
      %p503 = scmp.ne.s32.totalorder %s498, %s500
      %p504 = scmp.eq.s32.totalorder %s149, 0
      %p505 = por %p503, %p504
      %p506 = scmp.ne.s32.totalorder %s498, %s500
      %p507 = scmp.eq.s32.totalorder %s154, 1
      %p508 = por %p506, %p507
      %p509 = scmp.ne.s32.totalorder %s500, %s501
      %p510 = scmp.eq.s32.totalorder %s154, 0
      %p511 = por %p509, %p510
      %p512 = scmp.ne.s32.totalorder %s500, %s501
      %p513 = scmp.eq.s32.totalorder %s155, 1
      %p514 = por %p512, %p513
      %p516 = scmp.ne.s32.totalorder %s501, %s515
      %p517 = scmp.eq.s32.totalorder %s155, 0
      %p518 = por %p516, %p517
      %s520 = sadd.s32 %s519, 1
      %p523 = scmp.eq.s32.totalorder %s149, 1
      %p524 = scmp.ne.s32.totalorder %s519, %s521
      %p525 = scmp.eq.s32.totalorder %s149, 0
      %p526 = por %p524, %p525
      %p527 = scmp.ne.s32.totalorder %s519, %s521
      %p528 = scmp.eq.s32.totalorder %s154, 1
      %p529 = por %p527, %p528
      %p530 = scmp.ne.s32.totalorder %s521, %s522
      %p531 = scmp.eq.s32.totalorder %s154, 0
      %p532 = por %p530, %p531
      %p533 = scmp.ne.s32.totalorder %s521, %s522
      %p534 = scmp.eq.s32.totalorder %s155, 1
      %p535 = por %p533, %p534
      %p537 = scmp.ne.s32.totalorder %s522, %s536
      %p538 = scmp.eq.s32.totalorder %s155, 0
      %p539 = por %p537, %p538
      %s541 = sadd.s32 %s540, 1
      %p544 = scmp.eq.s32.totalorder %s149, 1
      %p545 = scmp.ne.s32.totalorder %s540, %s542
      %p546 = scmp.eq.s32.totalorder %s149, 0
      %p547 = por %p545, %p546
      %p548 = scmp.ne.s32.totalorder %s540, %s542
      %p549 = scmp.eq.s32.totalorder %s154, 1
      %p550 = por %p548, %p549
      %p551 = scmp.ne.s32.totalorder %s542, %s543
      %p552 = scmp.eq.s32.totalorder %s154, 0
      %p553 = por %p551, %p552
      %p554 = scmp.ne.s32.totalorder %s542, %s543
      %p555 = scmp.eq.s32.totalorder %s155, 1
      %p556 = por %p554, %p555
      %p558 = scmp.ne.s32.totalorder %s543, %s557
      %p559 = scmp.eq.s32.totalorder %s155, 0
      %p560 = por %p558, %p559
      %s562 = sadd.s32 %s561, 1
      %p565 = scmp.eq.s32.totalorder %s149, 1
      %p566 = scmp.ne.s32.totalorder %s561, %s563
      %p567 = scmp.eq.s32.totalorder %s149, 0
      %p568 = por %p566, %p567
      %p569 = scmp.ne.s32.totalorder %s561, %s563
      %p570 = scmp.eq.s32.totalorder %s154, 1
      %p571 = por %p569, %p570
      %p572 = scmp.ne.s32.totalorder %s563, %s564
      %p573 = scmp.eq.s32.totalorder %s154, 0
      %p574 = por %p572, %p573
      %p575 = scmp.ne.s32.totalorder %s563, %s564
      %p576 = scmp.eq.s32.totalorder %s155, 1
      %p577 = por %p575, %p576
      %p579 = scmp.ne.s32.totalorder %s564, %s578
      %p580 = scmp.eq.s32.totalorder %s155, 0
      %p581 = por %p579, %p580
      %s583 = sadd.s32 %s582, 1
      %p586 = scmp.eq.s32.totalorder %s149, 1
      %p587 = scmp.ne.s32.totalorder %s582, %s584
      %p588 = scmp.eq.s32.totalorder %s149, 0
      %p589 = por %p587, %p588
      %p590 = scmp.ne.s32.totalorder %s582, %s584
      %p591 = scmp.eq.s32.totalorder %s154, 1
      %p592 = por %p590, %p591
      %p593 = scmp.ne.s32.totalorder %s584, %s585
      %p594 = scmp.eq.s32.totalorder %s154, 0
      %p595 = por %p593, %p594
      %p596 = scmp.ne.s32.totalorder %s584, %s585
      %p597 = scmp.eq.s32.totalorder %s155, 1
      %p598 = por %p596, %p597
      %p600 = scmp.ne.s32.totalorder %s585, %s599
      %p601 = scmp.eq.s32.totalorder %s155, 0
      %p602 = por %p600, %p601
      %s604 = sadd.s32 %s603, 1
      %p607 = scmp.eq.s32.totalorder %s149, 1
      %p608 = scmp.ne.s32.totalorder %s603, %s605
      %p609 = scmp.eq.s32.totalorder %s149, 0
      %p610 = por %p608, %p609
      %p611 = scmp.ne.s32.totalorder %s603, %s605
      %p612 = scmp.eq.s32.totalorder %s154, 1
      %p613 = por %p611, %p612
      %p614 = scmp.ne.s32.totalorder %s605, %s606
      %p615 = scmp.eq.s32.totalorder %s154, 0
      %p616 = por %p614, %p615
      %p617 = scmp.ne.s32.totalorder %s605, %s606
      %p618 = scmp.eq.s32.totalorder %s155, 1
      %p619 = por %p617, %p618
      %p621 = scmp.ne.s32.totalorder %s606, %s620
      %p622 = scmp.eq.s32.totalorder %s155, 0
      %p623 = por %p621, %p622
      %s625 = sadd.s32 %s624, 1
      %p628 = scmp.eq.s32.totalorder %s149, 1
      %p629 = scmp.ne.s32.totalorder %s624, %s626
      %p630 = scmp.eq.s32.totalorder %s149, 0
      %p631 = por %p629, %p630
      %p632 = scmp.ne.s32.totalorder %s624, %s626
      %p633 = scmp.eq.s32.totalorder %s154, 1
      %p634 = por %p632, %p633
      %p635 = scmp.ne.s32.totalorder %s626, %s627
      %p636 = scmp.eq.s32.totalorder %s154, 0
      %p637 = por %p635, %p636
      %p638 = scmp.ne.s32.totalorder %s626, %s627
      %p639 = scmp.eq.s32.totalorder %s155, 1
      %p640 = por %p638, %p639
      %p642 = scmp.ne.s32.totalorder %s627, %s641
      %p643 = scmp.eq.s32.totalorder %s155, 0
      %p644 = por %p642, %p643
      %s646 = sadd.s32 %s645, 1
      %p649 = scmp.eq.s32.totalorder %s149, 1
      %p650 = scmp.ne.s32.totalorder %s645, %s647
      %p651 = scmp.eq.s32.totalorder %s149, 0
      %p652 = por %p650, %p651
      %p653 = scmp.ne.s32.totalorder %s645, %s647
      %p654 = scmp.eq.s32.totalorder %s154, 1
      %p655 = por %p653, %p654
      %p656 = scmp.ne.s32.totalorder %s647, %s648
      %p657 = scmp.eq.s32.totalorder %s154, 0
      %p658 = por %p656, %p657
      %p659 = scmp.ne.s32.totalorder %s647, %s648
      %p660 = scmp.eq.s32.totalorder %s155, 1
      %p661 = por %p659, %p660
      %p663 = scmp.ne.s32.totalorder %s648, %s662
      %p664 = scmp.eq.s32.totalorder %s155, 0
      %p665 = por %p663, %p664
      %s667 = sadd.s32 %s666, 1
      %p670 = scmp.eq.s32.totalorder %s149, 1
      %p671 = scmp.ne.s32.totalorder %s666, %s668
      %p672 = scmp.eq.s32.totalorder %s149, 0
      %p673 = por %p671, %p672
      %p674 = scmp.ne.s32.totalorder %s666, %s668
      %p675 = scmp.eq.s32.totalorder %s154, 1
      %p676 = por %p674, %p675
      %p677 = scmp.ne.s32.totalorder %s668, %s669
      %p678 = scmp.eq.s32.totalorder %s154, 0
      %p679 = por %p677, %p678
      %p680 = scmp.ne.s32.totalorder %s668, %s669
      %p681 = scmp.eq.s32.totalorder %s155, 1
      %p682 = por %p680, %p681
      %p684 = scmp.ne.s32.totalorder %s669, %s683
      %p685 = scmp.eq.s32.totalorder %s155, 0
      %p686 = por %p684, %p685
      %s688 = sadd.s32 %s687, 1
      %p691 = scmp.eq.s32.totalorder %s149, 1
      %p692 = scmp.ne.s32.totalorder %s687, %s689
      %p693 = scmp.eq.s32.totalorder %s149, 0
      %p694 = por %p692, %p693
      %p695 = scmp.ne.s32.totalorder %s687, %s689
      %p696 = scmp.eq.s32.totalorder %s154, 1
      %p697 = por %p695, %p696
      %p698 = scmp.ne.s32.totalorder %s689, %s690
      %p699 = scmp.eq.s32.totalorder %s154, 0
      %p700 = por %p698, %p699
      %p701 = scmp.ne.s32.totalorder %s689, %s690
      %p702 = scmp.eq.s32.totalorder %s155, 1
      %p703 = por %p701, %p702
      %p705 = scmp.ne.s32.totalorder %s690, %s704
      %p706 = scmp.eq.s32.totalorder %s155, 0
      %p707 = por %p705, %p706
      %s709 = sadd.s32 %s708, 1
      %p712 = scmp.eq.s32.totalorder %s149, 1
      %p713 = scmp.ne.s32.totalorder %s708, %s710
      %p714 = scmp.eq.s32.totalorder %s149, 0
      %p715 = por %p713, %p714
      %p716 = scmp.ne.s32.totalorder %s708, %s710
      %p717 = scmp.eq.s32.totalorder %s154, 1
      %p718 = por %p716, %p717
      %p719 = scmp.ne.s32.totalorder %s710, %s711
      %p720 = scmp.eq.s32.totalorder %s154, 0
      %p721 = por %p719, %p720
      %p722 = scmp.ne.s32.totalorder %s710, %s711
      %p723 = scmp.eq.s32.totalorder %s155, 1
      %p724 = por %p722, %p723
      %p726 = scmp.ne.s32.totalorder %s711, %s725
      %p727 = scmp.eq.s32.totalorder %s155, 0
      %p728 = por %p726, %p727
      %s730 = sadd.s32 %s729, 1
      %p733 = scmp.eq.s32.totalorder %s149, 1
      %p734 = scmp.ne.s32.totalorder %s729, %s731
      %p735 = scmp.eq.s32.totalorder %s149, 0
      %p736 = por %p734, %p735
      %p737 = scmp.ne.s32.totalorder %s729, %s731
      %p738 = scmp.eq.s32.totalorder %s154, 1
      %p739 = por %p737, %p738
      %p740 = scmp.ne.s32.totalorder %s731, %s732
      %p741 = scmp.eq.s32.totalorder %s154, 0
      %p742 = por %p740, %p741
      %p743 = scmp.ne.s32.totalorder %s731, %s732
      %p744 = scmp.eq.s32.totalorder %s155, 1
      %p745 = por %p743, %p744
      %p747 = scmp.ne.s32.totalorder %s732, %s746
      %p748 = scmp.eq.s32.totalorder %s155, 0
      %p749 = por %p747, %p748
      %s751 = sadd.s32 %s750, 1
      %p754 = scmp.eq.s32.totalorder %s149, 1
      %p755 = scmp.ne.s32.totalorder %s750, %s752
      %p756 = scmp.eq.s32.totalorder %s149, 0
      %p757 = por %p755, %p756
      %p758 = scmp.ne.s32.totalorder %s750, %s752
      %p759 = scmp.eq.s32.totalorder %s154, 1
      %p760 = por %p758, %p759
      %p761 = scmp.ne.s32.totalorder %s752, %s753
      %p762 = scmp.eq.s32.totalorder %s154, 0
      %p763 = por %p761, %p762
      %p764 = scmp.ne.s32.totalorder %s752, %s753
      %p765 = scmp.eq.s32.totalorder %s155, 1
      %p766 = por %p764, %p765
      %p768 = scmp.ne.s32.totalorder %s753, %s767
      %p769 = scmp.eq.s32.totalorder %s155, 0
      %p770 = por %p768, %p769
      %s772 = sadd.s32 %s771, 1
      %p775 = scmp.eq.s32.totalorder %s149, 1
      %p776 = scmp.ne.s32.totalorder %s771, %s773
      %p777 = scmp.eq.s32.totalorder %s149, 0
      %p778 = por %p776, %p777
      %p779 = scmp.ne.s32.totalorder %s771, %s773
      %p780 = scmp.eq.s32.totalorder %s154, 1
      %p781 = por %p779, %p780
      %p782 = scmp.ne.s32.totalorder %s773, %s774
      %p783 = scmp.eq.s32.totalorder %s154, 0
      %p784 = por %p782, %p783
      %p785 = scmp.ne.s32.totalorder %s773, %s774
      %p786 = scmp.eq.s32.totalorder %s155, 1
      %p787 = por %p785, %p786
      %p789 = scmp.ne.s32.totalorder %s774, %s788
      %p790 = scmp.eq.s32.totalorder %s155, 0
      %p791 = por %p789, %p790
      %s793 = sadd.s32 %s792, 1
      %p796 = scmp.eq.s32.totalorder %s149, 1
      %p797 = scmp.ne.s32.totalorder %s792, %s794
      %p798 = scmp.eq.s32.totalorder %s149, 0
      %p799 = por %p797, %p798
      %p800 = scmp.ne.s32.totalorder %s792, %s794
      %p801 = scmp.eq.s32.totalorder %s154, 1
      %p802 = por %p800, %p801
      %p803 = scmp.ne.s32.totalorder %s794, %s795
      %p804 = scmp.eq.s32.totalorder %s154, 0
      %p805 = por %p803, %p804
      %p806 = scmp.ne.s32.totalorder %s794, %s795
      %p807 = scmp.eq.s32.totalorder %s155, 1
      %p808 = por %p806, %p807
      %p810 = scmp.ne.s32.totalorder %s795, %s809
      %p811 = scmp.eq.s32.totalorder %s155, 0
      %p812 = por %p810, %p811
      %s814 = sadd.s32 %s813, 1
      %p817 = scmp.eq.s32.totalorder %s149, 1
      %p818 = scmp.ne.s32.totalorder %s813, %s815
      %p819 = scmp.eq.s32.totalorder %s149, 0
      %p820 = por %p818, %p819
      %p821 = scmp.ne.s32.totalorder %s813, %s815
      %p822 = scmp.eq.s32.totalorder %s154, 1
      %p823 = por %p821, %p822
      %p824 = scmp.ne.s32.totalorder %s815, %s816
      %p825 = scmp.eq.s32.totalorder %s154, 0
      %p826 = por %p824, %p825
      %p827 = scmp.ne.s32.totalorder %s815, %s816
      %p828 = scmp.eq.s32.totalorder %s155, 1
      %p829 = por %p827, %p828
      %p831 = scmp.ne.s32.totalorder %s816, %s830
      %p832 = scmp.eq.s32.totalorder %s155, 0
      %p833 = por %p831, %p832
      %s835 = sadd.s32 %s834, 1
      %p838 = scmp.eq.s32.totalorder %s149, 1
      %p839 = scmp.ne.s32.totalorder %s834, %s836
      %p840 = scmp.eq.s32.totalorder %s149, 0
      %p841 = por %p839, %p840
      %p842 = scmp.ne.s32.totalorder %s834, %s836
      %p843 = scmp.eq.s32.totalorder %s154, 1
      %p844 = por %p842, %p843
      %p845 = scmp.ne.s32.totalorder %s836, %s837
      %p846 = scmp.eq.s32.totalorder %s154, 0
      %p847 = por %p845, %p846
      %p848 = scmp.ne.s32.totalorder %s836, %s837
      %p849 = scmp.eq.s32.totalorder %s155, 1
      %p850 = por %p848, %p849
      %p852 = scmp.ne.s32.totalorder %s837, %s851
      %p853 = scmp.eq.s32.totalorder %s155, 0
      %p854 = por %p852, %p853
      %s856 = sadd.s32 %s855, 1
      %p859 = scmp.eq.s32.totalorder %s149, 1
      %p860 = scmp.ne.s32.totalorder %s855, %s857
      %p861 = scmp.eq.s32.totalorder %s149, 0
      %p862 = por %p860, %p861
      %p863 = scmp.ne.s32.totalorder %s855, %s857
      %p864 = scmp.eq.s32.totalorder %s154, 1
      %p865 = por %p863, %p864
      %p866 = scmp.ne.s32.totalorder %s857, %s858
      %p867 = scmp.eq.s32.totalorder %s154, 0
      %p868 = por %p866, %p867
      %p869 = scmp.ne.s32.totalorder %s857, %s858
      %p870 = scmp.eq.s32.totalorder %s155, 1
      %p871 = por %p869, %p870
      %p873 = scmp.ne.s32.totalorder %s858, %s872
      %p874 = scmp.eq.s32.totalorder %s155, 0
      %p875 = por %p873, %p874
      %s877 = sadd.s32 %s876, 1
      %p880 = scmp.eq.s32.totalorder %s149, 1
      %p881 = scmp.ne.s32.totalorder %s876, %s878
      %p882 = scmp.eq.s32.totalorder %s149, 0
      %p883 = por %p881, %p882
      %p884 = scmp.ne.s32.totalorder %s876, %s878
      %p885 = scmp.eq.s32.totalorder %s154, 1
      %p886 = por %p884, %p885
      %p887 = scmp.ne.s32.totalorder %s878, %s879
      %p888 = scmp.eq.s32.totalorder %s154, 0
      %p889 = por %p887, %p888
      %p890 = scmp.ne.s32.totalorder %s878, %s879
      %p891 = scmp.eq.s32.totalorder %s155, 1
      %p892 = por %p890, %p891
      %p894 = scmp.ne.s32.totalorder %s879, %s893
      %p895 = scmp.eq.s32.totalorder %s155, 0
      %p896 = por %p894, %p895
      %s898 = sadd.s32 %s897, 1
      %p901 = scmp.eq.s32.totalorder %s149, 1
      %p902 = scmp.ne.s32.totalorder %s897, %s899
      %p903 = scmp.eq.s32.totalorder %s149, 0
      %p904 = por %p902, %p903
      %p905 = scmp.ne.s32.totalorder %s897, %s899
      %p906 = scmp.eq.s32.totalorder %s154, 1
      %p907 = por %p905, %p906
      %p908 = scmp.ne.s32.totalorder %s899, %s900
      %p909 = scmp.eq.s32.totalorder %s154, 0
      %p910 = por %p908, %p909
      %p911 = scmp.ne.s32.totalorder %s899, %s900
      %p912 = scmp.eq.s32.totalorder %s155, 1
      %p913 = por %p911, %p912
      %p915 = scmp.ne.s32.totalorder %s900, %s914
      %p916 = scmp.eq.s32.totalorder %s155, 0
      %p917 = por %p915, %p916
      %s919 = sadd.s32 %s918, 1
      %p922 = scmp.eq.s32.totalorder %s149, 1
      %p923 = scmp.ne.s32.totalorder %s918, %s920
      %p924 = scmp.eq.s32.totalorder %s149, 0
      %p925 = por %p923, %p924
      %p926 = scmp.ne.s32.totalorder %s918, %s920
      %p927 = scmp.eq.s32.totalorder %s154, 1
      %p928 = por %p926, %p927
      %p929 = scmp.ne.s32.totalorder %s920, %s921
      %p930 = scmp.eq.s32.totalorder %s154, 0
      %p931 = por %p929, %p930
      %p932 = scmp.ne.s32.totalorder %s920, %s921
      %p933 = scmp.eq.s32.totalorder %s155, 1
      %p934 = por %p932, %p933
      %p936 = scmp.ne.s32.totalorder %s921, %s935
      %p937 = scmp.eq.s32.totalorder %s155, 0
      %p938 = por %p936, %p937
      %s940 = sadd.s32 %s939, 1
      %p943 = scmp.eq.s32.totalorder %s149, 1
      %p944 = scmp.ne.s32.totalorder %s939, %s941
      %p945 = scmp.eq.s32.totalorder %s149, 0
      %p946 = por %p944, %p945
      %p947 = scmp.ne.s32.totalorder %s939, %s941
      %p948 = scmp.eq.s32.totalorder %s154, 1
      %p949 = por %p947, %p948
      %p950 = scmp.ne.s32.totalorder %s941, %s942
      %p951 = scmp.eq.s32.totalorder %s154, 0
      %p952 = por %p950, %p951
      %p953 = scmp.ne.s32.totalorder %s941, %s942
      %p954 = scmp.eq.s32.totalorder %s155, 1
      %p955 = por %p953, %p954
      %p957 = scmp.ne.s32.totalorder %s942, %s956
      %p958 = scmp.eq.s32.totalorder %s155, 0
      %p959 = por %p957, %p958
      %s961 = sadd.s32 %s960, 1
      %p964 = scmp.eq.s32.totalorder %s149, 1
      %p965 = scmp.ne.s32.totalorder %s960, %s962
      %p966 = scmp.eq.s32.totalorder %s149, 0
      %p967 = por %p965, %p966
      %p968 = scmp.ne.s32.totalorder %s960, %s962
      %p969 = scmp.eq.s32.totalorder %s154, 1
      %p970 = por %p968, %p969
      %p971 = scmp.ne.s32.totalorder %s962, %s963
      %p972 = scmp.eq.s32.totalorder %s154, 0
      %p973 = por %p971, %p972
      %p974 = scmp.ne.s32.totalorder %s962, %s963
      %p975 = scmp.eq.s32.totalorder %s155, 1
      %p976 = por %p974, %p975
      %p978 = scmp.ne.s32.totalorder %s963, %s977
      %p979 = scmp.eq.s32.totalorder %s155, 0
      %p980 = por %p978, %p979
      %s982 = sadd.s32 %s981, 1
      %p985 = scmp.eq.s32.totalorder %s149, 1
      %p986 = scmp.ne.s32.totalorder %s981, %s983
      %p987 = scmp.eq.s32.totalorder %s149, 0
      %p988 = por %p986, %p987
      %p989 = scmp.ne.s32.totalorder %s981, %s983
      %p990 = scmp.eq.s32.totalorder %s154, 1
      %p991 = por %p989, %p990
      %p992 = scmp.ne.s32.totalorder %s983, %s984
      %p993 = scmp.eq.s32.totalorder %s154, 0
      %p994 = por %p992, %p993
      %p995 = scmp.ne.s32.totalorder %s983, %s984
      %p996 = scmp.eq.s32.totalorder %s155, 1
      %p997 = por %p995, %p996
      %p999 = scmp.ne.s32.totalorder %s984, %s998
      %p1000 = scmp.eq.s32.totalorder %s155, 0
      %p1001 = por %p999, %p1000
      %s1003 = sadd.s32 %s1002, 1
      %p1006 = scmp.eq.s32.totalorder %s149, 1
      %p1007 = scmp.ne.s32.totalorder %s1002, %s1004
      %p1008 = scmp.eq.s32.totalorder %s149, 0
      %p1009 = por %p1007, %p1008
      %p1010 = scmp.ne.s32.totalorder %s1002, %s1004
      %p1011 = scmp.eq.s32.totalorder %s154, 1
      %p1012 = por %p1010, %p1011
      %p1013 = scmp.ne.s32.totalorder %s1004, %s1005
      %p1014 = scmp.eq.s32.totalorder %s154, 0
      %p1015 = por %p1013, %p1014
      %p1016 = scmp.ne.s32.totalorder %s1004, %s1005
      %p1017 = scmp.eq.s32.totalorder %s155, 1
      %p1018 = por %p1016, %p1017
      %p1020 = scmp.ne.s32.totalorder %s1005, %s1019
      %p1021 = scmp.eq.s32.totalorder %s155, 0
      %p1022 = por %p1020, %p1021
      %s1024 = sadd.s32 %s1023, 1
      %p1027 = scmp.eq.s32.totalorder %s149, 1
      %p1028 = scmp.ne.s32.totalorder %s1023, %s1025
      %p1029 = scmp.eq.s32.totalorder %s149, 0
      %p1030 = por %p1028, %p1029
      %p1031 = scmp.ne.s32.totalorder %s1023, %s1025
      %p1032 = scmp.eq.s32.totalorder %s154, 1
      %p1033 = por %p1031, %p1032
      %p1034 = scmp.ne.s32.totalorder %s1025, %s1026
      %p1035 = scmp.eq.s32.totalorder %s154, 0
      %p1036 = por %p1034, %p1035
      %p1037 = scmp.ne.s32.totalorder %s1025, %s1026
      %p1038 = scmp.eq.s32.totalorder %s155, 1
      %p1039 = por %p1037, %p1038
      %p1041 = scmp.ne.s32.totalorder %s1026, %s1040
      %p1042 = scmp.eq.s32.totalorder %s155, 0
      %p1043 = por %p1041, %p1042
      %s1045 = sadd.s32 %s1044, 1
      %p1048 = scmp.eq.s32.totalorder %s149, 1
      %p1049 = scmp.ne.s32.totalorder %s1044, %s1046
      %p1050 = scmp.eq.s32.totalorder %s149, 0
      %p1051 = por %p1049, %p1050
      %p1052 = scmp.ne.s32.totalorder %s1044, %s1046
      %p1053 = scmp.eq.s32.totalorder %s154, 1
      %p1054 = por %p1052, %p1053
      %p1055 = scmp.ne.s32.totalorder %s1046, %s1047
      %p1056 = scmp.eq.s32.totalorder %s154, 0
      %p1057 = por %p1055, %p1056
      %p1058 = scmp.ne.s32.totalorder %s1046, %s1047
      %p1059 = scmp.eq.s32.totalorder %s155, 1
      %p1060 = por %p1058, %p1059
      %p1062 = scmp.ne.s32.totalorder %s1047, %s1061
      %p1063 = scmp.eq.s32.totalorder %s155, 0
      %p1064 = por %p1062, %p1063
      %s1066 = sadd.s32 %s1065, 1
      %p1069 = scmp.eq.s32.totalorder %s149, 1
      %p1070 = scmp.ne.s32.totalorder %s1065, %s1067
      %p1071 = scmp.eq.s32.totalorder %s149, 0
      %p1072 = por %p1070, %p1071
      %p1073 = scmp.ne.s32.totalorder %s1065, %s1067
      %p1074 = scmp.eq.s32.totalorder %s154, 1
      %p1075 = por %p1073, %p1074
      %p1076 = scmp.ne.s32.totalorder %s1067, %s1068
      %p1077 = scmp.eq.s32.totalorder %s154, 0
      %p1078 = por %p1076, %p1077
      %p1079 = scmp.ne.s32.totalorder %s1067, %s1068
      %p1080 = scmp.eq.s32.totalorder %s155, 1
      %p1081 = por %p1079, %p1080
      %p1083 = scmp.ne.s32.totalorder %s1068, %s1082
      %p1084 = scmp.eq.s32.totalorder %s155, 0
      %p1085 = por %p1083, %p1084
      %s1087 = sadd.s32 %s1086, 1
      %p1090 = scmp.eq.s32.totalorder %s149, 1
      %p1091 = scmp.ne.s32.totalorder %s1086, %s1088
      %p1092 = scmp.eq.s32.totalorder %s149, 0
      %p1093 = por %p1091, %p1092
      %p1094 = scmp.ne.s32.totalorder %s1086, %s1088
      %p1095 = scmp.eq.s32.totalorder %s154, 1
      %p1096 = por %p1094, %p1095
      %p1097 = scmp.ne.s32.totalorder %s1088, %s1089
      %p1098 = scmp.eq.s32.totalorder %s154, 0
      %p1099 = por %p1097, %p1098
      %p1100 = scmp.ne.s32.totalorder %s1088, %s1089
      %p1101 = scmp.eq.s32.totalorder %s155, 1
      %p1102 = por %p1100, %p1101
      %p1104 = scmp.ne.s32.totalorder %s1089, %s1103
      %p1105 = scmp.eq.s32.totalorder %s155, 0
      %p1106 = por %p1104, %p1105
      %s1108 = sadd.s32 %s1107, 1
      %p1111 = scmp.eq.s32.totalorder %s149, 1
      %p1112 = scmp.ne.s32.totalorder %s1107, %s1109
      %p1113 = scmp.eq.s32.totalorder %s149, 0
      %p1114 = por %p1112, %p1113
      %p1115 = scmp.ne.s32.totalorder %s1107, %s1109
      %p1116 = scmp.eq.s32.totalorder %s154, 1
      %p1117 = por %p1115, %p1116
      %p1118 = scmp.ne.s32.totalorder %s1109, %s1110
      %p1119 = scmp.eq.s32.totalorder %s154, 0
      %p1120 = por %p1118, %p1119
      %p1121 = scmp.ne.s32.totalorder %s1109, %s1110
      %p1122 = scmp.eq.s32.totalorder %s155, 1
      %p1123 = por %p1121, %p1122
      %p1125 = scmp.ne.s32.totalorder %s1110, %s1124
      %p1126 = scmp.eq.s32.totalorder %s155, 0
      %p1127 = por %p1125, %p1126
      %s1129 = sadd.s32 %s1128, 1
      %p1132 = scmp.eq.s32.totalorder %s149, 1
      %p1133 = scmp.ne.s32.totalorder %s1128, %s1130
      %p1134 = scmp.eq.s32.totalorder %s149, 0
      %p1135 = por %p1133, %p1134
      %p1136 = scmp.ne.s32.totalorder %s1128, %s1130
      %p1137 = scmp.eq.s32.totalorder %s154, 1
      %p1138 = por %p1136, %p1137
      %p1139 = scmp.ne.s32.totalorder %s1130, %s1131
      %p1140 = scmp.eq.s32.totalorder %s154, 0
      %p1141 = por %p1139, %p1140
      %p1142 = scmp.ne.s32.totalorder %s1130, %s1131
      %p1143 = scmp.eq.s32.totalorder %s155, 1
      %p1144 = por %p1142, %p1143
      %p1146 = scmp.ne.s32.totalorder %s1131, %s1145
      %p1147 = scmp.eq.s32.totalorder %s155, 0
      %p1148 = por %p1146, %p1147
      %s1150 = sadd.s32 %s1149, 1
      %p1153 = scmp.eq.s32.totalorder %s149, 1
      %p1154 = scmp.ne.s32.totalorder %s1149, %s1151
      %p1155 = scmp.eq.s32.totalorder %s149, 0
      %p1156 = por %p1154, %p1155
      %p1157 = scmp.ne.s32.totalorder %s1149, %s1151
      %p1158 = scmp.eq.s32.totalorder %s154, 1
      %p1159 = por %p1157, %p1158
      %p1160 = scmp.ne.s32.totalorder %s1151, %s1152
      %p1161 = scmp.eq.s32.totalorder %s154, 0
      %p1162 = por %p1160, %p1161
      %p1163 = scmp.ne.s32.totalorder %s1151, %s1152
      %p1164 = scmp.eq.s32.totalorder %s155, 1
      %p1165 = por %p1163, %p1164
      %p1167 = scmp.ne.s32.totalorder %s1152, %s1166
      %p1168 = scmp.eq.s32.totalorder %s155, 0
      %p1169 = por %p1167, %p1168
      %s1171 = sadd.s32 %s1170, 1
      %p1174 = scmp.eq.s32.totalorder %s149, 1
      %p1175 = scmp.ne.s32.totalorder %s1170, %s1172
      %p1176 = scmp.eq.s32.totalorder %s149, 0
      %p1177 = por %p1175, %p1176
      %p1178 = scmp.ne.s32.totalorder %s1170, %s1172
      %p1179 = scmp.eq.s32.totalorder %s154, 1
      %p1180 = por %p1178, %p1179
      %p1181 = scmp.ne.s32.totalorder %s1172, %s1173
      %p1182 = scmp.eq.s32.totalorder %s154, 0
      %p1183 = por %p1181, %p1182
      %p1184 = scmp.ne.s32.totalorder %s1172, %s1173
      %p1185 = scmp.eq.s32.totalorder %s155, 1
      %p1186 = por %p1184, %p1185
      %p1188 = scmp.ne.s32.totalorder %s1173, %s1187
      %p1189 = scmp.eq.s32.totalorder %s155, 0
      %p1190 = por %p1188, %p1189
      %s1192 = sadd.s32 %s1191, 1
      %p1195 = scmp.eq.s32.totalorder %s149, 1
      %p1196 = scmp.ne.s32.totalorder %s1191, %s1193
      %p1197 = scmp.eq.s32.totalorder %s149, 0
      %p1198 = por %p1196, %p1197
      %p1199 = scmp.ne.s32.totalorder %s1191, %s1193
      %p1200 = scmp.eq.s32.totalorder %s154, 1
      %p1201 = por %p1199, %p1200
      %p1202 = scmp.ne.s32.totalorder %s1193, %s1194
      %p1203 = scmp.eq.s32.totalorder %s154, 0
      %p1204 = por %p1202, %p1203
      %p1205 = scmp.ne.s32.totalorder %s1193, %s1194
      %p1206 = scmp.eq.s32.totalorder %s155, 1
      %p1207 = por %p1205, %p1206
      %p1209 = scmp.ne.s32.totalorder %s1194, %s1208
      %p1210 = scmp.eq.s32.totalorder %s155, 0
      %p1211 = por %p1209, %p1210
      %s1213 = sadd.s32 %s1212, 1
      %p1216 = scmp.eq.s32.totalorder %s149, 1
      %p1217 = scmp.ne.s32.totalorder %s1212, %s1214
      %p1218 = scmp.eq.s32.totalorder %s149, 0
      %p1219 = por %p1217, %p1218
      %p1220 = scmp.ne.s32.totalorder %s1212, %s1214
      %p1221 = scmp.eq.s32.totalorder %s154, 1
      %p1222 = por %p1220, %p1221
      %p1223 = scmp.ne.s32.totalorder %s1214, %s1215
      %p1224 = scmp.eq.s32.totalorder %s154, 0
      %p1225 = por %p1223, %p1224
      %p1226 = scmp.ne.s32.totalorder %s1214, %s1215
      %p1227 = scmp.eq.s32.totalorder %s155, 1
      %p1228 = por %p1226, %p1227
      %p1230 = scmp.ne.s32.totalorder %s1215, %s1229
      %p1231 = scmp.eq.s32.totalorder %s155, 0
      %p1232 = por %p1230, %p1231
      %s1234 = sadd.s32 %s1233, 1
      %p1237 = scmp.eq.s32.totalorder %s149, 1
      %p1238 = scmp.ne.s32.totalorder %s1233, %s1235
      %p1239 = scmp.eq.s32.totalorder %s149, 0
      %p1240 = por %p1238, %p1239
      %p1241 = scmp.ne.s32.totalorder %s1233, %s1235
      %p1242 = scmp.eq.s32.totalorder %s154, 1
      %p1243 = por %p1241, %p1242
      %p1244 = scmp.ne.s32.totalorder %s1235, %s1236
      %p1245 = scmp.eq.s32.totalorder %s154, 0
      %p1246 = por %p1244, %p1245
      %p1247 = scmp.ne.s32.totalorder %s1235, %s1236
      %p1248 = scmp.eq.s32.totalorder %s155, 1
      %p1249 = por %p1247, %p1248
      %p1251 = scmp.ne.s32.totalorder %s1236, %s1250
      %p1252 = scmp.eq.s32.totalorder %s155, 0
      %p1253 = por %p1251, %p1252
      %s1255 = sadd.s32 %s1254, 1
      %p1258 = scmp.eq.s32.totalorder %s149, 1
      %p1259 = scmp.ne.s32.totalorder %s1254, %s1256
      %p1260 = scmp.eq.s32.totalorder %s149, 0
      %p1261 = por %p1259, %p1260
      %p1262 = scmp.ne.s32.totalorder %s1254, %s1256
      %p1263 = scmp.eq.s32.totalorder %s154, 1
      %p1264 = por %p1262, %p1263
      %p1265 = scmp.ne.s32.totalorder %s1256, %s1257
      %p1266 = scmp.eq.s32.totalorder %s154, 0
      %p1267 = por %p1265, %p1266
      %p1268 = scmp.ne.s32.totalorder %s1256, %s1257
      %p1269 = scmp.eq.s32.totalorder %s155, 1
      %p1270 = por %p1268, %p1269
      %p1272 = scmp.ne.s32.totalorder %s1257, %s1271
      %p1273 = scmp.eq.s32.totalorder %s155, 0
      %p1274 = por %p1272, %p1273
      %s1276 = sadd.s32 %s1275, 1
      %p1279 = scmp.eq.s32.totalorder %s149, 1
      %p1280 = scmp.ne.s32.totalorder %s1275, %s1277
      %p1281 = scmp.eq.s32.totalorder %s149, 0
      %p1282 = por %p1280, %p1281
      %p1283 = scmp.ne.s32.totalorder %s1275, %s1277
      %p1284 = scmp.eq.s32.totalorder %s154, 1
      %p1285 = por %p1283, %p1284
      %p1286 = scmp.ne.s32.totalorder %s1277, %s1278
      %p1287 = scmp.eq.s32.totalorder %s154, 0
      %p1288 = por %p1286, %p1287
      %p1289 = scmp.ne.s32.totalorder %s1277, %s1278
      %p1290 = scmp.eq.s32.totalorder %s155, 1
      %p1291 = por %p1289, %p1290
      %p1293 = scmp.ne.s32.totalorder %s1278, %s1292
      %p1294 = scmp.eq.s32.totalorder %s155, 0
      %p1295 = por %p1293, %p1294
      %s1297 = sadd.s32 %s1296, 1
      %p1300 = scmp.eq.s32.totalorder %s149, 1
      %p1301 = scmp.ne.s32.totalorder %s1296, %s1298
      %p1302 = scmp.eq.s32.totalorder %s149, 0
      %p1303 = por %p1301, %p1302
      %p1304 = scmp.ne.s32.totalorder %s1296, %s1298
      %p1305 = scmp.eq.s32.totalorder %s154, 1
      %p1306 = por %p1304, %p1305
      %p1307 = scmp.ne.s32.totalorder %s1298, %s1299
      %p1308 = scmp.eq.s32.totalorder %s154, 0
      %p1309 = por %p1307, %p1308
      %p1310 = scmp.ne.s32.totalorder %s1298, %s1299
      %p1311 = scmp.eq.s32.totalorder %s155, 1
      %p1312 = por %p1310, %p1311
      %p1314 = scmp.ne.s32.totalorder %s1299, %s1313
      %p1315 = scmp.eq.s32.totalorder %s155, 0
      %p1316 = por %p1314, %p1315
      %s1318 = sadd.s32 %s1317, 1
      %p1321 = scmp.eq.s32.totalorder %s149, 1
      %p1322 = scmp.ne.s32.totalorder %s1317, %s1319
      %p1323 = scmp.eq.s32.totalorder %s149, 0
      %p1324 = por %p1322, %p1323
      %p1325 = scmp.ne.s32.totalorder %s1317, %s1319
      %p1326 = scmp.eq.s32.totalorder %s154, 1
      %p1327 = por %p1325, %p1326
      %p1328 = scmp.ne.s32.totalorder %s1319, %s1320
      %p1329 = scmp.eq.s32.totalorder %s154, 0
      %p1330 = por %p1328, %p1329
      %p1331 = scmp.ne.s32.totalorder %s1319, %s1320
      %p1332 = scmp.eq.s32.totalorder %s155, 1
      %p1333 = por %p1331, %p1332
      %p1335 = scmp.ne.s32.totalorder %s1320, %s1334
      %p1336 = scmp.eq.s32.totalorder %s155, 0
      %p1337 = por %p1335, %p1336
      %s1339 = sadd.s32 %s1338, 1
      %p1342 = scmp.eq.s32.totalorder %s149, 1
      %p1343 = scmp.ne.s32.totalorder %s1338, %s1340
      %p1344 = scmp.eq.s32.totalorder %s149, 0
      %p1345 = por %p1343, %p1344
      %p1346 = scmp.ne.s32.totalorder %s1338, %s1340
      %p1347 = scmp.eq.s32.totalorder %s154, 1
      %p1348 = por %p1346, %p1347
      %p1349 = scmp.ne.s32.totalorder %s1340, %s1341
      %p1350 = scmp.eq.s32.totalorder %s154, 0
      %p1351 = por %p1349, %p1350
      %p1352 = scmp.ne.s32.totalorder %s1340, %s1341
      %p1353 = scmp.eq.s32.totalorder %s155, 1
      %p1354 = por %p1352, %p1353
      %p1356 = scmp.ne.s32.totalorder %s1341, %s1355
      %p1357 = scmp.eq.s32.totalorder %s155, 0
      %p1358 = por %p1356, %p1357
      %s1360 = sadd.s32 %s1359, 1
      %p1363 = scmp.eq.s32.totalorder %s149, 1
      %p1364 = scmp.ne.s32.totalorder %s1359, %s1361
      %p1365 = scmp.eq.s32.totalorder %s149, 0
      %p1366 = por %p1364, %p1365
      %p1367 = scmp.ne.s32.totalorder %s1359, %s1361
      %p1368 = scmp.eq.s32.totalorder %s154, 1
      %p1369 = por %p1367, %p1368
      %p1370 = scmp.ne.s32.totalorder %s1361, %s1362
      %p1371 = scmp.eq.s32.totalorder %s154, 0
      %p1372 = por %p1370, %p1371
      %p1373 = scmp.ne.s32.totalorder %s1361, %s1362
      %p1374 = scmp.eq.s32.totalorder %s155, 1
      %p1375 = por %p1373, %p1374
      %p1377 = scmp.ne.s32.totalorder %s1362, %s1376
      %p1378 = scmp.eq.s32.totalorder %s155, 0
      %p1379 = por %p1377, %p1378
      %s1381 = sadd.s32 %s1380, 1
      %p1384 = scmp.eq.s32.totalorder %s149, 1
      %p1385 = scmp.ne.s32.totalorder %s1380, %s1382
      %p1386 = scmp.eq.s32.totalorder %s149, 0
      %p1387 = por %p1385, %p1386
      %p1388 = scmp.ne.s32.totalorder %s1380, %s1382
      %p1389 = scmp.eq.s32.totalorder %s154, 1
      %p1390 = por %p1388, %p1389
      %p1391 = scmp.ne.s32.totalorder %s1382, %s1383
      %p1392 = scmp.eq.s32.totalorder %s154, 0
      %p1393 = por %p1391, %p1392
      %p1394 = scmp.ne.s32.totalorder %s1382, %s1383
      %p1395 = scmp.eq.s32.totalorder %s155, 1
      %p1396 = por %p1394, %p1395
      %p1398 = scmp.ne.s32.totalorder %s1383, %s1397
      %p1399 = scmp.eq.s32.totalorder %s155, 0
      %p1400 = por %p1398, %p1399
      %s1402 = sadd.s32 %s1401, 1
      %p1405 = scmp.eq.s32.totalorder %s149, 1
      %p1406 = scmp.ne.s32.totalorder %s1401, %s1403
      %p1407 = scmp.eq.s32.totalorder %s149, 0
      %p1408 = por %p1406, %p1407
      %p1409 = scmp.ne.s32.totalorder %s1401, %s1403
      %p1410 = scmp.eq.s32.totalorder %s154, 1
      %p1411 = por %p1409, %p1410
      %p1412 = scmp.ne.s32.totalorder %s1403, %s1404
      %p1413 = scmp.eq.s32.totalorder %s154, 0
      %p1414 = por %p1412, %p1413
      %p1415 = scmp.ne.s32.totalorder %s1403, %s1404
      %p1416 = scmp.eq.s32.totalorder %s155, 1
      %p1417 = por %p1415, %p1416
      %p1419 = scmp.ne.s32.totalorder %s1404, %s1418
      %p1420 = scmp.eq.s32.totalorder %s155, 0
      %p1421 = por %p1419, %p1420
      %s1423 = sadd.s32 %s1422, 1
      %p1426 = scmp.eq.s32.totalorder %s149, 1
      %p1427 = scmp.ne.s32.totalorder %s1422, %s1424
      %p1428 = scmp.eq.s32.totalorder %s149, 0
      %p1429 = por %p1427, %p1428
      %p1430 = scmp.ne.s32.totalorder %s1422, %s1424
      %p1431 = scmp.eq.s32.totalorder %s154, 1
      %p1432 = por %p1430, %p1431
      %p1433 = scmp.ne.s32.totalorder %s1424, %s1425
      %p1434 = scmp.eq.s32.totalorder %s154, 0
      %p1435 = por %p1433, %p1434
      %p1436 = scmp.ne.s32.totalorder %s1424, %s1425
      %p1437 = scmp.eq.s32.totalorder %s155, 1
      %p1438 = por %p1436, %p1437
      %p1440 = scmp.ne.s32.totalorder %s1425, %s1439
      %p1441 = scmp.eq.s32.totalorder %s155, 0
      %p1442 = por %p1440, %p1441
      %s1444 = sadd.s32 %s1443, 1
      %p1447 = scmp.eq.s32.totalorder %s149, 1
      %p1448 = scmp.ne.s32.totalorder %s1443, %s1445
      %p1449 = scmp.eq.s32.totalorder %s149, 0
      %p1450 = por %p1448, %p1449
      %p1451 = scmp.ne.s32.totalorder %s1443, %s1445
      %p1452 = scmp.eq.s32.totalorder %s154, 1
      %p1453 = por %p1451, %p1452
      %p1454 = scmp.ne.s32.totalorder %s1445, %s1446
      %p1455 = scmp.eq.s32.totalorder %s154, 0
      %p1456 = por %p1454, %p1455
      %p1457 = scmp.ne.s32.totalorder %s1445, %s1446
      %p1458 = scmp.eq.s32.totalorder %s155, 1
      %p1459 = por %p1457, %p1458
      %p1461 = scmp.ne.s32.totalorder %s1446, %s1460
      %p1462 = scmp.eq.s32.totalorder %s155, 0
      %p1463 = por %p1461, %p1462
      %s1465 = sadd.s32 %s1464, 1
      %p1468 = scmp.eq.s32.totalorder %s149, 1
      %p1469 = scmp.ne.s32.totalorder %s1464, %s1466
      %p1470 = scmp.eq.s32.totalorder %s149, 0
      %p1471 = por %p1469, %p1470
      %p1472 = scmp.ne.s32.totalorder %s1464, %s1466
      %p1473 = scmp.eq.s32.totalorder %s154, 1
      %p1474 = por %p1472, %p1473
      %p1475 = scmp.ne.s32.totalorder %s1466, %s1467
      %p1476 = scmp.eq.s32.totalorder %s154, 0
      %p1477 = por %p1475, %p1476
      %p1478 = scmp.ne.s32.totalorder %s1466, %s1467
      %p1479 = scmp.eq.s32.totalorder %s155, 1
      %p1480 = por %p1478, %p1479
      %p1482 = scmp.ne.s32.totalorder %s1467, %s1481
      %p1483 = scmp.eq.s32.totalorder %s155, 0
      %p1484 = por %p1482, %p1483
      %s1486 = sadd.s32 %s1485, 1
      %p1489 = scmp.eq.s32.totalorder %s149, 1
      %p1490 = scmp.ne.s32.totalorder %s1485, %s1487
      %p1491 = scmp.eq.s32.totalorder %s149, 0
      %p1492 = por %p1490, %p1491
      %p1493 = scmp.ne.s32.totalorder %s1485, %s1487
      %p1494 = scmp.eq.s32.totalorder %s154, 1
      %p1495 = por %p1493, %p1494
      %p1496 = scmp.ne.s32.totalorder %s1487, %s1488
      %p1497 = scmp.eq.s32.totalorder %s154, 0
      %p1498 = por %p1496, %p1497
      %p1499 = scmp.ne.s32.totalorder %s1487, %s1488
      %p1500 = scmp.eq.s32.totalorder %s155, 1
      %p1501 = por %p1499, %p1500
      %p1503 = scmp.ne.s32.totalorder %s1488, %s1502
      %p1504 = scmp.eq.s32.totalorder %s155, 0
      %p1505 = por %p1503, %p1504
      %s1507 = sadd.s32 %s1506, 1
      %p1510 = scmp.eq.s32.totalorder %s149, 1
      %p1511 = scmp.ne.s32.totalorder %s1506, %s1508
      %p1512 = scmp.eq.s32.totalorder %s149, 0
      %p1513 = por %p1511, %p1512
      %p1514 = scmp.ne.s32.totalorder %s1506, %s1508
      %p1515 = scmp.eq.s32.totalorder %s154, 1
      %p1516 = por %p1514, %p1515
      %p1517 = scmp.ne.s32.totalorder %s1508, %s1509
      %p1518 = scmp.eq.s32.totalorder %s154, 0
      %p1519 = por %p1517, %p1518
      %p1520 = scmp.ne.s32.totalorder %s1508, %s1509
      %p1521 = scmp.eq.s32.totalorder %s155, 1
      %p1522 = por %p1520, %p1521
      %p1524 = scmp.ne.s32.totalorder %s1509, %s1523
      %p1525 = scmp.eq.s32.totalorder %s155, 0
      %p1526 = por %p1524, %p1525
      %s1528 = sadd.s32 %s1527, 1
      %p1531 = scmp.eq.s32.totalorder %s149, 1
      %p1532 = scmp.ne.s32.totalorder %s1527, %s1529
      %p1533 = scmp.eq.s32.totalorder %s149, 0
      %p1534 = por %p1532, %p1533
      %p1535 = scmp.ne.s32.totalorder %s1527, %s1529
      %p1536 = scmp.eq.s32.totalorder %s154, 1
      %p1537 = por %p1535, %p1536
      %p1538 = scmp.ne.s32.totalorder %s1529, %s1530
      %p1539 = scmp.eq.s32.totalorder %s154, 0
      %p1540 = por %p1538, %p1539
      %p1541 = scmp.ne.s32.totalorder %s1529, %s1530
      %p1542 = scmp.eq.s32.totalorder %s155, 1
      %p1543 = por %p1541, %p1542
      %p1545 = scmp.ne.s32.totalorder %s1530, %s1544
      %p1546 = scmp.eq.s32.totalorder %s155, 0
      %p1547 = por %p1545, %p1546
      %s1549 = sadd.s32 %s1548, 1
      %p1552 = scmp.eq.s32.totalorder %s149, 1
      %p1553 = scmp.ne.s32.totalorder %s1548, %s1550
      %p1554 = scmp.eq.s32.totalorder %s149, 0
      %p1555 = por %p1553, %p1554
      %p1556 = scmp.ne.s32.totalorder %s1548, %s1550
      %p1557 = scmp.eq.s32.totalorder %s154, 1
      %p1558 = por %p1556, %p1557
      %p1559 = scmp.ne.s32.totalorder %s1550, %s1551
      %p1560 = scmp.eq.s32.totalorder %s154, 0
      %p1561 = por %p1559, %p1560
      %p1562 = scmp.ne.s32.totalorder %s1550, %s1551
      %p1563 = scmp.eq.s32.totalorder %s155, 1
      %p1564 = por %p1562, %p1563
      %p1566 = scmp.ne.s32.totalorder %s1551, %s1565
      %p1567 = scmp.eq.s32.totalorder %s155, 0
      %p1568 = por %p1566, %p1567
      %s1570 = sadd.s32 %s1569, 1
      %p1573 = scmp.eq.s32.totalorder %s149, 1
      %p1574 = scmp.ne.s32.totalorder %s1569, %s1571
      %p1575 = scmp.eq.s32.totalorder %s149, 0
      %p1576 = por %p1574, %p1575
      %p1577 = scmp.ne.s32.totalorder %s1569, %s1571
      %p1578 = scmp.eq.s32.totalorder %s154, 1
      %p1579 = por %p1577, %p1578
      %p1580 = scmp.ne.s32.totalorder %s1571, %s1572
      %p1581 = scmp.eq.s32.totalorder %s154, 0
      %p1582 = por %p1580, %p1581
      %p1583 = scmp.ne.s32.totalorder %s1571, %s1572
      %p1584 = scmp.eq.s32.totalorder %s155, 1
      %p1585 = por %p1583, %p1584
      %p1587 = scmp.ne.s32.totalorder %s1572, %s1586
      %p1588 = scmp.eq.s32.totalorder %s155, 0
      %p1589 = por %p1587, %p1588
      %s1590 = ssub.s32 %s149, %s156
      %p1591 = scmp.eq.s32.totalorder %s1590, 0
      %s1593 = sadd.s32 %s1592, 1
      %s1594 = scalar_select %p1591, %s1592, %s1593
      %p1597 = pneg %p1591
      %p1598 = scmp.eq.s32.totalorder %s149, 1
      %p1599 = por %p1597, %p1598
      %p1600 = scmp.ne.s32.totalorder %s1592, %s1595
      %p1601 = scmp.eq.s32.totalorder %s149, 0
      %p1602 = por %p1600, %p1601
      %p1603 = scmp.ne.s32.totalorder %s1592, %s1595
      %p1604 = scmp.eq.s32.totalorder %s154, 1
      %p1605 = por %p1603, %p1604
      %p1606 = scmp.ne.s32.totalorder %s1595, %s1596
      %p1607 = scmp.eq.s32.totalorder %s154, 0
      %p1608 = por %p1606, %p1607
      %p1609 = scmp.ne.s32.totalorder %s1595, %s1596
      %p1610 = scmp.eq.s32.totalorder %s155, 1
      %p1611 = por %p1609, %p1610
      %p1613 = scmp.ne.s32.totalorder %s1596, %s1612
      %p1614 = scmp.eq.s32.totalorder %s155, 0
      %p1615 = por %p1613, %p1614
      %s1616 = ssub.s32 %s149, %s156
      %p1617 = scmp.eq.s32.totalorder %s1616, 0
      %s1619 = sadd.s32 %s1618, 1
      %s1620 = scalar_select %p1617, %s1618, %s1619
      %p1623 = pneg %p1617
      %p1624 = scmp.eq.s32.totalorder %s149, 1
      %p1625 = por %p1623, %p1624
      %p1626 = scmp.ne.s32.totalorder %s1618, %s1621
      %p1627 = scmp.eq.s32.totalorder %s149, 0
      %p1628 = por %p1626, %p1627
      %p1629 = scmp.ne.s32.totalorder %s1618, %s1621
      %p1630 = scmp.eq.s32.totalorder %s154, 1
      %p1631 = por %p1629, %p1630
      %p1632 = scmp.ne.s32.totalorder %s1621, %s1622
      %p1633 = scmp.eq.s32.totalorder %s154, 0
      %p1634 = por %p1632, %p1633
      %p1635 = scmp.ne.s32.totalorder %s1621, %s1622
      %p1636 = scmp.eq.s32.totalorder %s155, 1
      %p1637 = por %p1635, %p1636
      %p1639 = scmp.ne.s32.totalorder %s1622, %s1638
      %p1640 = scmp.eq.s32.totalorder %s155, 0
      %p1641 = por %p1639, %p1640
      %p1642 = scmp.le.s32.totalorder 1, %s149
      %p1643 = scmp.lt.s32.totalorder %s149, 3
      %p1644 = pnand %p1642, %p1643
      %p1645 = pneg %p1644
      // Predicated region
      $region9: #{timber_encoder_forward.1} parent=5 // pred_check
        _
      $region10: #{timber_encoder_forward.1} parent=5 // pred_check_branch
        %1647 = sbr.rel (%p1644) target = $region12
      $region11: #{timber_encoder_forward.1} parent=5 // pred_region
        %s1648 = ssub.s32 %s149, 1
        // Predicated region
        $region13: #{timber_encoder_forward.1} parent=11 // pred_check
          %p1649 = pneg %p196
        $region14: #{timber_encoder_forward.1} parent=11 // pred_check_branch
          %1651 = sbr.rel (%p1649) target = $region16
        $region15: #{timber_encoder_forward.1} parent=11 // pred_region
          _
        $region16: #{timber_encoder_forward.1} parent=11 // pred_fallthru
          _
        // Predicated region
        $region17: #{timber_encoder_forward.1} parent=11 // pred_check
          %p1652 = pneg %p217
        $region18: #{timber_encoder_forward.1} parent=11 // pred_check_branch
          %1654 = sbr.rel (%p1652) target = $region20
        $region19: #{timber_encoder_forward.1} parent=11 // pred_region
          _
        $region20: #{timber_encoder_forward.1} parent=11 // pred_fallthru
          _
        // Predicated region
        $region21: #{timber_encoder_forward.1} parent=11 // pred_check
          %p1655 = pneg %p238
        $region22: #{timber_encoder_forward.1} parent=11 // pred_check_branch
          %1657 = sbr.rel (%p1655) target = $region24
        $region23: #{timber_encoder_forward.1} parent=11 // pred_region
          _
        $region24: #{timber_encoder_forward.1} parent=11 // pred_fallthru
          _
        // Predicated region
        $region25: #{timber_encoder_forward.1} parent=11 // pred_check
          %p1658 = pneg %p259
        $region26: #{timber_encoder_forward.1} parent=11 // pred_check_branch
          %1660 = sbr.rel (%p1658) target = $region28
        $region27: #{timber_encoder_forward.1} parent=11 // pred_region
          _
        $region28: #{timber_encoder_forward.1} parent=11 // pred_fallthru
          _
        // Predicated region
        $region29: #{timber_encoder_forward.1} parent=11 // pred_check
          %p1661 = pneg %p280
        $region30: #{timber_encoder_forward.1} parent=11 // pred_check_branch
          %1663 = sbr.rel (%p1661) target = $region32
        $region31: #{timber_encoder_forward.1} parent=11 // pred_region
          _
        $region32: #{timber_encoder_forward.1} parent=11 // pred_fallthru
          _
        // Predicated region
        $region33: #{timber_encoder_forward.1} parent=11 // pred_check
          %p1664 = pneg %p301
        $region34: #{timber_encoder_forward.1} parent=11 // pred_check_branch
          %1666 = sbr.rel (%p1664) target = $region36
        $region35: #{timber_encoder_forward.1} parent=11 // pred_region
          _
        $region36: #{timber_encoder_forward.1} parent=11 // pred_fallthru
          _
        // Predicated region
        $region37: #{timber_encoder_forward.1} parent=11 // pred_check
          %p1667 = pneg %p322
        $region38: #{timber_encoder_forward.1} parent=11 // pred_check_branch
          %1669 = sbr.rel (%p1667) target = $region40
        $region39: #{timber_encoder_forward.1} parent=11 // pred_region
          _
        $region40: #{timber_encoder_forward.1} parent=11 // pred_fallthru
          _
        // Predicated region
        $region41: #{timber_encoder_forward.1} parent=11 // pred_check
          %p1670 = pneg %p343
        $region42: #{timber_encoder_forward.1} parent=11 // pred_check_branch
          %1672 = sbr.rel (%p1670) target = $region44
        $region43: #{timber_encoder_forward.1} parent=11 // pred_region
          _
        $region44: #{timber_encoder_forward.1} parent=11 // pred_fallthru
          _
        // Predicated region
        $region45: #{timber_encoder_forward.1} parent=11 // pred_check
          %p1673 = pneg %p364
        $region46: #{timber_encoder_forward.1} parent=11 // pred_check_branch
          %1675 = sbr.rel (%p1673) target = $region48
        $region47: #{timber_encoder_forward.1} parent=11 // pred_region
          _
        $region48: #{timber_encoder_forward.1} parent=11 // pred_fallthru
          _
        // Predicated region
        $region49: #{timber_encoder_forward.1} parent=11 // pred_check
          %p1676 = pneg %p385
        $region50: #{timber_encoder_forward.1} parent=11 // pred_check_branch
          %1678 = sbr.rel (%p1676) target = $region52
        $region51: #{timber_encoder_forward.1} parent=11 // pred_region
          _
        $region52: #{timber_encoder_forward.1} parent=11 // pred_fallthru
          _
        // Predicated region
        $region53: #{timber_encoder_forward.1} parent=11 // pred_check
          %p1679 = pneg %p406
        $region54: #{timber_encoder_forward.1} parent=11 // pred_check_branch
          %1681 = sbr.rel (%p1679) target = $region56
        $region55: #{timber_encoder_forward.1} parent=11 // pred_region
          _
        $region56: #{timber_encoder_forward.1} parent=11 // pred_fallthru
          _
        // Predicated region
        $region57: #{timber_encoder_forward.1} parent=11 // pred_check
          %p1682 = pneg %p427
        $region58: #{timber_encoder_forward.1} parent=11 // pred_check_branch
          %1684 = sbr.rel (%p1682) target = $region60
        $region59: #{timber_encoder_forward.1} parent=11 // pred_region
          _
        $region60: #{timber_encoder_forward.1} parent=11 // pred_fallthru
          _
        // Predicated region
        $region61: #{timber_encoder_forward.1} parent=11 // pred_check
          %p1685 = pneg %p448
        $region62: #{timber_encoder_forward.1} parent=11 // pred_check_branch
          %1687 = sbr.rel (%p1685) target = $region64
        $region63: #{timber_encoder_forward.1} parent=11 // pred_region
          _
        $region64: #{timber_encoder_forward.1} parent=11 // pred_fallthru
          _
        // Predicated region
        $region65: #{timber_encoder_forward.1} parent=11 // pred_check
          %p1688 = pneg %p469
        $region66: #{timber_encoder_forward.1} parent=11 // pred_check_branch
          %1690 = sbr.rel (%p1688) target = $region68
        $region67: #{timber_encoder_forward.1} parent=11 // pred_region
          _
        $region68: #{timber_encoder_forward.1} parent=11 // pred_fallthru
          _
        // Predicated region
        $region69: #{timber_encoder_forward.1} parent=11 // pred_check
          %p1691 = pneg %p490
        $region70: #{timber_encoder_forward.1} parent=11 // pred_check_branch
          %1693 = sbr.rel (%p1691) target = $region72
        $region71: #{timber_encoder_forward.1} parent=11 // pred_region
          _
        $region72: #{timber_encoder_forward.1} parent=11 // pred_fallthru
          _
        // Predicated region
        $region73: #{timber_encoder_forward.1} parent=11 // pred_check
          %p1694 = pneg %p511
        $region74: #{timber_encoder_forward.1} parent=11 // pred_check_branch
          %1696 = sbr.rel (%p1694) target = $region76
        $region75: #{timber_encoder_forward.1} parent=11 // pred_region
          _
        $region76: #{timber_encoder_forward.1} parent=11 // pred_fallthru
          _
        // Predicated region
        $region77: #{timber_encoder_forward.1} parent=11 // pred_check
          %p1697 = pneg %p532
        $region78: #{timber_encoder_forward.1} parent=11 // pred_check_branch
          %1699 = sbr.rel (%p1697) target = $region80
        $region79: #{timber_encoder_forward.1} parent=11 // pred_region
          _
        $region80: #{timber_encoder_forward.1} parent=11 // pred_fallthru
          _
        // Predicated region
        $region81: #{timber_encoder_forward.1} parent=11 // pred_check
          %p1700 = pneg %p553
        $region82: #{timber_encoder_forward.1} parent=11 // pred_check_branch
          %1702 = sbr.rel (%p1700) target = $region84
        $region83: #{timber_encoder_forward.1} parent=11 // pred_region
          _
        $region84: #{timber_encoder_forward.1} parent=11 // pred_fallthru
          _
        // Predicated region
        $region85: #{timber_encoder_forward.1} parent=11 // pred_check
          %p1703 = pneg %p574
        $region86: #{timber_encoder_forward.1} parent=11 // pred_check_branch
          %1705 = sbr.rel (%p1703) target = $region88
        $region87: #{timber_encoder_forward.1} parent=11 // pred_region
          _
        $region88: #{timber_encoder_forward.1} parent=11 // pred_fallthru
          _
        // Predicated region
        $region89: #{timber_encoder_forward.1} parent=11 // pred_check
          %p1706 = pneg %p595
        $region90: #{timber_encoder_forward.1} parent=11 // pred_check_branch
          %1708 = sbr.rel (%p1706) target = $region92
        $region91: #{timber_encoder_forward.1} parent=11 // pred_region
          _
        $region92: #{timber_encoder_forward.1} parent=11 // pred_fallthru
          _
        // Predicated region
        $region93: #{timber_encoder_forward.1} parent=11 // pred_check
          %p1709 = pneg %p616
        $region94: #{timber_encoder_forward.1} parent=11 // pred_check_branch
          %1711 = sbr.rel (%p1709) target = $region96
        $region95: #{timber_encoder_forward.1} parent=11 // pred_region
          _
        $region96: #{timber_encoder_forward.1} parent=11 // pred_fallthru
          _
        // Predicated region
        $region97: #{timber_encoder_forward.1} parent=11 // pred_check
          %p1712 = pneg %p637
        $region98: #{timber_encoder_forward.1} parent=11 // pred_check_branch
          %1714 = sbr.rel (%p1712) target = $region100
        $region99: #{timber_encoder_forward.1} parent=11 // pred_region
          _
        $region100: #{timber_encoder_forward.1} parent=11 // pred_fallthru
          _
        // Predicated region
        $region101: #{timber_encoder_forward.1} parent=11 // pred_check
          %p1715 = pneg %p658
        $region102: #{timber_encoder_forward.1} parent=11 // pred_check_branch
          %1717 = sbr.rel (%p1715) target = $region104
        $region103: #{timber_encoder_forward.1} parent=11 // pred_region
          _
        $region104: #{timber_encoder_forward.1} parent=11 // pred_fallthru
          _
        // Predicated region
        $region105: #{timber_encoder_forward.1} parent=11 // pred_check
          %p1718 = pneg %p679
        $region106: #{timber_encoder_forward.1} parent=11 // pred_check_branch
          %1720 = sbr.rel (%p1718) target = $region108
        $region107: #{timber_encoder_forward.1} parent=11 // pred_region
          _
        $region108: #{timber_encoder_forward.1} parent=11 // pred_fallthru
          _
        // Predicated region
        $region109: #{timber_encoder_forward.1} parent=11 // pred_check
          %p1721 = pneg %p700
        $region110: #{timber_encoder_forward.1} parent=11 // pred_check_branch
          %1723 = sbr.rel (%p1721) target = $region112
        $region111: #{timber_encoder_forward.1} parent=11 // pred_region
          _
        $region112: #{timber_encoder_forward.1} parent=11 // pred_fallthru
          _
        // Predicated region
        $region113: #{timber_encoder_forward.1} parent=11 // pred_check
          %p1724 = pneg %p721
        $region114: #{timber_encoder_forward.1} parent=11 // pred_check_branch
          %1726 = sbr.rel (%p1724) target = $region116
        $region115: #{timber_encoder_forward.1} parent=11 // pred_region
          _
        $region116: #{timber_encoder_forward.1} parent=11 // pred_fallthru
          _
        // Predicated region
        $region117: #{timber_encoder_forward.1} parent=11 // pred_check
          %p1727 = pneg %p742
        $region118: #{timber_encoder_forward.1} parent=11 // pred_check_branch
          %1729 = sbr.rel (%p1727) target = $region120
        $region119: #{timber_encoder_forward.1} parent=11 // pred_region
          _
        $region120: #{timber_encoder_forward.1} parent=11 // pred_fallthru
          _
        // Predicated region
        $region121: #{timber_encoder_forward.1} parent=11 // pred_check
          %p1730 = pneg %p763
        $region122: #{timber_encoder_forward.1} parent=11 // pred_check_branch
          %1732 = sbr.rel (%p1730) target = $region124
        $region123: #{timber_encoder_forward.1} parent=11 // pred_region
          _
        $region124: #{timber_encoder_forward.1} parent=11 // pred_fallthru
          _
        // Predicated region
        $region125: #{timber_encoder_forward.1} parent=11 // pred_check
          %p1733 = pneg %p784
        $region126: #{timber_encoder_forward.1} parent=11 // pred_check_branch
          %1735 = sbr.rel (%p1733) target = $region128
        $region127: #{timber_encoder_forward.1} parent=11 // pred_region
          _
        $region128: #{timber_encoder_forward.1} parent=11 // pred_fallthru
          _
        // Predicated region
        $region129: #{timber_encoder_forward.1} parent=11 // pred_check
          %p1736 = pneg %p805
        $region130: #{timber_encoder_forward.1} parent=11 // pred_check_branch
          %1738 = sbr.rel (%p1736) target = $region132
        $region131: #{timber_encoder_forward.1} parent=11 // pred_region
          _
        $region132: #{timber_encoder_forward.1} parent=11 // pred_fallthru
          _
        // Predicated region
        $region133: #{timber_encoder_forward.1} parent=11 // pred_check
          %p1739 = pneg %p826
        $region134: #{timber_encoder_forward.1} parent=11 // pred_check_branch
          %1741 = sbr.rel (%p1739) target = $region136
        $region135: #{timber_encoder_forward.1} parent=11 // pred_region
          _
        $region136: #{timber_encoder_forward.1} parent=11 // pred_fallthru
          _
        // Predicated region
        $region137: #{timber_encoder_forward.1} parent=11 // pred_check
          %p1742 = pneg %p847
        $region138: #{timber_encoder_forward.1} parent=11 // pred_check_branch
          %1744 = sbr.rel (%p1742) target = $region140
        $region139: #{timber_encoder_forward.1} parent=11 // pred_region
          _
        $region140: #{timber_encoder_forward.1} parent=11 // pred_fallthru
          _
        // Predicated region
        $region141: #{timber_encoder_forward.1} parent=11 // pred_check
          %p1745 = pneg %p868
        $region142: #{timber_encoder_forward.1} parent=11 // pred_check_branch
          %1747 = sbr.rel (%p1745) target = $region144
        $region143: #{timber_encoder_forward.1} parent=11 // pred_region
          _
        $region144: #{timber_encoder_forward.1} parent=11 // pred_fallthru
          _
        // Predicated region
        $region145: #{timber_encoder_forward.1} parent=11 // pred_check
          %p1748 = pneg %p889
        $region146: #{timber_encoder_forward.1} parent=11 // pred_check_branch
          %1750 = sbr.rel (%p1748) target = $region148
        $region147: #{timber_encoder_forward.1} parent=11 // pred_region
          _
        $region148: #{timber_encoder_forward.1} parent=11 // pred_fallthru
          _
        // Predicated region
        $region149: #{timber_encoder_forward.1} parent=11 // pred_check
          %p1751 = pneg %p910
        $region150: #{timber_encoder_forward.1} parent=11 // pred_check_branch
          %1753 = sbr.rel (%p1751) target = $region152
        $region151: #{timber_encoder_forward.1} parent=11 // pred_region
          _
        $region152: #{timber_encoder_forward.1} parent=11 // pred_fallthru
          _
        // Predicated region
        $region153: #{timber_encoder_forward.1} parent=11 // pred_check
          %p1754 = pneg %p931
        $region154: #{timber_encoder_forward.1} parent=11 // pred_check_branch
          %1756 = sbr.rel (%p1754) target = $region156
        $region155: #{timber_encoder_forward.1} parent=11 // pred_region
          _
        $region156: #{timber_encoder_forward.1} parent=11 // pred_fallthru
          _
        // Predicated region
        $region157: #{timber_encoder_forward.1} parent=11 // pred_check
          %p1757 = pneg %p952
        $region158: #{timber_encoder_forward.1} parent=11 // pred_check_branch
          %1759 = sbr.rel (%p1757) target = $region160
        $region159: #{timber_encoder_forward.1} parent=11 // pred_region
          _
        $region160: #{timber_encoder_forward.1} parent=11 // pred_fallthru
          _
        // Predicated region
        $region161: #{timber_encoder_forward.1} parent=11 // pred_check
          %p1760 = pneg %p973
        $region162: #{timber_encoder_forward.1} parent=11 // pred_check_branch
          %1762 = sbr.rel (%p1760) target = $region164
        $region163: #{timber_encoder_forward.1} parent=11 // pred_region
          _
        $region164: #{timber_encoder_forward.1} parent=11 // pred_fallthru
          _
        // Predicated region
        $region165: #{timber_encoder_forward.1} parent=11 // pred_check
          %p1763 = pneg %p994
        $region166: #{timber_encoder_forward.1} parent=11 // pred_check_branch
          %1765 = sbr.rel (%p1763) target = $region168
        $region167: #{timber_encoder_forward.1} parent=11 // pred_region
          _
        $region168: #{timber_encoder_forward.1} parent=11 // pred_fallthru
          _
        // Predicated region
        $region169: #{timber_encoder_forward.1} parent=11 // pred_check
          %p1766 = pneg %p1015
        $region170: #{timber_encoder_forward.1} parent=11 // pred_check_branch
          %1768 = sbr.rel (%p1766) target = $region172
        $region171: #{timber_encoder_forward.1} parent=11 // pred_region
          _
        $region172: #{timber_encoder_forward.1} parent=11 // pred_fallthru
          _
        // Predicated region
        $region173: #{timber_encoder_forward.1} parent=11 // pred_check
          %p1769 = pneg %p1036
        $region174: #{timber_encoder_forward.1} parent=11 // pred_check_branch
          %1771 = sbr.rel (%p1769) target = $region176
        $region175: #{timber_encoder_forward.1} parent=11 // pred_region
          _
        $region176: #{timber_encoder_forward.1} parent=11 // pred_fallthru
          _
        // Predicated region
        $region177: #{timber_encoder_forward.1} parent=11 // pred_check
          %p1772 = pneg %p1057
        $region178: #{timber_encoder_forward.1} parent=11 // pred_check_branch
          %1774 = sbr.rel (%p1772) target = $region180
        $region179: #{timber_encoder_forward.1} parent=11 // pred_region
          _
        $region180: #{timber_encoder_forward.1} parent=11 // pred_fallthru
          _
        // Predicated region
        $region181: #{timber_encoder_forward.1} parent=11 // pred_check
          %p1775 = pneg %p1078
        $region182: #{timber_encoder_forward.1} parent=11 // pred_check_branch
          %1777 = sbr.rel (%p1775) target = $region184
        $region183: #{timber_encoder_forward.1} parent=11 // pred_region
          _
        $region184: #{timber_encoder_forward.1} parent=11 // pred_fallthru
          _
        // Predicated region
        $region185: #{timber_encoder_forward.1} parent=11 // pred_check
          %p1778 = pneg %p1099
        $region186: #{timber_encoder_forward.1} parent=11 // pred_check_branch
          %1780 = sbr.rel (%p1778) target = $region188
        $region187: #{timber_encoder_forward.1} parent=11 // pred_region
          _
        $region188: #{timber_encoder_forward.1} parent=11 // pred_fallthru
          _
        // Predicated region
        $region189: #{timber_encoder_forward.1} parent=11 // pred_check
          %p1781 = pneg %p1120
        $region190: #{timber_encoder_forward.1} parent=11 // pred_check_branch
          %1783 = sbr.rel (%p1781) target = $region192
        $region191: #{timber_encoder_forward.1} parent=11 // pred_region
          _
        $region192: #{timber_encoder_forward.1} parent=11 // pred_fallthru
          _
        // Predicated region
        $region193: #{timber_encoder_forward.1} parent=11 // pred_check
          %p1784 = pneg %p1141
        $region194: #{timber_encoder_forward.1} parent=11 // pred_check_branch
          %1786 = sbr.rel (%p1784) target = $region196
        $region195: #{timber_encoder_forward.1} parent=11 // pred_region
          _
        $region196: #{timber_encoder_forward.1} parent=11 // pred_fallthru
          _
        // Predicated region
        $region197: #{timber_encoder_forward.1} parent=11 // pred_check
          %p1787 = pneg %p1162
        $region198: #{timber_encoder_forward.1} parent=11 // pred_check_branch
          %1789 = sbr.rel (%p1787) target = $region200
        $region199: #{timber_encoder_forward.1} parent=11 // pred_region
          _
        $region200: #{timber_encoder_forward.1} parent=11 // pred_fallthru
          _
        // Predicated region
        $region201: #{timber_encoder_forward.1} parent=11 // pred_check
          %p1790 = pneg %p1183
        $region202: #{timber_encoder_forward.1} parent=11 // pred_check_branch
          %1792 = sbr.rel (%p1790) target = $region204
        $region203: #{timber_encoder_forward.1} parent=11 // pred_region
          _
        $region204: #{timber_encoder_forward.1} parent=11 // pred_fallthru
          _
        // Predicated region
        $region205: #{timber_encoder_forward.1} parent=11 // pred_check
          %p1793 = pneg %p1204
        $region206: #{timber_encoder_forward.1} parent=11 // pred_check_branch
          %1795 = sbr.rel (%p1793) target = $region208
        $region207: #{timber_encoder_forward.1} parent=11 // pred_region
          _
        $region208: #{timber_encoder_forward.1} parent=11 // pred_fallthru
          _
        // Predicated region
        $region209: #{timber_encoder_forward.1} parent=11 // pred_check
          %p1796 = pneg %p1225
        $region210: #{timber_encoder_forward.1} parent=11 // pred_check_branch
          %1798 = sbr.rel (%p1796) target = $region212
        $region211: #{timber_encoder_forward.1} parent=11 // pred_region
          _
        $region212: #{timber_encoder_forward.1} parent=11 // pred_fallthru
          _
        // Predicated region
        $region213: #{timber_encoder_forward.1} parent=11 // pred_check
          %p1799 = pneg %p1246
        $region214: #{timber_encoder_forward.1} parent=11 // pred_check_branch
          %1801 = sbr.rel (%p1799) target = $region216
        $region215: #{timber_encoder_forward.1} parent=11 // pred_region
          _
        $region216: #{timber_encoder_forward.1} parent=11 // pred_fallthru
          _
        // Predicated region
        $region217: #{timber_encoder_forward.1} parent=11 // pred_check
          %p1802 = pneg %p1267
        $region218: #{timber_encoder_forward.1} parent=11 // pred_check_branch
          %1804 = sbr.rel (%p1802) target = $region220
        $region219: #{timber_encoder_forward.1} parent=11 // pred_region
          _
        $region220: #{timber_encoder_forward.1} parent=11 // pred_fallthru
          _
        // Predicated region
        $region221: #{timber_encoder_forward.1} parent=11 // pred_check
          %p1805 = pneg %p1288
        $region222: #{timber_encoder_forward.1} parent=11 // pred_check_branch
          %1807 = sbr.rel (%p1805) target = $region224
        $region223: #{timber_encoder_forward.1} parent=11 // pred_region
          _
        $region224: #{timber_encoder_forward.1} parent=11 // pred_fallthru
          _
        // Predicated region
        $region225: #{timber_encoder_forward.1} parent=11 // pred_check
          %p1808 = pneg %p1309
        $region226: #{timber_encoder_forward.1} parent=11 // pred_check_branch
          %1810 = sbr.rel (%p1808) target = $region228
        $region227: #{timber_encoder_forward.1} parent=11 // pred_region
          _
        $region228: #{timber_encoder_forward.1} parent=11 // pred_fallthru
          _
        // Predicated region
        $region229: #{timber_encoder_forward.1} parent=11 // pred_check
          %p1811 = pneg %p1330
        $region230: #{timber_encoder_forward.1} parent=11 // pred_check_branch
          %1813 = sbr.rel (%p1811) target = $region232
        $region231: #{timber_encoder_forward.1} parent=11 // pred_region
          _
        $region232: #{timber_encoder_forward.1} parent=11 // pred_fallthru
          _
        // Predicated region
        $region233: #{timber_encoder_forward.1} parent=11 // pred_check
          %p1814 = pneg %p1351
        $region234: #{timber_encoder_forward.1} parent=11 // pred_check_branch
          %1816 = sbr.rel (%p1814) target = $region236
        $region235: #{timber_encoder_forward.1} parent=11 // pred_region
          _
        $region236: #{timber_encoder_forward.1} parent=11 // pred_fallthru
          _
        // Predicated region
        $region237: #{timber_encoder_forward.1} parent=11 // pred_check
          %p1817 = pneg %p1372
        $region238: #{timber_encoder_forward.1} parent=11 // pred_check_branch
          %1819 = sbr.rel (%p1817) target = $region240
        $region239: #{timber_encoder_forward.1} parent=11 // pred_region
          _
        $region240: #{timber_encoder_forward.1} parent=11 // pred_fallthru
          _
        // Predicated region
        $region241: #{timber_encoder_forward.1} parent=11 // pred_check
          %p1820 = pneg %p1393
        $region242: #{timber_encoder_forward.1} parent=11 // pred_check_branch
          %1822 = sbr.rel (%p1820) target = $region244
        $region243: #{timber_encoder_forward.1} parent=11 // pred_region
          _
        $region244: #{timber_encoder_forward.1} parent=11 // pred_fallthru
          _
        // Predicated region
        $region245: #{timber_encoder_forward.1} parent=11 // pred_check
          %p1823 = pneg %p1414
        $region246: #{timber_encoder_forward.1} parent=11 // pred_check_branch
          %1825 = sbr.rel (%p1823) target = $region248
        $region247: #{timber_encoder_forward.1} parent=11 // pred_region
          _
        $region248: #{timber_encoder_forward.1} parent=11 // pred_fallthru
          _
        // Predicated region
        $region249: #{timber_encoder_forward.1} parent=11 // pred_check
          %p1826 = pneg %p1435
        $region250: #{timber_encoder_forward.1} parent=11 // pred_check_branch
          %1828 = sbr.rel (%p1826) target = $region252
        $region251: #{timber_encoder_forward.1} parent=11 // pred_region
          _
        $region252: #{timber_encoder_forward.1} parent=11 // pred_fallthru
          _
        // Predicated region
        $region253: #{timber_encoder_forward.1} parent=11 // pred_check
          %p1829 = pneg %p1456
        $region254: #{timber_encoder_forward.1} parent=11 // pred_check_branch
          %1831 = sbr.rel (%p1829) target = $region256
        $region255: #{timber_encoder_forward.1} parent=11 // pred_region
          _
        $region256: #{timber_encoder_forward.1} parent=11 // pred_fallthru
          _
        // Predicated region
        $region257: #{timber_encoder_forward.1} parent=11 // pred_check
          %p1832 = pneg %p1477
        $region258: #{timber_encoder_forward.1} parent=11 // pred_check_branch
          %1834 = sbr.rel (%p1832) target = $region260
        $region259: #{timber_encoder_forward.1} parent=11 // pred_region
          _
        $region260: #{timber_encoder_forward.1} parent=11 // pred_fallthru
          _
        // Predicated region
        $region261: #{timber_encoder_forward.1} parent=11 // pred_check
          %p1835 = pneg %p1498
        $region262: #{timber_encoder_forward.1} parent=11 // pred_check_branch
          %1837 = sbr.rel (%p1835) target = $region264
        $region263: #{timber_encoder_forward.1} parent=11 // pred_region
          _
        $region264: #{timber_encoder_forward.1} parent=11 // pred_fallthru
          _
        // Predicated region
        $region265: #{timber_encoder_forward.1} parent=11 // pred_check
          %p1838 = pneg %p1519
        $region266: #{timber_encoder_forward.1} parent=11 // pred_check_branch
          %1840 = sbr.rel (%p1838) target = $region268
        $region267: #{timber_encoder_forward.1} parent=11 // pred_region
          _
        $region268: #{timber_encoder_forward.1} parent=11 // pred_fallthru
          _
        // Predicated region
        $region269: #{timber_encoder_forward.1} parent=11 // pred_check
          %p1841 = pneg %p1540
        $region270: #{timber_encoder_forward.1} parent=11 // pred_check_branch
          %1843 = sbr.rel (%p1841) target = $region272
        $region271: #{timber_encoder_forward.1} parent=11 // pred_region
          _
        $region272: #{timber_encoder_forward.1} parent=11 // pred_fallthru
          _
        // Predicated region
        $region273: #{timber_encoder_forward.1} parent=11 // pred_check
          %p1844 = pneg %p1561
        $region274: #{timber_encoder_forward.1} parent=11 // pred_check_branch
          %1846 = sbr.rel (%p1844) target = $region276
        $region275: #{timber_encoder_forward.1} parent=11 // pred_region
          _
        $region276: #{timber_encoder_forward.1} parent=11 // pred_fallthru
          _
        // Predicated region
        $region277: #{timber_encoder_forward.1} parent=11 // pred_check
          %p1847 = pneg %p1582
        $region278: #{timber_encoder_forward.1} parent=11 // pred_check_branch
          %1849 = sbr.rel (%p1847) target = $region280
        $region279: #{timber_encoder_forward.1} parent=11 // pred_region
          _
        $region280: #{timber_encoder_forward.1} parent=11 // pred_fallthru
          _
      $region12: #{timber_encoder_forward.1} parent=5 // pred_fallthru
        _
      %p1850 = scmp.lt.s32.totalorder %s149, 2
      // Predicated region
      $region281: #{timber_encoder_forward.1} parent=5 // pred_check
        %p1851 = pneg %p1850
      $region282: #{timber_encoder_forward.1} parent=5 // pred_check_branch
        %1853 = sbr.rel (%p1851) target = $region284
      $region283: #{timber_encoder_forward.1} parent=5 // pred_region
        // Predicated region
        $region285: #{timber_encoder_forward.1} parent=283 // pred_check
          %p1854 = pneg %p169
        $region286: #{timber_encoder_forward.1} parent=283 // pred_check_branch
          %1856 = sbr.rel (%p1854) target = $region288
        $region287: #{timber_encoder_forward.1} parent=283 // pred_region
          %p1857 = scmp.lt.s32.totalorder %s149, 1
          %s1858 = scalar_select %p1857, %s149, 1
          %s1859 = smul.addr %s1858, 8
          %s1860 = scalar_lea.vmem %s1, %s1859
        $region288: #{timber_encoder_forward.1} parent=283 // pred_fallthru
          _
      $region284: #{timber_encoder_forward.1} parent=5 // pred_fallthru
        _
      %p1861 = scmp.le.s32.totalorder 1, %s149
      %p1862 = scmp.lt.s32.totalorder %s149, 3
      %p1863 = pnand %p1861, %p1862
      %p1864 = pneg %p1863
      // Predicated region
      $region289: #{timber_encoder_forward.1} parent=5 // pred_check
        _
      $region290: #{timber_encoder_forward.1} parent=5 // pred_check_branch
        %1866 = sbr.rel (%p1863) target = $region292
      $region291: #{timber_encoder_forward.1} parent=5 // pred_region
        %s1867 = ssub.s32 %s149, 1
        %p1868 = scmp.lt.s32.totalorder %s154, 1
        %s1869 = scalar_select %p1868, %s154, 1
        %s1870 = smul.addr %s1869, 8
        %s1871 = scalar_lea.vmem %s1, %s1870
        %p1872 = pneg %p175
        %p1873 = pneg %p172
        %p1874 = pneg %p196
        %p1875 = pneg %p193
        %p1876 = pneg %p217
        %p1877 = pneg %p214
        %p1878 = pneg %p238
        %p1879 = pneg %p235
        %p1880 = pneg %p259
        %p1881 = pneg %p256
        %p1882 = pneg %p280
        %p1883 = pneg %p277
        %p1884 = pneg %p301
        %p1885 = pneg %p298
        %p1886 = pneg %p322
        %p1887 = pneg %p319
        %p1888 = pneg %p343
        %p1889 = pneg %p340
        %p1890 = pneg %p364
        %p1891 = pneg %p361
        %p1892 = pneg %p385
        %p1893 = pneg %p382
        %p1894 = pneg %p406
        %p1895 = pneg %p403
        %p1896 = pneg %p427
        %p1897 = pneg %p424
        %p1898 = pneg %p448
        %p1899 = pneg %p445
        %p1900 = pneg %p469
        %p1901 = pneg %p466
        %p1902 = pneg %p490
        %p1903 = pneg %p487
        %p1904 = pneg %p511
        %p1905 = pneg %p508
        %p1906 = pneg %p532
        %p1907 = pneg %p529
        %p1908 = pneg %p553
        %p1909 = pneg %p550
        %p1910 = pneg %p574
        %p1911 = pneg %p571
        %p1912 = pneg %p595
        %p1913 = pneg %p592
        %p1914 = pneg %p616
        %p1915 = pneg %p613
        %p1916 = pneg %p637
        %p1917 = pneg %p634
        %p1918 = pneg %p658
        %p1919 = pneg %p655
        %p1920 = pneg %p679
        %p1921 = pneg %p676
        %p1922 = pneg %p700
        %p1923 = pneg %p697
        %p1924 = pneg %p721
        %p1925 = pneg %p718
        %p1926 = pneg %p742
        %p1927 = pneg %p739
        %p1928 = pneg %p763
        %p1929 = pneg %p760
        %p1930 = pneg %p784
        %p1931 = pneg %p781
        %p1932 = pneg %p805
        %p1933 = pneg %p802
        %p1934 = pneg %p826
        %p1935 = pneg %p823
        %p1936 = pneg %p847
        %p1937 = pneg %p844
        %p1938 = pneg %p868
        %p1939 = pneg %p865
        %p1940 = pneg %p889
        %p1941 = pneg %p886
        %p1942 = pneg %p910
        %p1943 = pneg %p907
        %p1944 = pneg %p931
        %p1945 = pneg %p928
        %p1946 = pneg %p952
        %p1947 = pneg %p949
        %p1948 = pneg %p973
        %p1949 = pneg %p970
        %p1950 = pneg %p994
        %p1951 = pneg %p991
        %p1952 = pneg %p1015
        %p1953 = pneg %p1012
        %p1954 = pneg %p1036
        %p1955 = pneg %p1033
        %p1956 = pneg %p1057
        %p1957 = pneg %p1054
        %p1958 = pneg %p1078
        %p1959 = pneg %p1075
        %p1960 = pneg %p1099
        %p1961 = pneg %p1096
        %p1962 = pneg %p1120
        %p1963 = pneg %p1117
        %p1964 = pneg %p1141
        %p1965 = pneg %p1138
        %p1966 = pneg %p1162
        %p1967 = pneg %p1159
        %p1968 = pneg %p1183
        %p1969 = pneg %p1180
        %p1970 = pneg %p1204
        %p1971 = pneg %p1201
        %p1972 = pneg %p1225
        %p1973 = pneg %p1222
        %p1974 = pneg %p1246
        %p1975 = pneg %p1243
        %p1976 = pneg %p1267
        %p1977 = pneg %p1264
        %p1978 = pneg %p1288
        %p1979 = pneg %p1285
        %p1980 = pneg %p1309
        %p1981 = pneg %p1306
        %p1982 = pneg %p1330
        %p1983 = pneg %p1327
        %p1984 = pneg %p1351
        %p1985 = pneg %p1348
        %p1986 = pneg %p1372
        %p1987 = pneg %p1369
        %p1988 = pneg %p1393
        %p1989 = pneg %p1390
        %p1990 = pneg %p1414
        %p1991 = pneg %p1411
        %p1992 = pneg %p1435
        %p1993 = pneg %p1432
        %p1994 = pneg %p1456
        %p1995 = pneg %p1453
        %p1996 = pneg %p1477
        %p1997 = pneg %p1474
        %p1998 = pneg %p1498
        %p1999 = pneg %p1495
        %p2000 = pneg %p1519
        %p2001 = pneg %p1516
        %p2002 = pneg %p1540
        %p2003 = pneg %p1537
        %p2004 = pneg %p1561
        %p2005 = pneg %p1558
        %p2006 = pneg %p1582
        %p2007 = pneg %p1579
        %p2008 = pneg %p1608
        %p2009 = pneg %p1605
        %s2010 = sand.u32 %s1595, 1
        %s2011 = scalar_lea.sflag [#allocation3], %s2010
        %s2012 = sand.u32 %s1595, 1
        %s2013 = scalar_lea.vmem [#allocation2], %s2012
        %p2014 = pneg %p1634
        %p2015 = pneg %p1631
        %p2016 = scmp.lt.s32.totalorder %s154, 1
        %s2017 = scalar_select %p2016, %s154, 1
        %s2018 = smul.addr %s2017, 2
        %s2019 = smul.addr %s2018, 8
        %s2020 = scalar_lea.vmem %s139, %s2019
        %p2021 = scmp.lt.s32.totalorder %s154, 1
        %s2022 = scalar_select %p2021, %s154, 1
        %s2023 = smul.addr %s2022, 8
        %s2024 = scalar_lea.vmem %s1, %s2023
        %p2025 = scmp.lt.s32.totalorder %s154, 1
        %s2026 = scalar_select %p2025, %s154, 1
        %s2027 = smul.addr %s2026, 2
        %s2028 = smul.addr %s2027, 8
        %s2029 = scalar_lea.vmem %s139, %s2028
        %v2031 = vld [vmem:[%s2024] sm:$0xff]
        %v2032 = vld [vmem:[%s3] sm:$0xf]
        %v2033 = vld [vmem:[%s3 + $0x4] sm:$0xf]
        %v2034 = vld [vmem:[%s3 + $0x8] sm:$0xf]
        %v2035 = vld [vmem:[%s3 + $0xc] sm:$0xf]
        %v2036 = vld [vmem:[%s3 + $0x10] sm:$0xf]
        %v2037 = vld [vmem:[%s3 + $0x14] sm:$0xf]
        %v2038 = vld [vmem:[%s3 + $0x18] sm:$0xf]
        %v2039 = vld [vmem:[%s3 + $0x1c] sm:$0xf]
        %v2040 = vld [vmem:[%s3 + $0x20] sm:$0xf]
        %v2041 = vld [vmem:[%s3 + $0x24] sm:$0xf]
        %v2042 = vld [vmem:[%s3 + $0x28] sm:$0xf]
        %v2043 = vld [vmem:[%s3 + $0x2c] sm:$0xf]
        %v2044 = vld [vmem:[%s3 + $0x30] sm:$0xf]
        %v2045 = vld [vmem:[%s3 + $0x34] sm:$0xf]
        %v2046 = vld [vmem:[%s3 + $0x38] sm:$0xf]
        %v2047 = vld [vmem:[%s3 + $0x3c] sm:$0xf]
        %v2048 = vld [vmem:[%s3 + $0x40] sm:$0xf]
        %v2049 = vld [vmem:[%s3 + $0x44] sm:$0xf]
        %v2050 = vld [vmem:[%s3 + $0x48] sm:$0xf]
        %v2051 = vld [vmem:[%s3 + $0x4c] sm:$0xf]
        %v2052 = vld [vmem:[%s5] sm:$0xff]
        %v2053 = vld [vmem:[%s5 + $0x8] sm:$0xff]
        %v2054 = vld [vmem:[%s5 + $0x10] sm:$0xff]
        %v2055 = vld [vmem:[%s5 + $0x18] sm:$0xff]
        %v2056 = vld [vmem:[%s7] sm:$0xff]
        %v2057 = vld [vmem:[%s7 + $0x8] sm:$0xff]
        %v2058 = vld [vmem:[%s7 + $0x10] sm:$0xff]
        %v2059 = vld [vmem:[%s7 + $0x18] sm:$0xff]
        %v2060 = vld [vmem:[%s9] sm:$0xff]
        %v2061 = vld [vmem:[%s9 + $0x8] sm:$0xff]
        %v2062 = vld [vmem:[%s9 + $0x10] sm:$0xff]
        %v2063 = vld [vmem:[%s9 + $0x18] sm:$0xff]
        %v2064 = vlaneseq
        %v2065 = vand.u32 %v2064, 127
        %2066 = vrot.lane.b32.xlu0 %v2031, 2
        %v2067 = vpop.permute.xlu0 %2066
        %vm2068 = vcmp.ge.s32.totalorder %v2065, 2
        %vm2069 = vcmp.lt.s32.totalorder %v2065, 130
        %vm2070 = vmand %vm2068, %vm2069
        %v2071 = vsel %vm2070, %v2067, 0.0
        %v2072 = vpack.c.bf16 %v2071, %v2071
        %2073 = vrot.lane.b32.xlu0 %v2031, 1
        %v2074 = vpop.permute.xlu0 %2073
        %vm2075 = vcmp.ge.s32.totalorder %v2065, 1
        %vm2076 = vcmp.lt.s32.totalorder %v2065, 129
        %vm2077 = vmand %vm2075, %vm2076
        %v2078 = vsel %vm2077, %v2074, 0.0
        %v2079 = vpack.c.bf16 %v2078, %v2078
        %vm2080 = vcmp.ge.s32.totalorder %v2065, 0
        %vm2081 = vcmp.lt.s32.totalorder %v2065, 128
        %vm2082 = vmand %vm2080, %vm2081
        %v2083 = vsel %vm2082, %v2031, 0.0
        %v2084 = vpack.c.bf16 %v2083, %v2083
        %2085 = vrot.lane.b32.xlu0 %v2031, 127
        %v2086 = vpop.permute.xlu0 %2085
        %vm2087 = vcmp.ge.s32.totalorder %v2065, 4294967295
        %vm2088 = vcmp.lt.s32.totalorder %v2065, 127
        %vm2089 = vmand %vm2087, %vm2088
        %v2090 = vsel %vm2089, %v2086, 0.0
        %v2091 = vpack.c.bf16 %v2090, %v2090
        %2092 = vrot.lane.b32.xlu0 %v2031, 126
        %v2093 = vpop.permute.xlu0 %2092
        %vm2094 = vcmp.ge.s32.totalorder %v2065, 4294967294
        %vm2095 = vcmp.lt.s32.totalorder %v2065, 126
        %vm2096 = vmand %vm2094, %vm2095
        %v2097 = vsel %vm2096, %v2093, 0.0
        %v2098 = vpack.c.bf16 %v2097, %v2097
        %v2103 = vunpack.c.l.b16 %v2036
        %v2104 = vunpack.c.l.b16 %v2037
        %v2105 = vunpack.c.l.b16 %v2038
        %v2106 = vunpack.c.l.b16 %v2039
        %v2107 = vpack.c.b16 %v2104, %v2103
        %v2108 = vpack.c.b16 %v2106, %v2105
        %vm2109 = vcmask 64512
        %v2111 = vsel %vm2109, %v2107, 0
        %v2114 = vsel %vm2109, %v2108, 0
        %vm2116 = vcmask 1043456
        %v2118 = vsel %vm2116, %v2079, 0
        %2120 = vmatprep.subr.bf16.mxu0 0
        %2121 = vmatpush1.bf16.msra.mxu0 %v2118
        %2122 = vmatprep.subr.bf16.mxu0 0
        %2123 = vmatpush1.bf16.msra.mxu0 0
        %2124 = vmatprep.subr.bf16.mxu0 0
        %2125 = vmatpush1.bf16.msra.mxu0 0
        %2126 = vmatprep.subr.bf16.mxu0 0
        %2127 = vmatpush1.bf16.msra.mxu0 0
        %2128 = vmatprep.subr.bf16.mxu0 0
        %2129 = vmatpush1.bf16.msra.mxu0 0
        %2130 = vmatprep.subr.bf16.mxu0 0
        %2131 = vmatpush1.bf16.msra.mxu0 0
        %2132 = vmatprep.subr.bf16.mxu0 0
        %2133 = vmatpush1.bf16.msra.mxu0 0
        %2134 = vmatprep.subr.bf16.mxu0 0
        %2135 = vmatpush1.bf16.msra.mxu0 0
        %2136 = vmatprep.subr.bf16.mxu0 0
        %2137 = vmatpush1.bf16.msra.mxu0 0
        %2138 = vmatprep.subr.bf16.mxu0 0
        %2139 = vmatpush1.bf16.msra.mxu0 0
        %2140 = vmatprep.subr.bf16.mxu0 0
        %2141 = vmatpush1.bf16.msra.mxu0 0
        %2142 = vmatprep.subr.bf16.mxu0 0
        %2143 = vmatpush1.bf16.msra.mxu0 0
        %2144 = vmatprep.subr.bf16.mxu0 0
        %2145 = vmatpush1.bf16.msra.mxu0 0
        %2146 = vmatprep.subr.bf16.mxu0 0
        %2147 = vmatpush1.bf16.msra.mxu0 0
        %2148 = vmatprep.subr.bf16.mxu0 0
        %2149 = vmatpush1.bf16.msra.mxu0 0
        %2150 = vmatprep.subr.bf16.mxu0 0
        %2151 = vmatpush1.bf16.msra.mxu0 0
        %2152 = vmatprep.mubr.bf16.mxu0 0
        %2153 = vmatmul.mubr.bf16.gmra.mrb[0].mxu0 %v2111
        %v2154 = vpop.f32.mrb[0].mxu0
        %v2155 = vadd.f32 0.0, %v2154
        %v2156 = vpop.f32.mrb[0].mxu0
        %v2157 = vpop.f32.mrb[0].mxu0
        %v2158 = vadd.f32 0.0, %v2157
        %v2159 = vpop.f32.mrb[0].mxu0
        %2160 = vmatprep.mubr.bf16.mxu0 0
        %2161 = vmatmul.mubr.bf16.gmra.mrb[0].mxu0 %v2114
        %v2162 = vpop.f32.mrb[0].mxu0
        %v2163 = vadd.f32 0.0, %v2162
        %v2164 = vpop.f32.mrb[0].mxu0
        %v2165 = vpop.f32.mrb[0].mxu0
        %v2166 = vadd.f32 0.0, %v2165
        %v2167 = vpop.f32.mrb[0].mxu0
        %2168 = vdwg.mxu0
        %v2173 = vunpack.c.l.b16 %v2032
        %v2174 = vunpack.c.l.b16 %v2033
        %v2175 = vunpack.c.l.b16 %v2034
        %v2176 = vunpack.c.l.b16 %v2035
        %v2177 = vpack.c.b16 %v2174, %v2173
        %v2178 = vpack.c.b16 %v2176, %v2175
        %v2180 = vsel %vm2109, %v2177, 0
        %v2183 = vsel %vm2109, %v2178, 0
        %v2186 = vsel %vm2116, %v2072, 0
        %2188 = vmatprep.subr.bf16.mxu0 0
        %2189 = vmatpush1.bf16.msra.mxu0 %v2186
        %2190 = vmatprep.subr.bf16.mxu0 0
        %2191 = vmatpush1.bf16.msra.mxu0 0
        %2192 = vmatprep.subr.bf16.mxu0 0
        %2193 = vmatpush1.bf16.msra.mxu0 0
        %2194 = vmatprep.subr.bf16.mxu0 0
        %2195 = vmatpush1.bf16.msra.mxu0 0
        %2196 = vmatprep.subr.bf16.mxu0 0
        %2197 = vmatpush1.bf16.msra.mxu0 0
        %2198 = vmatprep.subr.bf16.mxu0 0
        %2199 = vmatpush1.bf16.msra.mxu0 0
        %2200 = vmatprep.subr.bf16.mxu0 0
        %2201 = vmatpush1.bf16.msra.mxu0 0
        %2202 = vmatprep.subr.bf16.mxu0 0
        %2203 = vmatpush1.bf16.msra.mxu0 0
        %2204 = vmatprep.subr.bf16.mxu0 0
        %2205 = vmatpush1.bf16.msra.mxu0 0
        %2206 = vmatprep.subr.bf16.mxu0 0
        %2207 = vmatpush1.bf16.msra.mxu0 0
        %2208 = vmatprep.subr.bf16.mxu0 0
        %2209 = vmatpush1.bf16.msra.mxu0 0
        %2210 = vmatprep.subr.bf16.mxu0 0
        %2211 = vmatpush1.bf16.msra.mxu0 0
        %2212 = vmatprep.subr.bf16.mxu0 0
        %2213 = vmatpush1.bf16.msra.mxu0 0
        %2214 = vmatprep.subr.bf16.mxu0 0
        %2215 = vmatpush1.bf16.msra.mxu0 0
        %2216 = vmatprep.subr.bf16.mxu0 0
        %2217 = vmatpush1.bf16.msra.mxu0 0
        %2218 = vmatprep.subr.bf16.mxu0 0
        %2219 = vmatpush1.bf16.msra.mxu0 0
        %2220 = vmatprep.mubr.bf16.mxu0 0
        %2221 = vmatmul.mubr.bf16.gmra.mrb[0].mxu0 %v2180
        %v2222 = vpop.f32.mrb[0].mxu0
        %v2223 = vadd.f32 %v2155, %v2222
        %v2224 = vpop.f32.mrb[0].mxu0
        %v2225 = vpop.f32.mrb[0].mxu0
        %v2226 = vadd.f32 %v2158, %v2225
        %v2227 = vpop.f32.mrb[0].mxu0
        %2228 = vmatprep.mubr.bf16.mxu0 0
        %2229 = vmatmul.mubr.bf16.gmra.mrb[0].mxu0 %v2183
        %v2230 = vpop.f32.mrb[0].mxu0
        %v2231 = vadd.f32 %v2163, %v2230
        %v2232 = vpop.f32.mrb[0].mxu0
        %v2233 = vpop.f32.mrb[0].mxu0
        %v2234 = vadd.f32 %v2166, %v2233
        %v2235 = vpop.f32.mrb[0].mxu0
        %2236 = vdwg.mxu0
        %v2241 = vunpack.c.l.b16 %v2040
        %v2242 = vunpack.c.l.b16 %v2041
        %v2243 = vunpack.c.l.b16 %v2042
        %v2244 = vunpack.c.l.b16 %v2043
        %v2245 = vpack.c.b16 %v2242, %v2241
        %v2246 = vpack.c.b16 %v2244, %v2243
        %v2248 = vsel %vm2109, %v2245, 0
        %v2251 = vsel %vm2109, %v2246, 0
        %v2254 = vsel %vm2116, %v2084, 0
        %2256 = vmatprep.subr.bf16.mxu0 0
        %2257 = vmatpush1.bf16.msra.mxu0 %v2254
        %2258 = vmatprep.subr.bf16.mxu0 0
        %2259 = vmatpush1.bf16.msra.mxu0 0
        %2260 = vmatprep.subr.bf16.mxu0 0
        %2261 = vmatpush1.bf16.msra.mxu0 0
        %2262 = vmatprep.subr.bf16.mxu0 0
        %2263 = vmatpush1.bf16.msra.mxu0 0
        %2264 = vmatprep.subr.bf16.mxu0 0
        %2265 = vmatpush1.bf16.msra.mxu0 0
        %2266 = vmatprep.subr.bf16.mxu0 0
        %2267 = vmatpush1.bf16.msra.mxu0 0
        %2268 = vmatprep.subr.bf16.mxu0 0
        %2269 = vmatpush1.bf16.msra.mxu0 0
        %2270 = vmatprep.subr.bf16.mxu0 0
        %2271 = vmatpush1.bf16.msra.mxu0 0
        %2272 = vmatprep.subr.bf16.mxu0 0
        %2273 = vmatpush1.bf16.msra.mxu0 0
        %2274 = vmatprep.subr.bf16.mxu0 0
        %2275 = vmatpush1.bf16.msra.mxu0 0
        %2276 = vmatprep.subr.bf16.mxu0 0
        %2277 = vmatpush1.bf16.msra.mxu0 0
        %2278 = vmatprep.subr.bf16.mxu0 0
        %2279 = vmatpush1.bf16.msra.mxu0 0
        %2280 = vmatprep.subr.bf16.mxu0 0
        %2281 = vmatpush1.bf16.msra.mxu0 0
        %2282 = vmatprep.subr.bf16.mxu0 0
        %2283 = vmatpush1.bf16.msra.mxu0 0
        %2284 = vmatprep.subr.bf16.mxu0 0
        %2285 = vmatpush1.bf16.msra.mxu0 0
        %2286 = vmatprep.subr.bf16.mxu0 0
        %2287 = vmatpush1.bf16.msra.mxu0 0
        %2288 = vmatprep.mubr.bf16.mxu0 0
        %2289 = vmatmul.mubr.bf16.gmra.mrb[0].mxu0 %v2248
        %v2290 = vpop.f32.mrb[0].mxu0
        %v2291 = vadd.f32 0.0, %v2290
        %v2292 = vpop.f32.mrb[0].mxu0
        %v2293 = vpop.f32.mrb[0].mxu0
        %v2294 = vadd.f32 0.0, %v2293
        %v2295 = vpop.f32.mrb[0].mxu0
        %2296 = vmatprep.mubr.bf16.mxu0 0
        %2297 = vmatmul.mubr.bf16.gmra.mrb[0].mxu0 %v2251
        %v2298 = vpop.f32.mrb[0].mxu0
        %v2299 = vadd.f32 0.0, %v2298
        %v2300 = vpop.f32.mrb[0].mxu0
        %v2301 = vpop.f32.mrb[0].mxu0
        %v2302 = vadd.f32 0.0, %v2301
        %v2303 = vpop.f32.mrb[0].mxu0
        %2304 = vdwg.mxu0
        %v2305 = vadd.f32 %v2223, %v2291
        %v2306 = vadd.f32 %v2226, %v2294
        %v2307 = vadd.f32 %v2231, %v2299
        %v2308 = vadd.f32 %v2234, %v2302
        %v2313 = vunpack.c.l.b16 %v2044
        %v2314 = vunpack.c.l.b16 %v2045
        %v2315 = vunpack.c.l.b16 %v2046
        %v2316 = vunpack.c.l.b16 %v2047
        %v2317 = vpack.c.b16 %v2314, %v2313
        %v2318 = vpack.c.b16 %v2316, %v2315
        %v2320 = vsel %vm2109, %v2317, 0
        %v2323 = vsel %vm2109, %v2318, 0
        %v2326 = vsel %vm2116, %v2091, 0
        %2328 = vmatprep.subr.bf16.mxu0 0
        %2329 = vmatpush1.bf16.msra.mxu0 %v2326
        %2330 = vmatprep.subr.bf16.mxu0 0
        %2331 = vmatpush1.bf16.msra.mxu0 0
        %2332 = vmatprep.subr.bf16.mxu0 0
        %2333 = vmatpush1.bf16.msra.mxu0 0
        %2334 = vmatprep.subr.bf16.mxu0 0
        %2335 = vmatpush1.bf16.msra.mxu0 0
        %2336 = vmatprep.subr.bf16.mxu0 0
        %2337 = vmatpush1.bf16.msra.mxu0 0
        %2338 = vmatprep.subr.bf16.mxu0 0
        %2339 = vmatpush1.bf16.msra.mxu0 0
        %2340 = vmatprep.subr.bf16.mxu0 0
        %2341 = vmatpush1.bf16.msra.mxu0 0
        %2342 = vmatprep.subr.bf16.mxu0 0
        %2343 = vmatpush1.bf16.msra.mxu0 0
        %2344 = vmatprep.subr.bf16.mxu0 0
        %2345 = vmatpush1.bf16.msra.mxu0 0
        %2346 = vmatprep.subr.bf16.mxu0 0
        %2347 = vmatpush1.bf16.msra.mxu0 0
        %2348 = vmatprep.subr.bf16.mxu0 0
        %2349 = vmatpush1.bf16.msra.mxu0 0
        %2350 = vmatprep.subr.bf16.mxu0 0
        %2351 = vmatpush1.bf16.msra.mxu0 0
        %2352 = vmatprep.subr.bf16.mxu0 0
        %2353 = vmatpush1.bf16.msra.mxu0 0
        %2354 = vmatprep.subr.bf16.mxu0 0
        %2355 = vmatpush1.bf16.msra.mxu0 0
        %2356 = vmatprep.subr.bf16.mxu0 0
        %2357 = vmatpush1.bf16.msra.mxu0 0
        %2358 = vmatprep.subr.bf16.mxu0 0
        %2359 = vmatpush1.bf16.msra.mxu0 0
        %2360 = vmatprep.mubr.bf16.mxu0 0
        %2361 = vmatmul.mubr.bf16.gmra.mrb[0].mxu0 %v2320
        %v2362 = vpop.f32.mrb[0].mxu0
        %v2363 = vadd.f32 0.0, %v2362
        %v2364 = vpop.f32.mrb[0].mxu0
        %v2365 = vpop.f32.mrb[0].mxu0
        %v2366 = vadd.f32 0.0, %v2365
        %v2367 = vpop.f32.mrb[0].mxu0
        %2368 = vmatprep.mubr.bf16.mxu0 0
        %2369 = vmatmul.mubr.bf16.gmra.mrb[0].mxu0 %v2323
        %v2370 = vpop.f32.mrb[0].mxu0
        %v2371 = vadd.f32 0.0, %v2370
        %v2372 = vpop.f32.mrb[0].mxu0
        %v2373 = vpop.f32.mrb[0].mxu0
        %v2374 = vadd.f32 0.0, %v2373
        %v2375 = vpop.f32.mrb[0].mxu0
        %2376 = vdwg.mxu0
        %v2377 = vadd.f32 %v2305, %v2363
        %v2378 = vadd.f32 %v2306, %v2366
        %v2379 = vadd.f32 %v2307, %v2371
        %v2380 = vadd.f32 %v2308, %v2374
        %v2385 = vunpack.c.l.b16 %v2048
        %v2386 = vunpack.c.l.b16 %v2049
        %v2387 = vunpack.c.l.b16 %v2050
        %v2388 = vunpack.c.l.b16 %v2051
        %v2389 = vpack.c.b16 %v2386, %v2385
        %v2390 = vpack.c.b16 %v2388, %v2387
        %v2392 = vsel %vm2109, %v2389, 0
        %v2395 = vsel %vm2109, %v2390, 0
        %v2398 = vsel %vm2116, %v2098, 0
        %2400 = vmatprep.subr.bf16.mxu0 0
        %2401 = vmatpush1.bf16.msra.mxu0 %v2398
        %2402 = vmatprep.subr.bf16.mxu0 0
        %2403 = vmatpush1.bf16.msra.mxu0 0
        %2404 = vmatprep.subr.bf16.mxu0 0
        %2405 = vmatpush1.bf16.msra.mxu0 0
        %2406 = vmatprep.subr.bf16.mxu0 0
        %2407 = vmatpush1.bf16.msra.mxu0 0
        %2408 = vmatprep.subr.bf16.mxu0 0
        %2409 = vmatpush1.bf16.msra.mxu0 0
        %2410 = vmatprep.subr.bf16.mxu0 0
        %2411 = vmatpush1.bf16.msra.mxu0 0
        %2412 = vmatprep.subr.bf16.mxu0 0
        %2413 = vmatpush1.bf16.msra.mxu0 0
        %2414 = vmatprep.subr.bf16.mxu0 0
        %2415 = vmatpush1.bf16.msra.mxu0 0
        %2416 = vmatprep.subr.bf16.mxu0 0
        %2417 = vmatpush1.bf16.msra.mxu0 0
        %2418 = vmatprep.subr.bf16.mxu0 0
        %2419 = vmatpush1.bf16.msra.mxu0 0
        %2420 = vmatprep.subr.bf16.mxu0 0
        %2421 = vmatpush1.bf16.msra.mxu0 0
        %2422 = vmatprep.subr.bf16.mxu0 0
        %2423 = vmatpush1.bf16.msra.mxu0 0
        %2424 = vmatprep.subr.bf16.mxu0 0
        %2425 = vmatpush1.bf16.msra.mxu0 0
        %2426 = vmatprep.subr.bf16.mxu0 0
        %2427 = vmatpush1.bf16.msra.mxu0 0
        %2428 = vmatprep.subr.bf16.mxu0 0
        %2429 = vmatpush1.bf16.msra.mxu0 0
        %2430 = vmatprep.subr.bf16.mxu0 0
        %2431 = vmatpush1.bf16.msra.mxu0 0
        %2432 = vmatprep.mubr.bf16.mxu0 0
        %2433 = vmatmul.mubr.bf16.gmra.mrb[0].mxu0 %v2392
        %v2434 = vpop.f32.mrb[0].mxu0
        %v2435 = vadd.f32 0.0, %v2434
        %v2436 = vpop.f32.mrb[0].mxu0
        %v2437 = vpop.f32.mrb[0].mxu0
        %v2438 = vadd.f32 0.0, %v2437
        %v2439 = vpop.f32.mrb[0].mxu0
        %2440 = vmatprep.mubr.bf16.mxu0 0
        %2441 = vmatmul.mubr.bf16.gmra.mrb[0].mxu0 %v2395
        %v2442 = vpop.f32.mrb[0].mxu0
        %v2443 = vadd.f32 0.0, %v2442
        %v2444 = vpop.f32.mrb[0].mxu0
        %v2445 = vpop.f32.mrb[0].mxu0
        %v2446 = vadd.f32 0.0, %v2445
        %v2447 = vpop.f32.mrb[0].mxu0
        %2448 = vdwg.mxu0
        %v2449 = vadd.f32 %v2377, %v2435
        %v2450 = vadd.f32 %v2378, %v2438
        %v2451 = vadd.f32 %v2379, %v2443
        %v2452 = vadd.f32 %v2380, %v2446
        %2454 = vset.pattern.permute.xlu0 0
        %2455 = vperm.xlu0 %2454, %v2052
        %v2456 = vpop.permute.xlu0 %2455
        %2459 = vset.pattern.permute.xlu0 0
        %2460 = vperm.xlu0 %2459, %v2053
        %v2461 = vpop.permute.xlu0 %2460
        %2464 = vset.pattern.permute.xlu0 0
        %2465 = vperm.xlu0 %2464, %v2054
        %v2466 = vpop.permute.xlu0 %2465
        %2469 = vset.pattern.permute.xlu0 0
        %2470 = vperm.xlu0 %2469, %v2055
        %v2471 = vpop.permute.xlu0 %2470
        %v2473 = vadd.f32 %v2449, %v2456
        %v2474 = vadd.f32 %v2450, %v2461
        %v2475 = vadd.f32 %v2451, %v2466
        %v2476 = vadd.f32 %v2452, %v2471
        %v2477 = vmax.f32 %v2473, 0.0
        %v2478 = vmax.f32 %v2474, 0.0
        %v2479 = vmax.f32 %v2475, 0.0
        %v2480 = vmax.f32 %v2476, 0.0
        %2482 = vset.pattern.permute.xlu0 0
        %2483 = vperm.xlu0 %2482, %v2056
        %v2484 = vpop.permute.xlu0 %2483
        %2487 = vset.pattern.permute.xlu0 0
        %2488 = vperm.xlu0 %2487, %v2057
        %v2489 = vpop.permute.xlu0 %2488
        %2492 = vset.pattern.permute.xlu0 0
        %2493 = vperm.xlu0 %2492, %v2058
        %v2494 = vpop.permute.xlu0 %2493
        %2497 = vset.pattern.permute.xlu0 0
        %2498 = vperm.xlu0 %2497, %v2059
        %v2499 = vpop.permute.xlu0 %2498
        %v2501 = vmul.f32 %v2477, %v2484
        %v2502 = vmul.f32 %v2478, %v2489
        %v2503 = vmul.f32 %v2479, %v2494
        %v2504 = vmul.f32 %v2480, %v2499
        %2506 = vset.pattern.permute.xlu0 0
        %2507 = vperm.xlu0 %2506, %v2060
        %v2508 = vpop.permute.xlu0 %2507
        %2511 = vset.pattern.permute.xlu0 0
        %2512 = vperm.xlu0 %2511, %v2061
        %v2513 = vpop.permute.xlu0 %2512
        %2516 = vset.pattern.permute.xlu0 0
        %2517 = vperm.xlu0 %2516, %v2062
        %v2518 = vpop.permute.xlu0 %2517
        %2521 = vset.pattern.permute.xlu0 0
        %2522 = vperm.xlu0 %2521, %v2063
        %v2523 = vpop.permute.xlu0 %2522
        %v2525 = vadd.f32 %v2501, %v2508
        %v2526 = vadd.f32 %v2502, %v2513
        %v2527 = vadd.f32 %v2503, %v2518
        %v2528 = vadd.f32 %v2504, %v2523
        %v2529 = vpack.c.bf16 %v2526, %v2525
        %v2530 = vpack.c.bf16 %v2528, %v2527
        %v2531 = vld [vmem:[%s11] sm:$0xf]
        %v2532 = vld [vmem:[%s11 + $0x4] sm:$0xf]
        %v2533 = vld [vmem:[%s11 + $0x8] sm:$0xf]
        %v2534 = vld [vmem:[%s11 + $0xc] sm:$0xf]
        %v2535 = vld [vmem:[%s13] sm:$0xff]
        %v2536 = vld [vmem:[%s13 + $0x8] sm:$0xff]
        %v2537 = vld [vmem:[%s13 + $0x10] sm:$0xff]
        %v2538 = vld [vmem:[%s13 + $0x18] sm:$0xff]
        %v2539 = vld [vmem:[%s15] sm:$0xff]
        %v2540 = vld [vmem:[%s15 + $0x8] sm:$0xff]
        %v2541 = vld [vmem:[%s15 + $0x10] sm:$0xff]
        %v2542 = vld [vmem:[%s15 + $0x18] sm:$0xff]
        %v2543 = vld [vmem:[%s17] sm:$0xff]
        %v2544 = vld [vmem:[%s17 + $0x8] sm:$0xff]
        %v2545 = vld [vmem:[%s17 + $0x10] sm:$0xff]
        %v2546 = vld [vmem:[%s17 + $0x18] sm:$0xff]
        %v2547 = vld [vmem:[%s19] sm:$0xf]
        %v2548 = vld [vmem:[%s19 + $0x4] sm:$0xf]
        %v2549 = vld [vmem:[%s19 + $0x8] sm:$0xf]
        %v2550 = vld [vmem:[%s19 + $0xc] sm:$0xf]
        %v2551 = vld [vmem:[%s19 + $0x10] sm:$0xf]
        %v2552 = vld [vmem:[%s19 + $0x14] sm:$0xf]
        %v2553 = vld [vmem:[%s19 + $0x18] sm:$0xf]
        %v2554 = vld [vmem:[%s19 + $0x1c] sm:$0xf]
        %v2555 = vld [vmem:[%s19 + $0x20] sm:$0xf]
        %v2556 = vld [vmem:[%s21] sm:$0xff]
        %v2557 = vld [vmem:[%s21 + $0x8] sm:$0xff]
        %v2558 = vld [vmem:[%s21 + $0x10] sm:$0xff]
        %v2559 = vld [vmem:[%s23] sm:$0xff]
        %v2560 = vld [vmem:[%s23 + $0x8] sm:$0xff]
        %v2561 = vld [vmem:[%s23 + $0x10] sm:$0xff]
        %v2562 = vld [vmem:[%s25] sm:$0xff]
        %v2563 = vld [vmem:[%s25 + $0x8] sm:$0xff]
        %v2564 = vld [vmem:[%s25 + $0x10] sm:$0xff]
        %v2565 = vld [vmem:[%s27] sm:$0xf]
        %v2566 = vld [vmem:[%s27 + $0x4] sm:$0xf]
        %v2567 = vld [vmem:[%s27 + $0x8] sm:$0xf]
        %v2568 = vld [vmem:[%s27 + $0xc] sm:$0xf]
        %v2569 = vld [vmem:[%s29] sm:$0xf]
        %v2570 = vld [vmem:[%s29 + $0x4] sm:$0xf]
        %v2571 = vld [vmem:[%s29 + $0x8] sm:$0xf]
        %v2572 = vld [vmem:[%s29 + $0xc] sm:$0xf]
        %v2573 = vld [vmem:[%s31] sm:$0xff]
        %v2574 = vld [vmem:[%s31 + $0x8] sm:$0xff]
        %v2575 = vld [vmem:[%s31 + $0x10] sm:$0xff]
        %v2576 = vld [vmem:[%s31 + $0x18] sm:$0xff]
        %v2577 = vld [vmem:[%s33] sm:$0xff]
        %v2578 = vld [vmem:[%s33 + $0x8] sm:$0xff]
        %v2579 = vld [vmem:[%s33 + $0x10] sm:$0xff]
        %v2580 = vld [vmem:[%s33 + $0x18] sm:$0xff]
        %v2581 = vld [vmem:[%s35] sm:$0xff]
        %v2582 = vld [vmem:[%s35 + $0x8] sm:$0xff]
        %v2583 = vld [vmem:[%s35 + $0x10] sm:$0xff]
        %v2584 = vld [vmem:[%s35 + $0x18] sm:$0xff]
        %v2585 = vld [vmem:[%s37] sm:$0xf]
        %v2586 = vld [vmem:[%s39] sm:$0xff]
        %v2587 = vld [vmem:[%s41] sm:$0xf]
        %v2588 = vld [vmem:[%s41 + $0x4] sm:$0xf]
        %v2589 = vld [vmem:[%s41 + $0x8] sm:$0xf]
        %v2590 = vld [vmem:[%s41 + $0xc] sm:$0xf]
        %v2591 = vld [vmem:[%s43] sm:$0xff]
        %v2592 = vld [vmem:[%s43 + $0x8] sm:$0xff]
        %v2593 = vld [vmem:[%s43 + $0x10] sm:$0xff]
        %v2594 = vld [vmem:[%s43 + $0x18] sm:$0xff]
        %v2595 = vld [vmem:[%s45] sm:$0xf]
        %v2596 = vld [vmem:[%s45 + $0x4] sm:$0xf]
        %v2597 = vld [vmem:[%s45 + $0x8] sm:$0xf]
        %v2598 = vld [vmem:[%s45 + $0xc] sm:$0xf]
        %2600 = vset.pattern.permute.xlu0 0
        %2601 = vperm.xlu0 %2600, %v2535
        %v2602 = vpop.permute.xlu0 %2601
        %2605 = vset.pattern.permute.xlu0 0
        %2606 = vperm.xlu0 %2605, %v2536
        %v2607 = vpop.permute.xlu0 %2606
        %2610 = vset.pattern.permute.xlu0 0
        %2611 = vperm.xlu0 %2610, %v2537
        %v2612 = vpop.permute.xlu0 %2611
        %2615 = vset.pattern.permute.xlu0 0
        %2616 = vperm.xlu0 %2615, %v2538
        %v2617 = vpop.permute.xlu0 %2616
        %v2623 = vunpack.c.l.b16 %v2531
        %v2624 = vunpack.c.l.b16 %v2532
        %v2625 = vunpack.c.l.b16 %v2533
        %v2626 = vunpack.c.l.b16 %v2534
        %v2627 = vpack.c.b16 %v2624, %v2623
        %v2628 = vpack.c.b16 %v2626, %v2625
        %vm2629 = vcmask 261120
        %v2631 = vsel %vm2629, %v2627, 0
        %v2634 = vsel %vm2629, %v2628, 0
        %2636 = vmatprep.subr.bf16.mxu0 0
        %2637 = vmatpush1.bf16.msra.mxu0 %v2529
        %2638 = vmatprep.subr.bf16.mxu0 0
        %2639 = vmatpush1.bf16.msra.mxu0 %v2530
        %2640 = vmatprep.subr.bf16.mxu0 0
        %2641 = vmatpush1.bf16.msra.mxu0 0
        %2642 = vmatprep.subr.bf16.mxu0 0
        %2643 = vmatpush1.bf16.msra.mxu0 0
        %2644 = vmatprep.subr.bf16.mxu0 0
        %2645 = vmatpush1.bf16.msra.mxu0 0
        %2646 = vmatprep.subr.bf16.mxu0 0
        %2647 = vmatpush1.bf16.msra.mxu0 0
        %2648 = vmatprep.subr.bf16.mxu0 0
        %2649 = vmatpush1.bf16.msra.mxu0 0
        %2650 = vmatprep.subr.bf16.mxu0 0
        %2651 = vmatpush1.bf16.msra.mxu0 0
        %2652 = vmatprep.subr.bf16.mxu0 0
        %2653 = vmatpush1.bf16.msra.mxu0 0
        %2654 = vmatprep.subr.bf16.mxu0 0
        %2655 = vmatpush1.bf16.msra.mxu0 0
        %2656 = vmatprep.subr.bf16.mxu0 0
        %2657 = vmatpush1.bf16.msra.mxu0 0
        %2658 = vmatprep.subr.bf16.mxu0 0
        %2659 = vmatpush1.bf16.msra.mxu0 0
        %2660 = vmatprep.subr.bf16.mxu0 0
        %2661 = vmatpush1.bf16.msra.mxu0 0
        %2662 = vmatprep.subr.bf16.mxu0 0
        %2663 = vmatpush1.bf16.msra.mxu0 0
        %2664 = vmatprep.subr.bf16.mxu0 0
        %2665 = vmatpush1.bf16.msra.mxu0 0
        %2666 = vmatprep.subr.bf16.mxu0 0
        %2667 = vmatpush1.bf16.msra.mxu0 0
        %2668 = vmatprep.mubr.bf16.mxu0 0
        %2669 = vmatmul.mubr.bf16.gmra.mrb[0].mxu0 %v2631
        %v2670 = vpop.f32.mrb[0].mxu0
        %v2671 = vadd.f32 %v2602, %v2670
        %v2672 = vpop.f32.mrb[0].mxu0
        %v2673 = vpop.f32.mrb[0].mxu0
        %v2674 = vadd.f32 %v2607, %v2673
        %v2675 = vpop.f32.mrb[0].mxu0
        %2676 = vmatprep.mubr.bf16.mxu0 0
        %2677 = vmatmul.mubr.bf16.gmra.mrb[0].mxu0 %v2634
        %v2678 = vpop.f32.mrb[0].mxu0
        %v2679 = vadd.f32 %v2612, %v2678
        %v2680 = vpop.f32.mrb[0].mxu0
        %v2681 = vpop.f32.mrb[0].mxu0
        %v2682 = vadd.f32 %v2617, %v2681
        %v2683 = vpop.f32.mrb[0].mxu0
        %2684 = vdwg.mxu0
        %v2685 = vmax.f32 %v2671, 0.0
        %v2686 = vmax.f32 %v2674, 0.0
        %v2687 = vmax.f32 %v2679, 0.0
        %v2688 = vmax.f32 %v2682, 0.0
        %2690 = vset.pattern.permute.xlu0 0
        %2691 = vperm.xlu0 %2690, %v2539
        %v2692 = vpop.permute.xlu0 %2691
        %2695 = vset.pattern.permute.xlu0 0
        %2696 = vperm.xlu0 %2695, %v2540
        %v2697 = vpop.permute.xlu0 %2696
        %2700 = vset.pattern.permute.xlu0 0
        %2701 = vperm.xlu0 %2700, %v2541
        %v2702 = vpop.permute.xlu0 %2701
        %2705 = vset.pattern.permute.xlu0 0
        %2706 = vperm.xlu0 %2705, %v2542
        %v2707 = vpop.permute.xlu0 %2706
        %v2709 = vmul.f32 %v2685, %v2692
        %v2710 = vmul.f32 %v2686, %v2697
        %v2711 = vmul.f32 %v2687, %v2702
        %v2712 = vmul.f32 %v2688, %v2707
        %2714 = vset.pattern.permute.xlu0 0
        %2715 = vperm.xlu0 %2714, %v2543
        %v2716 = vpop.permute.xlu0 %2715
        %2719 = vset.pattern.permute.xlu0 0
        %2720 = vperm.xlu0 %2719, %v2544
        %v2721 = vpop.permute.xlu0 %2720
        %2724 = vset.pattern.permute.xlu0 0
        %2725 = vperm.xlu0 %2724, %v2545
        %v2726 = vpop.permute.xlu0 %2725
        %2729 = vset.pattern.permute.xlu0 0
        %2730 = vperm.xlu0 %2729, %v2546
        %v2731 = vpop.permute.xlu0 %2730
        %v2733 = vadd.f32 %v2709, %v2716
        %v2734 = vadd.f32 %v2710, %v2721
        %v2735 = vadd.f32 %v2711, %v2726
        %v2736 = vadd.f32 %v2712, %v2731
        %2737 = vrot.lane.b32.xlu0 %v2734, 2
        %v2738 = vpop.permute.xlu0 %2737
        %2739 = vrot.lane.b32.xlu0 %v2735, 2
        %v2740 = vpop.permute.xlu0 %2739
        %2741 = vrot.lane.b32.xlu0 %v2736, 2
        %v2742 = vpop.permute.xlu0 %2741
        %v2743 = vsel %vm2070, %v2738, 0.0
        %v2744 = vsel %vm2070, %v2740, 0.0
        %v2745 = vsel %vm2070, %v2742, 0.0
        %v2746 = vpack.c.bf16 %v2744, %v2743
        %v2747 = vpack.c.bf16 %v2745, %v2745
        %v2748 = vsel %vm2082, %v2734, 0.0
        %v2749 = vsel %vm2082, %v2735, 0.0
        %v2750 = vsel %vm2082, %v2736, 0.0
        %v2751 = vpack.c.bf16 %v2749, %v2748
        %v2752 = vpack.c.bf16 %v2750, %v2750
        %2753 = vrot.lane.b32.xlu0 %v2734, 126
        %v2754 = vpop.permute.xlu0 %2753
        %2755 = vrot.lane.b32.xlu0 %v2735, 126
        %v2756 = vpop.permute.xlu0 %2755
        %2757 = vrot.lane.b32.xlu0 %v2736, 126
        %v2758 = vpop.permute.xlu0 %2757
        %v2759 = vsel %vm2096, %v2754, 0.0
        %v2760 = vsel %vm2096, %v2756, 0.0
        %v2761 = vsel %vm2096, %v2758, 0.0
        %v2762 = vpack.c.bf16 %v2760, %v2759
        %v2763 = vpack.c.bf16 %v2761, %v2761
        %v2767 = vunpack.c.l.b16 %v2550
        %v2768 = vunpack.c.l.b16 %v2551
        %v2769 = vunpack.c.l.b16 %v2552
        %v2770 = vpack.c.b16 %v2768, %v2767
        %v2771 = vpack.c.b16 %v2769, %v2769
        %vm2772 = vcmask 195584
        %v2774 = vsel %vm2772, %v2770, 0
        %v2777 = vsel %vm2772, %v2771, 0
        %v2780 = vsel %vm2116, %v2752, 0
        %2782 = vmatprep.subr.bf16.mxu0 0
        %2783 = vmatpush1.bf16.msra.mxu0 %v2751
        %2784 = vmatprep.subr.bf16.mxu0 0
        %2785 = vmatpush1.bf16.msra.mxu0 %v2780
        %2786 = vmatprep.subr.bf16.mxu0 0
        %2787 = vmatpush1.bf16.msra.mxu0 0
        %2788 = vmatprep.subr.bf16.mxu0 0
        %2789 = vmatpush1.bf16.msra.mxu0 0
        %2790 = vmatprep.subr.bf16.mxu0 0
        %2791 = vmatpush1.bf16.msra.mxu0 0
        %2792 = vmatprep.subr.bf16.mxu0 0
        %2793 = vmatpush1.bf16.msra.mxu0 0
        %2794 = vmatprep.subr.bf16.mxu0 0
        %2795 = vmatpush1.bf16.msra.mxu0 0
        %2796 = vmatprep.subr.bf16.mxu0 0
        %2797 = vmatpush1.bf16.msra.mxu0 0
        %2798 = vmatprep.subr.bf16.mxu0 0
        %2799 = vmatpush1.bf16.msra.mxu0 0
        %2800 = vmatprep.subr.bf16.mxu0 0
        %2801 = vmatpush1.bf16.msra.mxu0 0
        %2802 = vmatprep.subr.bf16.mxu0 0
        %2803 = vmatpush1.bf16.msra.mxu0 0
        %2804 = vmatprep.subr.bf16.mxu0 0
        %2805 = vmatpush1.bf16.msra.mxu0 0
        %2806 = vmatprep.subr.bf16.mxu0 0
        %2807 = vmatpush1.bf16.msra.mxu0 0
        %2808 = vmatprep.subr.bf16.mxu0 0
        %2809 = vmatpush1.bf16.msra.mxu0 0
        %2810 = vmatprep.subr.bf16.mxu0 0
        %2811 = vmatpush1.bf16.msra.mxu0 0
        %2812 = vmatprep.subr.bf16.mxu0 0
        %2813 = vmatpush1.bf16.msra.mxu0 0
        %2814 = vmatprep.mubr.bf16.mxu0 0
        %2815 = vmatmul.mubr.bf16.gmra.mrb[0].mxu0 %v2774
        %v2816 = vpop.f32.mrb[0].mxu0
        %v2817 = vadd.f32 0.0, %v2816
        %v2818 = vpop.f32.mrb[0].mxu0
        %v2819 = vpop.f32.mrb[0].mxu0
        %v2820 = vadd.f32 0.0, %v2819
        %v2821 = vpop.f32.mrb[0].mxu0
        %2822 = vmatprep.mubr.bf16.mxu0 0
        %2823 = vmatmul.mubr.bf16.gmra.mrb[0].mxu0 %v2777
        %v2824 = vpop.f32.mrb[0].mxu0
        %v2825 = vadd.f32 0.0, %v2824
        %v2826 = vpop.f32.mrb[0].mxu0
        %v2827 = vpop.f32.mrb[0].mxu0
        %v2828 = vpop.f32.mrb[0].mxu0
        %2829 = vdwg.mxu0
        %v2833 = vunpack.c.l.b16 %v2547
        %v2834 = vunpack.c.l.b16 %v2548
        %v2835 = vunpack.c.l.b16 %v2549
        %v2836 = vpack.c.b16 %v2834, %v2833
        %v2837 = vpack.c.b16 %v2835, %v2835
        %v2839 = vsel %vm2772, %v2836, 0
        %v2842 = vsel %vm2772, %v2837, 0
        %v2845 = vsel %vm2116, %v2747, 0
        %2847 = vmatprep.subr.bf16.mxu0 0
        %2848 = vmatpush1.bf16.msra.mxu0 %v2746
        %2849 = vmatprep.subr.bf16.mxu0 0
        %2850 = vmatpush1.bf16.msra.mxu0 %v2845
        %2851 = vmatprep.subr.bf16.mxu0 0
        %2852 = vmatpush1.bf16.msra.mxu0 0
        %2853 = vmatprep.subr.bf16.mxu0 0
        %2854 = vmatpush1.bf16.msra.mxu0 0
        %2855 = vmatprep.subr.bf16.mxu0 0
        %2856 = vmatpush1.bf16.msra.mxu0 0
        %2857 = vmatprep.subr.bf16.mxu0 0
        %2858 = vmatpush1.bf16.msra.mxu0 0
        %2859 = vmatprep.subr.bf16.mxu0 0
        %2860 = vmatpush1.bf16.msra.mxu0 0
        %2861 = vmatprep.subr.bf16.mxu0 0
        %2862 = vmatpush1.bf16.msra.mxu0 0
        %2863 = vmatprep.subr.bf16.mxu0 0
        %2864 = vmatpush1.bf16.msra.mxu0 0
        %2865 = vmatprep.subr.bf16.mxu0 0
        %2866 = vmatpush1.bf16.msra.mxu0 0
        %2867 = vmatprep.subr.bf16.mxu0 0
        %2868 = vmatpush1.bf16.msra.mxu0 0
        %2869 = vmatprep.subr.bf16.mxu0 0
        %2870 = vmatpush1.bf16.msra.mxu0 0
        %2871 = vmatprep.subr.bf16.mxu0 0
        %2872 = vmatpush1.bf16.msra.mxu0 0
        %2873 = vmatprep.subr.bf16.mxu0 0
        %2874 = vmatpush1.bf16.msra.mxu0 0
        %2875 = vmatprep.subr.bf16.mxu0 0
        %2876 = vmatpush1.bf16.msra.mxu0 0
        %2877 = vmatprep.subr.bf16.mxu0 0
        %2878 = vmatpush1.bf16.msra.mxu0 0
        %2879 = vmatprep.mubr.bf16.mxu0 0
        %2880 = vmatmul.mubr.bf16.gmra.mrb[0].mxu0 %v2839
        %v2881 = vpop.f32.mrb[0].mxu0
        %v2882 = vadd.f32 %v2817, %v2881
        %v2883 = vpop.f32.mrb[0].mxu0
        %v2884 = vpop.f32.mrb[0].mxu0
        %v2885 = vadd.f32 %v2820, %v2884
        %v2886 = vpop.f32.mrb[0].mxu0
        %2887 = vmatprep.mubr.bf16.mxu0 0
        %2888 = vmatmul.mubr.bf16.gmra.mrb[0].mxu0 %v2842
        %v2889 = vpop.f32.mrb[0].mxu0
        %v2890 = vadd.f32 %v2825, %v2889
        %v2891 = vpop.f32.mrb[0].mxu0
        %v2892 = vpop.f32.mrb[0].mxu0
        %v2893 = vpop.f32.mrb[0].mxu0
        %2894 = vdwg.mxu0
        %v2898 = vunpack.c.l.b16 %v2553
        %v2899 = vunpack.c.l.b16 %v2554
        %v2900 = vunpack.c.l.b16 %v2555
        %v2901 = vpack.c.b16 %v2899, %v2898
        %v2902 = vpack.c.b16 %v2900, %v2900
        %v2904 = vsel %vm2772, %v2901, 0
        %v2907 = vsel %vm2772, %v2902, 0
        %v2910 = vsel %vm2116, %v2763, 0
        %2912 = vmatprep.subr.bf16.mxu0 0
        %2913 = vmatpush1.bf16.msra.mxu0 %v2762
        %2914 = vmatprep.subr.bf16.mxu0 0
        %2915 = vmatpush1.bf16.msra.mxu0 %v2910
        %2916 = vmatprep.subr.bf16.mxu0 0
        %2917 = vmatpush1.bf16.msra.mxu0 0
        %2918 = vmatprep.subr.bf16.mxu0 0
        %2919 = vmatpush1.bf16.msra.mxu0 0
        %2920 = vmatprep.subr.bf16.mxu0 0
        %2921 = vmatpush1.bf16.msra.mxu0 0
        %2922 = vmatprep.subr.bf16.mxu0 0
        %2923 = vmatpush1.bf16.msra.mxu0 0
        %2924 = vmatprep.subr.bf16.mxu0 0
        %2925 = vmatpush1.bf16.msra.mxu0 0
        %2926 = vmatprep.subr.bf16.mxu0 0
        %2927 = vmatpush1.bf16.msra.mxu0 0
        %2928 = vmatprep.subr.bf16.mxu0 0
        %2929 = vmatpush1.bf16.msra.mxu0 0
        %2930 = vmatprep.subr.bf16.mxu0 0
        %2931 = vmatpush1.bf16.msra.mxu0 0
        %2932 = vmatprep.subr.bf16.mxu0 0
        %2933 = vmatpush1.bf16.msra.mxu0 0
        %2934 = vmatprep.subr.bf16.mxu0 0
        %2935 = vmatpush1.bf16.msra.mxu0 0
        %2936 = vmatprep.subr.bf16.mxu0 0
        %2937 = vmatpush1.bf16.msra.mxu0 0
        %2938 = vmatprep.subr.bf16.mxu0 0
        %2939 = vmatpush1.bf16.msra.mxu0 0
        %2940 = vmatprep.subr.bf16.mxu0 0
        %2941 = vmatpush1.bf16.msra.mxu0 0
        %2942 = vmatprep.subr.bf16.mxu0 0
        %2943 = vmatpush1.bf16.msra.mxu0 0
        %2944 = vmatprep.mubr.bf16.mxu0 0
        %2945 = vmatmul.mubr.bf16.gmra.mrb[0].mxu0 %v2904
        %v2946 = vpop.f32.mrb[0].mxu0
        %v2947 = vadd.f32 0.0, %v2946
        %v2948 = vpop.f32.mrb[0].mxu0
        %v2949 = vpop.f32.mrb[0].mxu0
        %v2950 = vadd.f32 0.0, %v2949
        %v2951 = vpop.f32.mrb[0].mxu0
        %2952 = vmatprep.mubr.bf16.mxu0 0
        %2953 = vmatmul.mubr.bf16.gmra.mrb[0].mxu0 %v2907
        %v2954 = vpop.f32.mrb[0].mxu0
        %v2955 = vadd.f32 0.0, %v2954
        %v2956 = vpop.f32.mrb[0].mxu0
        %v2957 = vpop.f32.mrb[0].mxu0
        %v2958 = vpop.f32.mrb[0].mxu0
        %2959 = vdwg.mxu0
        %v2960 = vadd.f32 %v2882, %v2947
        %v2961 = vadd.f32 %v2885, %v2950
        %v2962 = vadd.f32 %v2890, %v2955
        %2964 = vset.pattern.permute.xlu0 0
        %2965 = vperm.xlu0 %2964, %v2556
        %v2966 = vpop.permute.xlu0 %2965
        %2969 = vset.pattern.permute.xlu0 0
        %2970 = vperm.xlu0 %2969, %v2557
        %v2971 = vpop.permute.xlu0 %2970
        %2974 = vset.pattern.permute.xlu0 0
        %2975 = vperm.xlu0 %2974, %v2558
        %v2976 = vpop.permute.xlu0 %2975
        %v2978 = vadd.f32 %v2960, %v2966
        %v2979 = vadd.f32 %v2961, %v2971
        %v2980 = vadd.f32 %v2962, %v2976
        %v2981 = vmax.f32 %v2978, 0.0
        %v2982 = vmax.f32 %v2979, 0.0
        %v2983 = vmax.f32 %v2980, 0.0
        %2985 = vset.pattern.permute.xlu0 0
        %2986 = vperm.xlu0 %2985, %v2559
        %v2987 = vpop.permute.xlu0 %2986
        %2990 = vset.pattern.permute.xlu0 0
        %2991 = vperm.xlu0 %2990, %v2560
        %v2992 = vpop.permute.xlu0 %2991
        %2995 = vset.pattern.permute.xlu0 0
        %2996 = vperm.xlu0 %2995, %v2561
        %v2997 = vpop.permute.xlu0 %2996
        %v2999 = vmul.f32 %v2981, %v2987
        %v3000 = vmul.f32 %v2982, %v2992
        %v3001 = vmul.f32 %v2983, %v2997
        %3003 = vset.pattern.permute.xlu0 0
        %3004 = vperm.xlu0 %3003, %v2562
        %v3005 = vpop.permute.xlu0 %3004
        %3008 = vset.pattern.permute.xlu0 0
        %3009 = vperm.xlu0 %3008, %v2563
        %v3010 = vpop.permute.xlu0 %3009
        %3013 = vset.pattern.permute.xlu0 0
        %3014 = vperm.xlu0 %3013, %v2564
        %v3015 = vpop.permute.xlu0 %3014
        %v3017 = vadd.f32 %v2999, %v3005
        %v3018 = vadd.f32 %v3000, %v3010
        %v3019 = vadd.f32 %v3001, %v3015
        %v3020 = vadd.f32 %v2733, %v3017
        %v3021 = vadd.f32 %v3020, %v3018
        %v3022 = vadd.f32 %v3021, %v3019
        %v3023 = vpack.c.bf16 %v3022, %v3022
        %v3024 = vpack.c.bf16 %v2735, %v2734
        %v3025 = vpack.c.bf16 %v2736, %v2736
        %v3030 = vunpack.c.l.b16 %v2569
        %v3031 = vunpack.c.l.b16 %v2570
        %v3032 = vunpack.c.l.b16 %v2571
        %v3033 = vunpack.c.l.b16 %v2572
        %v3034 = vpack.c.b16 %v3031, %v3030
        %v3035 = vpack.c.b16 %v3033, %v3032
        %v3037 = vsel %vm2772, %v3034, 0
        %v3040 = vsel %vm2772, %v3035, 0
        %v3043 = vsel %vm2116, %v3025, 0
        %3045 = vmatprep.subr.bf16.mxu0 0
        %3046 = vmatpush1.bf16.msra.mxu0 %v3024
        %3047 = vmatprep.subr.bf16.mxu0 0
        %3048 = vmatpush1.bf16.msra.mxu0 %v3043
        %3049 = vmatprep.subr.bf16.mxu0 0
        %3050 = vmatpush1.bf16.msra.mxu0 0
        %3051 = vmatprep.subr.bf16.mxu0 0
        %3052 = vmatpush1.bf16.msra.mxu0 0
        %3053 = vmatprep.subr.bf16.mxu0 0
        %3054 = vmatpush1.bf16.msra.mxu0 0
        %3055 = vmatprep.subr.bf16.mxu0 0
        %3056 = vmatpush1.bf16.msra.mxu0 0
        %3057 = vmatprep.subr.bf16.mxu0 0
        %3058 = vmatpush1.bf16.msra.mxu0 0
        %3059 = vmatprep.subr.bf16.mxu0 0
        %3060 = vmatpush1.bf16.msra.mxu0 0
        %3061 = vmatprep.subr.bf16.mxu0 0
        %3062 = vmatpush1.bf16.msra.mxu0 0
        %3063 = vmatprep.subr.bf16.mxu0 0
        %3064 = vmatpush1.bf16.msra.mxu0 0
        %3065 = vmatprep.subr.bf16.mxu0 0
        %3066 = vmatpush1.bf16.msra.mxu0 0
        %3067 = vmatprep.subr.bf16.mxu0 0
        %3068 = vmatpush1.bf16.msra.mxu0 0
        %3069 = vmatprep.subr.bf16.mxu0 0
        %3070 = vmatpush1.bf16.msra.mxu0 0
        %3071 = vmatprep.subr.bf16.mxu0 0
        %3072 = vmatpush1.bf16.msra.mxu0 0
        %3073 = vmatprep.subr.bf16.mxu0 0
        %3074 = vmatpush1.bf16.msra.mxu0 0
        %3075 = vmatprep.subr.bf16.mxu0 0
        %3076 = vmatpush1.bf16.msra.mxu0 0
        %3077 = vmatprep.mubr.bf16.mxu0 0
        %3078 = vmatmul.mubr.bf16.gmra.mrb[0].mxu0 %v3037
        %v3079 = vpop.f32.mrb[0].mxu0
        %v3080 = vadd.f32 0.0, %v3079
        %v3081 = vpop.f32.mrb[0].mxu0
        %v3082 = vpop.f32.mrb[0].mxu0
        %v3083 = vadd.f32 0.0, %v3082
        %v3084 = vpop.f32.mrb[0].mxu0
        %3085 = vmatprep.mubr.bf16.mxu0 0
        %3086 = vmatmul.mubr.bf16.gmra.mrb[0].mxu0 %v3040
        %v3087 = vpop.f32.mrb[0].mxu0
        %v3088 = vadd.f32 0.0, %v3087
        %v3089 = vpop.f32.mrb[0].mxu0
        %v3090 = vpop.f32.mrb[0].mxu0
        %v3091 = vadd.f32 0.0, %v3090
        %v3092 = vpop.f32.mrb[0].mxu0
        %3093 = vdwg.mxu0
        %v3098 = vunpack.c.l.b16 %v2565
        %v3099 = vunpack.c.l.b16 %v2566
        %v3100 = vunpack.c.l.b16 %v2567
        %v3101 = vunpack.c.l.b16 %v2568
        %v3102 = vpack.c.b16 %v3099, %v3098
        %v3103 = vpack.c.b16 %v3101, %v3100
        %v3105 = vsel %vm2109, %v3102, 0
        %v3108 = vsel %vm2109, %v3103, 0
        %v3111 = vsel %vm2116, %v3023, 0
        %3113 = vmatprep.subr.bf16.mxu0 0
        %3114 = vmatpush1.bf16.msra.mxu0 %v3111
        %3115 = vmatprep.subr.bf16.mxu0 0
        %3116 = vmatpush1.bf16.msra.mxu0 0
        %3117 = vmatprep.subr.bf16.mxu0 0
        %3118 = vmatpush1.bf16.msra.mxu0 0
        %3119 = vmatprep.subr.bf16.mxu0 0
        %3120 = vmatpush1.bf16.msra.mxu0 0
        %3121 = vmatprep.subr.bf16.mxu0 0
        %3122 = vmatpush1.bf16.msra.mxu0 0
        %3123 = vmatprep.subr.bf16.mxu0 0
        %3124 = vmatpush1.bf16.msra.mxu0 0
        %3125 = vmatprep.subr.bf16.mxu0 0
        %3126 = vmatpush1.bf16.msra.mxu0 0
        %3127 = vmatprep.subr.bf16.mxu0 0
        %3128 = vmatpush1.bf16.msra.mxu0 0
        %3129 = vmatprep.subr.bf16.mxu0 0
        %3130 = vmatpush1.bf16.msra.mxu0 0
        %3131 = vmatprep.subr.bf16.mxu0 0
        %3132 = vmatpush1.bf16.msra.mxu0 0
        %3133 = vmatprep.subr.bf16.mxu0 0
        %3134 = vmatpush1.bf16.msra.mxu0 0
        %3135 = vmatprep.subr.bf16.mxu0 0
        %3136 = vmatpush1.bf16.msra.mxu0 0
        %3137 = vmatprep.subr.bf16.mxu0 0
        %3138 = vmatpush1.bf16.msra.mxu0 0
        %3139 = vmatprep.subr.bf16.mxu0 0
        %3140 = vmatpush1.bf16.msra.mxu0 0
        %3141 = vmatprep.subr.bf16.mxu0 0
        %3142 = vmatpush1.bf16.msra.mxu0 0
        %3143 = vmatprep.subr.bf16.mxu0 0
        %3144 = vmatpush1.bf16.msra.mxu0 0
        %3145 = vmatprep.mubr.bf16.mxu0 0
        %3146 = vmatmul.mubr.bf16.gmra.mrb[0].mxu0 %v3105
        %v3147 = vpop.f32.mrb[0].mxu0
        %v3148 = vadd.f32 %v3080, %v3147
        %v3149 = vpop.f32.mrb[0].mxu0
        %v3150 = vpop.f32.mrb[0].mxu0
        %v3151 = vadd.f32 %v3083, %v3150
        %v3152 = vpop.f32.mrb[0].mxu0
        %3153 = vmatprep.mubr.bf16.mxu0 0
        %3154 = vmatmul.mubr.bf16.gmra.mrb[0].mxu0 %v3108
        %v3155 = vpop.f32.mrb[0].mxu0
        %v3156 = vadd.f32 %v3088, %v3155
        %v3157 = vpop.f32.mrb[0].mxu0
        %v3158 = vpop.f32.mrb[0].mxu0
        %v3159 = vadd.f32 %v3091, %v3158
        %v3160 = vpop.f32.mrb[0].mxu0
        %3161 = vdwg.mxu0
        %3163 = vset.pattern.permute.xlu0 0
        %3164 = vperm.xlu0 %3163, %v2573
        %v3165 = vpop.permute.xlu0 %3164
        %3168 = vset.pattern.permute.xlu0 0
        %3169 = vperm.xlu0 %3168, %v2574
        %v3170 = vpop.permute.xlu0 %3169
        %3173 = vset.pattern.permute.xlu0 0
        %3174 = vperm.xlu0 %3173, %v2575
        %v3175 = vpop.permute.xlu0 %3174
        %3178 = vset.pattern.permute.xlu0 0
        %3179 = vperm.xlu0 %3178, %v2576
        %v3180 = vpop.permute.xlu0 %3179
        %v3182 = vadd.f32 %v3148, %v3165
        %v3183 = vadd.f32 %v3151, %v3170
        %v3184 = vadd.f32 %v3156, %v3175
        %v3185 = vadd.f32 %v3159, %v3180
        %v3186 = vmax.f32 %v3182, 0.0
        %v3187 = vmax.f32 %v3183, 0.0
        %v3188 = vmax.f32 %v3184, 0.0
        %v3189 = vmax.f32 %v3185, 0.0
        %3191 = vset.pattern.permute.xlu0 0
        %3192 = vperm.xlu0 %3191, %v2577
        %v3193 = vpop.permute.xlu0 %3192
        %3196 = vset.pattern.permute.xlu0 0
        %3197 = vperm.xlu0 %3196, %v2578
        %v3198 = vpop.permute.xlu0 %3197
        %3201 = vset.pattern.permute.xlu0 0
        %3202 = vperm.xlu0 %3201, %v2579
        %v3203 = vpop.permute.xlu0 %3202
        %3206 = vset.pattern.permute.xlu0 0
        %3207 = vperm.xlu0 %3206, %v2580
        %v3208 = vpop.permute.xlu0 %3207
        %v3210 = vmul.f32 %v3186, %v3193
        %v3211 = vmul.f32 %v3187, %v3198
        %v3212 = vmul.f32 %v3188, %v3203
        %v3213 = vmul.f32 %v3189, %v3208
        %3215 = vset.pattern.permute.xlu0 0
        %3216 = vperm.xlu0 %3215, %v2581
        %v3217 = vpop.permute.xlu0 %3216
        %3220 = vset.pattern.permute.xlu0 0
        %3221 = vperm.xlu0 %3220, %v2582
        %v3222 = vpop.permute.xlu0 %3221
        %3225 = vset.pattern.permute.xlu0 0
        %3226 = vperm.xlu0 %3225, %v2583
        %v3227 = vpop.permute.xlu0 %3226
        %3230 = vset.pattern.permute.xlu0 0
        %3231 = vperm.xlu0 %3230, %v2584
        %v3232 = vpop.permute.xlu0 %3231
        %v3234 = vadd.f32 %v3210, %v3217
        %v3235 = vadd.f32 %v3211, %v3222
        %v3236 = vadd.f32 %v3212, %v3227
        %v3237 = vadd.f32 %v3213, %v3232
        %3238 = vadd.xlane.f32.xlu0 %v3234
        %v3239 = vpop.xlane.xlu0 %3238
        %3240 = vadd.xlane.f32.xlu0 %v3235
        %v3241 = vpop.xlane.xlu0 %3240
        %3242 = vadd.xlane.f32.xlu0 %v3236
        %v3243 = vpop.xlane.xlu0 %3242
        %3244 = vadd.xlane.f32.xlu0 %v3237
        %v3245 = vpop.xlane.xlu0 %3244
        %v3246 = vrcp.pop 128.0
        %v3247 = vmul.f32 %v3239, %v3246
        %v3248 = vmul.f32 %v3241, %v3246
        %v3249 = vmul.f32 %v3243, %v3246
        %v3250 = vmul.f32 %v3245, %v3246
        %v3251 = vpack.c.bf16 %v3248, %v3247
        %v3252 = vpack.c.bf16 %v3250, %v3249
        %v3254 = vsel %vm2629, %v2585, 0
        %3256 = vmatprep.subr.bf16.mxu0 0
        %3257 = vmatpush1.bf16.msra.mxu0 %v3251
        %3258 = vmatprep.subr.bf16.mxu0 0
        %3259 = vmatpush1.bf16.msra.mxu0 %v3252
        %3260 = vmatprep.subr.bf16.mxu0 0
        %3261 = vmatpush1.bf16.msra.mxu0 0
        %3262 = vmatprep.subr.bf16.mxu0 0
        %3263 = vmatpush1.bf16.msra.mxu0 0
        %3264 = vmatprep.subr.bf16.mxu0 0
        %3265 = vmatpush1.bf16.msra.mxu0 0
        %3266 = vmatprep.subr.bf16.mxu0 0
        %3267 = vmatpush1.bf16.msra.mxu0 0
        %3268 = vmatprep.subr.bf16.mxu0 0
        %3269 = vmatpush1.bf16.msra.mxu0 0
        %3270 = vmatprep.subr.bf16.mxu0 0
        %3271 = vmatpush1.bf16.msra.mxu0 0
        %3272 = vmatprep.subr.bf16.mxu0 0
        %3273 = vmatpush1.bf16.msra.mxu0 0
        %3274 = vmatprep.subr.bf16.mxu0 0
        %3275 = vmatpush1.bf16.msra.mxu0 0
        %3276 = vmatprep.subr.bf16.mxu0 0
        %3277 = vmatpush1.bf16.msra.mxu0 0
        %3278 = vmatprep.subr.bf16.mxu0 0
        %3279 = vmatpush1.bf16.msra.mxu0 0
        %3280 = vmatprep.subr.bf16.mxu0 0
        %3281 = vmatpush1.bf16.msra.mxu0 0
        %3282 = vmatprep.subr.bf16.mxu0 0
        %3283 = vmatpush1.bf16.msra.mxu0 0
        %3284 = vmatprep.subr.bf16.mxu0 0
        %3285 = vmatpush1.bf16.msra.mxu0 0
        %3286 = vmatprep.subr.bf16.mxu0 0
        %3287 = vmatpush1.bf16.msra.mxu0 0
        %3288 = vmatprep.mubr.bf16.mxu0 0
        %3289 = vmatmul.mubr.bf16.gmra.mrb[0].mxu0 %v3254
        %v3290 = vpop.f32.mrb[0].mxu0
        %v3291 = vadd.f32 %v2586, %v3290
        %v3292 = vpop.f32.mrb[0].mxu0
        %v3293 = vpop.f32.mrb[0].mxu0
        %v3294 = vpop.f32.mrb[0].mxu0
        %3295 = vdwg.mxu0
        %v3296 = vxor.u32 %v3291, 2147483648
        %v3297 = vmul.f32 %v3296, 1.442695
        %v3298 = vpow.pop %v3297
        %v3299 = vadd.f32 %v3298, 1.0
        %v3300 = vrcp.pop %v3299
        %v3301 = vmul.f32 1.0, %v3300
        %v3302 = vmul.f32 %v3291, %v3301
        %v3303 = vpack.c.bf16 %v3302, %v3302
        %v3308 = vunpack.c.l.b16 %v2587
        %v3309 = vunpack.c.l.b16 %v2588
        %v3310 = vunpack.c.l.b16 %v2589
        %v3311 = vunpack.c.l.b16 %v2590
        %v3312 = vpack.c.b16 %v3309, %v3308
        %v3313 = vpack.c.b16 %v3311, %v3310
        %v3315 = vsel %vm2109, %v3312, 0
        %v3318 = vsel %vm2109, %v3313, 0
        %v3321 = vsel %vm2116, %v3303, 0
        %3323 = vmatprep.subr.bf16.mxu0 0
        %3324 = vmatpush1.bf16.msra.mxu0 %v3321
        %3325 = vmatprep.subr.bf16.mxu0 0
        %3326 = vmatpush1.bf16.msra.mxu0 0
        %3327 = vmatprep.subr.bf16.mxu0 0
        %3328 = vmatpush1.bf16.msra.mxu0 0
        %3329 = vmatprep.subr.bf16.mxu0 0
        %3330 = vmatpush1.bf16.msra.mxu0 0
        %3331 = vmatprep.subr.bf16.mxu0 0
        %3332 = vmatpush1.bf16.msra.mxu0 0
        %3333 = vmatprep.subr.bf16.mxu0 0
        %3334 = vmatpush1.bf16.msra.mxu0 0
        %3335 = vmatprep.subr.bf16.mxu0 0
        %3336 = vmatpush1.bf16.msra.mxu0 0
        %3337 = vmatprep.subr.bf16.mxu0 0
        %3338 = vmatpush1.bf16.msra.mxu0 0
        %3339 = vmatprep.subr.bf16.mxu0 0
        %3340 = vmatpush1.bf16.msra.mxu0 0
        %3341 = vmatprep.subr.bf16.mxu0 0
        %3342 = vmatpush1.bf16.msra.mxu0 0
        %3343 = vmatprep.subr.bf16.mxu0 0
        %3344 = vmatpush1.bf16.msra.mxu0 0
        %3345 = vmatprep.subr.bf16.mxu0 0
        %3346 = vmatpush1.bf16.msra.mxu0 0
        %3347 = vmatprep.subr.bf16.mxu0 0
        %3348 = vmatpush1.bf16.msra.mxu0 0
        %3349 = vmatprep.subr.bf16.mxu0 0
        %3350 = vmatpush1.bf16.msra.mxu0 0
        %3351 = vmatprep.subr.bf16.mxu0 0
        %3352 = vmatpush1.bf16.msra.mxu0 0
        %3353 = vmatprep.subr.bf16.mxu0 0
        %3354 = vmatpush1.bf16.msra.mxu0 0
        %3355 = vmatprep.mubr.bf16.mxu0 0
        %3356 = vmatmul.mubr.bf16.gmra.mrb[0].mxu0 %v3315
        %v3357 = vpop.f32.mrb[0].mxu0
        %v3358 = vadd.f32 %v2591, %v3357
        %v3359 = vpop.f32.mrb[0].mxu0
        %v3360 = vpop.f32.mrb[0].mxu0
        %v3361 = vadd.f32 %v2592, %v3360
        %v3362 = vpop.f32.mrb[0].mxu0
        %3363 = vmatprep.mubr.bf16.mxu0 0
        %3364 = vmatmul.mubr.bf16.gmra.mrb[0].mxu0 %v3318
        %v3365 = vpop.f32.mrb[0].mxu0
        %v3366 = vadd.f32 %v2593, %v3365
        %v3367 = vpop.f32.mrb[0].mxu0
        %v3368 = vpop.f32.mrb[0].mxu0
        %v3369 = vadd.f32 %v2594, %v3368
        %v3370 = vpop.f32.mrb[0].mxu0
        %3371 = vdwg.mxu0
        %v3372 = vxor.u32 %v3358, 2147483648
        %v3373 = vxor.u32 %v3361, 2147483648
        %v3374 = vxor.u32 %v3366, 2147483648
        %v3375 = vxor.u32 %v3369, 2147483648
        %v3376 = vmul.f32 %v3372, 1.442695
        %v3377 = vpow.pop %v3376
        %v3378 = vmul.f32 %v3373, 1.442695
        %v3379 = vpow.pop %v3378
        %v3380 = vmul.f32 %v3374, 1.442695
        %v3381 = vpow.pop %v3380
        %v3382 = vmul.f32 %v3375, 1.442695
        %v3383 = vpow.pop %v3382
        %v3384 = vadd.f32 %v3377, 1.0
        %v3385 = vadd.f32 %v3379, 1.0
        %v3386 = vadd.f32 %v3381, 1.0
        %v3387 = vadd.f32 %v3383, 1.0
        %v3388 = vrcp.pop %v3384
        %v3389 = vmul.f32 1.0, %v3388
        %v3390 = vrcp.pop %v3385
        %v3391 = vmul.f32 1.0, %v3390
        %v3392 = vrcp.pop %v3386
        %v3393 = vmul.f32 1.0, %v3392
        %v3394 = vrcp.pop %v3387
        %v3395 = vmul.f32 1.0, %v3394
        %3397 = vset.pattern.permute.xlu0 0
        %3398 = vperm.xlu0 %3397, %v3389
        %v3399 = vpop.permute.xlu0 %3398
        %3402 = vset.pattern.permute.xlu0 0
        %3403 = vperm.xlu0 %3402, %v3391
        %v3404 = vpop.permute.xlu0 %3403
        %3407 = vset.pattern.permute.xlu0 0
        %3408 = vperm.xlu0 %3407, %v3393
        %v3409 = vpop.permute.xlu0 %3408
        %3412 = vset.pattern.permute.xlu0 0
        %3413 = vperm.xlu0 %3412, %v3395
        %v3414 = vpop.permute.xlu0 %3413
        %v3416 = vmul.f32 %v3234, %v3399
        %v3417 = vmul.f32 %v3235, %v3404
        %v3418 = vmul.f32 %v3236, %v3409
        %v3419 = vmul.f32 %v3237, %v3414
        %v3420 = vadd.f32 %v3416, %v2525
        %v3421 = vadd.f32 %v3417, %v2526
        %v3422 = vadd.f32 %v3418, %v2527
        %v3423 = vadd.f32 %v3419, %v2528
        %v3424 = vpack.c.bf16 %v3421, %v3420
        %v3425 = vpack.c.bf16 %v3423, %v3422
        %v3426 = vld [vmem:[%s47] sm:$0xf]
        %v3427 = vld [vmem:[%s47 + $0x4] sm:$0xf]
        %v3428 = vld [vmem:[%s47 + $0x8] sm:$0xf]
        %v3429 = vld [vmem:[%s47 + $0xc] sm:$0xf]
        %v3430 = vld [vmem:[%s49] sm:$0xff]
        %v3431 = vld [vmem:[%s49 + $0x8] sm:$0xff]
        %v3432 = vld [vmem:[%s49 + $0x10] sm:$0xff]
        %v3433 = vld [vmem:[%s49 + $0x18] sm:$0xff]
        %v3434 = vld [vmem:[%s51] sm:$0xff]
        %v3435 = vld [vmem:[%s51 + $0x8] sm:$0xff]
        %v3436 = vld [vmem:[%s51 + $0x10] sm:$0xff]
        %v3437 = vld [vmem:[%s51 + $0x18] sm:$0xff]
        %v3438 = vld [vmem:[%s53] sm:$0xff]
        %v3439 = vld [vmem:[%s53 + $0x8] sm:$0xff]
        %v3440 = vld [vmem:[%s53 + $0x10] sm:$0xff]
        %v3441 = vld [vmem:[%s53 + $0x18] sm:$0xff]
        %v3442 = vld [vmem:[%s55] sm:$0xf]
        %v3443 = vld [vmem:[%s55 + $0x4] sm:$0xf]
        %v3444 = vld [vmem:[%s55 + $0x8] sm:$0xf]
        %v3445 = vld [vmem:[%s55 + $0xc] sm:$0xf]
        %v3446 = vld [vmem:[%s55 + $0x10] sm:$0xf]
        %v3447 = vld [vmem:[%s55 + $0x14] sm:$0xf]
        %v3448 = vld [vmem:[%s55 + $0x18] sm:$0xf]
        %v3449 = vld [vmem:[%s55 + $0x1c] sm:$0xf]
        %v3450 = vld [vmem:[%s55 + $0x20] sm:$0xf]
        %v3451 = vld [vmem:[%s57] sm:$0xff]
        %v3452 = vld [vmem:[%s57 + $0x8] sm:$0xff]
        %v3453 = vld [vmem:[%s57 + $0x10] sm:$0xff]
        %v3454 = vld [vmem:[%s59] sm:$0xff]
        %v3455 = vld [vmem:[%s59 + $0x8] sm:$0xff]
        %v3456 = vld [vmem:[%s59 + $0x10] sm:$0xff]
        %v3457 = vld [vmem:[%s61] sm:$0xff]
        %v3458 = vld [vmem:[%s61 + $0x8] sm:$0xff]
        %v3459 = vld [vmem:[%s61 + $0x10] sm:$0xff]
        %v3460 = vld [vmem:[%s63] sm:$0xf]
        %v3461 = vld [vmem:[%s63 + $0x4] sm:$0xf]
        %v3462 = vld [vmem:[%s63 + $0x8] sm:$0xf]
        %v3463 = vld [vmem:[%s63 + $0xc] sm:$0xf]
        %v3464 = vld [vmem:[%s65] sm:$0xf]
        %v3465 = vld [vmem:[%s65 + $0x4] sm:$0xf]
        %v3466 = vld [vmem:[%s65 + $0x8] sm:$0xf]
        %v3467 = vld [vmem:[%s65 + $0xc] sm:$0xf]
        %v3468 = vld [vmem:[%s67] sm:$0xff]
        %v3469 = vld [vmem:[%s67 + $0x8] sm:$0xff]
        %v3470 = vld [vmem:[%s67 + $0x10] sm:$0xff]
        %v3471 = vld [vmem:[%s67 + $0x18] sm:$0xff]
        %v3472 = vld [vmem:[%s69] sm:$0xff]
        %v3473 = vld [vmem:[%s69 + $0x8] sm:$0xff]
        %v3474 = vld [vmem:[%s69 + $0x10] sm:$0xff]
        %v3475 = vld [vmem:[%s69 + $0x18] sm:$0xff]
        %v3476 = vld [vmem:[%s71] sm:$0xff]
        %v3477 = vld [vmem:[%s71 + $0x8] sm:$0xff]
        %v3478 = vld [vmem:[%s71 + $0x10] sm:$0xff]
        %v3479 = vld [vmem:[%s71 + $0x18] sm:$0xff]
        %v3480 = vld [vmem:[%s73] sm:$0xf]
        %v3481 = vld [vmem:[%s75] sm:$0xff]
        %v3482 = vld [vmem:[%s77] sm:$0xf]
        %v3483 = vld [vmem:[%s77 + $0x4] sm:$0xf]
        %v3484 = vld [vmem:[%s77 + $0x8] sm:$0xf]
        %v3485 = vld [vmem:[%s77 + $0xc] sm:$0xf]
        %v3486 = vld [vmem:[%s79] sm:$0xff]
        %v3487 = vld [vmem:[%s79 + $0x8] sm:$0xff]
        %v3488 = vld [vmem:[%s79 + $0x10] sm:$0xff]
        %v3489 = vld [vmem:[%s79 + $0x18] sm:$0xff]
        %v3490 = vld [vmem:[%s81] sm:$0xf]
        %v3491 = vld [vmem:[%s81 + $0x4] sm:$0xf]
        %v3492 = vld [vmem:[%s81 + $0x8] sm:$0xf]
        %v3493 = vld [vmem:[%s81 + $0xc] sm:$0xf]
        %3495 = vset.pattern.permute.xlu0 0
        %3496 = vperm.xlu0 %3495, %v3430
        %v3497 = vpop.permute.xlu0 %3496
        %3500 = vset.pattern.permute.xlu0 0
        %3501 = vperm.xlu0 %3500, %v3431
        %v3502 = vpop.permute.xlu0 %3501
        %3505 = vset.pattern.permute.xlu0 0
        %3506 = vperm.xlu0 %3505, %v3432
        %v3507 = vpop.permute.xlu0 %3506
        %3510 = vset.pattern.permute.xlu0 0
        %3511 = vperm.xlu0 %3510, %v3433
        %v3512 = vpop.permute.xlu0 %3511
        %v3518 = vunpack.c.l.b16 %v3426
        %v3519 = vunpack.c.l.b16 %v3427
        %v3520 = vunpack.c.l.b16 %v3428
        %v3521 = vunpack.c.l.b16 %v3429
        %v3522 = vpack.c.b16 %v3519, %v3518
        %v3523 = vpack.c.b16 %v3521, %v3520
        %v3525 = vsel %vm2629, %v3522, 0
        %v3528 = vsel %vm2629, %v3523, 0
        %3530 = vmatprep.subr.bf16.mxu0 0
        %3531 = vmatpush1.bf16.msra.mxu0 %v3424
        %3532 = vmatprep.subr.bf16.mxu0 0
        %3533 = vmatpush1.bf16.msra.mxu0 %v3425
        %3534 = vmatprep.subr.bf16.mxu0 0
        %3535 = vmatpush1.bf16.msra.mxu0 0
        %3536 = vmatprep.subr.bf16.mxu0 0
        %3537 = vmatpush1.bf16.msra.mxu0 0
        %3538 = vmatprep.subr.bf16.mxu0 0
        %3539 = vmatpush1.bf16.msra.mxu0 0
        %3540 = vmatprep.subr.bf16.mxu0 0
        %3541 = vmatpush1.bf16.msra.mxu0 0
        %3542 = vmatprep.subr.bf16.mxu0 0
        %3543 = vmatpush1.bf16.msra.mxu0 0
        %3544 = vmatprep.subr.bf16.mxu0 0
        %3545 = vmatpush1.bf16.msra.mxu0 0
        %3546 = vmatprep.subr.bf16.mxu0 0
        %3547 = vmatpush1.bf16.msra.mxu0 0
        %3548 = vmatprep.subr.bf16.mxu0 0
        %3549 = vmatpush1.bf16.msra.mxu0 0
        %3550 = vmatprep.subr.bf16.mxu0 0
        %3551 = vmatpush1.bf16.msra.mxu0 0
        %3552 = vmatprep.subr.bf16.mxu0 0
        %3553 = vmatpush1.bf16.msra.mxu0 0
        %3554 = vmatprep.subr.bf16.mxu0 0
        %3555 = vmatpush1.bf16.msra.mxu0 0
        %3556 = vmatprep.subr.bf16.mxu0 0
        %3557 = vmatpush1.bf16.msra.mxu0 0
        %3558 = vmatprep.subr.bf16.mxu0 0
        %3559 = vmatpush1.bf16.msra.mxu0 0
        %3560 = vmatprep.subr.bf16.mxu0 0
        %3561 = vmatpush1.bf16.msra.mxu0 0
        %3562 = vmatprep.mubr.bf16.mxu0 0
        %3563 = vmatmul.mubr.bf16.gmra.mrb[0].mxu0 %v3525
        %v3564 = vpop.f32.mrb[0].mxu0
        %v3565 = vadd.f32 %v3497, %v3564
        %v3566 = vpop.f32.mrb[0].mxu0
        %v3567 = vpop.f32.mrb[0].mxu0
        %v3568 = vadd.f32 %v3502, %v3567
        %v3569 = vpop.f32.mrb[0].mxu0
        %3570 = vmatprep.mubr.bf16.mxu0 0
        %3571 = vmatmul.mubr.bf16.gmra.mrb[0].mxu0 %v3528
        %v3572 = vpop.f32.mrb[0].mxu0
        %v3573 = vadd.f32 %v3507, %v3572
        %v3574 = vpop.f32.mrb[0].mxu0
        %v3575 = vpop.f32.mrb[0].mxu0
        %v3576 = vadd.f32 %v3512, %v3575
        %v3577 = vpop.f32.mrb[0].mxu0
        %3578 = vdwg.mxu0
        %v3579 = vmax.f32 %v3565, 0.0
        %v3580 = vmax.f32 %v3568, 0.0
        %v3581 = vmax.f32 %v3573, 0.0
        %v3582 = vmax.f32 %v3576, 0.0
        %3584 = vset.pattern.permute.xlu0 0
        %3585 = vperm.xlu0 %3584, %v3434
        %v3586 = vpop.permute.xlu0 %3585
        %3589 = vset.pattern.permute.xlu0 0
        %3590 = vperm.xlu0 %3589, %v3435
        %v3591 = vpop.permute.xlu0 %3590
        %3594 = vset.pattern.permute.xlu0 0
        %3595 = vperm.xlu0 %3594, %v3436
        %v3596 = vpop.permute.xlu0 %3595
        %3599 = vset.pattern.permute.xlu0 0
        %3600 = vperm.xlu0 %3599, %v3437
        %v3601 = vpop.permute.xlu0 %3600
        %v3603 = vmul.f32 %v3579, %v3586
        %v3604 = vmul.f32 %v3580, %v3591
        %v3605 = vmul.f32 %v3581, %v3596
        %v3606 = vmul.f32 %v3582, %v3601
        %3608 = vset.pattern.permute.xlu0 0
        %3609 = vperm.xlu0 %3608, %v3438
        %v3610 = vpop.permute.xlu0 %3609
        %3613 = vset.pattern.permute.xlu0 0
        %3614 = vperm.xlu0 %3613, %v3439
        %v3615 = vpop.permute.xlu0 %3614
        %3618 = vset.pattern.permute.xlu0 0
        %3619 = vperm.xlu0 %3618, %v3440
        %v3620 = vpop.permute.xlu0 %3619
        %3623 = vset.pattern.permute.xlu0 0
        %3624 = vperm.xlu0 %3623, %v3441
        %v3625 = vpop.permute.xlu0 %3624
        %v3627 = vadd.f32 %v3603, %v3610
        %v3628 = vadd.f32 %v3604, %v3615
        %v3629 = vadd.f32 %v3605, %v3620
        %v3630 = vadd.f32 %v3606, %v3625
        %3631 = vrot.lane.b32.xlu0 %v3628, 3
        %v3632 = vpop.permute.xlu0 %3631
        %3633 = vrot.lane.b32.xlu0 %v3629, 3
        %v3634 = vpop.permute.xlu0 %3633
        %3635 = vrot.lane.b32.xlu0 %v3630, 3
        %v3636 = vpop.permute.xlu0 %3635
        %vm3637 = vcmp.ge.s32.totalorder %v2065, 3
        %vm3638 = vcmp.lt.s32.totalorder %v2065, 131
        %vm3639 = vmand %vm3637, %vm3638
        %v3640 = vsel %vm3639, %v3632, 0.0
        %v3641 = vsel %vm3639, %v3634, 0.0
        %v3642 = vsel %vm3639, %v3636, 0.0
        %v3643 = vpack.c.bf16 %v3641, %v3640
        %v3644 = vpack.c.bf16 %v3642, %v3642
        %v3645 = vsel %vm2082, %v3628, 0.0
        %v3646 = vsel %vm2082, %v3629, 0.0
        %v3647 = vsel %vm2082, %v3630, 0.0
        %v3648 = vpack.c.bf16 %v3646, %v3645
        %v3649 = vpack.c.bf16 %v3647, %v3647
        %3650 = vrot.lane.b32.xlu0 %v3628, 125
        %v3651 = vpop.permute.xlu0 %3650
        %3652 = vrot.lane.b32.xlu0 %v3629, 125
        %v3653 = vpop.permute.xlu0 %3652
        %3654 = vrot.lane.b32.xlu0 %v3630, 125
        %v3655 = vpop.permute.xlu0 %3654
        %vm3656 = vcmp.ge.s32.totalorder %v2065, 4294967293
        %vm3657 = vcmp.lt.s32.totalorder %v2065, 125
        %vm3658 = vmand %vm3656, %vm3657
        %v3659 = vsel %vm3658, %v3651, 0.0
        %v3660 = vsel %vm3658, %v3653, 0.0
        %v3661 = vsel %vm3658, %v3655, 0.0
        %v3662 = vpack.c.bf16 %v3660, %v3659
        %v3663 = vpack.c.bf16 %v3661, %v3661
        %v3667 = vunpack.c.l.b16 %v3445
        %v3668 = vunpack.c.l.b16 %v3446
        %v3669 = vunpack.c.l.b16 %v3447
        %v3670 = vpack.c.b16 %v3668, %v3667
        %v3671 = vpack.c.b16 %v3669, %v3669
        %v3673 = vsel %vm2772, %v3670, 0
        %v3676 = vsel %vm2772, %v3671, 0
        %v3679 = vsel %vm2116, %v3649, 0
        %3681 = vmatprep.subr.bf16.mxu0 0
        %3682 = vmatpush1.bf16.msra.mxu0 %v3648
        %3683 = vmatprep.subr.bf16.mxu0 0
        %3684 = vmatpush1.bf16.msra.mxu0 %v3679
        %3685 = vmatprep.subr.bf16.mxu0 0
        %3686 = vmatpush1.bf16.msra.mxu0 0
        %3687 = vmatprep.subr.bf16.mxu0 0
        %3688 = vmatpush1.bf16.msra.mxu0 0
        %3689 = vmatprep.subr.bf16.mxu0 0
        %3690 = vmatpush1.bf16.msra.mxu0 0
        %3691 = vmatprep.subr.bf16.mxu0 0
        %3692 = vmatpush1.bf16.msra.mxu0 0
        %3693 = vmatprep.subr.bf16.mxu0 0
        %3694 = vmatpush1.bf16.msra.mxu0 0
        %3695 = vmatprep.subr.bf16.mxu0 0
        %3696 = vmatpush1.bf16.msra.mxu0 0
        %3697 = vmatprep.subr.bf16.mxu0 0
        %3698 = vmatpush1.bf16.msra.mxu0 0
        %3699 = vmatprep.subr.bf16.mxu0 0
        %3700 = vmatpush1.bf16.msra.mxu0 0
        %3701 = vmatprep.subr.bf16.mxu0 0
        %3702 = vmatpush1.bf16.msra.mxu0 0
        %3703 = vmatprep.subr.bf16.mxu0 0
        %3704 = vmatpush1.bf16.msra.mxu0 0
        %3705 = vmatprep.subr.bf16.mxu0 0
        %3706 = vmatpush1.bf16.msra.mxu0 0
        %3707 = vmatprep.subr.bf16.mxu0 0
        %3708 = vmatpush1.bf16.msra.mxu0 0
        %3709 = vmatprep.subr.bf16.mxu0 0
        %3710 = vmatpush1.bf16.msra.mxu0 0
        %3711 = vmatprep.subr.bf16.mxu0 0
        %3712 = vmatpush1.bf16.msra.mxu0 0
        %3713 = vmatprep.mubr.bf16.mxu0 0
        %3714 = vmatmul.mubr.bf16.gmra.mrb[0].mxu0 %v3673
        %v3715 = vpop.f32.mrb[0].mxu0
        %v3716 = vadd.f32 0.0, %v3715
        %v3717 = vpop.f32.mrb[0].mxu0
        %v3718 = vpop.f32.mrb[0].mxu0
        %v3719 = vadd.f32 0.0, %v3718
        %v3720 = vpop.f32.mrb[0].mxu0
        %3721 = vmatprep.mubr.bf16.mxu0 0
        %3722 = vmatmul.mubr.bf16.gmra.mrb[0].mxu0 %v3676
        %v3723 = vpop.f32.mrb[0].mxu0
        %v3724 = vadd.f32 0.0, %v3723
        %v3725 = vpop.f32.mrb[0].mxu0
        %v3726 = vpop.f32.mrb[0].mxu0
        %v3727 = vpop.f32.mrb[0].mxu0
        %3728 = vdwg.mxu0
        %v3732 = vunpack.c.l.b16 %v3442
        %v3733 = vunpack.c.l.b16 %v3443
        %v3734 = vunpack.c.l.b16 %v3444
        %v3735 = vpack.c.b16 %v3733, %v3732
        %v3736 = vpack.c.b16 %v3734, %v3734
        %v3738 = vsel %vm2772, %v3735, 0
        %v3741 = vsel %vm2772, %v3736, 0
        %v3744 = vsel %vm2116, %v3644, 0
        %3746 = vmatprep.subr.bf16.mxu0 0
        %3747 = vmatpush1.bf16.msra.mxu0 %v3643
        %3748 = vmatprep.subr.bf16.mxu0 0
        %3749 = vmatpush1.bf16.msra.mxu0 %v3744
        %3750 = vmatprep.subr.bf16.mxu0 0
        %3751 = vmatpush1.bf16.msra.mxu0 0
        %3752 = vmatprep.subr.bf16.mxu0 0
        %3753 = vmatpush1.bf16.msra.mxu0 0
        %3754 = vmatprep.subr.bf16.mxu0 0
        %3755 = vmatpush1.bf16.msra.mxu0 0
        %3756 = vmatprep.subr.bf16.mxu0 0
        %3757 = vmatpush1.bf16.msra.mxu0 0
        %3758 = vmatprep.subr.bf16.mxu0 0
        %3759 = vmatpush1.bf16.msra.mxu0 0
        %3760 = vmatprep.subr.bf16.mxu0 0
        %3761 = vmatpush1.bf16.msra.mxu0 0
        %3762 = vmatprep.subr.bf16.mxu0 0
        %3763 = vmatpush1.bf16.msra.mxu0 0
        %3764 = vmatprep.subr.bf16.mxu0 0
        %3765 = vmatpush1.bf16.msra.mxu0 0
        %3766 = vmatprep.subr.bf16.mxu0 0
        %3767 = vmatpush1.bf16.msra.mxu0 0
        %3768 = vmatprep.subr.bf16.mxu0 0
        %3769 = vmatpush1.bf16.msra.mxu0 0
        %3770 = vmatprep.subr.bf16.mxu0 0
        %3771 = vmatpush1.bf16.msra.mxu0 0
        %3772 = vmatprep.subr.bf16.mxu0 0
        %3773 = vmatpush1.bf16.msra.mxu0 0
        %3774 = vmatprep.subr.bf16.mxu0 0
        %3775 = vmatpush1.bf16.msra.mxu0 0
        %3776 = vmatprep.subr.bf16.mxu0 0
        %3777 = vmatpush1.bf16.msra.mxu0 0
        %3778 = vmatprep.mubr.bf16.mxu0 0
        %3779 = vmatmul.mubr.bf16.gmra.mrb[0].mxu0 %v3738
        %v3780 = vpop.f32.mrb[0].mxu0
        %v3781 = vadd.f32 %v3716, %v3780
        %v3782 = vpop.f32.mrb[0].mxu0
        %v3783 = vpop.f32.mrb[0].mxu0
        %v3784 = vadd.f32 %v3719, %v3783
        %v3785 = vpop.f32.mrb[0].mxu0
        %3786 = vmatprep.mubr.bf16.mxu0 0
        %3787 = vmatmul.mubr.bf16.gmra.mrb[0].mxu0 %v3741
        %v3788 = vpop.f32.mrb[0].mxu0
        %v3789 = vadd.f32 %v3724, %v3788
        %v3790 = vpop.f32.mrb[0].mxu0
        %v3791 = vpop.f32.mrb[0].mxu0
        %v3792 = vpop.f32.mrb[0].mxu0
        %3793 = vdwg.mxu0
        %v3797 = vunpack.c.l.b16 %v3448
        %v3798 = vunpack.c.l.b16 %v3449
        %v3799 = vunpack.c.l.b16 %v3450
        %v3800 = vpack.c.b16 %v3798, %v3797
        %v3801 = vpack.c.b16 %v3799, %v3799
        %v3803 = vsel %vm2772, %v3800, 0
        %v3806 = vsel %vm2772, %v3801, 0
        %v3809 = vsel %vm2116, %v3663, 0
        %3811 = vmatprep.subr.bf16.mxu0 0
        %3812 = vmatpush1.bf16.msra.mxu0 %v3662
        %3813 = vmatprep.subr.bf16.mxu0 0
        %3814 = vmatpush1.bf16.msra.mxu0 %v3809
        %3815 = vmatprep.subr.bf16.mxu0 0
        %3816 = vmatpush1.bf16.msra.mxu0 0
        %3817 = vmatprep.subr.bf16.mxu0 0
        %3818 = vmatpush1.bf16.msra.mxu0 0
        %3819 = vmatprep.subr.bf16.mxu0 0
        %3820 = vmatpush1.bf16.msra.mxu0 0
        %3821 = vmatprep.subr.bf16.mxu0 0
        %3822 = vmatpush1.bf16.msra.mxu0 0
        %3823 = vmatprep.subr.bf16.mxu0 0
        %3824 = vmatpush1.bf16.msra.mxu0 0
        %3825 = vmatprep.subr.bf16.mxu0 0
        %3826 = vmatpush1.bf16.msra.mxu0 0
        %3827 = vmatprep.subr.bf16.mxu0 0
        %3828 = vmatpush1.bf16.msra.mxu0 0
        %3829 = vmatprep.subr.bf16.mxu0 0
        %3830 = vmatpush1.bf16.msra.mxu0 0
        %3831 = vmatprep.subr.bf16.mxu0 0
        %3832 = vmatpush1.bf16.msra.mxu0 0
        %3833 = vmatprep.subr.bf16.mxu0 0
        %3834 = vmatpush1.bf16.msra.mxu0 0
        %3835 = vmatprep.subr.bf16.mxu0 0
        %3836 = vmatpush1.bf16.msra.mxu0 0
        %3837 = vmatprep.subr.bf16.mxu0 0
        %3838 = vmatpush1.bf16.msra.mxu0 0
        %3839 = vmatprep.subr.bf16.mxu0 0
        %3840 = vmatpush1.bf16.msra.mxu0 0
        %3841 = vmatprep.subr.bf16.mxu0 0
        %3842 = vmatpush1.bf16.msra.mxu0 0
        %3843 = vmatprep.mubr.bf16.mxu0 0
        %3844 = vmatmul.mubr.bf16.gmra.mrb[0].mxu0 %v3803
        %v3845 = vpop.f32.mrb[0].mxu0
        %v3846 = vadd.f32 0.0, %v3845
        %v3847 = vpop.f32.mrb[0].mxu0
        %v3848 = vpop.f32.mrb[0].mxu0
        %v3849 = vadd.f32 0.0, %v3848
        %v3850 = vpop.f32.mrb[0].mxu0
        %3851 = vmatprep.mubr.bf16.mxu0 0
        %3852 = vmatmul.mubr.bf16.gmra.mrb[0].mxu0 %v3806
        %v3853 = vpop.f32.mrb[0].mxu0
        %v3854 = vadd.f32 0.0, %v3853
        %v3855 = vpop.f32.mrb[0].mxu0
        %v3856 = vpop.f32.mrb[0].mxu0
        %v3857 = vpop.f32.mrb[0].mxu0
        %3858 = vdwg.mxu0
        %v3859 = vadd.f32 %v3781, %v3846
        %v3860 = vadd.f32 %v3784, %v3849
        %v3861 = vadd.f32 %v3789, %v3854
        %3863 = vset.pattern.permute.xlu0 0
        %3864 = vperm.xlu0 %3863, %v3451
        %v3865 = vpop.permute.xlu0 %3864
        %3868 = vset.pattern.permute.xlu0 0
        %3869 = vperm.xlu0 %3868, %v3452
        %v3870 = vpop.permute.xlu0 %3869
        %3873 = vset.pattern.permute.xlu0 0
        %3874 = vperm.xlu0 %3873, %v3453
        %v3875 = vpop.permute.xlu0 %3874
        %v3877 = vadd.f32 %v3859, %v3865
        %v3878 = vadd.f32 %v3860, %v3870
        %v3879 = vadd.f32 %v3861, %v3875
        %v3880 = vmax.f32 %v3877, 0.0
        %v3881 = vmax.f32 %v3878, 0.0
        %v3882 = vmax.f32 %v3879, 0.0
        %3884 = vset.pattern.permute.xlu0 0
        %3885 = vperm.xlu0 %3884, %v3454
        %v3886 = vpop.permute.xlu0 %3885
        %3889 = vset.pattern.permute.xlu0 0
        %3890 = vperm.xlu0 %3889, %v3455
        %v3891 = vpop.permute.xlu0 %3890
        %3894 = vset.pattern.permute.xlu0 0
        %3895 = vperm.xlu0 %3894, %v3456
        %v3896 = vpop.permute.xlu0 %3895
        %v3898 = vmul.f32 %v3880, %v3886
        %v3899 = vmul.f32 %v3881, %v3891
        %v3900 = vmul.f32 %v3882, %v3896
        %3902 = vset.pattern.permute.xlu0 0
        %3903 = vperm.xlu0 %3902, %v3457
        %v3904 = vpop.permute.xlu0 %3903
        %3907 = vset.pattern.permute.xlu0 0
        %3908 = vperm.xlu0 %3907, %v3458
        %v3909 = vpop.permute.xlu0 %3908
        %3912 = vset.pattern.permute.xlu0 0
        %3913 = vperm.xlu0 %3912, %v3459
        %v3914 = vpop.permute.xlu0 %3913
        %v3916 = vadd.f32 %v3898, %v3904
        %v3917 = vadd.f32 %v3899, %v3909
        %v3918 = vadd.f32 %v3900, %v3914
        %v3919 = vadd.f32 %v3627, %v3916
        %v3920 = vadd.f32 %v3919, %v3917
        %v3921 = vadd.f32 %v3920, %v3918
        %v3922 = vpack.c.bf16 %v3921, %v3921
        %v3923 = vpack.c.bf16 %v3629, %v3628
        %v3924 = vpack.c.bf16 %v3630, %v3630
        %v3929 = vunpack.c.l.b16 %v3464
        %v3930 = vunpack.c.l.b16 %v3465
        %v3931 = vunpack.c.l.b16 %v3466
        %v3932 = vunpack.c.l.b16 %v3467
        %v3933 = vpack.c.b16 %v3930, %v3929
        %v3934 = vpack.c.b16 %v3932, %v3931
        %v3936 = vsel %vm2772, %v3933, 0
        %v3939 = vsel %vm2772, %v3934, 0
        %v3942 = vsel %vm2116, %v3924, 0
        %3944 = vmatprep.subr.bf16.mxu0 0
        %3945 = vmatpush1.bf16.msra.mxu0 %v3923
        %3946 = vmatprep.subr.bf16.mxu0 0
        %3947 = vmatpush1.bf16.msra.mxu0 %v3942
        %3948 = vmatprep.subr.bf16.mxu0 0
        %3949 = vmatpush1.bf16.msra.mxu0 0
        %3950 = vmatprep.subr.bf16.mxu0 0
        %3951 = vmatpush1.bf16.msra.mxu0 0
        %3952 = vmatprep.subr.bf16.mxu0 0
        %3953 = vmatpush1.bf16.msra.mxu0 0
        %3954 = vmatprep.subr.bf16.mxu0 0
        %3955 = vmatpush1.bf16.msra.mxu0 0
        %3956 = vmatprep.subr.bf16.mxu0 0
        %3957 = vmatpush1.bf16.msra.mxu0 0
        %3958 = vmatprep.subr.bf16.mxu0 0
        %3959 = vmatpush1.bf16.msra.mxu0 0
        %3960 = vmatprep.subr.bf16.mxu0 0
        %3961 = vmatpush1.bf16.msra.mxu0 0
        %3962 = vmatprep.subr.bf16.mxu0 0
        %3963 = vmatpush1.bf16.msra.mxu0 0
        %3964 = vmatprep.subr.bf16.mxu0 0
        %3965 = vmatpush1.bf16.msra.mxu0 0
        %3966 = vmatprep.subr.bf16.mxu0 0
        %3967 = vmatpush1.bf16.msra.mxu0 0
        %3968 = vmatprep.subr.bf16.mxu0 0
        %3969 = vmatpush1.bf16.msra.mxu0 0
        %3970 = vmatprep.subr.bf16.mxu0 0
        %3971 = vmatpush1.bf16.msra.mxu0 0
        %3972 = vmatprep.subr.bf16.mxu0 0
        %3973 = vmatpush1.bf16.msra.mxu0 0
        %3974 = vmatprep.subr.bf16.mxu0 0
        %3975 = vmatpush1.bf16.msra.mxu0 0
        %3976 = vmatprep.mubr.bf16.mxu0 0
        %3977 = vmatmul.mubr.bf16.gmra.mrb[0].mxu0 %v3936
        %v3978 = vpop.f32.mrb[0].mxu0
        %v3979 = vadd.f32 0.0, %v3978
        %v3980 = vpop.f32.mrb[0].mxu0
        %v3981 = vpop.f32.mrb[0].mxu0
        %v3982 = vadd.f32 0.0, %v3981
        %v3983 = vpop.f32.mrb[0].mxu0
        %3984 = vmatprep.mubr.bf16.mxu0 0
        %3985 = vmatmul.mubr.bf16.gmra.mrb[0].mxu0 %v3939
        %v3986 = vpop.f32.mrb[0].mxu0
        %v3987 = vadd.f32 0.0, %v3986
        %v3988 = vpop.f32.mrb[0].mxu0
        %v3989 = vpop.f32.mrb[0].mxu0
        %v3990 = vadd.f32 0.0, %v3989
        %v3991 = vpop.f32.mrb[0].mxu0
        %3992 = vdwg.mxu0
        %v3997 = vunpack.c.l.b16 %v3460
        %v3998 = vunpack.c.l.b16 %v3461
        %v3999 = vunpack.c.l.b16 %v3462
        %v4000 = vunpack.c.l.b16 %v3463
        %v4001 = vpack.c.b16 %v3998, %v3997
        %v4002 = vpack.c.b16 %v4000, %v3999
        %v4004 = vsel %vm2109, %v4001, 0
        %v4007 = vsel %vm2109, %v4002, 0
        %v4010 = vsel %vm2116, %v3922, 0
        %4012 = vmatprep.subr.bf16.mxu0 0
        %4013 = vmatpush1.bf16.msra.mxu0 %v4010
        %4014 = vmatprep.subr.bf16.mxu0 0
        %4015 = vmatpush1.bf16.msra.mxu0 0
        %4016 = vmatprep.subr.bf16.mxu0 0
        %4017 = vmatpush1.bf16.msra.mxu0 0
        %4018 = vmatprep.subr.bf16.mxu0 0
        %4019 = vmatpush1.bf16.msra.mxu0 0
        %4020 = vmatprep.subr.bf16.mxu0 0
        %4021 = vmatpush1.bf16.msra.mxu0 0
        %4022 = vmatprep.subr.bf16.mxu0 0
        %4023 = vmatpush1.bf16.msra.mxu0 0
        %4024 = vmatprep.subr.bf16.mxu0 0
        %4025 = vmatpush1.bf16.msra.mxu0 0
        %4026 = vmatprep.subr.bf16.mxu0 0
        %4027 = vmatpush1.bf16.msra.mxu0 0
        %4028 = vmatprep.subr.bf16.mxu0 0
        %4029 = vmatpush1.bf16.msra.mxu0 0
        %4030 = vmatprep.subr.bf16.mxu0 0
        %4031 = vmatpush1.bf16.msra.mxu0 0
        %4032 = vmatprep.subr.bf16.mxu0 0
        %4033 = vmatpush1.bf16.msra.mxu0 0
        %4034 = vmatprep.subr.bf16.mxu0 0
        %4035 = vmatpush1.bf16.msra.mxu0 0
        %4036 = vmatprep.subr.bf16.mxu0 0
        %4037 = vmatpush1.bf16.msra.mxu0 0
        %4038 = vmatprep.subr.bf16.mxu0 0
        %4039 = vmatpush1.bf16.msra.mxu0 0
        %4040 = vmatprep.subr.bf16.mxu0 0
        %4041 = vmatpush1.bf16.msra.mxu0 0
        %4042 = vmatprep.subr.bf16.mxu0 0
        %4043 = vmatpush1.bf16.msra.mxu0 0
        %4044 = vmatprep.mubr.bf16.mxu0 0
        %4045 = vmatmul.mubr.bf16.gmra.mrb[0].mxu0 %v4004
        %v4046 = vpop.f32.mrb[0].mxu0
        %v4047 = vadd.f32 %v3979, %v4046
        %v4048 = vpop.f32.mrb[0].mxu0
        %v4049 = vpop.f32.mrb[0].mxu0
        %v4050 = vadd.f32 %v3982, %v4049
        %v4051 = vpop.f32.mrb[0].mxu0
        %4052 = vmatprep.mubr.bf16.mxu0 0
        %4053 = vmatmul.mubr.bf16.gmra.mrb[0].mxu0 %v4007
        %v4054 = vpop.f32.mrb[0].mxu0
        %v4055 = vadd.f32 %v3987, %v4054
        %v4056 = vpop.f32.mrb[0].mxu0
        %v4057 = vpop.f32.mrb[0].mxu0
        %v4058 = vadd.f32 %v3990, %v4057
        %v4059 = vpop.f32.mrb[0].mxu0
        %4060 = vdwg.mxu0
        %4062 = vset.pattern.permute.xlu0 0
        %4063 = vperm.xlu0 %4062, %v3468
        %v4064 = vpop.permute.xlu0 %4063
        %4067 = vset.pattern.permute.xlu0 0
        %4068 = vperm.xlu0 %4067, %v3469
        %v4069 = vpop.permute.xlu0 %4068
        %4072 = vset.pattern.permute.xlu0 0
        %4073 = vperm.xlu0 %4072, %v3470
        %v4074 = vpop.permute.xlu0 %4073
        %4077 = vset.pattern.permute.xlu0 0
        %4078 = vperm.xlu0 %4077, %v3471
        %v4079 = vpop.permute.xlu0 %4078
        %v4081 = vadd.f32 %v4047, %v4064
        %v4082 = vadd.f32 %v4050, %v4069
        %v4083 = vadd.f32 %v4055, %v4074
        %v4084 = vadd.f32 %v4058, %v4079
        %v4085 = vmax.f32 %v4081, 0.0
        %v4086 = vmax.f32 %v4082, 0.0
        %v4087 = vmax.f32 %v4083, 0.0
        %v4088 = vmax.f32 %v4084, 0.0
        %4090 = vset.pattern.permute.xlu0 0
        %4091 = vperm.xlu0 %4090, %v3472
        %v4092 = vpop.permute.xlu0 %4091
        %4095 = vset.pattern.permute.xlu0 0
        %4096 = vperm.xlu0 %4095, %v3473
        %v4097 = vpop.permute.xlu0 %4096
        %4100 = vset.pattern.permute.xlu0 0
        %4101 = vperm.xlu0 %4100, %v3474
        %v4102 = vpop.permute.xlu0 %4101
        %4105 = vset.pattern.permute.xlu0 0
        %4106 = vperm.xlu0 %4105, %v3475
        %v4107 = vpop.permute.xlu0 %4106
        %v4109 = vmul.f32 %v4085, %v4092
        %v4110 = vmul.f32 %v4086, %v4097
        %v4111 = vmul.f32 %v4087, %v4102
        %v4112 = vmul.f32 %v4088, %v4107
        %4114 = vset.pattern.permute.xlu0 0
        %4115 = vperm.xlu0 %4114, %v3476
        %v4116 = vpop.permute.xlu0 %4115
        %4119 = vset.pattern.permute.xlu0 0
        %4120 = vperm.xlu0 %4119, %v3477
        %v4121 = vpop.permute.xlu0 %4120
        %4124 = vset.pattern.permute.xlu0 0
        %4125 = vperm.xlu0 %4124, %v3478
        %v4126 = vpop.permute.xlu0 %4125
        %4129 = vset.pattern.permute.xlu0 0
        %4130 = vperm.xlu0 %4129, %v3479
        %v4131 = vpop.permute.xlu0 %4130
        %v4133 = vadd.f32 %v4109, %v4116
        %v4134 = vadd.f32 %v4110, %v4121
        %v4135 = vadd.f32 %v4111, %v4126
        %v4136 = vadd.f32 %v4112, %v4131
        %4137 = vadd.xlane.f32.xlu0 %v4133
        %v4138 = vpop.xlane.xlu0 %4137
        %4139 = vadd.xlane.f32.xlu0 %v4134
        %v4140 = vpop.xlane.xlu0 %4139
        %4141 = vadd.xlane.f32.xlu0 %v4135
        %v4142 = vpop.xlane.xlu0 %4141
        %4143 = vadd.xlane.f32.xlu0 %v4136
        %v4144 = vpop.xlane.xlu0 %4143
        %v4145 = vmul.f32 %v4138, %v3246
        %v4146 = vmul.f32 %v4140, %v3246
        %v4147 = vmul.f32 %v4142, %v3246
        %v4148 = vmul.f32 %v4144, %v3246
        %v4149 = vpack.c.bf16 %v4146, %v4145
        %v4150 = vpack.c.bf16 %v4148, %v4147
        %v4152 = vsel %vm2629, %v3480, 0
        %4154 = vmatprep.subr.bf16.mxu0 0
        %4155 = vmatpush1.bf16.msra.mxu0 %v4149
        %4156 = vmatprep.subr.bf16.mxu0 0
        %4157 = vmatpush1.bf16.msra.mxu0 %v4150
        %4158 = vmatprep.subr.bf16.mxu0 0
        %4159 = vmatpush1.bf16.msra.mxu0 0
        %4160 = vmatprep.subr.bf16.mxu0 0
        %4161 = vmatpush1.bf16.msra.mxu0 0
        %4162 = vmatprep.subr.bf16.mxu0 0
        %4163 = vmatpush1.bf16.msra.mxu0 0
        %4164 = vmatprep.subr.bf16.mxu0 0
        %4165 = vmatpush1.bf16.msra.mxu0 0
        %4166 = vmatprep.subr.bf16.mxu0 0
        %4167 = vmatpush1.bf16.msra.mxu0 0
        %4168 = vmatprep.subr.bf16.mxu0 0
        %4169 = vmatpush1.bf16.msra.mxu0 0
        %4170 = vmatprep.subr.bf16.mxu0 0
        %4171 = vmatpush1.bf16.msra.mxu0 0
        %4172 = vmatprep.subr.bf16.mxu0 0
        %4173 = vmatpush1.bf16.msra.mxu0 0
        %4174 = vmatprep.subr.bf16.mxu0 0
        %4175 = vmatpush1.bf16.msra.mxu0 0
        %4176 = vmatprep.subr.bf16.mxu0 0
        %4177 = vmatpush1.bf16.msra.mxu0 0
        %4178 = vmatprep.subr.bf16.mxu0 0
        %4179 = vmatpush1.bf16.msra.mxu0 0
        %4180 = vmatprep.subr.bf16.mxu0 0
        %4181 = vmatpush1.bf16.msra.mxu0 0
        %4182 = vmatprep.subr.bf16.mxu0 0
        %4183 = vmatpush1.bf16.msra.mxu0 0
        %4184 = vmatprep.subr.bf16.mxu0 0
        %4185 = vmatpush1.bf16.msra.mxu0 0
        %4186 = vmatprep.mubr.bf16.mxu0 0
        %4187 = vmatmul.mubr.bf16.gmra.mrb[0].mxu0 %v4152
        %v4188 = vpop.f32.mrb[0].mxu0
        %v4189 = vadd.f32 %v3481, %v4188
        %v4190 = vpop.f32.mrb[0].mxu0
        %v4191 = vpop.f32.mrb[0].mxu0
        %v4192 = vpop.f32.mrb[0].mxu0
        %4193 = vdwg.mxu0
        %v4194 = vxor.u32 %v4189, 2147483648
        %v4195 = vmul.f32 %v4194, 1.442695
        %v4196 = vpow.pop %v4195
        %v4197 = vadd.f32 %v4196, 1.0
        %v4198 = vrcp.pop %v4197
        %v4199 = vmul.f32 1.0, %v4198
        %v4200 = vmul.f32 %v4189, %v4199
        %v4201 = vpack.c.bf16 %v4200, %v4200
        %v4206 = vunpack.c.l.b16 %v3482
        %v4207 = vunpack.c.l.b16 %v3483
        %v4208 = vunpack.c.l.b16 %v3484
        %v4209 = vunpack.c.l.b16 %v3485
        %v4210 = vpack.c.b16 %v4207, %v4206
        %v4211 = vpack.c.b16 %v4209, %v4208
        %v4213 = vsel %vm2109, %v4210, 0
        %v4216 = vsel %vm2109, %v4211, 0
        %v4219 = vsel %vm2116, %v4201, 0
        %4221 = vmatprep.subr.bf16.mxu0 0
        %4222 = vmatpush1.bf16.msra.mxu0 %v4219
        %4223 = vmatprep.subr.bf16.mxu0 0
        %4224 = vmatpush1.bf16.msra.mxu0 0
        %4225 = vmatprep.subr.bf16.mxu0 0
        %4226 = vmatpush1.bf16.msra.mxu0 0
        %4227 = vmatprep.subr.bf16.mxu0 0
        %4228 = vmatpush1.bf16.msra.mxu0 0
        %4229 = vmatprep.subr.bf16.mxu0 0
        %4230 = vmatpush1.bf16.msra.mxu0 0
        %4231 = vmatprep.subr.bf16.mxu0 0
        %4232 = vmatpush1.bf16.msra.mxu0 0
        %4233 = vmatprep.subr.bf16.mxu0 0
        %4234 = vmatpush1.bf16.msra.mxu0 0
        %4235 = vmatprep.subr.bf16.mxu0 0
        %4236 = vmatpush1.bf16.msra.mxu0 0
        %4237 = vmatprep.subr.bf16.mxu0 0
        %4238 = vmatpush1.bf16.msra.mxu0 0
        %4239 = vmatprep.subr.bf16.mxu0 0
        %4240 = vmatpush1.bf16.msra.mxu0 0
        %4241 = vmatprep.subr.bf16.mxu0 0
        %4242 = vmatpush1.bf16.msra.mxu0 0
        %4243 = vmatprep.subr.bf16.mxu0 0
        %4244 = vmatpush1.bf16.msra.mxu0 0
        %4245 = vmatprep.subr.bf16.mxu0 0
        %4246 = vmatpush1.bf16.msra.mxu0 0
        %4247 = vmatprep.subr.bf16.mxu0 0
        %4248 = vmatpush1.bf16.msra.mxu0 0
        %4249 = vmatprep.subr.bf16.mxu0 0
        %4250 = vmatpush1.bf16.msra.mxu0 0
        %4251 = vmatprep.subr.bf16.mxu0 0
        %4252 = vmatpush1.bf16.msra.mxu0 0
        %4253 = vmatprep.mubr.bf16.mxu0 0
        %4254 = vmatmul.mubr.bf16.gmra.mrb[0].mxu0 %v4213
        %v4255 = vpop.f32.mrb[0].mxu0
        %v4256 = vadd.f32 %v3486, %v4255
        %v4257 = vpop.f32.mrb[0].mxu0
        %v4258 = vpop.f32.mrb[0].mxu0
        %v4259 = vadd.f32 %v3487, %v4258
        %v4260 = vpop.f32.mrb[0].mxu0
        %4261 = vmatprep.mubr.bf16.mxu0 0
        %4262 = vmatmul.mubr.bf16.gmra.mrb[0].mxu0 %v4216
        %v4263 = vpop.f32.mrb[0].mxu0
        %v4264 = vadd.f32 %v3488, %v4263
        %v4265 = vpop.f32.mrb[0].mxu0
        %v4266 = vpop.f32.mrb[0].mxu0
        %v4267 = vadd.f32 %v3489, %v4266
        %v4268 = vpop.f32.mrb[0].mxu0
        %4269 = vdwg.mxu0
        %v4270 = vxor.u32 %v4256, 2147483648
        %v4271 = vxor.u32 %v4259, 2147483648
        %v4272 = vxor.u32 %v4264, 2147483648
        %v4273 = vxor.u32 %v4267, 2147483648
        %v4274 = vmul.f32 %v4270, 1.442695
        %v4275 = vpow.pop %v4274
        %v4276 = vmul.f32 %v4271, 1.442695
        %v4277 = vpow.pop %v4276
        %v4278 = vmul.f32 %v4272, 1.442695
        %v4279 = vpow.pop %v4278
        %v4280 = vmul.f32 %v4273, 1.442695
        %v4281 = vpow.pop %v4280
        %v4282 = vadd.f32 %v4275, 1.0
        %v4283 = vadd.f32 %v4277, 1.0
        %v4284 = vadd.f32 %v4279, 1.0
        %v4285 = vadd.f32 %v4281, 1.0
        %v4286 = vrcp.pop %v4282
        %v4287 = vmul.f32 1.0, %v4286
        %v4288 = vrcp.pop %v4283
        %v4289 = vmul.f32 1.0, %v4288
        %v4290 = vrcp.pop %v4284
        %v4291 = vmul.f32 1.0, %v4290
        %v4292 = vrcp.pop %v4285
        %v4293 = vmul.f32 1.0, %v4292
        %4295 = vset.pattern.permute.xlu0 0
        %4296 = vperm.xlu0 %4295, %v4287
        %v4297 = vpop.permute.xlu0 %4296
        %4300 = vset.pattern.permute.xlu0 0
        %4301 = vperm.xlu0 %4300, %v4289
        %v4302 = vpop.permute.xlu0 %4301
        %4305 = vset.pattern.permute.xlu0 0
        %4306 = vperm.xlu0 %4305, %v4291
        %v4307 = vpop.permute.xlu0 %4306
        %4310 = vset.pattern.permute.xlu0 0
        %4311 = vperm.xlu0 %4310, %v4293
        %v4312 = vpop.permute.xlu0 %4311
        %v4314 = vmul.f32 %v4133, %v4297
        %v4315 = vmul.f32 %v4134, %v4302
        %v4316 = vmul.f32 %v4135, %v4307
        %v4317 = vmul.f32 %v4136, %v4312
        %v4318 = vadd.f32 %v4314, %v3420
        %v4319 = vadd.f32 %v4315, %v3421
        %v4320 = vadd.f32 %v4316, %v3422
        %v4321 = vadd.f32 %v4317, %v3423
        %v4322 = vpack.c.bf16 %v4319, %v4318
        %v4323 = vpack.c.bf16 %v4321, %v4320
        %v4328 = vunpack.c.l.b16 %v3490
        %v4329 = vunpack.c.l.b16 %v3491
        %v4330 = vunpack.c.l.b16 %v3492
        %v4331 = vunpack.c.l.b16 %v3493
        %v4332 = vpack.c.b16 %v4329, %v4328
        %v4333 = vpack.c.b16 %v4331, %v4330
        %v4335 = vsel %vm2629, %v4332, 0
        %v4338 = vsel %vm2629, %v4333, 0
        %4340 = vmatprep.subr.bf16.mxu0 0
        %4341 = vmatpush1.bf16.msra.mxu0 %v4322
        %4342 = vmatprep.subr.bf16.mxu0 0
        %4343 = vmatpush1.bf16.msra.mxu0 %v4323
        %4344 = vmatprep.subr.bf16.mxu0 0
        %4345 = vmatpush1.bf16.msra.mxu0 0
        %4346 = vmatprep.subr.bf16.mxu0 0
        %4347 = vmatpush1.bf16.msra.mxu0 0
        %4348 = vmatprep.subr.bf16.mxu0 0
        %4349 = vmatpush1.bf16.msra.mxu0 0
        %4350 = vmatprep.subr.bf16.mxu0 0
        %4351 = vmatpush1.bf16.msra.mxu0 0
        %4352 = vmatprep.subr.bf16.mxu0 0
        %4353 = vmatpush1.bf16.msra.mxu0 0
        %4354 = vmatprep.subr.bf16.mxu0 0
        %4355 = vmatpush1.bf16.msra.mxu0 0
        %4356 = vmatprep.subr.bf16.mxu0 0
        %4357 = vmatpush1.bf16.msra.mxu0 0
        %4358 = vmatprep.subr.bf16.mxu0 0
        %4359 = vmatpush1.bf16.msra.mxu0 0
        %4360 = vmatprep.subr.bf16.mxu0 0
        %4361 = vmatpush1.bf16.msra.mxu0 0
        %4362 = vmatprep.subr.bf16.mxu0 0
        %4363 = vmatpush1.bf16.msra.mxu0 0
        %4364 = vmatprep.subr.bf16.mxu0 0
        %4365 = vmatpush1.bf16.msra.mxu0 0
        %4366 = vmatprep.subr.bf16.mxu0 0
        %4367 = vmatpush1.bf16.msra.mxu0 0
        %4368 = vmatprep.subr.bf16.mxu0 0
        %4369 = vmatpush1.bf16.msra.mxu0 0
        %4370 = vmatprep.subr.bf16.mxu0 0
        %4371 = vmatpush1.bf16.msra.mxu0 0
        %4372 = vmatprep.mubr.bf16.mxu0 0
        %4373 = vmatmul.mubr.bf16.gmra.mrb[0].mxu0 %v4335
        %v4374 = vpop.f32.mrb[0].mxu0
        %v4375 = vadd.f32 0.0, %v4374
        %v4376 = vpop.f32.mrb[0].mxu0
        %v4377 = vpop.f32.mrb[0].mxu0
        %v4378 = vadd.f32 0.0, %v4377
        %v4379 = vpop.f32.mrb[0].mxu0
        %4380 = vmatprep.mubr.bf16.mxu0 0
        %4381 = vmatmul.mubr.bf16.gmra.mrb[0].mxu0 %v4338
        %v4382 = vpop.f32.mrb[0].mxu0
        %v4383 = vadd.f32 0.0, %v4382
        %v4384 = vpop.f32.mrb[0].mxu0
        %v4385 = vpop.f32.mrb[0].mxu0
        %v4386 = vadd.f32 0.0, %v4385
        %v4387 = vpop.f32.mrb[0].mxu0
        %4388 = vdwg.mxu0
        %v4393 = vunpack.c.l.b16 %v2595
        %v4394 = vunpack.c.l.b16 %v2596
        %v4395 = vunpack.c.l.b16 %v2597
        %v4396 = vunpack.c.l.b16 %v2598
        %v4397 = vpack.c.b16 %v4394, %v4393
        %v4398 = vpack.c.b16 %v4396, %v4395
        %v4400 = vsel %vm2629, %v4397, 0
        %v4403 = vsel %vm2629, %v4398, 0
        %4405 = vmatprep.subr.bf16.mxu0 0
        %4406 = vmatpush1.bf16.msra.mxu0 %v3424
        %4407 = vmatprep.subr.bf16.mxu0 0
        %4408 = vmatpush1.bf16.msra.mxu0 %v3425
        %4409 = vmatprep.subr.bf16.mxu0 0
        %4410 = vmatpush1.bf16.msra.mxu0 0
        %4411 = vmatprep.subr.bf16.mxu0 0
        %4412 = vmatpush1.bf16.msra.mxu0 0
        %4413 = vmatprep.subr.bf16.mxu0 0
        %4414 = vmatpush1.bf16.msra.mxu0 0
        %4415 = vmatprep.subr.bf16.mxu0 0
        %4416 = vmatpush1.bf16.msra.mxu0 0
        %4417 = vmatprep.subr.bf16.mxu0 0
        %4418 = vmatpush1.bf16.msra.mxu0 0
        %4419 = vmatprep.subr.bf16.mxu0 0
        %4420 = vmatpush1.bf16.msra.mxu0 0
        %4421 = vmatprep.subr.bf16.mxu0 0
        %4422 = vmatpush1.bf16.msra.mxu0 0
        %4423 = vmatprep.subr.bf16.mxu0 0
        %4424 = vmatpush1.bf16.msra.mxu0 0
        %4425 = vmatprep.subr.bf16.mxu0 0
        %4426 = vmatpush1.bf16.msra.mxu0 0
        %4427 = vmatprep.subr.bf16.mxu0 0
        %4428 = vmatpush1.bf16.msra.mxu0 0
        %4429 = vmatprep.subr.bf16.mxu0 0
        %4430 = vmatpush1.bf16.msra.mxu0 0
        %4431 = vmatprep.subr.bf16.mxu0 0
        %4432 = vmatpush1.bf16.msra.mxu0 0
        %4433 = vmatprep.subr.bf16.mxu0 0
        %4434 = vmatpush1.bf16.msra.mxu0 0
        %4435 = vmatprep.subr.bf16.mxu0 0
        %4436 = vmatpush1.bf16.msra.mxu0 0
        %4437 = vmatprep.mubr.bf16.mxu0 0
        %4438 = vmatmul.mubr.bf16.gmra.mrb[0].mxu0 %v4400
        %v4439 = vpop.f32.mrb[0].mxu0
        %v4440 = vadd.f32 %v4375, %v4439
        %v4441 = vpop.f32.mrb[0].mxu0
        %v4442 = vpop.f32.mrb[0].mxu0
        %v4443 = vadd.f32 %v4378, %v4442
        %v4444 = vpop.f32.mrb[0].mxu0
        %4445 = vmatprep.mubr.bf16.mxu0 0
        %4446 = vmatmul.mubr.bf16.gmra.mrb[0].mxu0 %v4403
        %v4447 = vpop.f32.mrb[0].mxu0
        %v4448 = vadd.f32 %v4383, %v4447
        %v4449 = vpop.f32.mrb[0].mxu0
        %v4450 = vpop.f32.mrb[0].mxu0
        %v4451 = vadd.f32 %v4386, %v4450
        %v4452 = vpop.f32.mrb[0].mxu0
        %4453 = vdwg.mxu0
        %v4454 = vld [vmem:[%s83] sm:$0xff]
        %v4455 = vld [vmem:[%s83 + $0x8] sm:$0xff]
        %v4456 = vld [vmem:[%s83 + $0x10] sm:$0xff]
        %v4457 = vld [vmem:[%s83 + $0x18] sm:$0xff]
        %4459 = vset.pattern.permute.xlu0 0
        %4460 = vperm.xlu0 %4459, %v4454
        %v4461 = vpop.permute.xlu0 %4460
        %4464 = vset.pattern.permute.xlu0 0
        %4465 = vperm.xlu0 %4464, %v4455
        %v4466 = vpop.permute.xlu0 %4465
        %4469 = vset.pattern.permute.xlu0 0
        %4470 = vperm.xlu0 %4469, %v4456
        %v4471 = vpop.permute.xlu0 %4470
        %4474 = vset.pattern.permute.xlu0 0
        %4475 = vperm.xlu0 %4474, %v4457
        %v4476 = vpop.permute.xlu0 %4475
        %v4478 = vadd.f32 %v4440, %v4461
        %v4479 = vadd.f32 %v4443, %v4466
        %v4480 = vadd.f32 %v4448, %v4471
        %v4481 = vadd.f32 %v4451, %v4476
        %v4482 = vmax.f32 %v4478, 0.0
        %v4483 = vmax.f32 %v4479, 0.0
        %v4484 = vmax.f32 %v4480, 0.0
        %v4485 = vmax.f32 %v4481, 0.0
        %v4486 = vpack.c.bf16 %v4483, %v4482
        %v4487 = vpack.c.bf16 %v4485, %v4484
        %v4488 = vld [vmem:[%s85] sm:$0x3]
        %v4489 = vld [vmem:[%s87] sm:$0xf]
        %v4490 = vld [vmem:[%s89] sm:$0xf]
        %v4491 = vld [vmem:[%s89 + $0x4] sm:$0xf]
        %v4492 = vld [vmem:[%s89 + $0x8] sm:$0xf]
        %v4493 = vld [vmem:[%s89 + $0xc] sm:$0xf]
        %v4494 = vld [vmem:[%s91] sm:$0xff]
        %v4495 = vld [vmem:[%s91 + $0x8] sm:$0xff]
        %v4496 = vld [vmem:[%s91 + $0x10] sm:$0xff]
        %v4497 = vld [vmem:[%s91 + $0x18] sm:$0xff]
        %4499 = vset.pattern.permute.xlu0 0
        %4500 = vperm.xlu0 %4499, %v4489
        %v4501 = vpop.permute.xlu0 %4500
        %v4504 = vsel %vm2629, %v4488, 0
        %4506 = vmatprep.subr.bf16.mxu0 0
        %4507 = vmatpush1.bf16.msra.mxu0 %v4486
        %4508 = vmatprep.subr.bf16.mxu0 0
        %4509 = vmatpush1.bf16.msra.mxu0 %v4487
        %4510 = vmatprep.subr.bf16.mxu0 0
        %4511 = vmatpush1.bf16.msra.mxu0 0
        %4512 = vmatprep.subr.bf16.mxu0 0
        %4513 = vmatpush1.bf16.msra.mxu0 0
        %4514 = vmatprep.subr.bf16.mxu0 0
        %4515 = vmatpush1.bf16.msra.mxu0 0
        %4516 = vmatprep.subr.bf16.mxu0 0
        %4517 = vmatpush1.bf16.msra.mxu0 0
        %4518 = vmatprep.subr.bf16.mxu0 0
        %4519 = vmatpush1.bf16.msra.mxu0 0
        %4520 = vmatprep.subr.bf16.mxu0 0
        %4521 = vmatpush1.bf16.msra.mxu0 0
        %4522 = vmatprep.subr.bf16.mxu0 0
        %4523 = vmatpush1.bf16.msra.mxu0 0
        %4524 = vmatprep.subr.bf16.mxu0 0
        %4525 = vmatpush1.bf16.msra.mxu0 0
        %4526 = vmatprep.subr.bf16.mxu0 0
        %4527 = vmatpush1.bf16.msra.mxu0 0
        %4528 = vmatprep.subr.bf16.mxu0 0
        %4529 = vmatpush1.bf16.msra.mxu0 0
        %4530 = vmatprep.subr.bf16.mxu0 0
        %4531 = vmatpush1.bf16.msra.mxu0 0
        %4532 = vmatprep.subr.bf16.mxu0 0
        %4533 = vmatpush1.bf16.msra.mxu0 0
        %4534 = vmatprep.subr.bf16.mxu0 0
        %4535 = vmatpush1.bf16.msra.mxu0 0
        %4536 = vmatprep.subr.bf16.mxu0 0
        %4537 = vmatpush1.bf16.msra.mxu0 0
        %4538 = vmatprep.mubr.bf16.mxu0 0
        %4539 = vmatmul.mubr.bf16.gmra.mrb[0].mxu0 %v4504
        %v4540 = vpop.f32.mrb[0].mxu0
        %v4541 = vadd.f32 %v4501, %v4540
        %v4542 = vpop.f32.mrb[0].mxu0
        %v4543 = vpop.f32.mrb[0].mxu0
        %v4544 = vpop.f32.mrb[0].mxu0
        %4545 = vdwg.mxu0
        %v4546 = vtanh.pop %v4541
        %v4547 = vpack.c.bf16 %v4546, %v4546
        %4549 = vset.pattern.permute.xlu0 0
        %4550 = vperm.xlu0 %4549, %v4494
        %v4551 = vpop.permute.xlu0 %4550
        %4554 = vset.pattern.permute.xlu0 0
        %4555 = vperm.xlu0 %4554, %v4495
        %v4556 = vpop.permute.xlu0 %4555
        %4559 = vset.pattern.permute.xlu0 0
        %4560 = vperm.xlu0 %4559, %v4496
        %v4561 = vpop.permute.xlu0 %4560
        %4564 = vset.pattern.permute.xlu0 0
        %4565 = vperm.xlu0 %4564, %v4497
        %v4566 = vpop.permute.xlu0 %4565
        %v4572 = vunpack.c.l.b16 %v4490
        %v4573 = vunpack.c.l.b16 %v4491
        %v4574 = vunpack.c.l.b16 %v4492
        %v4575 = vunpack.c.l.b16 %v4493
        %v4576 = vpack.c.b16 %v4573, %v4572
        %v4577 = vpack.c.b16 %v4575, %v4574
        %vm4578 = vcmask 31744
        %v4580 = vsel %vm4578, %v4576, 0
        %v4583 = vsel %vm4578, %v4577, 0
        %vm4585 = vcmask 1041408
        %v4587 = vsel %vm4585, %v4547, 0
        %4589 = vmatprep.subr.bf16.mxu0 0
        %4590 = vmatpush1.bf16.msra.mxu0 %v4587
        %4591 = vmatprep.subr.bf16.mxu0 0
        %4592 = vmatpush1.bf16.msra.mxu0 0
        %4593 = vmatprep.subr.bf16.mxu0 0
        %4594 = vmatpush1.bf16.msra.mxu0 0
        %4595 = vmatprep.subr.bf16.mxu0 0
        %4596 = vmatpush1.bf16.msra.mxu0 0
        %4597 = vmatprep.subr.bf16.mxu0 0
        %4598 = vmatpush1.bf16.msra.mxu0 0
        %4599 = vmatprep.subr.bf16.mxu0 0
        %4600 = vmatpush1.bf16.msra.mxu0 0
        %4601 = vmatprep.subr.bf16.mxu0 0
        %4602 = vmatpush1.bf16.msra.mxu0 0
        %4603 = vmatprep.subr.bf16.mxu0 0
        %4604 = vmatpush1.bf16.msra.mxu0 0
        %4605 = vmatprep.subr.bf16.mxu0 0
        %4606 = vmatpush1.bf16.msra.mxu0 0
        %4607 = vmatprep.subr.bf16.mxu0 0
        %4608 = vmatpush1.bf16.msra.mxu0 0
        %4609 = vmatprep.subr.bf16.mxu0 0
        %4610 = vmatpush1.bf16.msra.mxu0 0
        %4611 = vmatprep.subr.bf16.mxu0 0
        %4612 = vmatpush1.bf16.msra.mxu0 0
        %4613 = vmatprep.subr.bf16.mxu0 0
        %4614 = vmatpush1.bf16.msra.mxu0 0
        %4615 = vmatprep.subr.bf16.mxu0 0
        %4616 = vmatpush1.bf16.msra.mxu0 0
        %4617 = vmatprep.subr.bf16.mxu0 0
        %4618 = vmatpush1.bf16.msra.mxu0 0
        %4619 = vmatprep.subr.bf16.mxu0 0
        %4620 = vmatpush1.bf16.msra.mxu0 0
        %4621 = vmatprep.mubr.bf16.mxu0 0
        %4622 = vmatmul.mubr.bf16.gmra.mrb[0].mxu0 %v4580
        %v4623 = vpop.f32.mrb[0].mxu0
        %v4624 = vadd.f32 %v4551, %v4623
        %v4625 = vpop.f32.mrb[0].mxu0
        %v4626 = vpop.f32.mrb[0].mxu0
        %v4627 = vadd.f32 %v4556, %v4626
        %v4628 = vpop.f32.mrb[0].mxu0
        %4629 = vmatprep.mubr.bf16.mxu0 0
        %4630 = vmatmul.mubr.bf16.gmra.mrb[0].mxu0 %v4583
        %v4631 = vpop.f32.mrb[0].mxu0
        %v4632 = vadd.f32 %v4561, %v4631
        %v4633 = vpop.f32.mrb[0].mxu0
        %v4634 = vpop.f32.mrb[0].mxu0
        %v4635 = vadd.f32 %v4566, %v4634
        %v4636 = vpop.f32.mrb[0].mxu0
        %4637 = vdwg.mxu0
        %4638 = vmax.xlane.f32.xlu0 %v4624
        %v4639 = vpop.xlane.xlu0 %4638
        %4640 = vmax.xlane.f32.xlu0 %v4627
        %v4641 = vpop.xlane.xlu0 %4640
        %4642 = vmax.xlane.f32.xlu0 %v4632
        %v4643 = vpop.xlane.xlu0 %4642
        %4644 = vmax.xlane.f32.xlu0 %v4635
        %v4645 = vpop.xlane.xlu0 %4644
        %v4646 = vsub.f32 %v4624, %v4639
        %v4647 = vsub.f32 %v4627, %v4641
        %v4648 = vsub.f32 %v4632, %v4643
        %v4649 = vsub.f32 %v4635, %v4645
        %v4650 = vmul.f32 %v4646, 1.442695
        %v4651 = vpow.pop %v4650
        %v4652 = vmul.f32 %v4647, 1.442695
        %v4653 = vpow.pop %v4652
        %v4654 = vmul.f32 %v4648, 1.442695
        %v4655 = vpow.pop %v4654
        %v4656 = vmul.f32 %v4649, 1.442695
        %v4657 = vpow.pop %v4656
        %4658 = vadd.xlane.f32.xlu0 %v4651
        %v4659 = vpop.xlane.xlu0 %4658
        %4660 = vadd.xlane.f32.xlu0 %v4653
        %v4661 = vpop.xlane.xlu0 %4660
        %4662 = vadd.xlane.f32.xlu0 %v4655
        %v4663 = vpop.xlane.xlu0 %4662
        %4664 = vadd.xlane.f32.xlu0 %v4657
        %v4665 = vpop.xlane.xlu0 %4664
        %v4666 = vrcp.pop %v4659
        %v4667 = vrcp.pop %v4661
        %v4668 = vrcp.pop %v4663
        %v4669 = vrcp.pop %v4665
        %v4670 = vmul.f32 %v4651, %v4666
        %v4671 = vmul.f32 %v4653, %v4667
        %v4672 = vmul.f32 %v4655, %v4668
        %v4673 = vmul.f32 %v4657, %v4669
        %v4674 = vmul.f32 %v4670, %v4482
        %v4675 = vmul.f32 %v4671, %v4483
        %v4676 = vmul.f32 %v4672, %v4484
        %v4677 = vmul.f32 %v4673, %v4485
        %4678 = vadd.xlane.f32.xlu0 %v4674
        %v4679 = vpop.xlane.xlu0 %4678
        %4680 = vadd.xlane.f32.xlu0 %v4675
        %v4681 = vpop.xlane.xlu0 %4680
        %4682 = vadd.xlane.f32.xlu0 %v4676
        %v4683 = vpop.xlane.xlu0 %4682
        %4684 = vadd.xlane.f32.xlu0 %v4677
        %v4685 = vpop.xlane.xlu0 %4684
        %v4686 = vmul.f32 %v4674, %v4482
        %v4687 = vmul.f32 %v4675, %v4483
        %v4688 = vmul.f32 %v4676, %v4484
        %v4689 = vmul.f32 %v4677, %v4485
        %4690 = vadd.xlane.f32.xlu0 %v4686
        %v4691 = vpop.xlane.xlu0 %4690
        %4692 = vadd.xlane.f32.xlu0 %v4687
        %v4693 = vpop.xlane.xlu0 %4692
        %4694 = vadd.xlane.f32.xlu0 %v4688
        %v4695 = vpop.xlane.xlu0 %4694
        %4696 = vadd.xlane.f32.xlu0 %v4689
        %v4697 = vpop.xlane.xlu0 %4696
        %v4698 = vmul.f32 %v4679, %v4679
        %v4699 = vmul.f32 %v4681, %v4681
        %v4700 = vmul.f32 %v4683, %v4683
        %v4701 = vmul.f32 %v4685, %v4685
        %v4702 = vsub.f32 %v4691, %v4698
        %v4703 = vsub.f32 %v4693, %v4699
        %v4704 = vsub.f32 %v4695, %v4700
        %v4705 = vsub.f32 %v4697, %v4701
        %v4706 = vmax.f32 %v4702, 0.0
        %v4707 = vmax.f32 %v4703, 0.0
        %v4708 = vmax.f32 %v4704, 0.0
        %v4709 = vmax.f32 %v4705, 0.0
        %v4710 = vadd.f32 %v4706, 1e-07
        %v4711 = vadd.f32 %v4707, 1e-07
        %v4712 = vadd.f32 %v4708, 1e-07
        %v4713 = vadd.f32 %v4709, 1e-07
        %v4714 = vrsqrt.pop %v4710
        %v4715 = vmul.f32 %v4710, %v4714
        %vm4716 = vcmp.eq.f32.partialorder %v4710, inf
        %v4717 = vsel %vm4716, %v4710, %v4715
        %vm4718 = vcmp.eq.f32.partialorder %v4710, 0.0
        %v4719 = vand.u32 %v4710, 2147483648
        %v4720 = vsel %vm4718, %v4719, %v4717
        %v4721 = vrsqrt.pop %v4711
        %v4722 = vmul.f32 %v4711, %v4721
        %vm4723 = vcmp.eq.f32.partialorder %v4711, inf
        %v4724 = vsel %vm4723, %v4711, %v4722
        %vm4725 = vcmp.eq.f32.partialorder %v4711, 0.0
        %v4726 = vand.u32 %v4711, 2147483648
        %v4727 = vsel %vm4725, %v4726, %v4724
        %v4728 = vrsqrt.pop %v4712
        %v4729 = vmul.f32 %v4712, %v4728
        %vm4730 = vcmp.eq.f32.partialorder %v4712, inf
        %v4731 = vsel %vm4730, %v4712, %v4729
        %vm4732 = vcmp.eq.f32.partialorder %v4712, 0.0
        %v4733 = vand.u32 %v4712, 2147483648
        %v4734 = vsel %vm4732, %v4733, %v4731
        %v4735 = vrsqrt.pop %v4713
        %v4736 = vmul.f32 %v4713, %v4735
        %vm4737 = vcmp.eq.f32.partialorder %v4713, inf
        %v4738 = vsel %vm4737, %v4713, %v4736
        %vm4739 = vcmp.eq.f32.partialorder %v4713, 0.0
        %v4740 = vand.u32 %v4713, 2147483648
        %v4741 = vsel %vm4739, %v4740, %v4738
        %v4742 = vld [vmem:[%s93] sm:$0xff]
        %v4743 = vld [vmem:[%s93 + $0x8] sm:$0xff]
        %v4744 = vld [vmem:[%s93 + $0x10] sm:$0xff]
        %v4745 = vld [vmem:[%s93 + $0x18] sm:$0xff]
        %v4746 = vld [vmem:[%s95] sm:$0xff]
        %v4747 = vld [vmem:[%s95 + $0x8] sm:$0xff]
        %v4748 = vld [vmem:[%s95 + $0x10] sm:$0xff]
        %v4749 = vld [vmem:[%s95 + $0x18] sm:$0xff]
        %v4750 = vld [vmem:[%s97] sm:$0xff]
        %v4751 = vld [vmem:[%s97 + $0x8] sm:$0xff]
        %v4752 = vld [vmem:[%s97 + $0x10] sm:$0xff]
        %v4753 = vld [vmem:[%s97 + $0x18] sm:$0xff]
        %v4754 = vld [vmem:[%s99] sm:$0xff]
        %v4755 = vld [vmem:[%s99 + $0x8] sm:$0xff]
        %v4756 = vld [vmem:[%s99 + $0x10] sm:$0xff]
        %v4757 = vld [vmem:[%s99 + $0x18] sm:$0xff]
        %v4758 = vld [vmem:[%s101] sm:$0xf]
        %v4759 = vld [vmem:[%s101 + $0x4] sm:$0xf]
        %v4760 = vld [vmem:[%s103] sm:$0xf]
        %v4761 = vld [vmem:[%s103 + $0x4] sm:$0xf]
        %v4762 = vld [vmem:[%s105] sm:$0x1]
        %v4763 = vld [vmem:[%s107] sm:$0x1]
        %v4764 = vld [vmem:[%s109] sm:$0x1]
        %v4765 = vmul.f32 %v4679, %v4742
        %v4766 = vmul.f32 %v4681, %v4743
        %v4767 = vmul.f32 %v4683, %v4744
        %v4768 = vmul.f32 %v4685, %v4745
        %v4769 = vadd.f32 %v4765, %v4746
        %v4770 = vadd.f32 %v4766, %v4747
        %v4771 = vadd.f32 %v4767, %v4748
        %v4772 = vadd.f32 %v4768, %v4749
        %v4773 = vpack.c.bf16 %v4770, %v4769
        %v4774 = vpack.c.bf16 %v4772, %v4771
        %v4775 = vmul.f32 %v4720, %v4750
        %v4776 = vmul.f32 %v4727, %v4751
        %v4777 = vmul.f32 %v4734, %v4752
        %v4778 = vmul.f32 %v4741, %v4753
        %v4779 = vadd.f32 %v4775, %v4754
        %v4780 = vadd.f32 %v4776, %v4755
        %v4781 = vadd.f32 %v4777, %v4756
        %v4782 = vadd.f32 %v4778, %v4757
        %v4783 = vpack.c.bf16 %v4780, %v4779
        %v4784 = vpack.c.bf16 %v4782, %v4781
        %4785 = vxpose.xlu0.c.b16.start [1/8] %v4783, 128
        %4786 = vxpose.xlu0.c.b16.cont [2/8] %v4784, 128
        %4787 = vxpose.xlu0.c.b16.cont [3/8] 0, 128
        %4788 = vxpose.xlu0.c.b16.cont [4/8] 0, 128
        %4789 = vxpose.xlu0.c.b16.cont [5/8] 0, 128
        %4790 = vxpose.xlu0.c.b16.cont [6/8] 0, 128
        %4791 = vxpose.xlu0.c.b16.cont [7/8] 0, 128
        %4792 = vxpose.xlu0.c.b16.end [8/8] 0, 128
        %v4793 = vpop.trf.xlu0
        %v4794 = vpop.trf.xlu0
        %v4795 = vpop.trf.xlu0
        %v4796 = vpop.trf.xlu0
        %v4797 = vpop.trf.xlu0
        %v4798 = vpop.trf.xlu0
        %v4799 = vpop.trf.xlu0
        %v4800 = vpop.trf.xlu0
        %v4803 = vunpack.c.l.b16 %v4760
        %v4804 = vunpack.c.l.b16 %v4761
        %v4805 = vpack.c.b16 %v4804, %v4803
        %v4807 = vsel %vm2629, %v4793, 0
        %v4810 = vsel %vm2629, %v4805, 0
        %4812 = vmatprep.subr.bf16.mxu0 0
        %4813 = vmatpush1.bf16.xpose.msra.mxu0 %v4810
        %4814 = vmatprep.subr.bf16.mxu0 0
        %4815 = vmatpush1.bf16.xpose.msra.mxu0 0
        %4816 = vmatprep.subr.bf16.mxu0 0
        %4817 = vmatpush1.bf16.xpose.msra.mxu0 0
        %4818 = vmatprep.subr.bf16.mxu0 0
        %4819 = vmatpush1.bf16.xpose.msra.mxu0 0
        %4820 = vmatprep.subr.bf16.mxu0 0
        %4821 = vmatpush1.bf16.xpose.msra.mxu0 0
        %4822 = vmatprep.subr.bf16.mxu0 0
        %4823 = vmatpush1.bf16.xpose.msra.mxu0 0
        %4824 = vmatprep.subr.bf16.mxu0 0
        %4825 = vmatpush1.bf16.xpose.msra.mxu0 0
        %4826 = vmatprep.subr.bf16.mxu0 0
        %4827 = vmatpush1.bf16.xpose.msra.mxu0 0
        %4828 = vmatprep.subr.bf16.mxu0 0
        %4829 = vmatpush1.bf16.xpose.msra.mxu0 0
        %4830 = vmatprep.subr.bf16.mxu0 0
        %4831 = vmatpush1.bf16.xpose.msra.mxu0 0
        %4832 = vmatprep.subr.bf16.mxu0 0
        %4833 = vmatpush1.bf16.xpose.msra.mxu0 0
        %4834 = vmatprep.subr.bf16.mxu0 0
        %4835 = vmatpush1.bf16.xpose.msra.mxu0 0
        %4836 = vmatprep.subr.bf16.mxu0 0
        %4837 = vmatpush1.bf16.xpose.msra.mxu0 0
        %4838 = vmatprep.subr.bf16.mxu0 0
        %4839 = vmatpush1.bf16.xpose.msra.mxu0 0
        %4840 = vmatprep.subr.bf16.mxu0 0
        %4841 = vmatpush1.bf16.xpose.msra.mxu0 0
        %4842 = vmatprep.subr.bf16.mxu0 0
        %4843 = vmatpush1.bf16.xpose.msra.mxu0 0
        %4844 = vmatprep.mubr.bf16.mxu0 0
        %4845 = vmatmul.mubr.bf16.gmra.mrb[0].mxu0 %v4807
        %v4846 = vpop.f32.mrb[0].mxu0
        %v4847 = vadd.f32 0.0, %v4846
        %v4848 = vpop.f32.mrb[0].mxu0
        %v4849 = vpop.f32.mrb[0].mxu0
        %v4850 = vpop.f32.mrb[0].mxu0
        %4851 = vdwg.mxu0
        %4852 = vxpose.xlu0.c.b16.start [1/8] %v4773, 128
        %4853 = vxpose.xlu0.c.b16.cont [2/8] %v4774, 128
        %4854 = vxpose.xlu0.c.b16.cont [3/8] 0, 128
        %4855 = vxpose.xlu0.c.b16.cont [4/8] 0, 128
        %4856 = vxpose.xlu0.c.b16.cont [5/8] 0, 128
        %4857 = vxpose.xlu0.c.b16.cont [6/8] 0, 128
        %4858 = vxpose.xlu0.c.b16.cont [7/8] 0, 128
        %4859 = vxpose.xlu0.c.b16.end [8/8] 0, 128
        %v4860 = vpop.trf.xlu0
        %v4861 = vpop.trf.xlu0
        %v4862 = vpop.trf.xlu0
        %v4863 = vpop.trf.xlu0
        %v4864 = vpop.trf.xlu0
        %v4865 = vpop.trf.xlu0
        %v4866 = vpop.trf.xlu0
        %v4867 = vpop.trf.xlu0
        %v4870 = vunpack.c.l.b16 %v4758
        %v4871 = vunpack.c.l.b16 %v4759
        %v4872 = vpack.c.b16 %v4871, %v4870
        %v4874 = vsel %vm2629, %v4860, 0
        %v4877 = vsel %vm2629, %v4872, 0
        %4879 = vmatprep.subr.bf16.mxu0 0
        %4880 = vmatpush1.bf16.xpose.msra.mxu0 %v4877
        %4881 = vmatprep.subr.bf16.mxu0 0
        %4882 = vmatpush1.bf16.xpose.msra.mxu0 0
        %4883 = vmatprep.subr.bf16.mxu0 0
        %4884 = vmatpush1.bf16.xpose.msra.mxu0 0
        %4885 = vmatprep.subr.bf16.mxu0 0
        %4886 = vmatpush1.bf16.xpose.msra.mxu0 0
        %4887 = vmatprep.subr.bf16.mxu0 0
        %4888 = vmatpush1.bf16.xpose.msra.mxu0 0
        %4889 = vmatprep.subr.bf16.mxu0 0
        %4890 = vmatpush1.bf16.xpose.msra.mxu0 0
        %4891 = vmatprep.subr.bf16.mxu0 0
        %4892 = vmatpush1.bf16.xpose.msra.mxu0 0
        %4893 = vmatprep.subr.bf16.mxu0 0
        %4894 = vmatpush1.bf16.xpose.msra.mxu0 0
        %4895 = vmatprep.subr.bf16.mxu0 0
        %4896 = vmatpush1.bf16.xpose.msra.mxu0 0
        %4897 = vmatprep.subr.bf16.mxu0 0
        %4898 = vmatpush1.bf16.xpose.msra.mxu0 0
        %4899 = vmatprep.subr.bf16.mxu0 0
        %4900 = vmatpush1.bf16.xpose.msra.mxu0 0
        %4901 = vmatprep.subr.bf16.mxu0 0
        %4902 = vmatpush1.bf16.xpose.msra.mxu0 0
        %4903 = vmatprep.subr.bf16.mxu0 0
        %4904 = vmatpush1.bf16.xpose.msra.mxu0 0
        %4905 = vmatprep.subr.bf16.mxu0 0
        %4906 = vmatpush1.bf16.xpose.msra.mxu0 0
        %4907 = vmatprep.subr.bf16.mxu0 0
        %4908 = vmatpush1.bf16.xpose.msra.mxu0 0
        %4909 = vmatprep.subr.bf16.mxu0 0
        %4910 = vmatpush1.bf16.xpose.msra.mxu0 0
        %4911 = vmatprep.mubr.bf16.mxu0 0
        %4912 = vmatmul.mubr.bf16.gmra.mrb[0].mxu0 %v4874
        %v4913 = vpop.f32.mrb[0].mxu0
        %v4914 = vadd.f32 %v4847, %v4913
        %v4915 = vpop.f32.mrb[0].mxu0
        %v4916 = vpop.f32.mrb[0].mxu0
        %v4917 = vpop.f32.mrb[0].mxu0
        %4918 = vdwg.mxu0
        %v4919 = vadd.f32 %v4914, %v4762
        %v4920 = vmul.f32 %v4919, %v4763
        %v4921 = vadd.f32 %v4920, %v4764
        %v4922 = vmul.f32 %v4921, %v4921
        %vm4923 = vcmask 122880
        %v4924 = vsel %vm4923, %v4922, 0.0
        %4925 = vadd.xlane.f32.xlu0 %v4924
        %v4926 = vpop.xlane.xlu0 %4925
        %v4927 = vrsqrt.pop %v4926
        %v4928 = vmul.f32 %v4926, %v4927
        %vm4929 = vcmp.eq.f32.partialorder %v4926, inf
        %v4930 = vsel %vm4929, %v4926, %v4928
        %vm4931 = vcmp.eq.f32.partialorder %v4926, 0.0
        %v4932 = vand.u32 %v4926, 2147483648
        %v4933 = vsel %vm4931, %v4932, %v4930
        %v4934 = vmax.f32 %v4933, 1e-12
        %v4935 = vrcp.pop %v4934
        %v4936 = vmul.f32 %v4921, %v4935
        %4937 = vst.msk [vmem:[%s2013] sm:$0x1] %vm4923, %v4936
        %v4938 = vld [vmem:[%s111] sm:$0xff]
        %v4939 = vld [vmem:[%s111 + $0x8] sm:$0xff]
        %v4940 = vld [vmem:[%s113] sm:$0xf]
        %v4941 = vld [vmem:[%s113 + $0x4] sm:$0xf]
        %v4942 = vld [vmem:[%s113 + $0x8] sm:$0xf]
        %v4943 = vld [vmem:[%s113 + $0xc] sm:$0xf]
        %v4944 = vld [vmem:[%s115] sm:$0xff]
        %v4945 = vld [vmem:[%s115 + $0x8] sm:$0xff]
        %v4946 = vld [vmem:[%s115 + $0x10] sm:$0xff]
        %v4947 = vld [vmem:[%s115 + $0x18] sm:$0xff]
        %v4948 = vld [vmem:[%s117] sm:$0xf]
        %v4949 = vld [vmem:[%s117 + $0x4] sm:$0xf]
        %v4950 = vld [vmem:[%s119] sm:$0xff]
        %v4951 = vld [vmem:[%s119 + $0x8] sm:$0xff]
        %v4952 = vld [vmem:[%s121] sm:$0xf]
        %v4953 = vld [vmem:[%s121 + $0x4] sm:$0xf]
        %v4954 = vld [vmem:[%s123] sm:$0xff]
        %v4955 = vld [vmem:[%s123 + $0x8] sm:$0xff]
        %4957 = vset.pattern.permute.xlu0 0
        %4958 = vperm.xlu0 %4957, %v4944
        %v4959 = vpop.permute.xlu0 %4958
        %4962 = vset.pattern.permute.xlu0 0
        %4963 = vperm.xlu0 %4962, %v4945
        %v4964 = vpop.permute.xlu0 %4963
        %4967 = vset.pattern.permute.xlu0 0
        %4968 = vperm.xlu0 %4967, %v4946
        %v4969 = vpop.permute.xlu0 %4968
        %4972 = vset.pattern.permute.xlu0 0
        %4973 = vperm.xlu0 %4972, %v4947
        %v4974 = vpop.permute.xlu0 %4973
        %v4980 = vunpack.c.l.b16 %v4940
        %v4981 = vunpack.c.l.b16 %v4941
        %v4982 = vunpack.c.l.b16 %v4942
        %v4983 = vunpack.c.l.b16 %v4943
        %v4984 = vpack.c.b16 %v4981, %v4980
        %v4985 = vpack.c.b16 %v4983, %v4982
        %v4987 = vsel %vm2629, %v4984, 0
        %v4990 = vsel %vm2629, %v4985, 0
        %4992 = vmatprep.subr.bf16.mxu0 0
        %4993 = vmatpush1.bf16.msra.mxu0 %v4486
        %4994 = vmatprep.subr.bf16.mxu0 0
        %4995 = vmatpush1.bf16.msra.mxu0 %v4487
        %4996 = vmatprep.subr.bf16.mxu0 0
        %4997 = vmatpush1.bf16.msra.mxu0 0
        %4998 = vmatprep.subr.bf16.mxu0 0
        %4999 = vmatpush1.bf16.msra.mxu0 0
        %5000 = vmatprep.subr.bf16.mxu0 0
        %5001 = vmatpush1.bf16.msra.mxu0 0
        %5002 = vmatprep.subr.bf16.mxu0 0
        %5003 = vmatpush1.bf16.msra.mxu0 0
        %5004 = vmatprep.subr.bf16.mxu0 0
        %5005 = vmatpush1.bf16.msra.mxu0 0
        %5006 = vmatprep.subr.bf16.mxu0 0
        %5007 = vmatpush1.bf16.msra.mxu0 0
        %5008 = vmatprep.subr.bf16.mxu0 0
        %5009 = vmatpush1.bf16.msra.mxu0 0
        %5010 = vmatprep.subr.bf16.mxu0 0
        %5011 = vmatpush1.bf16.msra.mxu0 0
        %5012 = vmatprep.subr.bf16.mxu0 0
        %5013 = vmatpush1.bf16.msra.mxu0 0
        %5014 = vmatprep.subr.bf16.mxu0 0
        %5015 = vmatpush1.bf16.msra.mxu0 0
        %5016 = vmatprep.subr.bf16.mxu0 0
        %5017 = vmatpush1.bf16.msra.mxu0 0
        %5018 = vmatprep.subr.bf16.mxu0 0
        %5019 = vmatpush1.bf16.msra.mxu0 0
        %5020 = vmatprep.subr.bf16.mxu0 0
        %5021 = vmatpush1.bf16.msra.mxu0 0
        %5022 = vmatprep.subr.bf16.mxu0 0
        %5023 = vmatpush1.bf16.msra.mxu0 0
        %5024 = vmatprep.mubr.bf16.mxu0 0
        %5025 = vmatmul.mubr.bf16.gmra.mrb[0].mxu0 %v4987
        %v5026 = vpop.f32.mrb[0].mxu0
        %v5027 = vadd.f32 %v4959, %v5026
        %v5028 = vpop.f32.mrb[0].mxu0
        %v5029 = vpop.f32.mrb[0].mxu0
        %v5030 = vadd.f32 %v4964, %v5029
        %v5031 = vpop.f32.mrb[0].mxu0
        %5032 = vmatprep.mubr.bf16.mxu0 0
        %5033 = vmatmul.mubr.bf16.gmra.mrb[0].mxu0 %v4990
        %v5034 = vpop.f32.mrb[0].mxu0
        %v5035 = vadd.f32 %v4969, %v5034
        %v5036 = vpop.f32.mrb[0].mxu0
        %v5037 = vpop.f32.mrb[0].mxu0
        %v5038 = vadd.f32 %v4974, %v5037
        %v5039 = vpop.f32.mrb[0].mxu0
        %5040 = vdwg.mxu0
        %v5041 = vpack.c.bf16 %v4939, %v4938
        %5043 = vset.pattern.permute.xlu0 0
        %5044 = vperm.xlu0 %5043, %v4950
        %v5045 = vpop.permute.xlu0 %5044
        %5048 = vset.pattern.permute.xlu0 0
        %5049 = vperm.xlu0 %5048, %v4951
        %v5050 = vpop.permute.xlu0 %5049
        %v5054 = vunpack.c.l.b16 %v4948
        %v5055 = vunpack.c.l.b16 %v4949
        %v5056 = vpack.c.b16 %v5055, %v5054
        %vm5057 = vcmask 130048
        %v5059 = vsel %vm5057, %v5056, 0
        %5061 = vmatprep.subr.bf16.mxu0 0
        %5062 = vmatpush1.bf16.msra.mxu0 %v5041
        %5063 = vmatprep.subr.bf16.mxu0 0
        %5064 = vmatpush1.bf16.msra.mxu0 0
        %5065 = vmatprep.subr.bf16.mxu0 0
        %5066 = vmatpush1.bf16.msra.mxu0 0
        %5067 = vmatprep.subr.bf16.mxu0 0
        %5068 = vmatpush1.bf16.msra.mxu0 0
        %5069 = vmatprep.subr.bf16.mxu0 0
        %5070 = vmatpush1.bf16.msra.mxu0 0
        %5071 = vmatprep.subr.bf16.mxu0 0
        %5072 = vmatpush1.bf16.msra.mxu0 0
        %5073 = vmatprep.subr.bf16.mxu0 0
        %5074 = vmatpush1.bf16.msra.mxu0 0
        %5075 = vmatprep.subr.bf16.mxu0 0
        %5076 = vmatpush1.bf16.msra.mxu0 0
        %5077 = vmatprep.subr.bf16.mxu0 0
        %5078 = vmatpush1.bf16.msra.mxu0 0
        %5079 = vmatprep.subr.bf16.mxu0 0
        %5080 = vmatpush1.bf16.msra.mxu0 0
        %5081 = vmatprep.subr.bf16.mxu0 0
        %5082 = vmatpush1.bf16.msra.mxu0 0
        %5083 = vmatprep.subr.bf16.mxu0 0
        %5084 = vmatpush1.bf16.msra.mxu0 0
        %5085 = vmatprep.subr.bf16.mxu0 0
        %5086 = vmatpush1.bf16.msra.mxu0 0
        %5087 = vmatprep.subr.bf16.mxu0 0
        %5088 = vmatpush1.bf16.msra.mxu0 0
        %5089 = vmatprep.subr.bf16.mxu0 0
        %5090 = vmatpush1.bf16.msra.mxu0 0
        %5091 = vmatprep.subr.bf16.mxu0 0
        %5092 = vmatpush1.bf16.msra.mxu0 0
        %5093 = vmatprep.mubr.bf16.mxu0 0
        %5094 = vmatmul.mubr.bf16.gmra.mrb[0].mxu0 %v5059
        %v5095 = vpop.f32.mrb[0].mxu0
        %v5096 = vadd.f32 %v5045, %v5095
        %v5097 = vpop.f32.mrb[0].mxu0
        %v5098 = vpop.f32.mrb[0].mxu0
        %v5099 = vadd.f32 %v5050, %v5098
        %v5100 = vpop.f32.mrb[0].mxu0
        %5101 = vdwg.mxu0
        %v5102 = vpack.c.bf16 %v5027, %v5027
        %v5103 = vpack.c.bf16 %v5030, %v5030
        %v5104 = vpack.c.bf16 %v5035, %v5035
        %v5105 = vpack.c.bf16 %v5038, %v5038
        %v5106 = vpack.c.bf16 %v5096, %v5096
        %v5107 = vpack.c.bf16 %v5099, %v5099
        %5108 = vxpose.xlu0.c.b16.start [1/8] %v5102, 128
        %5109 = vxpose.xlu0.c.b16.cont [2/8] 0, 128
        %5110 = vxpose.xlu0.c.b16.cont [3/8] 0, 128
        %5111 = vxpose.xlu0.c.b16.cont [4/8] 0, 128
        %5112 = vxpose.xlu0.c.b16.cont [5/8] 0, 128
        %5113 = vxpose.xlu0.c.b16.cont [6/8] 0, 128
        %5114 = vxpose.xlu0.c.b16.cont [7/8] 0, 128
        %5115 = vxpose.xlu0.c.b16.end [8/8] 0, 128
        %v5116 = vpop.trf.xlu0
        %v5117 = vpop.trf.xlu0
        %v5118 = vpop.trf.xlu0
        %v5119 = vpop.trf.xlu0
        %v5120 = vpop.trf.xlu0
        %v5121 = vpop.trf.xlu0
        %v5122 = vpop.trf.xlu0
        %v5123 = vpop.trf.xlu0
        %v5125 = vsel %vm2109, %v5116, 0
        %v5128 = vsel %vm2109, %v5117, 0
        %v5131 = vsel %vm2109, %v5118, 0
        %v5134 = vsel %vm2109, %v5119, 0
        %v5137 = vsel %vm2109, %v5120, 0
        %v5140 = vsel %vm2109, %v5121, 0
        %v5143 = vsel %vm2109, %v5122, 0
        %v5146 = vsel %vm2109, %v5123, 0
        %v5149 = vsel %vm2116, %v5106, 0
        %5151 = vmatprep.subr.bf16.mxu0 0
        %5152 = vmatpush1.bf16.msra.mxu0 %v5149
        %5153 = vmatprep.subr.bf16.mxu0 0
        %5154 = vmatpush1.bf16.msra.mxu0 0
        %5155 = vmatprep.subr.bf16.mxu0 0
        %5156 = vmatpush1.bf16.msra.mxu0 0
        %5157 = vmatprep.subr.bf16.mxu0 0
        %5158 = vmatpush1.bf16.msra.mxu0 0
        %5159 = vmatprep.subr.bf16.mxu0 0
        %5160 = vmatpush1.bf16.msra.mxu0 0
        %5161 = vmatprep.subr.bf16.mxu0 0
        %5162 = vmatpush1.bf16.msra.mxu0 0
        %5163 = vmatprep.subr.bf16.mxu0 0
        %5164 = vmatpush1.bf16.msra.mxu0 0
        %5165 = vmatprep.subr.bf16.mxu0 0
        %5166 = vmatpush1.bf16.msra.mxu0 0
        %5167 = vmatprep.subr.bf16.mxu0 0
        %5168 = vmatpush1.bf16.msra.mxu0 0
        %5169 = vmatprep.subr.bf16.mxu0 0
        %5170 = vmatpush1.bf16.msra.mxu0 0
        %5171 = vmatprep.subr.bf16.mxu0 0
        %5172 = vmatpush1.bf16.msra.mxu0 0
        %5173 = vmatprep.subr.bf16.mxu0 0
        %5174 = vmatpush1.bf16.msra.mxu0 0
        %5175 = vmatprep.subr.bf16.mxu0 0
        %5176 = vmatpush1.bf16.msra.mxu0 0
        %5177 = vmatprep.subr.bf16.mxu0 0
        %5178 = vmatpush1.bf16.msra.mxu0 0
        %5179 = vmatprep.subr.bf16.mxu0 0
        %5180 = vmatpush1.bf16.msra.mxu0 0
        %5181 = vmatprep.subr.bf16.mxu0 0
        %5182 = vmatpush1.bf16.msra.mxu0 0
        %5183 = vmatprep.mubr.bf16.mxu0 0
        %5184 = vmatmul.mubr.bf16.gmra.mrb[0].mxu0 %v5125
        %v5185 = vpop.f32.mrb[0].mxu0
        %v5186 = vadd.f32 0.0, %v5185
        %v5187 = vpop.f32.mrb[0].mxu0
        %v5188 = vpop.f32.mrb[0].mxu0
        %v5189 = vadd.f32 0.0, %v5188
        %v5190 = vpop.f32.mrb[0].mxu0
        %5191 = vmatprep.mubr.bf16.mxu0 0
        %5192 = vmatmul.mubr.bf16.gmra.mrb[0].mxu0 %v5128
        %v5193 = vpop.f32.mrb[0].mxu0
        %v5194 = vadd.f32 0.0, %v5193
        %v5195 = vpop.f32.mrb[0].mxu0
        %v5196 = vpop.f32.mrb[0].mxu0
        %v5197 = vadd.f32 0.0, %v5196
        %v5198 = vpop.f32.mrb[0].mxu0
        %5199 = vmatprep.mubr.bf16.mxu0 0
        %5200 = vmatmul.mubr.bf16.gmra.mrb[0].mxu0 %v5131
        %v5201 = vpop.f32.mrb[0].mxu0
        %v5202 = vadd.f32 0.0, %v5201
        %v5203 = vpop.f32.mrb[0].mxu0
        %v5204 = vpop.f32.mrb[0].mxu0
        %v5205 = vadd.f32 0.0, %v5204
        %v5206 = vpop.f32.mrb[0].mxu0
        %5207 = vmatprep.mubr.bf16.mxu0 0
        %5208 = vmatmul.mubr.bf16.gmra.mrb[0].mxu0 %v5134
        %v5209 = vpop.f32.mrb[0].mxu0
        %v5210 = vadd.f32 0.0, %v5209
        %v5211 = vpop.f32.mrb[0].mxu0
        %v5212 = vpop.f32.mrb[0].mxu0
        %v5213 = vadd.f32 0.0, %v5212
        %v5214 = vpop.f32.mrb[0].mxu0
        %5215 = vmatprep.mubr.bf16.mxu0 0
        %5216 = vmatmul.mubr.bf16.gmra.mrb[0].mxu0 %v5137
        %v5217 = vpop.f32.mrb[0].mxu0
        %v5218 = vadd.f32 0.0, %v5217
        %v5219 = vpop.f32.mrb[0].mxu0
        %v5220 = vpop.f32.mrb[0].mxu0
        %v5221 = vadd.f32 0.0, %v5220
        %v5222 = vpop.f32.mrb[0].mxu0
        %5223 = vmatprep.mubr.bf16.mxu0 0
        %5224 = vmatmul.mubr.bf16.gmra.mrb[0].mxu0 %v5140
        %v5225 = vpop.f32.mrb[0].mxu0
        %v5226 = vadd.f32 0.0, %v5225
        %v5227 = vpop.f32.mrb[0].mxu0
        %v5228 = vpop.f32.mrb[0].mxu0
        %v5229 = vadd.f32 0.0, %v5228
        %v5230 = vpop.f32.mrb[0].mxu0
        %5231 = vmatprep.mubr.bf16.mxu0 0
        %5232 = vmatmul.mubr.bf16.gmra.mrb[0].mxu0 %v5143
        %v5233 = vpop.f32.mrb[0].mxu0
        %v5234 = vadd.f32 0.0, %v5233
        %v5235 = vpop.f32.mrb[0].mxu0
        %v5236 = vpop.f32.mrb[0].mxu0
        %v5237 = vadd.f32 0.0, %v5236
        %v5238 = vpop.f32.mrb[0].mxu0
        %5239 = vmatprep.mubr.bf16.mxu0 0
        %5240 = vmatmul.mubr.bf16.gmra.mrb[0].mxu0 %v5146
        %v5241 = vpop.f32.mrb[0].mxu0
        %v5242 = vadd.f32 0.0, %v5241
        %v5243 = vpop.f32.mrb[0].mxu0
        %v5244 = vpop.f32.mrb[0].mxu0
        %v5245 = vadd.f32 0.0, %v5244
        %v5246 = vpop.f32.mrb[0].mxu0
        %5247 = vdwg.mxu0
        %5248 = vxpose.xlu0.c.b16.start [1/8] %v5103, 128
        %5249 = vxpose.xlu0.c.b16.cont [2/8] 0, 128
        %5250 = vxpose.xlu0.c.b16.cont [3/8] 0, 128
        %5251 = vxpose.xlu0.c.b16.cont [4/8] 0, 128
        %5252 = vxpose.xlu0.c.b16.cont [5/8] 0, 128
        %5253 = vxpose.xlu0.c.b16.cont [6/8] 0, 128
        %5254 = vxpose.xlu0.c.b16.cont [7/8] 0, 128
        %5255 = vxpose.xlu0.c.b16.end [8/8] 0, 128
        %v5256 = vpop.trf.xlu0
        %v5257 = vpop.trf.xlu0
        %v5258 = vpop.trf.xlu0
        %v5259 = vpop.trf.xlu0
        %v5260 = vpop.trf.xlu0
        %v5261 = vpop.trf.xlu0
        %v5262 = vpop.trf.xlu0
        %v5263 = vpop.trf.xlu0
        %v5265 = vsel %vm2109, %v5256, 0
        %v5268 = vsel %vm2109, %v5257, 0
        %v5271 = vsel %vm2109, %v5258, 0
        %v5274 = vsel %vm2109, %v5259, 0
        %v5277 = vsel %vm2109, %v5260, 0
        %v5280 = vsel %vm2109, %v5261, 0
        %v5283 = vsel %vm2109, %v5262, 0
        %v5286 = vsel %vm2109, %v5263, 0
        %v5289 = vsel %vm2116, %v5107, 0
        %5291 = vmatprep.subr.bf16.mxu0 0
        %5292 = vmatpush1.bf16.msra.mxu0 %v5289
        %5293 = vmatprep.subr.bf16.mxu0 0
        %5294 = vmatpush1.bf16.msra.mxu0 0
        %5295 = vmatprep.subr.bf16.mxu0 0
        %5296 = vmatpush1.bf16.msra.mxu0 0
        %5297 = vmatprep.subr.bf16.mxu0 0
        %5298 = vmatpush1.bf16.msra.mxu0 0
        %5299 = vmatprep.subr.bf16.mxu0 0
        %5300 = vmatpush1.bf16.msra.mxu0 0
        %5301 = vmatprep.subr.bf16.mxu0 0
        %5302 = vmatpush1.bf16.msra.mxu0 0
        %5303 = vmatprep.subr.bf16.mxu0 0
        %5304 = vmatpush1.bf16.msra.mxu0 0
        %5305 = vmatprep.subr.bf16.mxu0 0
        %5306 = vmatpush1.bf16.msra.mxu0 0
        %5307 = vmatprep.subr.bf16.mxu0 0
        %5308 = vmatpush1.bf16.msra.mxu0 0
        %5309 = vmatprep.subr.bf16.mxu0 0
        %5310 = vmatpush1.bf16.msra.mxu0 0
        %5311 = vmatprep.subr.bf16.mxu0 0
        %5312 = vmatpush1.bf16.msra.mxu0 0
        %5313 = vmatprep.subr.bf16.mxu0 0
        %5314 = vmatpush1.bf16.msra.mxu0 0
        %5315 = vmatprep.subr.bf16.mxu0 0
        %5316 = vmatpush1.bf16.msra.mxu0 0
        %5317 = vmatprep.subr.bf16.mxu0 0
        %5318 = vmatpush1.bf16.msra.mxu0 0
        %5319 = vmatprep.subr.bf16.mxu0 0
        %5320 = vmatpush1.bf16.msra.mxu0 0
        %5321 = vmatprep.subr.bf16.mxu0 0
        %5322 = vmatpush1.bf16.msra.mxu0 0
        %5323 = vmatprep.mubr.bf16.mxu0 0
        %5324 = vmatmul.mubr.bf16.gmra.mrb[0].mxu0 %v5265
        %v5325 = vpop.f32.mrb[0].mxu0
        %v5326 = vadd.f32 0.0, %v5325
        %v5327 = vpop.f32.mrb[0].mxu0
        %v5328 = vpop.f32.mrb[0].mxu0
        %v5329 = vadd.f32 0.0, %v5328
        %v5330 = vpop.f32.mrb[0].mxu0
        %5331 = vmatprep.mubr.bf16.mxu0 0
        %5332 = vmatmul.mubr.bf16.gmra.mrb[0].mxu0 %v5268
        %v5333 = vpop.f32.mrb[0].mxu0
        %v5334 = vadd.f32 0.0, %v5333
        %v5335 = vpop.f32.mrb[0].mxu0
        %v5336 = vpop.f32.mrb[0].mxu0
        %v5337 = vadd.f32 0.0, %v5336
        %v5338 = vpop.f32.mrb[0].mxu0
        %5339 = vmatprep.mubr.bf16.mxu0 0
        %5340 = vmatmul.mubr.bf16.gmra.mrb[0].mxu0 %v5271
        %v5341 = vpop.f32.mrb[0].mxu0
        %v5342 = vadd.f32 0.0, %v5341
        %v5343 = vpop.f32.mrb[0].mxu0
        %v5344 = vpop.f32.mrb[0].mxu0
        %v5345 = vadd.f32 0.0, %v5344
        %v5346 = vpop.f32.mrb[0].mxu0
        %5347 = vmatprep.mubr.bf16.mxu0 0
        %5348 = vmatmul.mubr.bf16.gmra.mrb[0].mxu0 %v5274
        %v5349 = vpop.f32.mrb[0].mxu0
        %v5350 = vadd.f32 0.0, %v5349
        %v5351 = vpop.f32.mrb[0].mxu0
        %v5352 = vpop.f32.mrb[0].mxu0
        %v5353 = vadd.f32 0.0, %v5352
        %v5354 = vpop.f32.mrb[0].mxu0
        %5355 = vmatprep.mubr.bf16.mxu0 0
        %5356 = vmatmul.mubr.bf16.gmra.mrb[0].mxu0 %v5277
        %v5357 = vpop.f32.mrb[0].mxu0
        %v5358 = vadd.f32 0.0, %v5357
        %v5359 = vpop.f32.mrb[0].mxu0
        %v5360 = vpop.f32.mrb[0].mxu0
        %v5361 = vadd.f32 0.0, %v5360
        %v5362 = vpop.f32.mrb[0].mxu0
        %5363 = vmatprep.mubr.bf16.mxu0 0
        %5364 = vmatmul.mubr.bf16.gmra.mrb[0].mxu0 %v5280
        %v5365 = vpop.f32.mrb[0].mxu0
        %v5366 = vadd.f32 0.0, %v5365
        %v5367 = vpop.f32.mrb[0].mxu0
        %v5368 = vpop.f32.mrb[0].mxu0
        %v5369 = vadd.f32 0.0, %v5368
        %v5370 = vpop.f32.mrb[0].mxu0
        %5371 = vmatprep.mubr.bf16.mxu0 0
        %5372 = vmatmul.mubr.bf16.gmra.mrb[0].mxu0 %v5283
        %v5373 = vpop.f32.mrb[0].mxu0
        %v5374 = vadd.f32 0.0, %v5373
        %v5375 = vpop.f32.mrb[0].mxu0
        %v5376 = vpop.f32.mrb[0].mxu0
        %v5377 = vadd.f32 0.0, %v5376
        %v5378 = vpop.f32.mrb[0].mxu0
        %5379 = vmatprep.mubr.bf16.mxu0 0
        %5380 = vmatmul.mubr.bf16.gmra.mrb[0].mxu0 %v5286
        %v5381 = vpop.f32.mrb[0].mxu0
        %v5382 = vadd.f32 0.0, %v5381
        %v5383 = vpop.f32.mrb[0].mxu0
        %v5384 = vpop.f32.mrb[0].mxu0
        %v5385 = vadd.f32 0.0, %v5384
        %v5386 = vpop.f32.mrb[0].mxu0
        %5387 = vdwg.mxu0
        %v5388 = vmul.f32 %v5186, 0.35355338
        %v5389 = vmul.f32 %v5189, 0.35355338
        %v5390 = vmul.f32 %v5194, 0.35355338
        %v5391 = vmul.f32 %v5197, 0.35355338
        %v5392 = vmul.f32 %v5202, 0.35355338
        %v5393 = vmul.f32 %v5205, 0.35355338
        %v5394 = vmul.f32 %v5210, 0.35355338
        %v5395 = vmul.f32 %v5213, 0.35355338
        %v5396 = vmul.f32 %v5218, 0.35355338
        %v5397 = vmul.f32 %v5221, 0.35355338
        %v5398 = vmul.f32 %v5226, 0.35355338
        %v5399 = vmul.f32 %v5229, 0.35355338
        %v5400 = vmul.f32 %v5234, 0.35355338
        %v5401 = vmul.f32 %v5237, 0.35355338
        %v5402 = vmul.f32 %v5242, 0.35355338
        %v5403 = vmul.f32 %v5245, 0.35355338
        %v5404 = vmul.f32 %v5326, 0.35355338
        %v5405 = vmul.f32 %v5329, 0.35355338
        %v5406 = vmul.f32 %v5334, 0.35355338
        %v5407 = vmul.f32 %v5337, 0.35355338
        %v5408 = vmul.f32 %v5342, 0.35355338
        %v5409 = vmul.f32 %v5345, 0.35355338
        %v5410 = vmul.f32 %v5350, 0.35355338
        %v5411 = vmul.f32 %v5353, 0.35355338
        %v5412 = vmul.f32 %v5358, 0.35355338
        %v5413 = vmul.f32 %v5361, 0.35355338
        %v5414 = vmul.f32 %v5366, 0.35355338
        %v5415 = vmul.f32 %v5369, 0.35355338
        %v5416 = vmul.f32 %v5374, 0.35355338
        %v5417 = vmul.f32 %v5377, 0.35355338
        %v5418 = vmul.f32 %v5382, 0.35355338
        %v5419 = vmul.f32 %v5385, 0.35355338
        %v5420 = vsel %vm4578, %v5388, -inf
        %v5421 = vsel %vm4578, %v5389, -inf
        %v5422 = vsel %vm4578, %v5390, -inf
        %v5423 = vmax.f32 %v5420, %v5422
        %v5424 = vsel %vm4578, %v5391, -inf
        %v5425 = vmax.f32 %v5421, %v5424
        %v5426 = vsel %vm4578, %v5392, -inf
        %v5427 = vmax.f32 %v5423, %v5426
        %v5428 = vsel %vm4578, %v5393, -inf
        %v5429 = vmax.f32 %v5425, %v5428
        %v5430 = vsel %vm4578, %v5394, -inf
        %v5431 = vmax.f32 %v5427, %v5430
        %v5432 = vsel %vm4578, %v5395, -inf
        %v5433 = vmax.f32 %v5429, %v5432
        %v5434 = vsel %vm4578, %v5396, -inf
        %v5435 = vmax.f32 %v5431, %v5434
        %v5436 = vsel %vm4578, %v5397, -inf
        %v5437 = vmax.f32 %v5433, %v5436
        %v5438 = vsel %vm4578, %v5398, -inf
        %v5439 = vmax.f32 %v5435, %v5438
        %v5440 = vsel %vm4578, %v5399, -inf
        %v5441 = vmax.f32 %v5437, %v5440
        %v5442 = vsel %vm4578, %v5400, -inf
        %v5443 = vmax.f32 %v5439, %v5442
        %v5444 = vsel %vm4578, %v5401, -inf
        %v5445 = vmax.f32 %v5441, %v5444
        %v5446 = vsel %vm4578, %v5402, -inf
        %v5447 = vmax.f32 %v5443, %v5446
        %v5448 = vsel %vm4578, %v5403, -inf
        %v5449 = vmax.f32 %v5445, %v5448
        %v5450 = vmax.f32 %v5447, %v5449
        %v5451 = vrot.slane %v5450, 4
        %v5452 = vmax.f32 %v5450, %v5451
        %v5453 = vrot.slane %v5452, 2
        %v5454 = vmax.f32 %v5452, %v5453
        %v5455 = vrot.slane %v5454, 1
        %v5456 = vmax.f32 %v5454, %v5455
        %v5457 = vsel %vm4578, %v5404, -inf
        %v5458 = vsel %vm4578, %v5405, -inf
        %v5459 = vsel %vm4578, %v5406, -inf
        %v5460 = vmax.f32 %v5457, %v5459
        %v5461 = vsel %vm4578, %v5407, -inf
        %v5462 = vmax.f32 %v5458, %v5461
        %v5463 = vsel %vm4578, %v5408, -inf
        %v5464 = vmax.f32 %v5460, %v5463
        %v5465 = vsel %vm4578, %v5409, -inf
        %v5466 = vmax.f32 %v5462, %v5465
        %v5467 = vsel %vm4578, %v5410, -inf
        %v5468 = vmax.f32 %v5464, %v5467
        %v5469 = vsel %vm4578, %v5411, -inf
        %v5470 = vmax.f32 %v5466, %v5469
        %v5471 = vsel %vm4578, %v5412, -inf
        %v5472 = vmax.f32 %v5468, %v5471
        %v5473 = vsel %vm4578, %v5413, -inf
        %v5474 = vmax.f32 %v5470, %v5473
        %v5475 = vsel %vm4578, %v5414, -inf
        %v5476 = vmax.f32 %v5472, %v5475
        %v5477 = vsel %vm4578, %v5415, -inf
        %v5478 = vmax.f32 %v5474, %v5477
        %v5479 = vsel %vm4578, %v5416, -inf
        %v5480 = vmax.f32 %v5476, %v5479
        %v5481 = vsel %vm4578, %v5417, -inf
        %v5482 = vmax.f32 %v5478, %v5481
        %v5483 = vsel %vm4578, %v5418, -inf
        %v5484 = vmax.f32 %v5480, %v5483
        %v5485 = vsel %vm4578, %v5419, -inf
        %v5486 = vmax.f32 %v5482, %v5485
        %v5487 = vmax.f32 %v5484, %v5486
        %v5488 = vrot.slane %v5487, 4
        %v5489 = vmax.f32 %v5487, %v5488
        %v5490 = vrot.slane %v5489, 2
        %v5491 = vmax.f32 %v5489, %v5490
        %v5492 = vrot.slane %v5491, 1
        %v5493 = vmax.f32 %v5491, %v5492
        %v5494 = vsub.f32 %v5388, %v5456
        %v5495 = vsub.f32 %v5389, %v5456
        %v5496 = vsub.f32 %v5390, %v5456
        %v5497 = vsub.f32 %v5391, %v5456
        %v5498 = vsub.f32 %v5392, %v5456
        %v5499 = vsub.f32 %v5393, %v5456
        %v5500 = vsub.f32 %v5394, %v5456
        %v5501 = vsub.f32 %v5395, %v5456
        %v5502 = vsub.f32 %v5396, %v5456
        %v5503 = vsub.f32 %v5397, %v5456
        %v5504 = vsub.f32 %v5398, %v5456
        %v5505 = vsub.f32 %v5399, %v5456
        %v5506 = vsub.f32 %v5400, %v5456
        %v5507 = vsub.f32 %v5401, %v5456
        %v5508 = vsub.f32 %v5402, %v5456
        %v5509 = vsub.f32 %v5403, %v5456
        %v5510 = vsub.f32 %v5404, %v5493
        %v5511 = vsub.f32 %v5405, %v5493
        %v5512 = vsub.f32 %v5406, %v5493
        %v5513 = vsub.f32 %v5407, %v5493
        %v5514 = vsub.f32 %v5408, %v5493
        %v5515 = vsub.f32 %v5409, %v5493
        %v5516 = vsub.f32 %v5410, %v5493
        %v5517 = vsub.f32 %v5411, %v5493
        %v5518 = vsub.f32 %v5412, %v5493
        %v5519 = vsub.f32 %v5413, %v5493
        %v5520 = vsub.f32 %v5414, %v5493
        %v5521 = vsub.f32 %v5415, %v5493
        %v5522 = vsub.f32 %v5416, %v5493
        %v5523 = vsub.f32 %v5417, %v5493
        %v5524 = vsub.f32 %v5418, %v5493
        %v5525 = vsub.f32 %v5419, %v5493
        %v5526 = vmul.f32 %v5494, 1.442695
        %v5527 = vpow.pop %v5526
        %v5528 = vmul.f32 %v5495, 1.442695
        %v5529 = vpow.pop %v5528
        %v5530 = vmul.f32 %v5496, 1.442695
        %v5531 = vpow.pop %v5530
        %v5532 = vmul.f32 %v5497, 1.442695
        %v5533 = vpow.pop %v5532
        %v5534 = vmul.f32 %v5498, 1.442695
        %v5535 = vpow.pop %v5534
        %v5536 = vmul.f32 %v5499, 1.442695
        %v5537 = vpow.pop %v5536
        %v5538 = vmul.f32 %v5500, 1.442695
        %v5539 = vpow.pop %v5538
        %v5540 = vmul.f32 %v5501, 1.442695
        %v5541 = vpow.pop %v5540
        %v5542 = vmul.f32 %v5502, 1.442695
        %v5543 = vpow.pop %v5542
        %v5544 = vmul.f32 %v5503, 1.442695
        %v5545 = vpow.pop %v5544
        %v5546 = vmul.f32 %v5504, 1.442695
        %v5547 = vpow.pop %v5546
        %v5548 = vmul.f32 %v5505, 1.442695
        %v5549 = vpow.pop %v5548
        %v5550 = vmul.f32 %v5506, 1.442695
        %v5551 = vpow.pop %v5550
        %v5552 = vmul.f32 %v5507, 1.442695
        %v5553 = vpow.pop %v5552
        %v5554 = vmul.f32 %v5508, 1.442695
        %v5555 = vpow.pop %v5554
        %v5556 = vmul.f32 %v5509, 1.442695
        %v5557 = vpow.pop %v5556
        %v5558 = vmul.f32 %v5510, 1.442695
        %v5559 = vpow.pop %v5558
        %v5560 = vmul.f32 %v5511, 1.442695
        %v5561 = vpow.pop %v5560
        %v5562 = vmul.f32 %v5512, 1.442695
        %v5563 = vpow.pop %v5562
        %v5564 = vmul.f32 %v5513, 1.442695
        %v5565 = vpow.pop %v5564
        %v5566 = vmul.f32 %v5514, 1.442695
        %v5567 = vpow.pop %v5566
        %v5568 = vmul.f32 %v5515, 1.442695
        %v5569 = vpow.pop %v5568
        %v5570 = vmul.f32 %v5516, 1.442695
        %v5571 = vpow.pop %v5570
        %v5572 = vmul.f32 %v5517, 1.442695
        %v5573 = vpow.pop %v5572
        %v5574 = vmul.f32 %v5518, 1.442695
        %v5575 = vpow.pop %v5574
        %v5576 = vmul.f32 %v5519, 1.442695
        %v5577 = vpow.pop %v5576
        %v5578 = vmul.f32 %v5520, 1.442695
        %v5579 = vpow.pop %v5578
        %v5580 = vmul.f32 %v5521, 1.442695
        %v5581 = vpow.pop %v5580
        %v5582 = vmul.f32 %v5522, 1.442695
        %v5583 = vpow.pop %v5582
        %v5584 = vmul.f32 %v5523, 1.442695
        %v5585 = vpow.pop %v5584
        %v5586 = vmul.f32 %v5524, 1.442695
        %v5587 = vpow.pop %v5586
        %v5588 = vmul.f32 %v5525, 1.442695
        %v5589 = vpow.pop %v5588
        %v5590 = vsel %vm4578, %v5527, 0.0
        %v5591 = vsel %vm4578, %v5529, 0.0
        %v5592 = vadd.f32 %v5590, %v5591
        %v5593 = vsel %vm4578, %v5531, 0.0
        %v5594 = vadd.f32 %v5592, %v5593
        %v5595 = vsel %vm4578, %v5533, 0.0
        %v5596 = vadd.f32 %v5594, %v5595
        %v5597 = vsel %vm4578, %v5535, 0.0
        %v5598 = vadd.f32 %v5596, %v5597
        %v5599 = vsel %vm4578, %v5537, 0.0
        %v5600 = vadd.f32 %v5598, %v5599
        %v5601 = vsel %vm4578, %v5539, 0.0
        %v5602 = vadd.f32 %v5600, %v5601
        %v5603 = vsel %vm4578, %v5541, 0.0
        %v5604 = vadd.f32 %v5602, %v5603
        %v5605 = vsel %vm4578, %v5543, 0.0
        %v5606 = vadd.f32 %v5604, %v5605
        %v5607 = vsel %vm4578, %v5545, 0.0
        %v5608 = vadd.f32 %v5606, %v5607
        %v5609 = vsel %vm4578, %v5547, 0.0
        %v5610 = vadd.f32 %v5608, %v5609
        %v5611 = vsel %vm4578, %v5549, 0.0
        %v5612 = vadd.f32 %v5610, %v5611
        %v5613 = vsel %vm4578, %v5551, 0.0
        %v5614 = vadd.f32 %v5612, %v5613
        %v5615 = vsel %vm4578, %v5553, 0.0
        %v5616 = vadd.f32 %v5614, %v5615
        %v5617 = vsel %vm4578, %v5555, 0.0
        %v5618 = vadd.f32 %v5616, %v5617
        %v5619 = vsel %vm4578, %v5557, 0.0
        %v5620 = vadd.f32 %v5618, %v5619
        %v5621 = vrot.slane %v5620, 4
        %v5622 = vadd.f32 %v5620, %v5621
        %v5623 = vrot.slane %v5622, 2
        %v5624 = vadd.f32 %v5622, %v5623
        %v5625 = vrot.slane %v5624, 1
        %v5626 = vadd.f32 %v5624, %v5625
        %v5627 = vsel %vm4578, %v5559, 0.0
        %v5628 = vsel %vm4578, %v5561, 0.0
        %v5629 = vadd.f32 %v5627, %v5628
        %v5630 = vsel %vm4578, %v5563, 0.0
        %v5631 = vadd.f32 %v5629, %v5630
        %v5632 = vsel %vm4578, %v5565, 0.0
        %v5633 = vadd.f32 %v5631, %v5632
        %v5634 = vsel %vm4578, %v5567, 0.0
        %v5635 = vadd.f32 %v5633, %v5634
        %v5636 = vsel %vm4578, %v5569, 0.0
        %v5637 = vadd.f32 %v5635, %v5636
        %v5638 = vsel %vm4578, %v5571, 0.0
        %v5639 = vadd.f32 %v5637, %v5638
        %v5640 = vsel %vm4578, %v5573, 0.0
        %v5641 = vadd.f32 %v5639, %v5640
        %v5642 = vsel %vm4578, %v5575, 0.0
        %v5643 = vadd.f32 %v5641, %v5642
        %v5644 = vsel %vm4578, %v5577, 0.0
        %v5645 = vadd.f32 %v5643, %v5644
        %v5646 = vsel %vm4578, %v5579, 0.0
        %v5647 = vadd.f32 %v5645, %v5646
        %v5648 = vsel %vm4578, %v5581, 0.0
        %v5649 = vadd.f32 %v5647, %v5648
        %v5650 = vsel %vm4578, %v5583, 0.0
        %v5651 = vadd.f32 %v5649, %v5650
        %v5652 = vsel %vm4578, %v5585, 0.0
        %v5653 = vadd.f32 %v5651, %v5652
        %v5654 = vsel %vm4578, %v5587, 0.0
        %v5655 = vadd.f32 %v5653, %v5654
        %v5656 = vsel %vm4578, %v5589, 0.0
        %v5657 = vadd.f32 %v5655, %v5656
        %v5658 = vrot.slane %v5657, 4
        %v5659 = vadd.f32 %v5657, %v5658
        %v5660 = vrot.slane %v5659, 2
        %v5661 = vadd.f32 %v5659, %v5660
        %v5662 = vrot.slane %v5661, 1
        %v5663 = vadd.f32 %v5661, %v5662
        %v5664 = vrcp.pop %v5626
        %v5665 = vrcp.pop %v5663
        %v5666 = vmul.f32 %v5527, %v5664
        %v5667 = vmul.f32 %v5529, %v5664
        %v5668 = vmul.f32 %v5531, %v5664
        %v5669 = vmul.f32 %v5533, %v5664
        %v5670 = vmul.f32 %v5535, %v5664
        %v5671 = vmul.f32 %v5537, %v5664
        %v5672 = vmul.f32 %v5539, %v5664
        %v5673 = vmul.f32 %v5541, %v5664
        %v5674 = vmul.f32 %v5543, %v5664
        %v5675 = vmul.f32 %v5545, %v5664
        %v5676 = vmul.f32 %v5547, %v5664
        %v5677 = vmul.f32 %v5549, %v5664
        %v5678 = vmul.f32 %v5551, %v5664
        %v5679 = vmul.f32 %v5553, %v5664
        %v5680 = vmul.f32 %v5555, %v5664
        %v5681 = vmul.f32 %v5557, %v5664
        %v5682 = vmul.f32 %v5559, %v5665
        %v5683 = vmul.f32 %v5561, %v5665
        %v5684 = vmul.f32 %v5563, %v5665
        %v5685 = vmul.f32 %v5565, %v5665
        %v5686 = vmul.f32 %v5567, %v5665
        %v5687 = vmul.f32 %v5569, %v5665
        %v5688 = vmul.f32 %v5571, %v5665
        %v5689 = vmul.f32 %v5573, %v5665
        %v5690 = vmul.f32 %v5575, %v5665
        %v5691 = vmul.f32 %v5577, %v5665
        %v5692 = vmul.f32 %v5579, %v5665
        %v5693 = vmul.f32 %v5581, %v5665
        %v5694 = vmul.f32 %v5583, %v5665
        %v5695 = vmul.f32 %v5585, %v5665
        %v5696 = vmul.f32 %v5587, %v5665
        %v5697 = vmul.f32 %v5589, %v5665
        %v5698 = vpack.c.bf16 %v5667, %v5666
        %v5699 = vpack.c.bf16 %v5669, %v5668
        %v5700 = vpack.c.bf16 %v5671, %v5670
        %v5701 = vpack.c.bf16 %v5673, %v5672
        %v5702 = vpack.c.bf16 %v5675, %v5674
        %v5703 = vpack.c.bf16 %v5677, %v5676
        %v5704 = vpack.c.bf16 %v5679, %v5678
        %v5705 = vpack.c.bf16 %v5681, %v5680
        %v5706 = vpack.c.bf16 %v5683, %v5682
        %v5707 = vpack.c.bf16 %v5685, %v5684
        %v5708 = vpack.c.bf16 %v5687, %v5686
        %v5709 = vpack.c.bf16 %v5689, %v5688
        %v5710 = vpack.c.bf16 %v5691, %v5690
        %v5711 = vpack.c.bf16 %v5693, %v5692
        %v5712 = vpack.c.bf16 %v5695, %v5694
        %v5713 = vpack.c.bf16 %v5697, %v5696
        %5714 = vmatprep.subr.bf16.mxu0 0
        %5715 = vmatpush1.bf16.msra.mxu0 %v5698
        %5716 = vmatprep.subr.bf16.mxu0 0
        %5717 = vmatpush1.bf16.msra.mxu0 %v5699
        %5718 = vmatprep.subr.bf16.mxu0 0
        %5719 = vmatpush1.bf16.msra.mxu0 %v5700
        %5720 = vmatprep.subr.bf16.mxu0 0
        %5721 = vmatpush1.bf16.msra.mxu0 %v5701
        %5722 = vmatprep.subr.bf16.mxu0 0
        %5723 = vmatpush1.bf16.msra.mxu0 %v5702
        %5724 = vmatprep.subr.bf16.mxu0 0
        %5725 = vmatpush1.bf16.msra.mxu0 %v5703
        %5726 = vmatprep.subr.bf16.mxu0 0
        %5727 = vmatpush1.bf16.msra.mxu0 %v5704
        %5728 = vmatprep.subr.bf16.mxu0 0
        %5729 = vmatpush1.bf16.msra.mxu0 %v5705
        %5730 = vmatprep.subr.bf16.mxu0 0
        %5731 = vmatpush1.bf16.msra.mxu0 0
        %5732 = vmatprep.subr.bf16.mxu0 0
        %5733 = vmatpush1.bf16.msra.mxu0 0
        %5734 = vmatprep.subr.bf16.mxu0 0
        %5735 = vmatpush1.bf16.msra.mxu0 0
        %5736 = vmatprep.subr.bf16.mxu0 0
        %5737 = vmatpush1.bf16.msra.mxu0 0
        %5738 = vmatprep.subr.bf16.mxu0 0
        %5739 = vmatpush1.bf16.msra.mxu0 0
        %5740 = vmatprep.subr.bf16.mxu0 0
        %5741 = vmatpush1.bf16.msra.mxu0 0
        %5742 = vmatprep.subr.bf16.mxu0 0
        %5743 = vmatpush1.bf16.msra.mxu0 0
        %5744 = vmatprep.subr.bf16.mxu0 0
        %5745 = vmatpush1.bf16.msra.mxu0 0
        %5746 = vmatprep.mubr.bf16.mxu0 0
        %5747 = vmatmul.mubr.bf16.gmra.mrb[0].mxu0 %v5104
        %v5748 = vpop.f32.mrb[0].mxu0
        %v5749 = vadd.f32 0.0, %v5748
        %v5750 = vpop.f32.mrb[0].mxu0
        %v5751 = vpop.f32.mrb[0].mxu0
        %v5752 = vpop.f32.mrb[0].mxu0
        %5753 = vdwg.mxu0
        %5754 = vmatprep.subr.bf16.mxu0 0
        %5755 = vmatpush1.bf16.msra.mxu0 %v5706
        %5756 = vmatprep.subr.bf16.mxu0 0
        %5757 = vmatpush1.bf16.msra.mxu0 %v5707
        %5758 = vmatprep.subr.bf16.mxu0 0
        %5759 = vmatpush1.bf16.msra.mxu0 %v5708
        %5760 = vmatprep.subr.bf16.mxu0 0
        %5761 = vmatpush1.bf16.msra.mxu0 %v5709
        %5762 = vmatprep.subr.bf16.mxu0 0
        %5763 = vmatpush1.bf16.msra.mxu0 %v5710
        %5764 = vmatprep.subr.bf16.mxu0 0
        %5765 = vmatpush1.bf16.msra.mxu0 %v5711
        %5766 = vmatprep.subr.bf16.mxu0 0
        %5767 = vmatpush1.bf16.msra.mxu0 %v5712
        %5768 = vmatprep.subr.bf16.mxu0 0
        %5769 = vmatpush1.bf16.msra.mxu0 %v5713
        %5770 = vmatprep.subr.bf16.mxu0 0
        %5771 = vmatpush1.bf16.msra.mxu0 0
        %5772 = vmatprep.subr.bf16.mxu0 0
        %5773 = vmatpush1.bf16.msra.mxu0 0
        %5774 = vmatprep.subr.bf16.mxu0 0
        %5775 = vmatpush1.bf16.msra.mxu0 0
        %5776 = vmatprep.subr.bf16.mxu0 0
        %5777 = vmatpush1.bf16.msra.mxu0 0
        %5778 = vmatprep.subr.bf16.mxu0 0
        %5779 = vmatpush1.bf16.msra.mxu0 0
        %5780 = vmatprep.subr.bf16.mxu0 0
        %5781 = vmatpush1.bf16.msra.mxu0 0
        %5782 = vmatprep.subr.bf16.mxu0 0
        %5783 = vmatpush1.bf16.msra.mxu0 0
        %5784 = vmatprep.subr.bf16.mxu0 0
        %5785 = vmatpush1.bf16.msra.mxu0 0
        %5786 = vmatprep.mubr.bf16.mxu0 0
        %5787 = vmatmul.mubr.bf16.gmra.mrb[0].mxu0 %v5105
        %v5788 = vpop.f32.mrb[0].mxu0
        %v5789 = vadd.f32 0.0, %v5788
        %v5790 = vpop.f32.mrb[0].mxu0
        %v5791 = vpop.f32.mrb[0].mxu0
        %v5792 = vpop.f32.mrb[0].mxu0
        %5793 = vdwg.mxu0
        %v5794 = vpack.c.bf16 %v5789, %v5749
        %5796 = vset.pattern.permute.xlu0 0
        %5797 = vperm.xlu0 %5796, %v4954
        %v5798 = vpop.permute.xlu0 %5797
        %5801 = vset.pattern.permute.xlu0 0
        %5802 = vperm.xlu0 %5801, %v4955
        %v5803 = vpop.permute.xlu0 %5802
        %v5807 = vunpack.c.l.b16 %v4952
        %v5808 = vunpack.c.l.b16 %v4953
        %v5809 = vpack.c.b16 %v5808, %v5807
        %v5811 = vsel %vm5057, %v5809, 0
        %5813 = vmatprep.subr.bf16.mxu0 0
        %5814 = vmatpush1.bf16.msra.mxu0 %v5794
        %5815 = vmatprep.subr.bf16.mxu0 0
        %5816 = vmatpush1.bf16.msra.mxu0 0
        %5817 = vmatprep.subr.bf16.mxu0 0
        %5818 = vmatpush1.bf16.msra.mxu0 0
        %5819 = vmatprep.subr.bf16.mxu0 0
        %5820 = vmatpush1.bf16.msra.mxu0 0
        %5821 = vmatprep.subr.bf16.mxu0 0
        %5822 = vmatpush1.bf16.msra.mxu0 0
        %5823 = vmatprep.subr.bf16.mxu0 0
        %5824 = vmatpush1.bf16.msra.mxu0 0
        %5825 = vmatprep.subr.bf16.mxu0 0
        %5826 = vmatpush1.bf16.msra.mxu0 0
        %5827 = vmatprep.subr.bf16.mxu0 0
        %5828 = vmatpush1.bf16.msra.mxu0 0
        %5829 = vmatprep.subr.bf16.mxu0 0
        %5830 = vmatpush1.bf16.msra.mxu0 0
        %5831 = vmatprep.subr.bf16.mxu0 0
        %5832 = vmatpush1.bf16.msra.mxu0 0
        %5833 = vmatprep.subr.bf16.mxu0 0
        %5834 = vmatpush1.bf16.msra.mxu0 0
        %5835 = vmatprep.subr.bf16.mxu0 0
        %5836 = vmatpush1.bf16.msra.mxu0 0
        %5837 = vmatprep.subr.bf16.mxu0 0
        %5838 = vmatpush1.bf16.msra.mxu0 0
        %5839 = vmatprep.subr.bf16.mxu0 0
        %5840 = vmatpush1.bf16.msra.mxu0 0
        %5841 = vmatprep.subr.bf16.mxu0 0
        %5842 = vmatpush1.bf16.msra.mxu0 0
        %5843 = vmatprep.subr.bf16.mxu0 0
        %5844 = vmatpush1.bf16.msra.mxu0 0
        %5845 = vmatprep.mubr.bf16.mxu0 0
        %5846 = vmatmul.mubr.bf16.gmra.mrb[0].mxu0 %v5811
        %v5847 = vpop.f32.mrb[0].mxu0
        %v5848 = vadd.f32 %v5798, %v5847
        %v5849 = vpop.f32.mrb[0].mxu0
        %v5850 = vpop.f32.mrb[0].mxu0
        %v5851 = vadd.f32 %v5803, %v5850
        %v5852 = vpop.f32.mrb[0].mxu0
        %5853 = vdwg.mxu0
        %v5854 = vadd.f32 %v5848, %v4938
        %v5855 = vadd.f32 %v5851, %v4939
        %v5856 = vld [vmem:[%s125] sm:$0xf]
        %v5857 = vld [vmem:[%s125 + $0x4] sm:$0xf]
        %v5858 = vld [vmem:[%s125 + $0x8] sm:$0xf]
        %v5859 = vld [vmem:[%s125 + $0xc] sm:$0xf]
        %v5860 = vld [vmem:[%s127] sm:$0xff]
        %v5861 = vld [vmem:[%s127 + $0x8] sm:$0xff]
        %v5862 = vld [vmem:[%s127 + $0x10] sm:$0xff]
        %v5863 = vld [vmem:[%s127 + $0x18] sm:$0xff]
        %v5864 = vld [vmem:[%s129] sm:$0xf]
        %v5865 = vld [vmem:[%s129 + $0x4] sm:$0xf]
        %v5866 = vld [vmem:[%s131] sm:$0xff]
        %v5867 = vld [vmem:[%s131 + $0x8] sm:$0xff]
        %v5868 = vld [vmem:[%s133] sm:$0xf]
        %v5869 = vld [vmem:[%s133 + $0x4] sm:$0xf]
        %v5870 = vld [vmem:[%s135] sm:$0xff]
        %v5871 = vld [vmem:[%s135 + $0x8] sm:$0xff]
        %5873 = vset.pattern.permute.xlu0 0
        %5874 = vperm.xlu0 %5873, %v5860
        %v5875 = vpop.permute.xlu0 %5874
        %5878 = vset.pattern.permute.xlu0 0
        %5879 = vperm.xlu0 %5878, %v5861
        %v5880 = vpop.permute.xlu0 %5879
        %5883 = vset.pattern.permute.xlu0 0
        %5884 = vperm.xlu0 %5883, %v5862
        %v5885 = vpop.permute.xlu0 %5884
        %5888 = vset.pattern.permute.xlu0 0
        %5889 = vperm.xlu0 %5888, %v5863
        %v5890 = vpop.permute.xlu0 %5889
        %v5896 = vunpack.c.l.b16 %v5856
        %v5897 = vunpack.c.l.b16 %v5857
        %v5898 = vunpack.c.l.b16 %v5858
        %v5899 = vunpack.c.l.b16 %v5859
        %v5900 = vpack.c.b16 %v5897, %v5896
        %v5901 = vpack.c.b16 %v5899, %v5898
        %v5903 = vsel %vm2629, %v5900, 0
        %v5906 = vsel %vm2629, %v5901, 0
        %5908 = vmatprep.subr.bf16.mxu0 0
        %5909 = vmatpush1.bf16.msra.mxu0 %v4486
        %5910 = vmatprep.subr.bf16.mxu0 0
        %5911 = vmatpush1.bf16.msra.mxu0 %v4487
        %5912 = vmatprep.subr.bf16.mxu0 0
        %5913 = vmatpush1.bf16.msra.mxu0 0
        %5914 = vmatprep.subr.bf16.mxu0 0
        %5915 = vmatpush1.bf16.msra.mxu0 0
        %5916 = vmatprep.subr.bf16.mxu0 0
        %5917 = vmatpush1.bf16.msra.mxu0 0
        %5918 = vmatprep.subr.bf16.mxu0 0
        %5919 = vmatpush1.bf16.msra.mxu0 0
        %5920 = vmatprep.subr.bf16.mxu0 0
        %5921 = vmatpush1.bf16.msra.mxu0 0
        %5922 = vmatprep.subr.bf16.mxu0 0
        %5923 = vmatpush1.bf16.msra.mxu0 0
        %5924 = vmatprep.subr.bf16.mxu0 0
        %5925 = vmatpush1.bf16.msra.mxu0 0
        %5926 = vmatprep.subr.bf16.mxu0 0
        %5927 = vmatpush1.bf16.msra.mxu0 0
        %5928 = vmatprep.subr.bf16.mxu0 0
        %5929 = vmatpush1.bf16.msra.mxu0 0
        %5930 = vmatprep.subr.bf16.mxu0 0
        %5931 = vmatpush1.bf16.msra.mxu0 0
        %5932 = vmatprep.subr.bf16.mxu0 0
        %5933 = vmatpush1.bf16.msra.mxu0 0
        %5934 = vmatprep.subr.bf16.mxu0 0
        %5935 = vmatpush1.bf16.msra.mxu0 0
        %5936 = vmatprep.subr.bf16.mxu0 0
        %5937 = vmatpush1.bf16.msra.mxu0 0
        %5938 = vmatprep.subr.bf16.mxu0 0
        %5939 = vmatpush1.bf16.msra.mxu0 0
        %5940 = vmatprep.mubr.bf16.mxu0 0
        %5941 = vmatmul.mubr.bf16.gmra.mrb[0].mxu0 %v5903
        %v5942 = vpop.f32.mrb[0].mxu0
        %v5943 = vadd.f32 %v5875, %v5942
        %v5944 = vpop.f32.mrb[0].mxu0
        %v5945 = vpop.f32.mrb[0].mxu0
        %v5946 = vadd.f32 %v5880, %v5945
        %v5947 = vpop.f32.mrb[0].mxu0
        %5948 = vmatprep.mubr.bf16.mxu0 0
        %5949 = vmatmul.mubr.bf16.gmra.mrb[0].mxu0 %v5906
        %v5950 = vpop.f32.mrb[0].mxu0
        %v5951 = vadd.f32 %v5885, %v5950
        %v5952 = vpop.f32.mrb[0].mxu0
        %v5953 = vpop.f32.mrb[0].mxu0
        %v5954 = vadd.f32 %v5890, %v5953
        %v5955 = vpop.f32.mrb[0].mxu0
        %5956 = vdwg.mxu0
        %v5957 = vpack.c.bf16 %v5855, %v5854
        %5959 = vset.pattern.permute.xlu0 0
        %5960 = vperm.xlu0 %5959, %v5866
        %v5961 = vpop.permute.xlu0 %5960
        %5964 = vset.pattern.permute.xlu0 0
        %5965 = vperm.xlu0 %5964, %v5867
        %v5966 = vpop.permute.xlu0 %5965
        %v5970 = vunpack.c.l.b16 %v5864
        %v5971 = vunpack.c.l.b16 %v5865
        %v5972 = vpack.c.b16 %v5971, %v5970
        %v5974 = vsel %vm5057, %v5972, 0
        %5976 = vmatprep.subr.bf16.mxu0 0
        %5977 = vmatpush1.bf16.msra.mxu0 %v5957
        %5978 = vmatprep.subr.bf16.mxu0 0
        %5979 = vmatpush1.bf16.msra.mxu0 0
        %5980 = vmatprep.subr.bf16.mxu0 0
        %5981 = vmatpush1.bf16.msra.mxu0 0
        %5982 = vmatprep.subr.bf16.mxu0 0
        %5983 = vmatpush1.bf16.msra.mxu0 0
        %5984 = vmatprep.subr.bf16.mxu0 0
        %5985 = vmatpush1.bf16.msra.mxu0 0
        %5986 = vmatprep.subr.bf16.mxu0 0
        %5987 = vmatpush1.bf16.msra.mxu0 0
        %5988 = vmatprep.subr.bf16.mxu0 0
        %5989 = vmatpush1.bf16.msra.mxu0 0
        %5990 = vmatprep.subr.bf16.mxu0 0
        %5991 = vmatpush1.bf16.msra.mxu0 0
        %5992 = vmatprep.subr.bf16.mxu0 0
        %5993 = vmatpush1.bf16.msra.mxu0 0
        %5994 = vmatprep.subr.bf16.mxu0 0
        %5995 = vmatpush1.bf16.msra.mxu0 0
        %5996 = vmatprep.subr.bf16.mxu0 0
        %5997 = vmatpush1.bf16.msra.mxu0 0
        %5998 = vmatprep.subr.bf16.mxu0 0
        %5999 = vmatpush1.bf16.msra.mxu0 0
        %6000 = vmatprep.subr.bf16.mxu0 0
        %6001 = vmatpush1.bf16.msra.mxu0 0
        %6002 = vmatprep.subr.bf16.mxu0 0
        %6003 = vmatpush1.bf16.msra.mxu0 0
        %6004 = vmatprep.subr.bf16.mxu0 0
        %6005 = vmatpush1.bf16.msra.mxu0 0
        %6006 = vmatprep.subr.bf16.mxu0 0
        %6007 = vmatpush1.bf16.msra.mxu0 0
        %6008 = vmatprep.mubr.bf16.mxu0 0
        %6009 = vmatmul.mubr.bf16.gmra.mrb[0].mxu0 %v5974
        %v6010 = vpop.f32.mrb[0].mxu0
        %v6011 = vadd.f32 %v5961, %v6010
        %v6012 = vpop.f32.mrb[0].mxu0
        %v6013 = vpop.f32.mrb[0].mxu0
        %v6014 = vadd.f32 %v5966, %v6013
        %v6015 = vpop.f32.mrb[0].mxu0
        %6016 = vdwg.mxu0
        %v6017 = vpack.c.bf16 %v5943, %v5943
        %v6018 = vpack.c.bf16 %v5946, %v5946
        %v6019 = vpack.c.bf16 %v5951, %v5951
        %v6020 = vpack.c.bf16 %v5954, %v5954
        %v6021 = vpack.c.bf16 %v6011, %v6011
        %v6022 = vpack.c.bf16 %v6014, %v6014
        %6023 = vxpose.xlu0.c.b16.start [1/8] %v6017, 128
        %6024 = vxpose.xlu0.c.b16.cont [2/8] 0, 128
        %6025 = vxpose.xlu0.c.b16.cont [3/8] 0, 128
        %6026 = vxpose.xlu0.c.b16.cont [4/8] 0, 128
        %6027 = vxpose.xlu0.c.b16.cont [5/8] 0, 128
        %6028 = vxpose.xlu0.c.b16.cont [6/8] 0, 128
        %6029 = vxpose.xlu0.c.b16.cont [7/8] 0, 128
        %6030 = vxpose.xlu0.c.b16.end [8/8] 0, 128
        %v6031 = vpop.trf.xlu0
        %v6032 = vpop.trf.xlu0
        %v6033 = vpop.trf.xlu0
        %v6034 = vpop.trf.xlu0
        %v6035 = vpop.trf.xlu0
        %v6036 = vpop.trf.xlu0
        %v6037 = vpop.trf.xlu0
        %v6038 = vpop.trf.xlu0
        %v6040 = vsel %vm2109, %v6031, 0
        %v6043 = vsel %vm2109, %v6032, 0
        %v6046 = vsel %vm2109, %v6033, 0
        %v6049 = vsel %vm2109, %v6034, 0
        %v6052 = vsel %vm2109, %v6035, 0
        %v6055 = vsel %vm2109, %v6036, 0
        %v6058 = vsel %vm2109, %v6037, 0
        %v6061 = vsel %vm2109, %v6038, 0
        %v6064 = vsel %vm2116, %v6021, 0
        %6066 = vmatprep.subr.bf16.mxu0 0
        %6067 = vmatpush1.bf16.msra.mxu0 %v6064
        %6068 = vmatprep.subr.bf16.mxu0 0
        %6069 = vmatpush1.bf16.msra.mxu0 0
        %6070 = vmatprep.subr.bf16.mxu0 0
        %6071 = vmatpush1.bf16.msra.mxu0 0
        %6072 = vmatprep.subr.bf16.mxu0 0
        %6073 = vmatpush1.bf16.msra.mxu0 0
        %6074 = vmatprep.subr.bf16.mxu0 0
        %6075 = vmatpush1.bf16.msra.mxu0 0
        %6076 = vmatprep.subr.bf16.mxu0 0
        %6077 = vmatpush1.bf16.msra.mxu0 0
        %6078 = vmatprep.subr.bf16.mxu0 0
        %6079 = vmatpush1.bf16.msra.mxu0 0
        %6080 = vmatprep.subr.bf16.mxu0 0
        %6081 = vmatpush1.bf16.msra.mxu0 0
        %6082 = vmatprep.subr.bf16.mxu0 0
        %6083 = vmatpush1.bf16.msra.mxu0 0
        %6084 = vmatprep.subr.bf16.mxu0 0
        %6085 = vmatpush1.bf16.msra.mxu0 0
        %6086 = vmatprep.subr.bf16.mxu0 0
        %6087 = vmatpush1.bf16.msra.mxu0 0
        %6088 = vmatprep.subr.bf16.mxu0 0
        %6089 = vmatpush1.bf16.msra.mxu0 0
        %6090 = vmatprep.subr.bf16.mxu0 0
        %6091 = vmatpush1.bf16.msra.mxu0 0
        %6092 = vmatprep.subr.bf16.mxu0 0
        %6093 = vmatpush1.bf16.msra.mxu0 0
        %6094 = vmatprep.subr.bf16.mxu0 0
        %6095 = vmatpush1.bf16.msra.mxu0 0
        %6096 = vmatprep.subr.bf16.mxu0 0
        %6097 = vmatpush1.bf16.msra.mxu0 0
        %6098 = vmatprep.mubr.bf16.mxu0 0
        %6099 = vmatmul.mubr.bf16.gmra.mrb[0].mxu0 %v6040
        %v6100 = vpop.f32.mrb[0].mxu0
        %v6101 = vadd.f32 0.0, %v6100
        %v6102 = vpop.f32.mrb[0].mxu0
        %v6103 = vpop.f32.mrb[0].mxu0
        %v6104 = vadd.f32 0.0, %v6103
        %v6105 = vpop.f32.mrb[0].mxu0
        %6106 = vmatprep.mubr.bf16.mxu0 0
        %6107 = vmatmul.mubr.bf16.gmra.mrb[0].mxu0 %v6043
        %v6108 = vpop.f32.mrb[0].mxu0
        %v6109 = vadd.f32 0.0, %v6108
        %v6110 = vpop.f32.mrb[0].mxu0
        %v6111 = vpop.f32.mrb[0].mxu0
        %v6112 = vadd.f32 0.0, %v6111
        %v6113 = vpop.f32.mrb[0].mxu0
        %6114 = vmatprep.mubr.bf16.mxu0 0
        %6115 = vmatmul.mubr.bf16.gmra.mrb[0].mxu0 %v6046
        %v6116 = vpop.f32.mrb[0].mxu0
        %v6117 = vadd.f32 0.0, %v6116
        %v6118 = vpop.f32.mrb[0].mxu0
        %v6119 = vpop.f32.mrb[0].mxu0
        %v6120 = vadd.f32 0.0, %v6119
        %v6121 = vpop.f32.mrb[0].mxu0
        %6122 = vmatprep.mubr.bf16.mxu0 0
        %6123 = vmatmul.mubr.bf16.gmra.mrb[0].mxu0 %v6049
        %v6124 = vpop.f32.mrb[0].mxu0
        %v6125 = vadd.f32 0.0, %v6124
        %v6126 = vpop.f32.mrb[0].mxu0
        %v6127 = vpop.f32.mrb[0].mxu0
        %v6128 = vadd.f32 0.0, %v6127
        %v6129 = vpop.f32.mrb[0].mxu0
        %6130 = vmatprep.mubr.bf16.mxu0 0
        %6131 = vmatmul.mubr.bf16.gmra.mrb[0].mxu0 %v6052
        %v6132 = vpop.f32.mrb[0].mxu0
        %v6133 = vadd.f32 0.0, %v6132
        %v6134 = vpop.f32.mrb[0].mxu0
        %v6135 = vpop.f32.mrb[0].mxu0
        %v6136 = vadd.f32 0.0, %v6135
        %v6137 = vpop.f32.mrb[0].mxu0
        %6138 = vmatprep.mubr.bf16.mxu0 0
        %6139 = vmatmul.mubr.bf16.gmra.mrb[0].mxu0 %v6055
        %v6140 = vpop.f32.mrb[0].mxu0
        %v6141 = vadd.f32 0.0, %v6140
        %v6142 = vpop.f32.mrb[0].mxu0
        %v6143 = vpop.f32.mrb[0].mxu0
        %v6144 = vadd.f32 0.0, %v6143
        %v6145 = vpop.f32.mrb[0].mxu0
        %6146 = vmatprep.mubr.bf16.mxu0 0
        %6147 = vmatmul.mubr.bf16.gmra.mrb[0].mxu0 %v6058
        %v6148 = vpop.f32.mrb[0].mxu0
        %v6149 = vadd.f32 0.0, %v6148
        %v6150 = vpop.f32.mrb[0].mxu0
        %v6151 = vpop.f32.mrb[0].mxu0
        %v6152 = vadd.f32 0.0, %v6151
        %v6153 = vpop.f32.mrb[0].mxu0
        %6154 = vmatprep.mubr.bf16.mxu0 0
        %6155 = vmatmul.mubr.bf16.gmra.mrb[0].mxu0 %v6061
        %v6156 = vpop.f32.mrb[0].mxu0
        %v6157 = vadd.f32 0.0, %v6156
        %v6158 = vpop.f32.mrb[0].mxu0
        %v6159 = vpop.f32.mrb[0].mxu0
        %v6160 = vadd.f32 0.0, %v6159
        %v6161 = vpop.f32.mrb[0].mxu0
        %6162 = vdwg.mxu0
        %6163 = vxpose.xlu0.c.b16.start [1/8] %v6018, 128
        %6164 = vxpose.xlu0.c.b16.cont [2/8] 0, 128
        %6165 = vxpose.xlu0.c.b16.cont [3/8] 0, 128
        %6166 = vxpose.xlu0.c.b16.cont [4/8] 0, 128
        %6167 = vxpose.xlu0.c.b16.cont [5/8] 0, 128
        %6168 = vxpose.xlu0.c.b16.cont [6/8] 0, 128
        %6169 = vxpose.xlu0.c.b16.cont [7/8] 0, 128
        %6170 = vxpose.xlu0.c.b16.end [8/8] 0, 128
        %v6171 = vpop.trf.xlu0
        %v6172 = vpop.trf.xlu0
        %v6173 = vpop.trf.xlu0
        %v6174 = vpop.trf.xlu0
        %v6175 = vpop.trf.xlu0
        %v6176 = vpop.trf.xlu0
        %v6177 = vpop.trf.xlu0
        %v6178 = vpop.trf.xlu0
        %v6180 = vsel %vm2109, %v6171, 0
        %v6183 = vsel %vm2109, %v6172, 0
        %v6186 = vsel %vm2109, %v6173, 0
        %v6189 = vsel %vm2109, %v6174, 0
        %v6192 = vsel %vm2109, %v6175, 0
        %v6195 = vsel %vm2109, %v6176, 0
        %v6198 = vsel %vm2109, %v6177, 0
        %v6201 = vsel %vm2109, %v6178, 0
        %v6204 = vsel %vm2116, %v6022, 0
        %6206 = vmatprep.subr.bf16.mxu0 0
        %6207 = vmatpush1.bf16.msra.mxu0 %v6204
        %6208 = vmatprep.subr.bf16.mxu0 0
        %6209 = vmatpush1.bf16.msra.mxu0 0
        %6210 = vmatprep.subr.bf16.mxu0 0
        %6211 = vmatpush1.bf16.msra.mxu0 0
        %6212 = vmatprep.subr.bf16.mxu0 0
        %6213 = vmatpush1.bf16.msra.mxu0 0
        %6214 = vmatprep.subr.bf16.mxu0 0
        %6215 = vmatpush1.bf16.msra.mxu0 0
        %6216 = vmatprep.subr.bf16.mxu0 0
        %6217 = vmatpush1.bf16.msra.mxu0 0
        %6218 = vmatprep.subr.bf16.mxu0 0
        %6219 = vmatpush1.bf16.msra.mxu0 0
        %6220 = vmatprep.subr.bf16.mxu0 0
        %6221 = vmatpush1.bf16.msra.mxu0 0
        %6222 = vmatprep.subr.bf16.mxu0 0
        %6223 = vmatpush1.bf16.msra.mxu0 0
        %6224 = vmatprep.subr.bf16.mxu0 0
        %6225 = vmatpush1.bf16.msra.mxu0 0
        %6226 = vmatprep.subr.bf16.mxu0 0
        %6227 = vmatpush1.bf16.msra.mxu0 0
        %6228 = vmatprep.subr.bf16.mxu0 0
        %6229 = vmatpush1.bf16.msra.mxu0 0
        %6230 = vmatprep.subr.bf16.mxu0 0
        %6231 = vmatpush1.bf16.msra.mxu0 0
        %6232 = vmatprep.subr.bf16.mxu0 0
        %6233 = vmatpush1.bf16.msra.mxu0 0
        %6234 = vmatprep.subr.bf16.mxu0 0
        %6235 = vmatpush1.bf16.msra.mxu0 0
        %6236 = vmatprep.subr.bf16.mxu0 0
        %6237 = vmatpush1.bf16.msra.mxu0 0
        %6238 = vmatprep.mubr.bf16.mxu0 0
        %6239 = vmatmul.mubr.bf16.gmra.mrb[0].mxu0 %v6180
        %v6240 = vpop.f32.mrb[0].mxu0
        %v6241 = vadd.f32 0.0, %v6240
        %v6242 = vpop.f32.mrb[0].mxu0
        %v6243 = vpop.f32.mrb[0].mxu0
        %v6244 = vadd.f32 0.0, %v6243
        %v6245 = vpop.f32.mrb[0].mxu0
        %6246 = vmatprep.mubr.bf16.mxu0 0
        %6247 = vmatmul.mubr.bf16.gmra.mrb[0].mxu0 %v6183
        %v6248 = vpop.f32.mrb[0].mxu0
        %v6249 = vadd.f32 0.0, %v6248
        %v6250 = vpop.f32.mrb[0].mxu0
        %v6251 = vpop.f32.mrb[0].mxu0
        %v6252 = vadd.f32 0.0, %v6251
        %v6253 = vpop.f32.mrb[0].mxu0
        %6254 = vmatprep.mubr.bf16.mxu0 0
        %6255 = vmatmul.mubr.bf16.gmra.mrb[0].mxu0 %v6186
        %v6256 = vpop.f32.mrb[0].mxu0
        %v6257 = vadd.f32 0.0, %v6256
        %v6258 = vpop.f32.mrb[0].mxu0
        %v6259 = vpop.f32.mrb[0].mxu0
        %v6260 = vadd.f32 0.0, %v6259
        %v6261 = vpop.f32.mrb[0].mxu0
        %6262 = vmatprep.mubr.bf16.mxu0 0
        %6263 = vmatmul.mubr.bf16.gmra.mrb[0].mxu0 %v6189
        %v6264 = vpop.f32.mrb[0].mxu0
        %v6265 = vadd.f32 0.0, %v6264
        %v6266 = vpop.f32.mrb[0].mxu0
        %v6267 = vpop.f32.mrb[0].mxu0
        %v6268 = vadd.f32 0.0, %v6267
        %v6269 = vpop.f32.mrb[0].mxu0
        %6270 = vmatprep.mubr.bf16.mxu0 0
        %6271 = vmatmul.mubr.bf16.gmra.mrb[0].mxu0 %v6192
        %v6272 = vpop.f32.mrb[0].mxu0
        %v6273 = vadd.f32 0.0, %v6272
        %v6274 = vpop.f32.mrb[0].mxu0
        %v6275 = vpop.f32.mrb[0].mxu0
        %v6276 = vadd.f32 0.0, %v6275
        %v6277 = vpop.f32.mrb[0].mxu0
        %6278 = vmatprep.mubr.bf16.mxu0 0
        %6279 = vmatmul.mubr.bf16.gmra.mrb[0].mxu0 %v6195
        %v6280 = vpop.f32.mrb[0].mxu0
        %v6281 = vadd.f32 0.0, %v6280
        %v6282 = vpop.f32.mrb[0].mxu0
        %v6283 = vpop.f32.mrb[0].mxu0
        %v6284 = vadd.f32 0.0, %v6283
        %v6285 = vpop.f32.mrb[0].mxu0
        %6286 = vmatprep.mubr.bf16.mxu0 0
        %6287 = vmatmul.mubr.bf16.gmra.mrb[0].mxu0 %v6198
        %v6288 = vpop.f32.mrb[0].mxu0
        %v6289 = vadd.f32 0.0, %v6288
        %v6290 = vpop.f32.mrb[0].mxu0
        %v6291 = vpop.f32.mrb[0].mxu0
        %v6292 = vadd.f32 0.0, %v6291
        %v6293 = vpop.f32.mrb[0].mxu0
        %6294 = vmatprep.mubr.bf16.mxu0 0
        %6295 = vmatmul.mubr.bf16.gmra.mrb[0].mxu0 %v6201
        %v6296 = vpop.f32.mrb[0].mxu0
        %v6297 = vadd.f32 0.0, %v6296
        %v6298 = vpop.f32.mrb[0].mxu0
        %v6299 = vpop.f32.mrb[0].mxu0
        %v6300 = vadd.f32 0.0, %v6299
        %v6301 = vpop.f32.mrb[0].mxu0
        %6302 = vdwg.mxu0
        %v6303 = vmul.f32 %v6101, 0.35355338
        %v6304 = vmul.f32 %v6104, 0.35355338
        %v6305 = vmul.f32 %v6109, 0.35355338
        %v6306 = vmul.f32 %v6112, 0.35355338
        %v6307 = vmul.f32 %v6117, 0.35355338
        %v6308 = vmul.f32 %v6120, 0.35355338
        %v6309 = vmul.f32 %v6125, 0.35355338
        %v6310 = vmul.f32 %v6128, 0.35355338
        %v6311 = vmul.f32 %v6133, 0.35355338
        %v6312 = vmul.f32 %v6136, 0.35355338
        %v6313 = vmul.f32 %v6141, 0.35355338
        %v6314 = vmul.f32 %v6144, 0.35355338
        %v6315 = vmul.f32 %v6149, 0.35355338
        %v6316 = vmul.f32 %v6152, 0.35355338
        %v6317 = vmul.f32 %v6157, 0.35355338
        %v6318 = vmul.f32 %v6160, 0.35355338
        %v6319 = vmul.f32 %v6241, 0.35355338
        %v6320 = vmul.f32 %v6244, 0.35355338
        %v6321 = vmul.f32 %v6249, 0.35355338
        %v6322 = vmul.f32 %v6252, 0.35355338
        %v6323 = vmul.f32 %v6257, 0.35355338
        %v6324 = vmul.f32 %v6260, 0.35355338
        %v6325 = vmul.f32 %v6265, 0.35355338
        %v6326 = vmul.f32 %v6268, 0.35355338
        %v6327 = vmul.f32 %v6273, 0.35355338
        %v6328 = vmul.f32 %v6276, 0.35355338
        %v6329 = vmul.f32 %v6281, 0.35355338
        %v6330 = vmul.f32 %v6284, 0.35355338
        %v6331 = vmul.f32 %v6289, 0.35355338
        %v6332 = vmul.f32 %v6292, 0.35355338
        %v6333 = vmul.f32 %v6297, 0.35355338
        %v6334 = vmul.f32 %v6300, 0.35355338
        %v6335 = vsel %vm4578, %v6303, -inf
        %v6336 = vsel %vm4578, %v6304, -inf
        %v6337 = vsel %vm4578, %v6305, -inf
        %v6338 = vmax.f32 %v6335, %v6337
        %v6339 = vsel %vm4578, %v6306, -inf
        %v6340 = vmax.f32 %v6336, %v6339
        %v6341 = vsel %vm4578, %v6307, -inf
        %v6342 = vmax.f32 %v6338, %v6341
        %v6343 = vsel %vm4578, %v6308, -inf
        %v6344 = vmax.f32 %v6340, %v6343
        %v6345 = vsel %vm4578, %v6309, -inf
        %v6346 = vmax.f32 %v6342, %v6345
        %v6347 = vsel %vm4578, %v6310, -inf
        %v6348 = vmax.f32 %v6344, %v6347
        %v6349 = vsel %vm4578, %v6311, -inf
        %v6350 = vmax.f32 %v6346, %v6349
        %v6351 = vsel %vm4578, %v6312, -inf
        %v6352 = vmax.f32 %v6348, %v6351
        %v6353 = vsel %vm4578, %v6313, -inf
        %v6354 = vmax.f32 %v6350, %v6353
        %v6355 = vsel %vm4578, %v6314, -inf
        %v6356 = vmax.f32 %v6352, %v6355
        %v6357 = vsel %vm4578, %v6315, -inf
        %v6358 = vmax.f32 %v6354, %v6357
        %v6359 = vsel %vm4578, %v6316, -inf
        %v6360 = vmax.f32 %v6356, %v6359
        %v6361 = vsel %vm4578, %v6317, -inf
        %v6362 = vmax.f32 %v6358, %v6361
        %v6363 = vsel %vm4578, %v6318, -inf
        %v6364 = vmax.f32 %v6360, %v6363
        %v6365 = vmax.f32 %v6362, %v6364
        %v6366 = vrot.slane %v6365, 4
        %v6367 = vmax.f32 %v6365, %v6366
        %v6368 = vrot.slane %v6367, 2
        %v6369 = vmax.f32 %v6367, %v6368
        %v6370 = vrot.slane %v6369, 1
        %v6371 = vmax.f32 %v6369, %v6370
        %v6372 = vsel %vm4578, %v6319, -inf
        %v6373 = vsel %vm4578, %v6320, -inf
        %v6374 = vsel %vm4578, %v6321, -inf
        %v6375 = vmax.f32 %v6372, %v6374
        %v6376 = vsel %vm4578, %v6322, -inf
        %v6377 = vmax.f32 %v6373, %v6376
        %v6378 = vsel %vm4578, %v6323, -inf
        %v6379 = vmax.f32 %v6375, %v6378
        %v6380 = vsel %vm4578, %v6324, -inf
        %v6381 = vmax.f32 %v6377, %v6380
        %v6382 = vsel %vm4578, %v6325, -inf
        %v6383 = vmax.f32 %v6379, %v6382
        %v6384 = vsel %vm4578, %v6326, -inf
        %v6385 = vmax.f32 %v6381, %v6384
        %v6386 = vsel %vm4578, %v6327, -inf
        %v6387 = vmax.f32 %v6383, %v6386
        %v6388 = vsel %vm4578, %v6328, -inf
        %v6389 = vmax.f32 %v6385, %v6388
        %v6390 = vsel %vm4578, %v6329, -inf
        %v6391 = vmax.f32 %v6387, %v6390
        %v6392 = vsel %vm4578, %v6330, -inf
        %v6393 = vmax.f32 %v6389, %v6392
        %v6394 = vsel %vm4578, %v6331, -inf
        %v6395 = vmax.f32 %v6391, %v6394
        %v6396 = vsel %vm4578, %v6332, -inf
        %v6397 = vmax.f32 %v6393, %v6396
        %v6398 = vsel %vm4578, %v6333, -inf
        %v6399 = vmax.f32 %v6395, %v6398
        %v6400 = vsel %vm4578, %v6334, -inf
        %v6401 = vmax.f32 %v6397, %v6400
        %v6402 = vmax.f32 %v6399, %v6401
        %v6403 = vrot.slane %v6402, 4
        %v6404 = vmax.f32 %v6402, %v6403
        %v6405 = vrot.slane %v6404, 2
        %v6406 = vmax.f32 %v6404, %v6405
        %v6407 = vrot.slane %v6406, 1
        %v6408 = vmax.f32 %v6406, %v6407
        %v6409 = vsub.f32 %v6303, %v6371
        %v6410 = vsub.f32 %v6304, %v6371
        %v6411 = vsub.f32 %v6305, %v6371
        %v6412 = vsub.f32 %v6306, %v6371
        %v6413 = vsub.f32 %v6307, %v6371
        %v6414 = vsub.f32 %v6308, %v6371
        %v6415 = vsub.f32 %v6309, %v6371
        %v6416 = vsub.f32 %v6310, %v6371
        %v6417 = vsub.f32 %v6311, %v6371
        %v6418 = vsub.f32 %v6312, %v6371
        %v6419 = vsub.f32 %v6313, %v6371
        %v6420 = vsub.f32 %v6314, %v6371
        %v6421 = vsub.f32 %v6315, %v6371
        %v6422 = vsub.f32 %v6316, %v6371
        %v6423 = vsub.f32 %v6317, %v6371
        %v6424 = vsub.f32 %v6318, %v6371
        %v6425 = vsub.f32 %v6319, %v6408
        %v6426 = vsub.f32 %v6320, %v6408
        %v6427 = vsub.f32 %v6321, %v6408
        %v6428 = vsub.f32 %v6322, %v6408
        %v6429 = vsub.f32 %v6323, %v6408
        %v6430 = vsub.f32 %v6324, %v6408
        %v6431 = vsub.f32 %v6325, %v6408
        %v6432 = vsub.f32 %v6326, %v6408
        %v6433 = vsub.f32 %v6327, %v6408
        %v6434 = vsub.f32 %v6328, %v6408
        %v6435 = vsub.f32 %v6329, %v6408
        %v6436 = vsub.f32 %v6330, %v6408
        %v6437 = vsub.f32 %v6331, %v6408
        %v6438 = vsub.f32 %v6332, %v6408
        %v6439 = vsub.f32 %v6333, %v6408
        %v6440 = vsub.f32 %v6334, %v6408
        %v6441 = vmul.f32 %v6409, 1.442695
        %v6442 = vpow.pop %v6441
        %v6443 = vmul.f32 %v6410, 1.442695
        %v6444 = vpow.pop %v6443
        %v6445 = vmul.f32 %v6411, 1.442695
        %v6446 = vpow.pop %v6445
        %v6447 = vmul.f32 %v6412, 1.442695
        %v6448 = vpow.pop %v6447
        %v6449 = vmul.f32 %v6413, 1.442695
        %v6450 = vpow.pop %v6449
        %v6451 = vmul.f32 %v6414, 1.442695
        %v6452 = vpow.pop %v6451
        %v6453 = vmul.f32 %v6415, 1.442695
        %v6454 = vpow.pop %v6453
        %v6455 = vmul.f32 %v6416, 1.442695
        %v6456 = vpow.pop %v6455
        %v6457 = vmul.f32 %v6417, 1.442695
        %v6458 = vpow.pop %v6457
        %v6459 = vmul.f32 %v6418, 1.442695
        %v6460 = vpow.pop %v6459
        %v6461 = vmul.f32 %v6419, 1.442695
        %v6462 = vpow.pop %v6461
        %v6463 = vmul.f32 %v6420, 1.442695
        %v6464 = vpow.pop %v6463
        %v6465 = vmul.f32 %v6421, 1.442695
        %v6466 = vpow.pop %v6465
        %v6467 = vmul.f32 %v6422, 1.442695
        %v6468 = vpow.pop %v6467
        %v6469 = vmul.f32 %v6423, 1.442695
        %v6470 = vpow.pop %v6469
        %v6471 = vmul.f32 %v6424, 1.442695
        %v6472 = vpow.pop %v6471
        %v6473 = vmul.f32 %v6425, 1.442695
        %v6474 = vpow.pop %v6473
        %v6475 = vmul.f32 %v6426, 1.442695
        %v6476 = vpow.pop %v6475
        %v6477 = vmul.f32 %v6427, 1.442695
        %v6478 = vpow.pop %v6477
        %v6479 = vmul.f32 %v6428, 1.442695
        %v6480 = vpow.pop %v6479
        %v6481 = vmul.f32 %v6429, 1.442695
        %v6482 = vpow.pop %v6481
        %v6483 = vmul.f32 %v6430, 1.442695
        %v6484 = vpow.pop %v6483
        %v6485 = vmul.f32 %v6431, 1.442695
        %v6486 = vpow.pop %v6485
        %v6487 = vmul.f32 %v6432, 1.442695
        %v6488 = vpow.pop %v6487
        %v6489 = vmul.f32 %v6433, 1.442695
        %v6490 = vpow.pop %v6489
        %v6491 = vmul.f32 %v6434, 1.442695
        %v6492 = vpow.pop %v6491
        %v6493 = vmul.f32 %v6435, 1.442695
        %v6494 = vpow.pop %v6493
        %v6495 = vmul.f32 %v6436, 1.442695
        %v6496 = vpow.pop %v6495
        %v6497 = vmul.f32 %v6437, 1.442695
        %v6498 = vpow.pop %v6497
        %v6499 = vmul.f32 %v6438, 1.442695
        %v6500 = vpow.pop %v6499
        %v6501 = vmul.f32 %v6439, 1.442695
        %v6502 = vpow.pop %v6501
        %v6503 = vmul.f32 %v6440, 1.442695
        %v6504 = vpow.pop %v6503
        %v6505 = vsel %vm4578, %v6442, 0.0
        %v6506 = vsel %vm4578, %v6444, 0.0
        %v6507 = vadd.f32 %v6505, %v6506
        %v6508 = vsel %vm4578, %v6446, 0.0
        %v6509 = vadd.f32 %v6507, %v6508
        %v6510 = vsel %vm4578, %v6448, 0.0
        %v6511 = vadd.f32 %v6509, %v6510
        %v6512 = vsel %vm4578, %v6450, 0.0
        %v6513 = vadd.f32 %v6511, %v6512
        %v6514 = vsel %vm4578, %v6452, 0.0
        %v6515 = vadd.f32 %v6513, %v6514
        %v6516 = vsel %vm4578, %v6454, 0.0
        %v6517 = vadd.f32 %v6515, %v6516
        %v6518 = vsel %vm4578, %v6456, 0.0
        %v6519 = vadd.f32 %v6517, %v6518
        %v6520 = vsel %vm4578, %v6458, 0.0
        %v6521 = vadd.f32 %v6519, %v6520
        %v6522 = vsel %vm4578, %v6460, 0.0
        %v6523 = vadd.f32 %v6521, %v6522
        %v6524 = vsel %vm4578, %v6462, 0.0
        %v6525 = vadd.f32 %v6523, %v6524
        %v6526 = vsel %vm4578, %v6464, 0.0
        %v6527 = vadd.f32 %v6525, %v6526
        %v6528 = vsel %vm4578, %v6466, 0.0
        %v6529 = vadd.f32 %v6527, %v6528
        %v6530 = vsel %vm4578, %v6468, 0.0
        %v6531 = vadd.f32 %v6529, %v6530
        %v6532 = vsel %vm4578, %v6470, 0.0
        %v6533 = vadd.f32 %v6531, %v6532
        %v6534 = vsel %vm4578, %v6472, 0.0
        %v6535 = vadd.f32 %v6533, %v6534
        %v6536 = vrot.slane %v6535, 4
        %v6537 = vadd.f32 %v6535, %v6536
        %v6538 = vrot.slane %v6537, 2
        %v6539 = vadd.f32 %v6537, %v6538
        %v6540 = vrot.slane %v6539, 1
        %v6541 = vadd.f32 %v6539, %v6540
        %v6542 = vsel %vm4578, %v6474, 0.0
        %v6543 = vsel %vm4578, %v6476, 0.0
        %v6544 = vadd.f32 %v6542, %v6543
        %v6545 = vsel %vm4578, %v6478, 0.0
        %v6546 = vadd.f32 %v6544, %v6545
        %v6547 = vsel %vm4578, %v6480, 0.0
        %v6548 = vadd.f32 %v6546, %v6547
        %v6549 = vsel %vm4578, %v6482, 0.0
        %v6550 = vadd.f32 %v6548, %v6549
        %v6551 = vsel %vm4578, %v6484, 0.0
        %v6552 = vadd.f32 %v6550, %v6551
        %v6553 = vsel %vm4578, %v6486, 0.0
        %v6554 = vadd.f32 %v6552, %v6553
        %v6555 = vsel %vm4578, %v6488, 0.0
        %v6556 = vadd.f32 %v6554, %v6555
        %v6557 = vsel %vm4578, %v6490, 0.0
        %v6558 = vadd.f32 %v6556, %v6557
        %v6559 = vsel %vm4578, %v6492, 0.0
        %v6560 = vadd.f32 %v6558, %v6559
        %v6561 = vsel %vm4578, %v6494, 0.0
        %v6562 = vadd.f32 %v6560, %v6561
        %v6563 = vsel %vm4578, %v6496, 0.0
        %v6564 = vadd.f32 %v6562, %v6563
        %v6565 = vsel %vm4578, %v6498, 0.0
        %v6566 = vadd.f32 %v6564, %v6565
        %v6567 = vsel %vm4578, %v6500, 0.0
        %v6568 = vadd.f32 %v6566, %v6567
        %v6569 = vsel %vm4578, %v6502, 0.0
        %v6570 = vadd.f32 %v6568, %v6569
        %v6571 = vsel %vm4578, %v6504, 0.0
        %v6572 = vadd.f32 %v6570, %v6571
        %v6573 = vrot.slane %v6572, 4
        %v6574 = vadd.f32 %v6572, %v6573
        %v6575 = vrot.slane %v6574, 2
        %v6576 = vadd.f32 %v6574, %v6575
        %v6577 = vrot.slane %v6576, 1
        %v6578 = vadd.f32 %v6576, %v6577
        %v6579 = vrcp.pop %v6541
        %v6580 = vrcp.pop %v6578
        %v6581 = vmul.f32 %v6442, %v6579
        %v6582 = vmul.f32 %v6444, %v6579
        %v6583 = vmul.f32 %v6446, %v6579
        %v6584 = vmul.f32 %v6448, %v6579
        %v6585 = vmul.f32 %v6450, %v6579
        %v6586 = vmul.f32 %v6452, %v6579
        %v6587 = vmul.f32 %v6454, %v6579
        %v6588 = vmul.f32 %v6456, %v6579
        %v6589 = vmul.f32 %v6458, %v6579
        %v6590 = vmul.f32 %v6460, %v6579
        %v6591 = vmul.f32 %v6462, %v6579
        %v6592 = vmul.f32 %v6464, %v6579
        %v6593 = vmul.f32 %v6466, %v6579
        %v6594 = vmul.f32 %v6468, %v6579
        %v6595 = vmul.f32 %v6470, %v6579
        %v6596 = vmul.f32 %v6472, %v6579
        %v6597 = vmul.f32 %v6474, %v6580
        %v6598 = vmul.f32 %v6476, %v6580
        %v6599 = vmul.f32 %v6478, %v6580
        %v6600 = vmul.f32 %v6480, %v6580
        %v6601 = vmul.f32 %v6482, %v6580
        %v6602 = vmul.f32 %v6484, %v6580
        %v6603 = vmul.f32 %v6486, %v6580
        %v6604 = vmul.f32 %v6488, %v6580
        %v6605 = vmul.f32 %v6490, %v6580
        %v6606 = vmul.f32 %v6492, %v6580
        %v6607 = vmul.f32 %v6494, %v6580
        %v6608 = vmul.f32 %v6496, %v6580
        %v6609 = vmul.f32 %v6498, %v6580
        %v6610 = vmul.f32 %v6500, %v6580
        %v6611 = vmul.f32 %v6502, %v6580
        %v6612 = vmul.f32 %v6504, %v6580
        %v6613 = vpack.c.bf16 %v6582, %v6581
        %v6614 = vpack.c.bf16 %v6584, %v6583
        %v6615 = vpack.c.bf16 %v6586, %v6585
        %v6616 = vpack.c.bf16 %v6588, %v6587
        %v6617 = vpack.c.bf16 %v6590, %v6589
        %v6618 = vpack.c.bf16 %v6592, %v6591
        %v6619 = vpack.c.bf16 %v6594, %v6593
        %v6620 = vpack.c.bf16 %v6596, %v6595
        %v6621 = vpack.c.bf16 %v6598, %v6597
        %v6622 = vpack.c.bf16 %v6600, %v6599
        %v6623 = vpack.c.bf16 %v6602, %v6601
        %v6624 = vpack.c.bf16 %v6604, %v6603
        %v6625 = vpack.c.bf16 %v6606, %v6605
        %v6626 = vpack.c.bf16 %v6608, %v6607
        %v6627 = vpack.c.bf16 %v6610, %v6609
        %v6628 = vpack.c.bf16 %v6612, %v6611
        %6629 = vmatprep.subr.bf16.mxu0 0
        %6630 = vmatpush1.bf16.msra.mxu0 %v6613
        %6631 = vmatprep.subr.bf16.mxu0 0
        %6632 = vmatpush1.bf16.msra.mxu0 %v6614
        %6633 = vmatprep.subr.bf16.mxu0 0
        %6634 = vmatpush1.bf16.msra.mxu0 %v6615
        %6635 = vmatprep.subr.bf16.mxu0 0
        %6636 = vmatpush1.bf16.msra.mxu0 %v6616
        %6637 = vmatprep.subr.bf16.mxu0 0
        %6638 = vmatpush1.bf16.msra.mxu0 %v6617
        %6639 = vmatprep.subr.bf16.mxu0 0
        %6640 = vmatpush1.bf16.msra.mxu0 %v6618
        %6641 = vmatprep.subr.bf16.mxu0 0
        %6642 = vmatpush1.bf16.msra.mxu0 %v6619
        %6643 = vmatprep.subr.bf16.mxu0 0
        %6644 = vmatpush1.bf16.msra.mxu0 %v6620
        %6645 = vmatprep.subr.bf16.mxu0 0
        %6646 = vmatpush1.bf16.msra.mxu0 0
        %6647 = vmatprep.subr.bf16.mxu0 0
        %6648 = vmatpush1.bf16.msra.mxu0 0
        %6649 = vmatprep.subr.bf16.mxu0 0
        %6650 = vmatpush1.bf16.msra.mxu0 0
        %6651 = vmatprep.subr.bf16.mxu0 0
        %6652 = vmatpush1.bf16.msra.mxu0 0
        %6653 = vmatprep.subr.bf16.mxu0 0
        %6654 = vmatpush1.bf16.msra.mxu0 0
        %6655 = vmatprep.subr.bf16.mxu0 0
        %6656 = vmatpush1.bf16.msra.mxu0 0
        %6657 = vmatprep.subr.bf16.mxu0 0
        %6658 = vmatpush1.bf16.msra.mxu0 0
        %6659 = vmatprep.subr.bf16.mxu0 0
        %6660 = vmatpush1.bf16.msra.mxu0 0
        %6661 = vmatprep.mubr.bf16.mxu0 0
        %6662 = vmatmul.mubr.bf16.gmra.mrb[0].mxu0 %v6019
        %v6663 = vpop.f32.mrb[0].mxu0
        %v6664 = vadd.f32 0.0, %v6663
        %v6665 = vpop.f32.mrb[0].mxu0
        %v6666 = vpop.f32.mrb[0].mxu0
        %v6667 = vpop.f32.mrb[0].mxu0
        %6668 = vdwg.mxu0
        %6669 = vmatprep.subr.bf16.mxu0 0
        %6670 = vmatpush1.bf16.msra.mxu0 %v6621
        %6671 = vmatprep.subr.bf16.mxu0 0
        %6672 = vmatpush1.bf16.msra.mxu0 %v6622
        %6673 = vmatprep.subr.bf16.mxu0 0
        %6674 = vmatpush1.bf16.msra.mxu0 %v6623
        %6675 = vmatprep.subr.bf16.mxu0 0
        %6676 = vmatpush1.bf16.msra.mxu0 %v6624
        %6677 = vmatprep.subr.bf16.mxu0 0
        %6678 = vmatpush1.bf16.msra.mxu0 %v6625
        %6679 = vmatprep.subr.bf16.mxu0 0
        %6680 = vmatpush1.bf16.msra.mxu0 %v6626
        %6681 = vmatprep.subr.bf16.mxu0 0
        %6682 = vmatpush1.bf16.msra.mxu0 %v6627
        %6683 = vmatprep.subr.bf16.mxu0 0
        %6684 = vmatpush1.bf16.msra.mxu0 %v6628
        %6685 = vmatprep.subr.bf16.mxu0 0
        %6686 = vmatpush1.bf16.msra.mxu0 0
        %6687 = vmatprep.subr.bf16.mxu0 0
        %6688 = vmatpush1.bf16.msra.mxu0 0
        %6689 = vmatprep.subr.bf16.mxu0 0
        %6690 = vmatpush1.bf16.msra.mxu0 0
        %6691 = vmatprep.subr.bf16.mxu0 0
        %6692 = vmatpush1.bf16.msra.mxu0 0
        %6693 = vmatprep.subr.bf16.mxu0 0
        %6694 = vmatpush1.bf16.msra.mxu0 0
        %6695 = vmatprep.subr.bf16.mxu0 0
        %6696 = vmatpush1.bf16.msra.mxu0 0
        %6697 = vmatprep.subr.bf16.mxu0 0
        %6698 = vmatpush1.bf16.msra.mxu0 0
        %6699 = vmatprep.subr.bf16.mxu0 0
        %6700 = vmatpush1.bf16.msra.mxu0 0
        %6701 = vmatprep.mubr.bf16.mxu0 0
        %6702 = vmatmul.mubr.bf16.gmra.mrb[0].mxu0 %v6020
        %v6703 = vpop.f32.mrb[0].mxu0
        %v6704 = vadd.f32 0.0, %v6703
        %v6705 = vpop.f32.mrb[0].mxu0
        %v6706 = vpop.f32.mrb[0].mxu0
        %v6707 = vpop.f32.mrb[0].mxu0
        %6708 = vdwg.mxu0
        %v6709 = vpack.c.bf16 %v6704, %v6664
        %6711 = vset.pattern.permute.xlu0 0
        %6712 = vperm.xlu0 %6711, %v5870
        %v6713 = vpop.permute.xlu0 %6712
        %6716 = vset.pattern.permute.xlu0 0
        %6717 = vperm.xlu0 %6716, %v5871
        %v6718 = vpop.permute.xlu0 %6717
        %v6722 = vunpack.c.l.b16 %v5868
        %v6723 = vunpack.c.l.b16 %v5869
        %v6724 = vpack.c.b16 %v6723, %v6722
        %v6726 = vsel %vm5057, %v6724, 0
        %6728 = vmatprep.subr.bf16.mxu0 0
        %6729 = vmatpush1.bf16.msra.mxu0 %v6709
        %6730 = vmatprep.subr.bf16.mxu0 0
        %6731 = vmatpush1.bf16.msra.mxu0 0
        %6732 = vmatprep.subr.bf16.mxu0 0
        %6733 = vmatpush1.bf16.msra.mxu0 0
        %6734 = vmatprep.subr.bf16.mxu0 0
        %6735 = vmatpush1.bf16.msra.mxu0 0
        %6736 = vmatprep.subr.bf16.mxu0 0
        %6737 = vmatpush1.bf16.msra.mxu0 0
        %6738 = vmatprep.subr.bf16.mxu0 0
        %6739 = vmatpush1.bf16.msra.mxu0 0
        %6740 = vmatprep.subr.bf16.mxu0 0
        %6741 = vmatpush1.bf16.msra.mxu0 0
        %6742 = vmatprep.subr.bf16.mxu0 0
        %6743 = vmatpush1.bf16.msra.mxu0 0
        %6744 = vmatprep.subr.bf16.mxu0 0
        %6745 = vmatpush1.bf16.msra.mxu0 0
        %6746 = vmatprep.subr.bf16.mxu0 0
        %6747 = vmatpush1.bf16.msra.mxu0 0
        %6748 = vmatprep.subr.bf16.mxu0 0
        %6749 = vmatpush1.bf16.msra.mxu0 0
        %6750 = vmatprep.subr.bf16.mxu0 0
        %6751 = vmatpush1.bf16.msra.mxu0 0
        %6752 = vmatprep.subr.bf16.mxu0 0
        %6753 = vmatpush1.bf16.msra.mxu0 0
        %6754 = vmatprep.subr.bf16.mxu0 0
        %6755 = vmatpush1.bf16.msra.mxu0 0
        %6756 = vmatprep.subr.bf16.mxu0 0
        %6757 = vmatpush1.bf16.msra.mxu0 0
        %6758 = vmatprep.subr.bf16.mxu0 0
        %6759 = vmatpush1.bf16.msra.mxu0 0
        %6760 = vmatprep.mubr.bf16.mxu0 0
        %6761 = vmatmul.mubr.bf16.gmra.mrb[0].mxu0 %v6726
        %v6762 = vpop.f32.mrb[0].mxu0
        %v6763 = vadd.f32 %v6713, %v6762
        %v6764 = vpop.f32.mrb[0].mxu0
        %v6765 = vpop.f32.mrb[0].mxu0
        %v6766 = vadd.f32 %v6718, %v6765
        %v6767 = vpop.f32.mrb[0].mxu0
        %6768 = vdwg.mxu0
        %6769 = vst.msk [vmem:[%s2029] sm:$0xff] %vm4578, %v6763
        %6770 = vst.msk [vmem:[%s2029 + $0x8] sm:$0xff] %vm4578, %v6766
        %s6771 = sand.u32 %s1595, 1
        %s6772 = scalar_lea.sflag [#allocation3], %s6771
        %s6773 = sand.u32 %s1595, 1
        %s6774 = scalar_lea.vmem [#allocation2], %s6773
        %p6775 = scmp.lt.s32.totalorder %s154, 1
        %s6776 = scalar_select %p6775, %s154, 1
        %s6777 = smul.addr %s6776, 2
        %s6778 = smul.addr %s6777, 8
        %s6779 = scalar_lea.vmem %s139, %s6778
        // Predicated region
        $region293: #{timber_encoder_forward.1} parent=291 // pred_check
          %p6780 = pneg %p1605
        $region294: #{timber_encoder_forward.1} parent=291 // pred_check_branch
          %6782 = sbr.rel (%p6780) target = $region296
        $region295: #{timber_encoder_forward.1} parent=291 // pred_region
          %s6784 = ssub.s32 16, 16
          %6785 = vsyncadd %s6772, %s6784
          %s6786 = smul.addr %s154, 16
          %s6787 = scalar_lea.hbm %s137, %s6786
          %s6789 = sshll.u32 %s6774, 4
          %s6790 = int_to_ptr.vmem [resolvable:$true] %s6789
          %6792 = dma.vmem_to_hbm [thread:$0]  %s6790, 16, %s6787, %s6772
        $region296: #{timber_encoder_forward.1} parent=291 // pred_fallthru
          _
        // Predicated region
        $region297: #{timber_encoder_forward.1} parent=291 // pred_check
          %p6793 = pneg %p1631
        $region298: #{timber_encoder_forward.1} parent=291 // pred_check_branch
          %6795 = sbr.rel (%p6793) target = $region300
        $region299: #{timber_encoder_forward.1} parent=291 // pred_region
          _
        $region300: #{timber_encoder_forward.1} parent=291 // pred_fallthru
          _
      $region292: #{timber_encoder_forward.1} parent=5 // pred_fallthru
        _
      %p6796 = scmp.le.s32.totalorder 2, %s149
      // Predicated region
      $region301: #{timber_encoder_forward.1} parent=5 // pred_check
        %p6797 = pneg %p6796
      $region302: #{timber_encoder_forward.1} parent=5 // pred_check_branch
        %6799 = sbr.rel (%p6797) target = $region304
      $region303: #{timber_encoder_forward.1} parent=5 // pred_region
        %s6800 = ssub.s32 %s149, 2
        // Predicated region
        $region305: #{timber_encoder_forward.1} parent=303 // pred_check
          %p6801 = pneg %p1611
        $region306: #{timber_encoder_forward.1} parent=303 // pred_check_branch
          %6803 = sbr.rel (%p6801) target = $region308
        $region307: #{timber_encoder_forward.1} parent=303 // pred_region
          %s6804 = sand.u32 %s1596, 1
          %s6805 = scalar_lea.sflag [#allocation3], %s6804
          %s6806 = sand.u32 %s1596, 1
          %s6807 = scalar_lea.vmem [#allocation2], %s6806
          %6808 = dma.done %s6805, 16
        $region308: #{timber_encoder_forward.1} parent=303 // pred_fallthru
          _
        // Predicated region
        $region309: #{timber_encoder_forward.1} parent=303 // pred_check
          %p6809 = pneg %p1637
        $region310: #{timber_encoder_forward.1} parent=303 // pred_check_branch
          %6811 = sbr.rel (%p6809) target = $region312
        $region311: #{timber_encoder_forward.1} parent=303 // pred_region
          %p6812 = scmp.lt.s32.totalorder %s155, 1
          %s6813 = scalar_select %p6812, %s155, 1
          %s6814 = smul.addr %s6813, 2
          %s6815 = smul.addr %s6814, 8
          %s6816 = scalar_lea.vmem %s139, %s6815
        $region312: #{timber_encoder_forward.1} parent=303 // pred_fallthru
          _
      $region304: #{timber_encoder_forward.1} parent=5 // pred_fallthru
        _
    $region6: #{timber_encoder_forward.1} parent=1 // loop_footer
      %s153 = sadd.s32 1, %s149
    $region7: #{timber_encoder_forward.1} parent=1 // loop_footer_branch
      %148 = sbr.rel target = $region3
    $region8: #{timber_encoder_forward.1} parent=1 // loop_exit
      _
    %6817 = vsyncpa [#allocation3], 1
    %s6818 = scalar_lea.sflag [#allocation3], 1
    %6819 = vsyncpa %s6818, 1

</llo_original>
